<compile_context>
chip_gen: v5e
topology: v5e:2x2
jax: 0.10.0
libtpu: 0.0.40
codegen_flags: <defaults>
</compile_context>

<pallas_src>
import jax
import jax.numpy as jnp
from jax.experimental import pallas as pl
from jax.experimental.pallas import tpu as pltpu

ENCODED_VALUES = tuple(range(16))              # synthetic card vocabulary
V = len(ENCODED_VALUES)                        # 16
N_SLOTS = 6
LAYER_DIMS = [N_SLOTS * V, 1000, 1000, 100, 32, 6]   # 96 -> ... -> 6


def _pad_up(n, m):
    return ((n + m - 1) // m) * m


PAD_DIMS = [_pad_up(d, 128) for d in LAYER_DIMS]   # [128,1024,1024,128,128,128]
IN_PAD = PAD_DIMS[0]
OUT_PAD = PAD_DIMS[-1]

# Batch tile (MXU M dim). 128 matches the v5e 4x128x128 MXU and divides cleanly
# everywhere; bump to 256 on v6e/v7x to fill one full 2x256x256 MXU pass.
TILE_M = 128


# ----------------------------- Pallas kernel --------------------------------
def flipcard_kernel(codes_ref, cards_ref,
                    w1, b1, w2, b2, w3, b3, w4, b4, w5, b5,
                    o_ref):
    # Build the flattened one-hot on the VPU: codes_ref[b, c] holds the card
    # value of slot c // V for c < 6*V and -1 elsewhere, so comparing against
    # (lane index mod V) reproduces the one-hot layout of the reference.
    codes = codes_ref[...]                                         # (TILE_M, IN_PAD) i32
    col = jax.lax.broadcasted_iota(jnp.int32, codes.shape, 1)
    val = (col & (V - 1)) if (V & (V - 1)) == 0 else (col % V)
    x = (codes == val).astype(jnp.float32).astype(jnp.bfloat16)    # one-hot, bf16 for MXU

    def dense_relu(h_bf16, w_ref, b_ref):
        z = jnp.dot(h_bf16, w_ref[...], preferred_element_type=jnp.float32)
        z = jnp.maximum(z + b_ref[...], 0.0)        # bias + ReLU in f32 (VPU)
        return z.astype(jnp.bfloat16)               # bf16 only at the MXU input

    h = dense_relu(x, w1, b1)
    h = dense_relu(h, w2, b2)
    h = dense_relu(h, w3, b3)
    h = dense_relu(h, w4, b4)
    z = jnp.dot(h, w5[...], preferred_element_type=jnp.float32) + b5[...]

    # Sigmoid: exp on the EUP, approximate reciprocal also on the EUP.
    y = pl.reciprocal(1.0 + jnp.exp(-z), approx=True)

    # mask[b, j] = 1 where slot j is empty (card value 0); padded lanes are -1
    # so they give mask = 0 (padded output lanes / padded batch rows stay 0).
    mask = (cards_ref[...] == 0).astype(jnp.float32)
    o_ref[...] = y * mask + mask                    # sigmoid(x)*mask + mask


# ------------------------------ parameters ----------------------------------
def init_params(key):
    """PyTorch-style Linear init: U(-1/sqrt(fan_in), 1/sqrt(fan_in)), f32."""
    params = []
    for i in range(5):
        key, kw, kb = jax.random.split(key, 3)
        fan_in, fan_out = LAYER_DIMS[i], LAYER_DIMS[i + 1]
        bound = 1.0 / float(fan_in) ** 0.5
        w = jax.random.uniform(kw, (fan_in, fan_out), jnp.float32, -bound, bound)
        b = jax.random.uniform(kb, (fan_out,), jnp.float32, -bound, bound)
        params.append((w, b))
    return params


def _pad2(a, rows, cols, dtype):
    out = jnp.zeros((rows, cols), dtype)
    return out.at[: a.shape[0], : a.shape[1]].set(a.astype(dtype))


def prepare_params(params):
    """One-time prep: zero-pad every layer to (8,128)-friendly shapes, cast
    weights to bf16 (halves HBM->VMEM bytes), keep biases in f32. The returned
    device buffers are reused by every forward call (no per-call padding)."""
    flat = []
    for i, (w, b) in enumerate(params):
        flat.append(_pad2(w, PAD_DIMS[i], PAD_DIMS[i + 1], jnp.bfloat16))
        flat.append(_pad2(b.reshape(1, -1), 1, PAD_DIMS[i + 1], jnp.float32))
    return tuple(jax.device_put(x) for x in flat)


# ------------------------------ forward --------------------------------------
@jax.jit
def flipcard_forward_batch(game_encoded_batch, padded_params):
    """game_encoded_batch: (B, L) int; first 6 entries of each row = own deck.
    Returns (B, 6) f32."""
    own = game_encoded_batch[:, :N_SLOTS].astype(jnp.int32)        # (B, 6)
    B = own.shape[0]
    B_pad = _pad_up(B, TILE_M)

    # codes_rep[b, c] = own[b, c // V] for c < 6*V, else -1 (never matches).
    codes_rep = jnp.repeat(own, V, axis=1)                          # (B, 96)
    codes_rep = jnp.pad(codes_rep,
                        ((0, B_pad - B), (0, IN_PAD - N_SLOTS * V)),
                        constant_values=-1)
    # cards_pad[b, j] = own[b, j] for j < 6, else -1  (-> mask 0 on padding).
    cards_pad = jnp.pad(own, ((0, B_pad - B), (0, OUT_PAD - N_SLOTS)),
                        constant_values=-1)

    nb = B_pad // TILE_M
    row_in_spec = pl.BlockSpec((TILE_M, IN_PAD), lambda i: (i, 0))
    row_out_spec = pl.BlockSpec((TILE_M, OUT_PAD), lambda i: (i, 0))

    in_specs = [row_in_spec, row_out_spec]        # codes_rep, cards_pad
    for li in range(5):
        # Constant index_map: weights/biases DMA'd to VMEM once, reused per tile.
        in_specs.append(pl.BlockSpec((PAD_DIMS[li], PAD_DIMS[li + 1]),
                                     lambda i: (0, 0)))
        in_specs.append(pl.BlockSpec((1, PAD_DIMS[li + 1]),
                                     lambda i: (0, 0)))

    out = pl.pallas_call(
        flipcard_kernel,
        out_shape=jax.ShapeDtypeStruct((B_pad, OUT_PAD), jnp.float32),
        grid_spec=pltpu.PrefetchScalarGridSpec(
            num_scalar_prefetch=0,
            grid=(nb,),
            in_specs=in_specs,
            out_specs=row_out_spec,
        ),
        compiler_params=pltpu.CompilerParams(
            dimension_semantics=("parallel",),    # v7x: batch tiles over 2 TCs
        ),
    )(codes_rep, cards_pad, *padded_params)

    return out[:B, :N_SLOTS]


def flipcard_forward(game_encoded, padded_params):
    """Single-example API matching the PyTorch module's forward signature."""
    return flipcard_forward_batch(game_encoded[None, :], padded_params)[0]


# ------------------------------ reference ------------------------------------
def ref_forward_batch(game_encoded_batch, params):
    """Pure-JAX f32 reference mirroring the PyTorch forward."""
    own = game_encoded_batch[:, :N_SLOTS]
    h = jax.nn.one_hot(own, V, dtype=jnp.float32).reshape(own.shape[0], -1)
    for i, (w, b) in enumerate(params):
        h = h @ w + b
        if i < 4:
            h = jnp.maximum(h, 0.0)
    y = jax.nn.sigmoid(h)
    mask = jnp.where(own != 0, 0.0, 1.0).astype(jnp.float32)
    return y * mask + mask


if __name__ == "__main__":
    key = jax.random.PRNGKey(0)
    k_game, k_params = jax.random.split(key)

    # Batch of game states; first 6 entries of each row are the player's own
    # deck slots (0 == face-down / empty slot).
    B, L = 4, 12
    game_encoded = jax.random.randint(k_game, (B, L), 0, V, dtype=jnp.int32)
    game_encoded = game_encoded.at[:, 2].set(0)   # ensure at least one empty slot

    params = init_params(k_params)
    padded = prepare_params(params)               # pad + bf16 cast, done ONCE

    out = flipcard_forward_batch(game_encoded, padded)
    out = jax.block_until_ready(out)

    ref = ref_forward_batch(game_encoded, params)
    assert out.shape == (B, N_SLOTS)
    # bf16 weights vs f32 reference -> relaxed tolerance
    assert jnp.allclose(out, ref, atol=5e-2, rtol=5e-2), (out, ref)

    # Single-example path (original module signature) must match batch row 0.
    single = jax.block_until_ready(flipcard_forward(game_encoded[0], padded))
    assert jnp.allclose(single, out[0], atol=1e-6)

    print("KERNEL_OK")
</pallas_src>

<mosaic_0001>
module attributes {stable_mosaic.version = 11 : i64} {
  func.func @flipcard_kernel(%arg0: i32, %arg1: memref<128x128xi32, #tpu.memory_space<vmem>>, %arg2: memref<128x128xi32, #tpu.memory_space<vmem>>, %arg3: memref<128x1024xbf16, #tpu.memory_space<vmem>>, %arg4: memref<1x1024xf32, #tpu.memory_space<vmem>>, %arg5: memref<1024x1024xbf16, #tpu.memory_space<vmem>>, %arg6: memref<1x1024xf32, #tpu.memory_space<vmem>>, %arg7: memref<1024x128xbf16, #tpu.memory_space<vmem>>, %arg8: memref<1x128xf32, #tpu.memory_space<vmem>>, %arg9: memref<128x128xbf16, #tpu.memory_space<vmem>>, %arg10: memref<1x128xf32, #tpu.memory_space<vmem>>, %arg11: memref<128x128xbf16, #tpu.memory_space<vmem>>, %arg12: memref<1x128xf32, #tpu.memory_space<vmem>>, %arg13: memref<128x128xf32, #tpu.memory_space<vmem>>) attributes {dimension_semantics = [#tpu.dimension_semantics<parallel>], iteration_bounds = array<i64: 1>, scalar_prefetch = 0 : i64, scratch_operands = 0 : i64, tpu.core_type = #tpu.core_type<tc>, window_params = [{transform_indices = @transform_0, window_bounds = array<i64: 128, 128>}, {transform_indices = @transform_1, window_bounds = array<i64: 128, 128>}, {pipeline_mode = #tpu.pipeline_mode<synchronous>, transform_indices = @transform_2, window_bounds = array<i64: 128, 1024>}, {pipeline_mode = #tpu.pipeline_mode<synchronous>, transform_indices = @transform_3, window_bounds = array<i64: 1, 1024>}, {pipeline_mode = #tpu.pipeline_mode<synchronous>, transform_indices = @transform_4, window_bounds = array<i64: 1024, 1024>}, {pipeline_mode = #tpu.pipeline_mode<synchronous>, transform_indices = @transform_5, window_bounds = array<i64: 1, 1024>}, {pipeline_mode = #tpu.pipeline_mode<synchronous>, transform_indices = @transform_6, window_bounds = array<i64: 1024, 128>}, {pipeline_mode = #tpu.pipeline_mode<synchronous>, transform_indices = @transform_7, window_bounds = array<i64: 1, 128>}, {pipeline_mode = #tpu.pipeline_mode<synchronous>, transform_indices = @transform_8, window_bounds = array<i64: 128, 128>}, {pipeline_mode = #tpu.pipeline_mode<synchronous>, transform_indices = @transform_9, window_bounds = array<i64: 1, 128>}, {pipeline_mode = #tpu.pipeline_mode<synchronous>, transform_indices = @transform_10, window_bounds = array<i64: 128, 128>}, {pipeline_mode = #tpu.pipeline_mode<synchronous>, transform_indices = @transform_11, window_bounds = array<i64: 1, 128>}, {transform_indices = @transform_12, window_bounds = array<i64: 128, 128>}]} {
    %c0 = arith.constant 0 : index
    %c0_0 = arith.constant 0 : index
    %0 = vector.load %arg1[%c0, %c0_0] : memref<128x128xi32, #tpu.memory_space<vmem>>, vector<128x128xi32>
    %1 = tpu.iota {dimensions = array<i32: 1>} : vector<128x128xi32>
    %c15_i32 = arith.constant 15 : i32
    %2 = vector.broadcast %c15_i32 : i32 to vector<128x128xi32>
    %3 = arith.andi %1, %2 : vector<128x128xi32>
    %4 = arith.cmpi eq, %0, %3 : vector<128x128xi32>
    %5 = arith.extui %4 : vector<128x128xi1> to vector<128x128xi32>
    %6 = arith.sitofp %5 : vector<128x128xi32> to vector<128x128xf32>
    %7 = arith.truncf %6 : vector<128x128xf32> to vector<128x128xbf16>
    %c0_1 = arith.constant 0 : index
    %c0_2 = arith.constant 0 : index
    %8 = vector.load %arg3[%c0_1, %c0_2] : memref<128x1024xbf16, #tpu.memory_space<vmem>>, vector<128x1024xbf16>
    %cst = arith.constant dense<0.000000e+00> : vector<128x1024xf32>
    %9 = tpu.matmul %7, %8, %cst {dimension_numbers = #tpu.dot_dimension_numbers<[1], [0], [0], [1], [0, 0, 1, 1], [], []>} : vector<128x128xbf16>, vector<128x1024xbf16>, vector<128x1024xf32> -> vector<128x1024xf32>
    %c0_3 = arith.constant 0 : index
    %c0_4 = arith.constant 0 : index
    %10 = vector.load %arg4[%c0_3, %c0_4] : memref<1x1024xf32, #tpu.memory_space<vmem>>, vector<1x1024xf32>
    %11 = vector.broadcast %10 : vector<1x1024xf32> to vector<128x1024xf32>
    %12 = arith.addf %9, %11 : vector<128x1024xf32>
    %cst_5 = arith.constant 0.000000e+00 : f32
    %13 = vector.broadcast %cst_5 : f32 to vector<128x1024xf32>
    %14 = arith.maximumf %12, %13 : vector<128x1024xf32>
    %15 = arith.truncf %14 : vector<128x1024xf32> to vector<128x1024xbf16>
    %c0_6 = arith.constant 0 : index
    %c0_7 = arith.constant 0 : index
    %16 = vector.load %arg5[%c0_6, %c0_7] : memref<1024x1024xbf16, #tpu.memory_space<vmem>>, vector<1024x1024xbf16>
    %cst_8 = arith.constant dense<0.000000e+00> : vector<128x1024xf32>
    %17 = tpu.matmul %15, %16, %cst_8 {dimension_numbers = #tpu.dot_dimension_numbers<[1], [0], [0], [1], [0, 0, 1, 1], [], []>} : vector<128x1024xbf16>, vector<1024x1024xbf16>, vector<128x1024xf32> -> vector<128x1024xf32>
    %c0_9 = arith.constant 0 : index
    %c0_10 = arith.constant 0 : index
    %18 = vector.load %arg6[%c0_9, %c0_10] : memref<1x1024xf32, #tpu.memory_space<vmem>>, vector<1x1024xf32>
    %19 = vector.broadcast %18 : vector<1x1024xf32> to vector<128x1024xf32>
    %20 = arith.addf %17, %19 : vector<128x1024xf32>
    %cst_11 = arith.constant 0.000000e+00 : f32
    %21 = vector.broadcast %cst_11 : f32 to vector<128x1024xf32>
    %22 = arith.maximumf %20, %21 : vector<128x1024xf32>
    %23 = arith.truncf %22 : vector<128x1024xf32> to vector<128x1024xbf16>
    %c0_12 = arith.constant 0 : index
    %c0_13 = arith.constant 0 : index
    %24 = vector.load %arg7[%c0_12, %c0_13] : memref<1024x128xbf16, #tpu.memory_space<vmem>>, vector<1024x128xbf16>
    %cst_14 = arith.constant dense<0.000000e+00> : vector<128x128xf32>
    %25 = tpu.matmul %23, %24, %cst_14 {dimension_numbers = #tpu.dot_dimension_numbers<[1], [0], [0], [1], [0, 0, 1, 1], [], []>} : vector<128x1024xbf16>, vector<1024x128xbf16>, vector<128x128xf32> -> vector<128x128xf32>
    %c0_15 = arith.constant 0 : index
    %c0_16 = arith.constant 0 : index
    %26 = vector.load %arg8[%c0_15, %c0_16] : memref<1x128xf32, #tpu.memory_space<vmem>>, vector<1x128xf32>
    %27 = vector.broadcast %26 : vector<1x128xf32> to vector<128x128xf32>
    %28 = arith.addf %25, %27 : vector<128x128xf32>
    %cst_17 = arith.constant 0.000000e+00 : f32
    %29 = vector.broadcast %cst_17 : f32 to vector<128x128xf32>
    %30 = arith.maximumf %28, %29 : vector<128x128xf32>
    %31 = arith.truncf %30 : vector<128x128xf32> to vector<128x128xbf16>
    %c0_18 = arith.constant 0 : index
    %c0_19 = arith.constant 0 : index
    %32 = vector.load %arg9[%c0_18, %c0_19] : memref<128x128xbf16, #tpu.memory_space<vmem>>, vector<128x128xbf16>
    %cst_20 = arith.constant dense<0.000000e+00> : vector<128x128xf32>
    %33 = tpu.matmul %31, %32, %cst_20 {dimension_numbers = #tpu.dot_dimension_numbers<[1], [0], [0], [1], [0, 0, 1, 1], [], []>} : vector<128x128xbf16>, vector<128x128xbf16>, vector<128x128xf32> -> vector<128x128xf32>
    %c0_21 = arith.constant 0 : index
    %c0_22 = arith.constant 0 : index
    %34 = vector.load %arg10[%c0_21, %c0_22] : memref<1x128xf32, #tpu.memory_space<vmem>>, vector<1x128xf32>
    %35 = vector.broadcast %34 : vector<1x128xf32> to vector<128x128xf32>
    %36 = arith.addf %33, %35 : vector<128x128xf32>
    %cst_23 = arith.constant 0.000000e+00 : f32
    %37 = vector.broadcast %cst_23 : f32 to vector<128x128xf32>
    %38 = arith.maximumf %36, %37 : vector<128x128xf32>
    %39 = arith.truncf %38 : vector<128x128xf32> to vector<128x128xbf16>
    %c0_24 = arith.constant 0 : index
    %c0_25 = arith.constant 0 : index
    %40 = vector.load %arg11[%c0_24, %c0_25] : memref<128x128xbf16, #tpu.memory_space<vmem>>, vector<128x128xbf16>
    %cst_26 = arith.constant dense<0.000000e+00> : vector<128x128xf32>
    %41 = tpu.matmul %39, %40, %cst_26 {dimension_numbers = #tpu.dot_dimension_numbers<[1], [0], [0], [1], [0, 0, 1, 1], [], []>} : vector<128x128xbf16>, vector<128x128xbf16>, vector<128x128xf32> -> vector<128x128xf32>
    %c0_27 = arith.constant 0 : index
    %c0_28 = arith.constant 0 : index
    %42 = vector.load %arg12[%c0_27, %c0_28] : memref<1x128xf32, #tpu.memory_space<vmem>>, vector<1x128xf32>
    %43 = vector.broadcast %42 : vector<1x128xf32> to vector<128x128xf32>
    %44 = arith.addf %41, %43 : vector<128x128xf32>
    %cst_29 = arith.constant 0.000000e+00 : f32
    %45 = vector.broadcast %cst_29 : f32 to vector<128x128xf32>
    %46 = arith.subf %45, %44 : vector<128x128xf32>
    %47 = math.exp %46 : vector<128x128xf32>
    %cst_30 = arith.constant 1.000000e+00 : f32
    %48 = vector.broadcast %cst_30 : f32 to vector<128x128xf32>
    %49 = arith.addf %48, %47 : vector<128x128xf32>
    %50 = tpu.reciprocal %49 {approx = true} : vector<128x128xf32> -> vector<128x128xf32>
    %c0_31 = arith.constant 0 : index
    %c0_32 = arith.constant 0 : index
    %51 = vector.load %arg2[%c0_31, %c0_32] : memref<128x128xi32, #tpu.memory_space<vmem>>, vector<128x128xi32>
    %c0_i32 = arith.constant 0 : i32
    %52 = vector.broadcast %c0_i32 : i32 to vector<128x128xi32>
    %53 = arith.cmpi eq, %51, %52 : vector<128x128xi32>
    %54 = arith.extui %53 : vector<128x128xi1> to vector<128x128xi32>
    %55 = arith.sitofp %54 : vector<128x128xi32> to vector<128x128xf32>
    %56 = arith.mulf %50, %55 : vector<128x128xf32>
    %57 = arith.addf %56, %55 : vector<128x128xf32>
    %c0_33 = arith.constant 0 : index
    %c0_34 = arith.constant 0 : index
    %58 = vector.load %arg13[%c0_33, %c0_34] : memref<128x128xf32, #tpu.memory_space<vmem>>, vector<128x128xf32>
    tpu.vector_store %arg13[%c0_33, %c0_34], %57 {strides = array<i32>} : memref<128x128xf32, #tpu.memory_space<vmem>>, vector<128x128xf32>,
    return
  }
  func.func @transform_0(%arg0: i32) -> (i32, i32) {
    %c0_i32 = arith.constant 0 : i32
    %c0_i32_0 = arith.constant 0 : i32
    return %arg0, %c0_i32 : i32, i32
  }
  func.func @transform_1(%arg0: i32) -> (i32, i32) {
    %c0_i32 = arith.constant 0 : i32
    %c0_i32_0 = arith.constant 0 : i32
    return %arg0, %c0_i32 : i32, i32
  }
  func.func @transform_2(%arg0: i32) -> (i32, i32) {
    %c0_i32 = arith.constant 0 : i32
    %c0_i32_0 = arith.constant 0 : i32
    %c0_i32_1 = arith.constant 0 : i32
    return %c0_i32, %c0_i32_0 : i32, i32
  }
  func.func @transform_3(%arg0: i32) -> (i32, i32) {
    %c0_i32 = arith.constant 0 : i32
    %c0_i32_0 = arith.constant 0 : i32
    %c0_i32_1 = arith.constant 0 : i32
    return %c0_i32, %c0_i32_0 : i32, i32
  }
  func.func @transform_4(%arg0: i32) -> (i32, i32) {
    %c0_i32 = arith.constant 0 : i32
    %c0_i32_0 = arith.constant 0 : i32
    %c0_i32_1 = arith.constant 0 : i32
    return %c0_i32, %c0_i32_0 : i32, i32
  }
  func.func @transform_5(%arg0: i32) -> (i32, i32) {
    %c0_i32 = arith.constant 0 : i32
    %c0_i32_0 = arith.constant 0 : i32
    %c0_i32_1 = arith.constant 0 : i32
    return %c0_i32, %c0_i32_0 : i32, i32
  }
  func.func @transform_6(%arg0: i32) -> (i32, i32) {
    %c0_i32 = arith.constant 0 : i32
    %c0_i32_0 = arith.constant 0 : i32
    %c0_i32_1 = arith.constant 0 : i32
    return %c0_i32, %c0_i32_0 : i32, i32
  }
  func.func @transform_7(%arg0: i32) -> (i32, i32) {
    %c0_i32 = arith.constant 0 : i32
    %c0_i32_0 = arith.constant 0 : i32
    %c0_i32_1 = arith.constant 0 : i32
    return %c0_i32, %c0_i32_0 : i32, i32
  }
  func.func @transform_8(%arg0: i32) -> (i32, i32) {
    %c0_i32 = arith.constant 0 : i32
    %c0_i32_0 = arith.constant 0 : i32
    %c0_i32_1 = arith.constant 0 : i32
    return %c0_i32, %c0_i32_0 : i32, i32
  }
  func.func @transform_9(%arg0: i32) -> (i32, i32) {
    %c0_i32 = arith.constant 0 : i32
    %c0_i32_0 = arith.constant 0 : i32
    %c0_i32_1 = arith.constant 0 : i32
    return %c0_i32, %c0_i32_0 : i32, i32
  }
  func.func @transform_10(%arg0: i32) -> (i32, i32) {
    %c0_i32 = arith.constant 0 : i32
    %c0_i32_0 = arith.constant 0 : i32
    %c0_i32_1 = arith.constant 0 : i32
    return %c0_i32, %c0_i32_0 : i32, i32
  }
  func.func @transform_11(%arg0: i32) -> (i32, i32) {
    %c0_i32 = arith.constant 0 : i32
    %c0_i32_0 = arith.constant 0 : i32
    %c0_i32_1 = arith.constant 0 : i32
    return %c0_i32, %c0_i32_0 : i32, i32
  }
  func.func @transform_12(%arg0: i32) -> (i32, i32) {
    %c0_i32 = arith.constant 0 : i32
    %c0_i32_0 = arith.constant 0 : i32
    return %arg0, %c0_i32 : i32, i32
  }
}

</mosaic_0001>

<llo_original>
// kernel: flipcard_forward_batch.1
$region0: #{flipcard_forward_batch.1}
  #allocation0 [shape = 'u32[]', space=smem, size = 0x4, offset = 0x4, fixed_abs, tag = 'smem constant byte address 0x4 - core index']
  #allocation1 [shape = 'u32[72,128]{1,0:T(1,128)}', space=vmem, size = 0x9000, scoped, tag = 'internal scratch']
  %s0 = inlined_call_operand.vmem [shape: s32[128,128], index: 0, kind: input, shape index: {}]
  %s1 = inlined_call_operand.vmem [shape: s32[128,128], index: 1, kind: input, shape index: {}]
  %s2 = inlined_call_operand.hbm [shape: bf16[128,1024], index: 2, kind: input, shape index: {}]
  %s3 = inlined_call_operand.hbm [shape: f32[1,1024], index: 3, kind: input, shape index: {}]
  %s4 = inlined_call_operand.hbm [shape: bf16[1024,1024], index: 4, kind: input, shape index: {}]
  %s5 = inlined_call_operand.hbm [shape: f32[1,1024], index: 5, kind: input, shape index: {}]
  %s6 = inlined_call_operand.hbm [shape: bf16[1024,128], index: 6, kind: input, shape index: {}]
  %s7 = inlined_call_operand.hbm [shape: f32[1,128], index: 7, kind: input, shape index: {}]
  %s8 = inlined_call_operand.hbm [shape: bf16[128,128], index: 8, kind: input, shape index: {}]
  %s9 = inlined_call_operand.hbm [shape: f32[1,128], index: 9, kind: input, shape index: {}]
  %s10 = inlined_call_operand.hbm [shape: bf16[128,128], index: 10, kind: input, shape index: {}]
  %s11 = inlined_call_operand.hbm [shape: f32[1,128], index: 11, kind: input, shape index: {}]
  %s12 = inlined_call_operand.vmem [shape: f32[128,128], index: 12, kind: output, shape index: {}]
  %s13 = sld [smem:[#allocation0]]
  $region98: #{flipcard_forward_batch.1} parent=0
    _
  %s15 = ssub.s32 1, %s13
  %s16 = scalar_select 0, %s15, %s13
  $region1: #{flipcard_forward_batch.1} parent=0
    #allocation2 [shape = 'u8[262144]{0}', space=vmem, size = 0x40000, scoped, tag = 'input window, operand 2, single buffered']
    #allocation3 [shape = 's32[1]{0}', space=sflag, size = 0x4, scoped, tag = 'scoped memory for flipcard_forward_batch.1']
    #allocation4 [shape = 'u8[4096]{0}', space=vmem, size = 0x1000, scoped, tag = 'input window, operand 3, single buffered']
    #allocation5 [shape = 's32[1]{0}', space=sflag, size = 0x4, scoped, tag = 'scoped memory for flipcard_forward_batch.1']
    #allocation6 [shape = 'u8[2097152]{0}', space=vmem, size = 0x200000, scoped, tag = 'input window, operand 4, single buffered']
    #allocation7 [shape = 'u8[4096]{0}', space=vmem, size = 0x1000, scoped, tag = 'input window, operand 5, single buffered']
    #allocation8 [shape = 's32[1]{0}', space=sflag, size = 0x4, scoped, tag = 'scoped memory for flipcard_forward_batch.1']
    #allocation9 [shape = 'u8[262144]{0}', space=vmem, size = 0x40000, scoped, tag = 'input window, operand 6, single buffered']
    #allocation10 [shape = 'u8[512]{0}', space=vmem, size = 0x400, scoped, tag = 'input window, operand 7, single buffered']
    #allocation11 [shape = 's32[1]{0}', space=sflag, size = 0x4, scoped, tag = 'scoped memory for flipcard_forward_batch.1']
    #allocation12 [shape = 'u8[32768]{0}', space=vmem, size = 0x8000, scoped, tag = 'input window, operand 8, single buffered']
    #allocation13 [shape = 'u8[512]{0}', space=vmem, size = 0x400, scoped, tag = 'input window, operand 9, single buffered']
    #allocation14 [shape = 's32[1]{0}', space=sflag, size = 0x4, scoped, tag = 'scoped memory for flipcard_forward_batch.1']
    #allocation15 [shape = 'u8[32768]{0}', space=vmem, size = 0x8000, scoped, tag = 'input window, operand 10, single buffered']
    #allocation16 [shape = 'u8[512]{0}', space=vmem, size = 0x400, scoped, tag = 'input window, operand 11, single buffered']
    #allocation17 [shape = 's32[1]{0}', space=sflag, size = 0x4, scoped, tag = 'scoped memory for flipcard_forward_batch.1']
    %17 = vsyncpa [#allocation3], 0
    %18 = vsyncpa [#allocation5], 0
    %19 = vsyncpa [#allocation8], 0
    %20 = vsyncpa [#allocation11], 0
    %21 = vsyncpa [#allocation14], 0
    %22 = vsyncpa [#allocation17], 0
    // Predicated region
    $region2: #{flipcard_forward_batch.1} parent=1 // pred_check
      _
    $region3: #{flipcard_forward_batch.1} parent=1 // pred_check_branch
      %24 = sbr.rel (0) target = $region5
    $region4: #{flipcard_forward_batch.1} parent=1 // pred_region
      _
    $region5: #{flipcard_forward_batch.1} parent=1 // pred_fallthru
      _
    // Predicated region
    $region6: #{flipcard_forward_batch.1} parent=1 // pred_check
      _
    $region7: #{flipcard_forward_batch.1} parent=1 // pred_check_branch
      %26 = sbr.rel (0) target = $region9
    $region8: #{flipcard_forward_batch.1} parent=1 // pred_region
      _
    $region9: #{flipcard_forward_batch.1} parent=1 // pred_fallthru
      _
    // Predicated region
    $region10: #{flipcard_forward_batch.1} parent=1 // pred_check
      _
    $region11: #{flipcard_forward_batch.1} parent=1 // pred_check_branch
      %28 = sbr.rel (0) target = $region13
    $region12: #{flipcard_forward_batch.1} parent=1 // pred_region
      %30 = vsyncadd [#allocation3], 0
      %s31 = sshll.u32 %s2, 4
      %s32 = int_to_ptr.hbm [resolvable:$true] %s31
      %s33 = sshll.u32 [#allocation2], 4
      %s34 = int_to_ptr.vmem [resolvable:$true] %s33
      %39 = dma.hbm_to_vmem [thread:$0]  %s32, 8192, %s34, [#allocation3], 512, 512, 32
    $region13: #{flipcard_forward_batch.1} parent=1 // pred_fallthru
      _
    // Predicated region
    $region14: #{flipcard_forward_batch.1} parent=1 // pred_check
      _
    $region15: #{flipcard_forward_batch.1} parent=1 // pred_check_branch
      %41 = sbr.rel (0) target = $region17
    $region16: #{flipcard_forward_batch.1} parent=1 // pred_region
      %43 = vsyncadd [#allocation5], 0
      %s45 = sshll.u32 %s3, 4
      %s46 = int_to_ptr.hbm [resolvable:$true] %s45
      %s47 = sshll.u32 [#allocation4], 4
      %s48 = int_to_ptr.vmem [resolvable:$true] %s47
      %50 = dma.hbm_to_vmem [thread:$0]  %s46, 128, %s48, [#allocation5]
    $region17: #{flipcard_forward_batch.1} parent=1 // pred_fallthru
      _
    // Predicated region
    $region18: #{flipcard_forward_batch.1} parent=1 // pred_check
      _
    $region19: #{flipcard_forward_batch.1} parent=1 // pred_check_branch
      %52 = sbr.rel (0) target = $region21
    $region20: #{flipcard_forward_batch.1} parent=1 // pred_region
      %54 = vsyncadd [#allocation5], 0
      %s55 = sshll.u32 %s4, 4
      %s56 = int_to_ptr.hbm [resolvable:$true] %s55
      %s57 = sshll.u32 [#allocation6], 4
      %s58 = int_to_ptr.vmem [resolvable:$true] %s57
      %63 = dma.hbm_to_vmem [thread:$0]  %s56, 65536, %s58, [#allocation5], 512, 512, 32
    $region21: #{flipcard_forward_batch.1} parent=1 // pred_fallthru
      _
    // Predicated region
    $region22: #{flipcard_forward_batch.1} parent=1 // pred_check
      _
    $region23: #{flipcard_forward_batch.1} parent=1 // pred_check_branch
      %65 = sbr.rel (0) target = $region25
    $region24: #{flipcard_forward_batch.1} parent=1 // pred_region
      %67 = vsyncadd [#allocation8], 0
      %s69 = sshll.u32 %s5, 4
      %s70 = int_to_ptr.hbm [resolvable:$true] %s69
      %s71 = sshll.u32 [#allocation7], 4
      %s72 = int_to_ptr.vmem [resolvable:$true] %s71
      %74 = dma.hbm_to_vmem [thread:$0]  %s70, 128, %s72, [#allocation8]
    $region25: #{flipcard_forward_batch.1} parent=1 // pred_fallthru
      _
    // Predicated region
    $region26: #{flipcard_forward_batch.1} parent=1 // pred_check
      _
    $region27: #{flipcard_forward_batch.1} parent=1 // pred_check_branch
      %76 = sbr.rel (0) target = $region29
    $region28: #{flipcard_forward_batch.1} parent=1 // pred_region
      %78 = vsyncadd [#allocation8], 0
      %s79 = sshll.u32 %s6, 4
      %s80 = int_to_ptr.hbm [resolvable:$true] %s79
      %s81 = sshll.u32 [#allocation9], 4
      %s82 = int_to_ptr.vmem [resolvable:$true] %s81
      %87 = dma.hbm_to_vmem [thread:$0]  %s80, 8192, %s82, [#allocation8], 64, 64, 4
    $region29: #{flipcard_forward_batch.1} parent=1 // pred_fallthru
      _
    // Predicated region
    $region30: #{flipcard_forward_batch.1} parent=1 // pred_check
      _
    $region31: #{flipcard_forward_batch.1} parent=1 // pred_check_branch
      %89 = sbr.rel (0) target = $region33
    $region32: #{flipcard_forward_batch.1} parent=1 // pred_region
      %91 = vsyncadd [#allocation11], 0
      %s93 = sshll.u32 %s7, 4
      %s94 = int_to_ptr.hbm [resolvable:$true] %s93
      %s95 = sshll.u32 [#allocation10], 4
      %s96 = int_to_ptr.vmem [resolvable:$true] %s95
      %98 = dma.hbm_to_vmem [thread:$0]  %s94, 16, %s96, [#allocation11]
    $region33: #{flipcard_forward_batch.1} parent=1 // pred_fallthru
      _
    // Predicated region
    $region34: #{flipcard_forward_batch.1} parent=1 // pred_check
      _
    $region35: #{flipcard_forward_batch.1} parent=1 // pred_check_branch
      %100 = sbr.rel (0) target = $region37
    $region36: #{flipcard_forward_batch.1} parent=1 // pred_region
      %102 = vsyncadd [#allocation11], 0
      %s103 = sshll.u32 %s8, 4
      %s104 = int_to_ptr.hbm [resolvable:$true] %s103
      %s105 = sshll.u32 [#allocation12], 4
      %s106 = int_to_ptr.vmem [resolvable:$true] %s105
      %111 = dma.hbm_to_vmem [thread:$0]  %s104, 1024, %s106, [#allocation11], 64, 64, 4
    $region37: #{flipcard_forward_batch.1} parent=1 // pred_fallthru
      _
    // Predicated region
    $region38: #{flipcard_forward_batch.1} parent=1 // pred_check
      _
    $region39: #{flipcard_forward_batch.1} parent=1 // pred_check_branch
      %113 = sbr.rel (0) target = $region41
    $region40: #{flipcard_forward_batch.1} parent=1 // pred_region
      %115 = vsyncadd [#allocation14], 0
      %s117 = sshll.u32 %s9, 4
      %s118 = int_to_ptr.hbm [resolvable:$true] %s117
      %s119 = sshll.u32 [#allocation13], 4
      %s120 = int_to_ptr.vmem [resolvable:$true] %s119
      %122 = dma.hbm_to_vmem [thread:$0]  %s118, 16, %s120, [#allocation14]
    $region41: #{flipcard_forward_batch.1} parent=1 // pred_fallthru
      _
    // Predicated region
    $region42: #{flipcard_forward_batch.1} parent=1 // pred_check
      _
    $region43: #{flipcard_forward_batch.1} parent=1 // pred_check_branch
      %124 = sbr.rel (0) target = $region45
    $region44: #{flipcard_forward_batch.1} parent=1 // pred_region
      %126 = vsyncadd [#allocation14], 0
      %s127 = sshll.u32 %s10, 4
      %s128 = int_to_ptr.hbm [resolvable:$true] %s127
      %s129 = sshll.u32 [#allocation15], 4
      %s130 = int_to_ptr.vmem [resolvable:$true] %s129
      %135 = dma.hbm_to_vmem [thread:$0]  %s128, 1024, %s130, [#allocation14], 64, 64, 4
    $region45: #{flipcard_forward_batch.1} parent=1 // pred_fallthru
      _
    // Predicated region
    $region46: #{flipcard_forward_batch.1} parent=1 // pred_check
      _
    $region47: #{flipcard_forward_batch.1} parent=1 // pred_check_branch
      %137 = sbr.rel (0) target = $region49
    $region48: #{flipcard_forward_batch.1} parent=1 // pred_region
      %139 = vsyncadd [#allocation17], 0
      %s141 = sshll.u32 %s11, 4
      %s142 = int_to_ptr.hbm [resolvable:$true] %s141
      %s143 = sshll.u32 [#allocation16], 4
      %s144 = int_to_ptr.vmem [resolvable:$true] %s143
      %146 = dma.hbm_to_vmem [thread:$0]  %s142, 16, %s144, [#allocation17]
    $region49: #{flipcard_forward_batch.1} parent=1 // pred_fallthru
      _
    // Predicated region
    $region50: #{flipcard_forward_batch.1} parent=1 // pred_check
      _
    $region51: #{flipcard_forward_batch.1} parent=1 // pred_check_branch
      %148 = sbr.rel (0) target = $region53
    $region52: #{flipcard_forward_batch.1} parent=1 // pred_region
      %150 = dma.done [#allocation3], 8192
    $region53: #{flipcard_forward_batch.1} parent=1 // pred_fallthru
      _
    // Predicated region
    $region54: #{flipcard_forward_batch.1} parent=1 // pred_check
      _
    $region55: #{flipcard_forward_batch.1} parent=1 // pred_check_branch
      %152 = sbr.rel (0) target = $region57
    $region56: #{flipcard_forward_batch.1} parent=1 // pred_region
      %154 = dma.done [#allocation5], 128
    $region57: #{flipcard_forward_batch.1} parent=1 // pred_fallthru
      _
    // Predicated region
    $region58: #{flipcard_forward_batch.1} parent=1 // pred_check
      _
    $region59: #{flipcard_forward_batch.1} parent=1 // pred_check_branch
      %156 = sbr.rel (0) target = $region61
    $region60: #{flipcard_forward_batch.1} parent=1 // pred_region
      %158 = dma.done [#allocation5], 65536
    $region61: #{flipcard_forward_batch.1} parent=1 // pred_fallthru
      _
    // Predicated region
    $region62: #{flipcard_forward_batch.1} parent=1 // pred_check
      _
    $region63: #{flipcard_forward_batch.1} parent=1 // pred_check_branch
      %160 = sbr.rel (0) target = $region65
    $region64: #{flipcard_forward_batch.1} parent=1 // pred_region
      %162 = dma.done [#allocation8], 128
    $region65: #{flipcard_forward_batch.1} parent=1 // pred_fallthru
      _
    // Predicated region
    $region66: #{flipcard_forward_batch.1} parent=1 // pred_check
      _
    $region67: #{flipcard_forward_batch.1} parent=1 // pred_check_branch
      %164 = sbr.rel (0) target = $region69
    $region68: #{flipcard_forward_batch.1} parent=1 // pred_region
      %166 = dma.done [#allocation8], 8192
    $region69: #{flipcard_forward_batch.1} parent=1 // pred_fallthru
      _
    // Predicated region
    $region70: #{flipcard_forward_batch.1} parent=1 // pred_check
      _
    $region71: #{flipcard_forward_batch.1} parent=1 // pred_check_branch
      %168 = sbr.rel (0) target = $region73
    $region72: #{flipcard_forward_batch.1} parent=1 // pred_region
      %170 = dma.done [#allocation11], 16
    $region73: #{flipcard_forward_batch.1} parent=1 // pred_fallthru
      _
    // Predicated region
    $region74: #{flipcard_forward_batch.1} parent=1 // pred_check
      _
    $region75: #{flipcard_forward_batch.1} parent=1 // pred_check_branch
      %172 = sbr.rel (0) target = $region77
    $region76: #{flipcard_forward_batch.1} parent=1 // pred_region
      %174 = dma.done [#allocation11], 1024
    $region77: #{flipcard_forward_batch.1} parent=1 // pred_fallthru
      _
    // Predicated region
    $region78: #{flipcard_forward_batch.1} parent=1 // pred_check
      _
    $region79: #{flipcard_forward_batch.1} parent=1 // pred_check_branch
      %176 = sbr.rel (0) target = $region81
    $region80: #{flipcard_forward_batch.1} parent=1 // pred_region
      %178 = dma.done [#allocation14], 16
    $region81: #{flipcard_forward_batch.1} parent=1 // pred_fallthru
      _
    // Predicated region
    $region82: #{flipcard_forward_batch.1} parent=1 // pred_check
      _
    $region83: #{flipcard_forward_batch.1} parent=1 // pred_check_branch
      %180 = sbr.rel (0) target = $region85
    $region84: #{flipcard_forward_batch.1} parent=1 // pred_region
      %182 = dma.done [#allocation14], 1024
    $region85: #{flipcard_forward_batch.1} parent=1 // pred_fallthru
      _
    // Predicated region
    $region86: #{flipcard_forward_batch.1} parent=1 // pred_check
      _
    $region87: #{flipcard_forward_batch.1} parent=1 // pred_check_branch
      %184 = sbr.rel (0) target = $region89
    $region88: #{flipcard_forward_batch.1} parent=1 // pred_region
      %186 = dma.done [#allocation17], 16
    $region89: #{flipcard_forward_batch.1} parent=1 // pred_fallthru
      _
    %v187 = vld [vmem:[%s0] sm:$0xff]
    %v188 = vld [vmem:[%s0 + $0x8] sm:$0xff]
    %v189 = vld [vmem:[%s0 + $0x10] sm:$0xff]
    %v190 = vld [vmem:[%s0 + $0x18] sm:$0xff]
    %v191 = vld [vmem:[%s0 + $0x20] sm:$0xff]
    %v192 = vld [vmem:[%s0 + $0x28] sm:$0xff]
    %v193 = vld [vmem:[%s0 + $0x30] sm:$0xff]
    %v194 = vld [vmem:[%s0 + $0x38] sm:$0xff]
    %v195 = vld [vmem:[%s0 + $0x40] sm:$0xff]
    %v196 = vld [vmem:[%s0 + $0x48] sm:$0xff]
    %v197 = vld [vmem:[%s0 + $0x50] sm:$0xff]
    %v198 = vld [vmem:[%s0 + $0x58] sm:$0xff]
    %v199 = vld [vmem:[%s0 + $0x60] sm:$0xff]
    %v200 = vld [vmem:[%s0 + $0x68] sm:$0xff]
    %v201 = vld [vmem:[%s0 + $0x70] sm:$0xff]
    %v202 = vld [vmem:[%s0 + $0x78] sm:$0xff]
    %v203 = vlaneseq
    %v204 = vand.u32 %v203, 127
    %v205 = vand.u32 %v204, 15
    %vm206 = vcmp.eq.s32.totalorder %v187, %v205
    %vm207 = vcmp.eq.s32.totalorder %v188, %v205
    %vm208 = vcmp.eq.s32.totalorder %v189, %v205
    %vm209 = vcmp.eq.s32.totalorder %v190, %v205
    %vm210 = vcmp.eq.s32.totalorder %v191, %v205
    %vm211 = vcmp.eq.s32.totalorder %v192, %v205
    %vm212 = vcmp.eq.s32.totalorder %v193, %v205
    %vm213 = vcmp.eq.s32.totalorder %v194, %v205
    %vm214 = vcmp.eq.s32.totalorder %v195, %v205
    %vm215 = vcmp.eq.s32.totalorder %v196, %v205
    %vm216 = vcmp.eq.s32.totalorder %v197, %v205
    %vm217 = vcmp.eq.s32.totalorder %v198, %v205
    %vm218 = vcmp.eq.s32.totalorder %v199, %v205
    %vm219 = vcmp.eq.s32.totalorder %v200, %v205
    %vm220 = vcmp.eq.s32.totalorder %v201, %v205
    %vm221 = vcmp.eq.s32.totalorder %v202, %v205
    %v222 = vsel %vm206, 1, 0
    %v223 = vsel %vm207, 1, 0
    %v224 = vsel %vm208, 1, 0
    %v225 = vsel %vm209, 1, 0
    %v226 = vsel %vm210, 1, 0
    %v227 = vsel %vm211, 1, 0
    %v228 = vsel %vm212, 1, 0
    %v229 = vsel %vm213, 1, 0
    %v230 = vsel %vm214, 1, 0
    %v231 = vsel %vm215, 1, 0
    %v232 = vsel %vm216, 1, 0
    %v233 = vsel %vm217, 1, 0
    %v234 = vsel %vm218, 1, 0
    %v235 = vsel %vm219, 1, 0
    %v236 = vsel %vm220, 1, 0
    %v237 = vsel %vm221, 1, 0
    %v238 = vcvt.s32.f32 %v222
    %v239 = vcvt.s32.f32 %v223
    %v240 = vcvt.s32.f32 %v224
    %v241 = vcvt.s32.f32 %v225
    %v242 = vcvt.s32.f32 %v226
    %v243 = vcvt.s32.f32 %v227
    %v244 = vcvt.s32.f32 %v228
    %v245 = vcvt.s32.f32 %v229
    %v246 = vcvt.s32.f32 %v230
    %v247 = vcvt.s32.f32 %v231
    %v248 = vcvt.s32.f32 %v232
    %v249 = vcvt.s32.f32 %v233
    %v250 = vcvt.s32.f32 %v234
    %v251 = vcvt.s32.f32 %v235
    %v252 = vcvt.s32.f32 %v236
    %v253 = vcvt.s32.f32 %v237
    %v254 = vpack.c.bf16 %v239, %v238
    %v255 = vpack.c.bf16 %v241, %v240
    %v256 = vpack.c.bf16 %v243, %v242
    %v257 = vpack.c.bf16 %v245, %v244
    %v258 = vpack.c.bf16 %v247, %v246
    %v259 = vpack.c.bf16 %v249, %v248
    %v260 = vpack.c.bf16 %v251, %v250
    %v261 = vpack.c.bf16 %v253, %v252
    %v262 = vld [vmem:[#allocation2] sm:$0xff]
    %v263 = vld [vmem:[#allocation2 + $0x8] sm:$0xff]
    %v264 = vld [vmem:[#allocation2 + $0x10] sm:$0xff]
    %v265 = vld [vmem:[#allocation2 + $0x18] sm:$0xff]
    %v266 = vld [vmem:[#allocation2 + $0x20] sm:$0xff]
    %v267 = vld [vmem:[#allocation2 + $0x28] sm:$0xff]
    %v268 = vld [vmem:[#allocation2 + $0x30] sm:$0xff]
    %v269 = vld [vmem:[#allocation2 + $0x38] sm:$0xff]
    %v270 = vld [vmem:[#allocation2 + $0x40] sm:$0xff]
    %v271 = vld [vmem:[#allocation2 + $0x48] sm:$0xff]
    %v272 = vld [vmem:[#allocation2 + $0x50] sm:$0xff]
    %v273 = vld [vmem:[#allocation2 + $0x58] sm:$0xff]
    %v274 = vld [vmem:[#allocation2 + $0x60] sm:$0xff]
    %v275 = vld [vmem:[#allocation2 + $0x68] sm:$0xff]
    %v276 = vld [vmem:[#allocation2 + $0x70] sm:$0xff]
    %v277 = vld [vmem:[#allocation2 + $0x78] sm:$0xff]
    %v278 = vld [vmem:[#allocation2 + $0x80] sm:$0xff]
    %v279 = vld [vmem:[#allocation2 + $0x88] sm:$0xff]
    %v280 = vld [vmem:[#allocation2 + $0x90] sm:$0xff]
    %v281 = vld [vmem:[#allocation2 + $0x98] sm:$0xff]
    %v282 = vld [vmem:[#allocation2 + $0xa0] sm:$0xff]
    %v283 = vld [vmem:[#allocation2 + $0xa8] sm:$0xff]
    %v284 = vld [vmem:[#allocation2 + $0xb0] sm:$0xff]
    %v285 = vld [vmem:[#allocation2 + $0xb8] sm:$0xff]
    %v286 = vld [vmem:[#allocation2 + $0xc0] sm:$0xff]
    %v287 = vld [vmem:[#allocation2 + $0xc8] sm:$0xff]
    %v288 = vld [vmem:[#allocation2 + $0xd0] sm:$0xff]
    %v289 = vld [vmem:[#allocation2 + $0xd8] sm:$0xff]
    %v290 = vld [vmem:[#allocation2 + $0xe0] sm:$0xff]
    %v291 = vld [vmem:[#allocation2 + $0xe8] sm:$0xff]
    %v292 = vld [vmem:[#allocation2 + $0xf0] sm:$0xff]
    %v293 = vld [vmem:[#allocation2 + $0xf8] sm:$0xff]
    %v294 = vld [vmem:[#allocation2 + $0x100] sm:$0xff]
    %v295 = vld [vmem:[#allocation2 + $0x108] sm:$0xff]
    %v296 = vld [vmem:[#allocation2 + $0x110] sm:$0xff]
    %v297 = vld [vmem:[#allocation2 + $0x118] sm:$0xff]
    %v298 = vld [vmem:[#allocation2 + $0x120] sm:$0xff]
    %v299 = vld [vmem:[#allocation2 + $0x128] sm:$0xff]
    %v300 = vld [vmem:[#allocation2 + $0x130] sm:$0xff]
    %v301 = vld [vmem:[#allocation2 + $0x138] sm:$0xff]
    %v302 = vld [vmem:[#allocation2 + $0x140] sm:$0xff]
    %v303 = vld [vmem:[#allocation2 + $0x148] sm:$0xff]
    %v304 = vld [vmem:[#allocation2 + $0x150] sm:$0xff]
    %v305 = vld [vmem:[#allocation2 + $0x158] sm:$0xff]
    %v306 = vld [vmem:[#allocation2 + $0x160] sm:$0xff]
    %v307 = vld [vmem:[#allocation2 + $0x168] sm:$0xff]
    %v308 = vld [vmem:[#allocation2 + $0x170] sm:$0xff]
    %v309 = vld [vmem:[#allocation2 + $0x178] sm:$0xff]
    %v310 = vld [vmem:[#allocation2 + $0x180] sm:$0xff]
    %v311 = vld [vmem:[#allocation2 + $0x188] sm:$0xff]
    %v312 = vld [vmem:[#allocation2 + $0x190] sm:$0xff]
    %v313 = vld [vmem:[#allocation2 + $0x198] sm:$0xff]
    %v314 = vld [vmem:[#allocation2 + $0x1a0] sm:$0xff]
    %v315 = vld [vmem:[#allocation2 + $0x1a8] sm:$0xff]
    %v316 = vld [vmem:[#allocation2 + $0x1b0] sm:$0xff]
    %v317 = vld [vmem:[#allocation2 + $0x1b8] sm:$0xff]
    %v318 = vld [vmem:[#allocation2 + $0x1c0] sm:$0xff]
    %v319 = vld [vmem:[#allocation2 + $0x1c8] sm:$0xff]
    %v320 = vld [vmem:[#allocation2 + $0x1d0] sm:$0xff]
    %v321 = vld [vmem:[#allocation2 + $0x1d8] sm:$0xff]
    %v322 = vld [vmem:[#allocation2 + $0x1e0] sm:$0xff]
    %v323 = vld [vmem:[#allocation2 + $0x1e8] sm:$0xff]
    %v324 = vld [vmem:[#allocation2 + $0x1f0] sm:$0xff]
    %v325 = vld [vmem:[#allocation2 + $0x1f8] sm:$0xff]
    %v326 = vld [vmem:[#allocation4] sm:$0xff]
    %v328 = vperm.slane %v326, 0
    %v329 = vperm.slane %v326, 1
    %v330 = vperm.slane %v326, 2
    %v331 = vperm.slane %v326, 3
    %v332 = vperm.slane %v326, 4
    %v333 = vperm.slane %v326, 5
    %v334 = vperm.slane %v326, 6
    %v335 = vperm.slane %v326, 7
    %v408 = vunpack.c.l.b16 %v262
    %v409 = vunpack.c.h.b16 %v262
    %v410 = vunpack.c.l.b16 %v263
    %v411 = vunpack.c.h.b16 %v263
    %v412 = vunpack.c.l.b16 %v264
    %v413 = vunpack.c.h.b16 %v264
    %v414 = vunpack.c.l.b16 %v265
    %v415 = vunpack.c.h.b16 %v265
    %v416 = vunpack.c.l.b16 %v266
    %v417 = vunpack.c.h.b16 %v266
    %v418 = vunpack.c.l.b16 %v267
    %v419 = vunpack.c.h.b16 %v267
    %v420 = vunpack.c.l.b16 %v268
    %v421 = vunpack.c.h.b16 %v268
    %v422 = vunpack.c.l.b16 %v269
    %v423 = vunpack.c.h.b16 %v269
    %v424 = vunpack.c.l.b16 %v270
    %v425 = vunpack.c.h.b16 %v270
    %v426 = vunpack.c.l.b16 %v271
    %v427 = vunpack.c.h.b16 %v271
    %v428 = vunpack.c.l.b16 %v272
    %v429 = vunpack.c.h.b16 %v272
    %v430 = vunpack.c.l.b16 %v273
    %v431 = vunpack.c.h.b16 %v273
    %v432 = vunpack.c.l.b16 %v274
    %v433 = vunpack.c.h.b16 %v274
    %v434 = vunpack.c.l.b16 %v275
    %v435 = vunpack.c.h.b16 %v275
    %v436 = vunpack.c.l.b16 %v276
    %v437 = vunpack.c.h.b16 %v276
    %v438 = vunpack.c.l.b16 %v277
    %v439 = vunpack.c.h.b16 %v277
    %v440 = vunpack.c.l.b16 %v278
    %v441 = vunpack.c.h.b16 %v278
    %v442 = vunpack.c.l.b16 %v279
    %v443 = vunpack.c.h.b16 %v279
    %v444 = vunpack.c.l.b16 %v280
    %v445 = vunpack.c.h.b16 %v280
    %v446 = vunpack.c.l.b16 %v281
    %v447 = vunpack.c.h.b16 %v281
    %v448 = vunpack.c.l.b16 %v282
    %v449 = vunpack.c.h.b16 %v282
    %v450 = vunpack.c.l.b16 %v283
    %v451 = vunpack.c.h.b16 %v283
    %v452 = vunpack.c.l.b16 %v284
    %v453 = vunpack.c.h.b16 %v284
    %v454 = vunpack.c.l.b16 %v285
    %v455 = vunpack.c.h.b16 %v285
    %v456 = vunpack.c.l.b16 %v286
    %v457 = vunpack.c.h.b16 %v286
    %v458 = vunpack.c.l.b16 %v287
    %v459 = vunpack.c.h.b16 %v287
    %v460 = vunpack.c.l.b16 %v288
    %v461 = vunpack.c.h.b16 %v288
    %v462 = vunpack.c.l.b16 %v289
    %v463 = vunpack.c.h.b16 %v289
    %v464 = vunpack.c.l.b16 %v290
    %v465 = vunpack.c.h.b16 %v290
    %v466 = vunpack.c.l.b16 %v291
    %v467 = vunpack.c.h.b16 %v291
    %v468 = vunpack.c.l.b16 %v292
    %v469 = vunpack.c.h.b16 %v292
    %v470 = vunpack.c.l.b16 %v293
    %v471 = vunpack.c.h.b16 %v293
    %v472 = vunpack.c.l.b16 %v294
    %v473 = vunpack.c.h.b16 %v294
    %v474 = vunpack.c.l.b16 %v295
    %v475 = vunpack.c.h.b16 %v295
    %v476 = vunpack.c.l.b16 %v296
    %v477 = vunpack.c.h.b16 %v296
    %v478 = vunpack.c.l.b16 %v297
    %v479 = vunpack.c.h.b16 %v297
    %v480 = vunpack.c.l.b16 %v298
    %v481 = vunpack.c.h.b16 %v298
    %v482 = vunpack.c.l.b16 %v299
    %v483 = vunpack.c.h.b16 %v299
    %v484 = vunpack.c.l.b16 %v300
    %v485 = vunpack.c.h.b16 %v300
    %v486 = vunpack.c.l.b16 %v301
    %v487 = vunpack.c.h.b16 %v301
    %v488 = vunpack.c.l.b16 %v302
    %v489 = vunpack.c.h.b16 %v302
    %v490 = vunpack.c.l.b16 %v303
    %v491 = vunpack.c.h.b16 %v303
    %v492 = vunpack.c.l.b16 %v304
    %v493 = vunpack.c.h.b16 %v304
    %v494 = vunpack.c.l.b16 %v305
    %v495 = vunpack.c.h.b16 %v305
    %v496 = vunpack.c.l.b16 %v306
    %v497 = vunpack.c.h.b16 %v306
    %v498 = vunpack.c.l.b16 %v307
    %v499 = vunpack.c.h.b16 %v307
    %v500 = vunpack.c.l.b16 %v308
    %v501 = vunpack.c.h.b16 %v308
    %v502 = vunpack.c.l.b16 %v309
    %v503 = vunpack.c.h.b16 %v309
    %v504 = vunpack.c.l.b16 %v310
    %v505 = vunpack.c.h.b16 %v310
    %v506 = vunpack.c.l.b16 %v311
    %v507 = vunpack.c.h.b16 %v311
    %v508 = vunpack.c.l.b16 %v312
    %v509 = vunpack.c.h.b16 %v312
    %v510 = vunpack.c.l.b16 %v313
    %v511 = vunpack.c.h.b16 %v313
    %v512 = vunpack.c.l.b16 %v314
    %v513 = vunpack.c.h.b16 %v314
    %v514 = vunpack.c.l.b16 %v315
    %v515 = vunpack.c.h.b16 %v315
    %v516 = vunpack.c.l.b16 %v316
    %v517 = vunpack.c.h.b16 %v316
    %v518 = vunpack.c.l.b16 %v317
    %v519 = vunpack.c.h.b16 %v317
    %v520 = vunpack.c.l.b16 %v318
    %v521 = vunpack.c.h.b16 %v318
    %v522 = vunpack.c.l.b16 %v319
    %v523 = vunpack.c.h.b16 %v319
    %v524 = vunpack.c.l.b16 %v320
    %v525 = vunpack.c.h.b16 %v320
    %v526 = vunpack.c.l.b16 %v321
    %v527 = vunpack.c.h.b16 %v321
    %v528 = vunpack.c.l.b16 %v322
    %v529 = vunpack.c.h.b16 %v322
    %v530 = vunpack.c.l.b16 %v323
    %v531 = vunpack.c.h.b16 %v323
    %v532 = vunpack.c.l.b16 %v324
    %v533 = vunpack.c.h.b16 %v324
    %v534 = vunpack.c.l.b16 %v325
    %v535 = vunpack.c.h.b16 %v325
    %v536 = vpack.c.b16 %v416, %v408
    %v537 = vpack.c.b16 %v417, %v409
    %v538 = vpack.c.b16 %v418, %v410
    %v539 = vpack.c.b16 %v419, %v411
    %v540 = vpack.c.b16 %v420, %v412
    %v541 = vpack.c.b16 %v421, %v413
    %v542 = vpack.c.b16 %v422, %v414
    %v543 = vpack.c.b16 %v423, %v415
    %v544 = vpack.c.b16 %v432, %v424
    %v545 = vpack.c.b16 %v433, %v425
    %v546 = vpack.c.b16 %v434, %v426
    %v547 = vpack.c.b16 %v435, %v427
    %v548 = vpack.c.b16 %v436, %v428
    %v549 = vpack.c.b16 %v437, %v429
    %v550 = vpack.c.b16 %v438, %v430
    %v551 = vpack.c.b16 %v439, %v431
    %v552 = vpack.c.b16 %v448, %v440
    %v553 = vpack.c.b16 %v449, %v441
    %v554 = vpack.c.b16 %v450, %v442
    %v555 = vpack.c.b16 %v451, %v443
    %v556 = vpack.c.b16 %v452, %v444
    %v557 = vpack.c.b16 %v453, %v445
    %v558 = vpack.c.b16 %v454, %v446
    %v559 = vpack.c.b16 %v455, %v447
    %v560 = vpack.c.b16 %v464, %v456
    %v561 = vpack.c.b16 %v465, %v457
    %v562 = vpack.c.b16 %v466, %v458
    %v563 = vpack.c.b16 %v467, %v459
    %v564 = vpack.c.b16 %v468, %v460
    %v565 = vpack.c.b16 %v469, %v461
    %v566 = vpack.c.b16 %v470, %v462
    %v567 = vpack.c.b16 %v471, %v463
    %v568 = vpack.c.b16 %v480, %v472
    %v569 = vpack.c.b16 %v481, %v473
    %v570 = vpack.c.b16 %v482, %v474
    %v571 = vpack.c.b16 %v483, %v475
    %v572 = vpack.c.b16 %v484, %v476
    %v573 = vpack.c.b16 %v485, %v477
    %v574 = vpack.c.b16 %v486, %v478
    %v575 = vpack.c.b16 %v487, %v479
    %v576 = vpack.c.b16 %v496, %v488
    %v577 = vpack.c.b16 %v497, %v489
    %v578 = vpack.c.b16 %v498, %v490
    %v579 = vpack.c.b16 %v499, %v491
    %v580 = vpack.c.b16 %v500, %v492
    %v581 = vpack.c.b16 %v501, %v493
    %v582 = vpack.c.b16 %v502, %v494
    %v583 = vpack.c.b16 %v503, %v495
    %v584 = vpack.c.b16 %v512, %v504
    %v585 = vpack.c.b16 %v513, %v505
    %v586 = vpack.c.b16 %v514, %v506
    %v587 = vpack.c.b16 %v515, %v507
    %v588 = vpack.c.b16 %v516, %v508
    %v589 = vpack.c.b16 %v517, %v509
    %v590 = vpack.c.b16 %v518, %v510
    %v591 = vpack.c.b16 %v519, %v511
    %v592 = vpack.c.b16 %v528, %v520
    %v593 = vpack.c.b16 %v529, %v521
    %v594 = vpack.c.b16 %v530, %v522
    %v595 = vpack.c.b16 %v531, %v523
    %v596 = vpack.c.b16 %v532, %v524
    %v597 = vpack.c.b16 %v533, %v525
    %v598 = vpack.c.b16 %v534, %v526
    %v599 = vpack.c.b16 %v535, %v527
    %664 = vmatpush.bf16.msra.mxu0 %v592
    %665 = vmatpush.bf16.msra.mxu0 %v584
    %666 = vmatpush.bf16.msra.mxu0 %v576
    %667 = vmatpush.bf16.msra.mxu0 %v568
    %668 = vmatpush.bf16.msra.mxu0 %v560
    %669 = vmatpush.bf16.msra.mxu0 %v552
    %670 = vmatpush.bf16.msra.mxu0 %v544
    %671 = vmatpush.bf16.msra.mxu0 %v536
    %672 = vmatmul.bf16.gmra.mxu0 %v254
    %v673 = vpop.f32.mrf.mxu0
    %v674 = vadd.f32 %v328, %v673
    %v675 = vpop.f32.mrf.mxu0
    %v676 = vadd.f32 %v328, %v675
    %677 = vmatmul.bf16.gmra.mxu0 %v255
    %v678 = vpop.f32.mrf.mxu0
    %v679 = vadd.f32 %v328, %v678
    %v680 = vpop.f32.mrf.mxu0
    %v681 = vadd.f32 %v328, %v680
    %682 = vmatmul.bf16.gmra.mxu0 %v256
    %v683 = vpop.f32.mrf.mxu0
    %v684 = vadd.f32 %v328, %v683
    %v685 = vpop.f32.mrf.mxu0
    %v686 = vadd.f32 %v328, %v685
    %687 = vmatmul.bf16.gmra.mxu0 %v257
    %v688 = vpop.f32.mrf.mxu0
    %v689 = vadd.f32 %v328, %v688
    %v690 = vpop.f32.mrf.mxu0
    %v691 = vadd.f32 %v328, %v690
    %692 = vmatmul.bf16.gmra.mxu0 %v258
    %v693 = vpop.f32.mrf.mxu0
    %v694 = vadd.f32 %v328, %v693
    %v695 = vpop.f32.mrf.mxu0
    %v696 = vadd.f32 %v328, %v695
    %697 = vmatmul.bf16.gmra.mxu0 %v259
    %v698 = vpop.f32.mrf.mxu0
    %v699 = vadd.f32 %v328, %v698
    %v700 = vpop.f32.mrf.mxu0
    %v701 = vadd.f32 %v328, %v700
    %702 = vmatmul.bf16.gmra.mxu0 %v260
    %v703 = vpop.f32.mrf.mxu0
    %v704 = vadd.f32 %v328, %v703
    %v705 = vpop.f32.mrf.mxu0
    %v706 = vadd.f32 %v328, %v705
    %707 = vmatmul.bf16.gmra.mxu0 %v261
    %v708 = vpop.f32.mrf.mxu0
    %v709 = vadd.f32 %v328, %v708
    %v710 = vpop.f32.mrf.mxu0
    %v711 = vadd.f32 %v328, %v710
    %712 = vdwg.mxu0
    %713 = vmatpush.bf16.msra.mxu0 %v593
    %714 = vmatpush.bf16.msra.mxu0 %v585
    %715 = vmatpush.bf16.msra.mxu0 %v577
    %716 = vmatpush.bf16.msra.mxu0 %v569
    %717 = vmatpush.bf16.msra.mxu0 %v561
    %718 = vmatpush.bf16.msra.mxu0 %v553
    %719 = vmatpush.bf16.msra.mxu0 %v545
    %720 = vmatpush.bf16.msra.mxu0 %v537
    %721 = vmatmul.bf16.gmra.mxu0 %v254
    %v722 = vpop.f32.mrf.mxu0
    %v723 = vadd.f32 %v329, %v722
    %v724 = vpop.f32.mrf.mxu0
    %v725 = vadd.f32 %v329, %v724
    %726 = vmatmul.bf16.gmra.mxu0 %v255
    %v727 = vpop.f32.mrf.mxu0
    %v728 = vadd.f32 %v329, %v727
    %v729 = vpop.f32.mrf.mxu0
    %v730 = vadd.f32 %v329, %v729
    %731 = vmatmul.bf16.gmra.mxu0 %v256
    %v732 = vpop.f32.mrf.mxu0
    %v733 = vadd.f32 %v329, %v732
    %v734 = vpop.f32.mrf.mxu0
    %v735 = vadd.f32 %v329, %v734
    %736 = vmatmul.bf16.gmra.mxu0 %v257
    %v737 = vpop.f32.mrf.mxu0
    %v738 = vadd.f32 %v329, %v737
    %v739 = vpop.f32.mrf.mxu0
    %v740 = vadd.f32 %v329, %v739
    %741 = vmatmul.bf16.gmra.mxu0 %v258
    %v742 = vpop.f32.mrf.mxu0
    %v743 = vadd.f32 %v329, %v742
    %v744 = vpop.f32.mrf.mxu0
    %v745 = vadd.f32 %v329, %v744
    %746 = vmatmul.bf16.gmra.mxu0 %v259
    %v747 = vpop.f32.mrf.mxu0
    %v748 = vadd.f32 %v329, %v747
    %v749 = vpop.f32.mrf.mxu0
    %v750 = vadd.f32 %v329, %v749
    %751 = vmatmul.bf16.gmra.mxu0 %v260
    %v752 = vpop.f32.mrf.mxu0
    %v753 = vadd.f32 %v329, %v752
    %v754 = vpop.f32.mrf.mxu0
    %v755 = vadd.f32 %v329, %v754
    %756 = vmatmul.bf16.gmra.mxu0 %v261
    %v757 = vpop.f32.mrf.mxu0
    %v758 = vadd.f32 %v329, %v757
    %v759 = vpop.f32.mrf.mxu0
    %v760 = vadd.f32 %v329, %v759
    %761 = vdwg.mxu0
    %762 = vmatpush.bf16.msra.mxu0 %v594
    %763 = vmatpush.bf16.msra.mxu0 %v586
    %764 = vmatpush.bf16.msra.mxu0 %v578
    %765 = vmatpush.bf16.msra.mxu0 %v570
    %766 = vmatpush.bf16.msra.mxu0 %v562
    %767 = vmatpush.bf16.msra.mxu0 %v554
    %768 = vmatpush.bf16.msra.mxu0 %v546
    %769 = vmatpush.bf16.msra.mxu0 %v538
    %770 = vmatmul.bf16.gmra.mxu0 %v254
    %v771 = vpop.f32.mrf.mxu0
    %v772 = vadd.f32 %v330, %v771
    %v773 = vpop.f32.mrf.mxu0
    %v774 = vadd.f32 %v330, %v773
    %775 = vmatmul.bf16.gmra.mxu0 %v255
    %v776 = vpop.f32.mrf.mxu0
    %v777 = vadd.f32 %v330, %v776
    %v778 = vpop.f32.mrf.mxu0
    %v779 = vadd.f32 %v330, %v778
    %780 = vmatmul.bf16.gmra.mxu0 %v256
    %v781 = vpop.f32.mrf.mxu0
    %v782 = vadd.f32 %v330, %v781
    %v783 = vpop.f32.mrf.mxu0
    %v784 = vadd.f32 %v330, %v783
    %785 = vmatmul.bf16.gmra.mxu0 %v257
    %v786 = vpop.f32.mrf.mxu0
    %v787 = vadd.f32 %v330, %v786
    %v788 = vpop.f32.mrf.mxu0
    %v789 = vadd.f32 %v330, %v788
    %790 = vmatmul.bf16.gmra.mxu0 %v258
    %v791 = vpop.f32.mrf.mxu0
    %v792 = vadd.f32 %v330, %v791
    %v793 = vpop.f32.mrf.mxu0
    %v794 = vadd.f32 %v330, %v793
    %795 = vmatmul.bf16.gmra.mxu0 %v259
    %v796 = vpop.f32.mrf.mxu0
    %v797 = vadd.f32 %v330, %v796
    %v798 = vpop.f32.mrf.mxu0
    %v799 = vadd.f32 %v330, %v798
    %800 = vmatmul.bf16.gmra.mxu0 %v260
    %v801 = vpop.f32.mrf.mxu0
    %v802 = vadd.f32 %v330, %v801
    %v803 = vpop.f32.mrf.mxu0
    %v804 = vadd.f32 %v330, %v803
    %805 = vmatmul.bf16.gmra.mxu0 %v261
    %v806 = vpop.f32.mrf.mxu0
    %v807 = vadd.f32 %v330, %v806
    %v808 = vpop.f32.mrf.mxu0
    %v809 = vadd.f32 %v330, %v808
    %810 = vdwg.mxu0
    %811 = vmatpush.bf16.msra.mxu0 %v595
    %812 = vmatpush.bf16.msra.mxu0 %v587
    %813 = vmatpush.bf16.msra.mxu0 %v579
    %814 = vmatpush.bf16.msra.mxu0 %v571
    %815 = vmatpush.bf16.msra.mxu0 %v563
    %816 = vmatpush.bf16.msra.mxu0 %v555
    %817 = vmatpush.bf16.msra.mxu0 %v547
    %818 = vmatpush.bf16.msra.mxu0 %v539
    %819 = vmatmul.bf16.gmra.mxu0 %v254
    %v820 = vpop.f32.mrf.mxu0
    %v821 = vadd.f32 %v331, %v820
    %v822 = vpop.f32.mrf.mxu0
    %v823 = vadd.f32 %v331, %v822
    %824 = vmatmul.bf16.gmra.mxu0 %v255
    %v825 = vpop.f32.mrf.mxu0
    %v826 = vadd.f32 %v331, %v825
    %v827 = vpop.f32.mrf.mxu0
    %v828 = vadd.f32 %v331, %v827
    %829 = vmatmul.bf16.gmra.mxu0 %v256
    %v830 = vpop.f32.mrf.mxu0
    %v831 = vadd.f32 %v331, %v830
    %v832 = vpop.f32.mrf.mxu0
    %v833 = vadd.f32 %v331, %v832
    %834 = vmatmul.bf16.gmra.mxu0 %v257
    %v835 = vpop.f32.mrf.mxu0
    %v836 = vadd.f32 %v331, %v835
    %v837 = vpop.f32.mrf.mxu0
    %v838 = vadd.f32 %v331, %v837
    %839 = vmatmul.bf16.gmra.mxu0 %v258
    %v840 = vpop.f32.mrf.mxu0
    %v841 = vadd.f32 %v331, %v840
    %v842 = vpop.f32.mrf.mxu0
    %v843 = vadd.f32 %v331, %v842
    %844 = vmatmul.bf16.gmra.mxu0 %v259
    %v845 = vpop.f32.mrf.mxu0
    %v846 = vadd.f32 %v331, %v845
    %v847 = vpop.f32.mrf.mxu0
    %v848 = vadd.f32 %v331, %v847
    %849 = vmatmul.bf16.gmra.mxu0 %v260
    %v850 = vpop.f32.mrf.mxu0
    %v851 = vadd.f32 %v331, %v850
    %v852 = vpop.f32.mrf.mxu0
    %v853 = vadd.f32 %v331, %v852
    %854 = vmatmul.bf16.gmra.mxu0 %v261
    %v855 = vpop.f32.mrf.mxu0
    %v856 = vadd.f32 %v331, %v855
    %v857 = vpop.f32.mrf.mxu0
    %v858 = vadd.f32 %v331, %v857
    %859 = vdwg.mxu0
    %860 = vmatpush.bf16.msra.mxu0 %v596
    %861 = vmatpush.bf16.msra.mxu0 %v588
    %862 = vmatpush.bf16.msra.mxu0 %v580
    %863 = vmatpush.bf16.msra.mxu0 %v572
    %864 = vmatpush.bf16.msra.mxu0 %v564
    %865 = vmatpush.bf16.msra.mxu0 %v556
    %866 = vmatpush.bf16.msra.mxu0 %v548
    %867 = vmatpush.bf16.msra.mxu0 %v540
    %868 = vmatmul.bf16.gmra.mxu0 %v254
    %v869 = vpop.f32.mrf.mxu0
    %v870 = vadd.f32 %v332, %v869
    %v871 = vpop.f32.mrf.mxu0
    %v872 = vadd.f32 %v332, %v871
    %873 = vmatmul.bf16.gmra.mxu0 %v255
    %v874 = vpop.f32.mrf.mxu0
    %v875 = vadd.f32 %v332, %v874
    %v876 = vpop.f32.mrf.mxu0
    %v877 = vadd.f32 %v332, %v876
    %878 = vmatmul.bf16.gmra.mxu0 %v256
    %v879 = vpop.f32.mrf.mxu0
    %v880 = vadd.f32 %v332, %v879
    %v881 = vpop.f32.mrf.mxu0
    %v882 = vadd.f32 %v332, %v881
    %883 = vmatmul.bf16.gmra.mxu0 %v257
    %v884 = vpop.f32.mrf.mxu0
    %v885 = vadd.f32 %v332, %v884
    %v886 = vpop.f32.mrf.mxu0
    %v887 = vadd.f32 %v332, %v886
    %888 = vmatmul.bf16.gmra.mxu0 %v258
    %v889 = vpop.f32.mrf.mxu0
    %v890 = vadd.f32 %v332, %v889
    %v891 = vpop.f32.mrf.mxu0
    %v892 = vadd.f32 %v332, %v891
    %893 = vmatmul.bf16.gmra.mxu0 %v259
    %v894 = vpop.f32.mrf.mxu0
    %v895 = vadd.f32 %v332, %v894
    %v896 = vpop.f32.mrf.mxu0
    %v897 = vadd.f32 %v332, %v896
    %898 = vmatmul.bf16.gmra.mxu0 %v260
    %v899 = vpop.f32.mrf.mxu0
    %v900 = vadd.f32 %v332, %v899
    %v901 = vpop.f32.mrf.mxu0
    %v902 = vadd.f32 %v332, %v901
    %903 = vmatmul.bf16.gmra.mxu0 %v261
    %v904 = vpop.f32.mrf.mxu0
    %v905 = vadd.f32 %v332, %v904
    %v906 = vpop.f32.mrf.mxu0
    %v907 = vadd.f32 %v332, %v906
    %908 = vdwg.mxu0
    %909 = vmatpush.bf16.msra.mxu0 %v597
    %910 = vmatpush.bf16.msra.mxu0 %v589
    %911 = vmatpush.bf16.msra.mxu0 %v581
    %912 = vmatpush.bf16.msra.mxu0 %v573
    %913 = vmatpush.bf16.msra.mxu0 %v565
    %914 = vmatpush.bf16.msra.mxu0 %v557
    %915 = vmatpush.bf16.msra.mxu0 %v549
    %916 = vmatpush.bf16.msra.mxu0 %v541
    %917 = vmatmul.bf16.gmra.mxu0 %v254
    %v918 = vpop.f32.mrf.mxu0
    %v919 = vadd.f32 %v333, %v918
    %v920 = vpop.f32.mrf.mxu0
    %v921 = vadd.f32 %v333, %v920
    %922 = vmatmul.bf16.gmra.mxu0 %v255
    %v923 = vpop.f32.mrf.mxu0
    %v924 = vadd.f32 %v333, %v923
    %v925 = vpop.f32.mrf.mxu0
    %v926 = vadd.f32 %v333, %v925
    %927 = vmatmul.bf16.gmra.mxu0 %v256
    %v928 = vpop.f32.mrf.mxu0
    %v929 = vadd.f32 %v333, %v928
    %v930 = vpop.f32.mrf.mxu0
    %v931 = vadd.f32 %v333, %v930
    %932 = vmatmul.bf16.gmra.mxu0 %v257
    %v933 = vpop.f32.mrf.mxu0
    %v934 = vadd.f32 %v333, %v933
    %v935 = vpop.f32.mrf.mxu0
    %v936 = vadd.f32 %v333, %v935
    %937 = vmatmul.bf16.gmra.mxu0 %v258
    %v938 = vpop.f32.mrf.mxu0
    %v939 = vadd.f32 %v333, %v938
    %v940 = vpop.f32.mrf.mxu0
    %v941 = vadd.f32 %v333, %v940
    %942 = vmatmul.bf16.gmra.mxu0 %v259
    %v943 = vpop.f32.mrf.mxu0
    %v944 = vadd.f32 %v333, %v943
    %v945 = vpop.f32.mrf.mxu0
    %v946 = vadd.f32 %v333, %v945
    %947 = vmatmul.bf16.gmra.mxu0 %v260
    %v948 = vpop.f32.mrf.mxu0
    %v949 = vadd.f32 %v333, %v948
    %v950 = vpop.f32.mrf.mxu0
    %v951 = vadd.f32 %v333, %v950
    %952 = vmatmul.bf16.gmra.mxu0 %v261
    %v953 = vpop.f32.mrf.mxu0
    %v954 = vadd.f32 %v333, %v953
    %v955 = vpop.f32.mrf.mxu0
    %v956 = vadd.f32 %v333, %v955
    %957 = vdwg.mxu0
    %958 = vmatpush.bf16.msra.mxu0 %v598
    %959 = vmatpush.bf16.msra.mxu0 %v590
    %960 = vmatpush.bf16.msra.mxu0 %v582
    %961 = vmatpush.bf16.msra.mxu0 %v574
    %962 = vmatpush.bf16.msra.mxu0 %v566
    %963 = vmatpush.bf16.msra.mxu0 %v558
    %964 = vmatpush.bf16.msra.mxu0 %v550
    %965 = vmatpush.bf16.msra.mxu0 %v542
    %966 = vmatmul.bf16.gmra.mxu0 %v254
    %v967 = vpop.f32.mrf.mxu0
    %v968 = vadd.f32 %v334, %v967
    %v969 = vpop.f32.mrf.mxu0
    %v970 = vadd.f32 %v334, %v969
    %971 = vmatmul.bf16.gmra.mxu0 %v255
    %v972 = vpop.f32.mrf.mxu0
    %v973 = vadd.f32 %v334, %v972
    %v974 = vpop.f32.mrf.mxu0
    %v975 = vadd.f32 %v334, %v974
    %976 = vmatmul.bf16.gmra.mxu0 %v256
    %v977 = vpop.f32.mrf.mxu0
    %v978 = vadd.f32 %v334, %v977
    %v979 = vpop.f32.mrf.mxu0
    %v980 = vadd.f32 %v334, %v979
    %981 = vmatmul.bf16.gmra.mxu0 %v257
    %v982 = vpop.f32.mrf.mxu0
    %v983 = vadd.f32 %v334, %v982
    %v984 = vpop.f32.mrf.mxu0
    %v985 = vadd.f32 %v334, %v984
    %986 = vmatmul.bf16.gmra.mxu0 %v258
    %v987 = vpop.f32.mrf.mxu0
    %v988 = vadd.f32 %v334, %v987
    %v989 = vpop.f32.mrf.mxu0
    %v990 = vadd.f32 %v334, %v989
    %991 = vmatmul.bf16.gmra.mxu0 %v259
    %v992 = vpop.f32.mrf.mxu0
    %v993 = vadd.f32 %v334, %v992
    %v994 = vpop.f32.mrf.mxu0
    %v995 = vadd.f32 %v334, %v994
    %996 = vmatmul.bf16.gmra.mxu0 %v260
    %v997 = vpop.f32.mrf.mxu0
    %v998 = vadd.f32 %v334, %v997
    %v999 = vpop.f32.mrf.mxu0
    %v1000 = vadd.f32 %v334, %v999
    %1001 = vmatmul.bf16.gmra.mxu0 %v261
    %v1002 = vpop.f32.mrf.mxu0
    %v1003 = vadd.f32 %v334, %v1002
    %v1004 = vpop.f32.mrf.mxu0
    %v1005 = vadd.f32 %v334, %v1004
    %1006 = vdwg.mxu0
    %1007 = vmatpush.bf16.msra.mxu0 %v599
    %1008 = vmatpush.bf16.msra.mxu0 %v591
    %1009 = vmatpush.bf16.msra.mxu0 %v583
    %1010 = vmatpush.bf16.msra.mxu0 %v575
    %1011 = vmatpush.bf16.msra.mxu0 %v567
    %1012 = vmatpush.bf16.msra.mxu0 %v559
    %1013 = vmatpush.bf16.msra.mxu0 %v551
    %1014 = vmatpush.bf16.msra.mxu0 %v543
    %1015 = vmatmul.bf16.gmra.mxu0 %v254
    %v1016 = vpop.f32.mrf.mxu0
    %v1017 = vadd.f32 %v335, %v1016
    %v1018 = vpop.f32.mrf.mxu0
    %v1019 = vadd.f32 %v335, %v1018
    %1020 = vmatmul.bf16.gmra.mxu0 %v255
    %v1021 = vpop.f32.mrf.mxu0
    %v1022 = vadd.f32 %v335, %v1021
    %v1023 = vpop.f32.mrf.mxu0
    %v1024 = vadd.f32 %v335, %v1023
    %1025 = vmatmul.bf16.gmra.mxu0 %v256
    %v1026 = vpop.f32.mrf.mxu0
    %v1027 = vadd.f32 %v335, %v1026
    %v1028 = vpop.f32.mrf.mxu0
    %v1029 = vadd.f32 %v335, %v1028
    %1030 = vmatmul.bf16.gmra.mxu0 %v257
    %v1031 = vpop.f32.mrf.mxu0
    %v1032 = vadd.f32 %v335, %v1031
    %v1033 = vpop.f32.mrf.mxu0
    %v1034 = vadd.f32 %v335, %v1033
    %1035 = vmatmul.bf16.gmra.mxu0 %v258
    %v1036 = vpop.f32.mrf.mxu0
    %v1037 = vadd.f32 %v335, %v1036
    %v1038 = vpop.f32.mrf.mxu0
    %v1039 = vadd.f32 %v335, %v1038
    %1040 = vmatmul.bf16.gmra.mxu0 %v259
    %v1041 = vpop.f32.mrf.mxu0
    %v1042 = vadd.f32 %v335, %v1041
    %v1043 = vpop.f32.mrf.mxu0
    %v1044 = vadd.f32 %v335, %v1043
    %1045 = vmatmul.bf16.gmra.mxu0 %v260
    %v1046 = vpop.f32.mrf.mxu0
    %v1047 = vadd.f32 %v335, %v1046
    %v1048 = vpop.f32.mrf.mxu0
    %v1049 = vadd.f32 %v335, %v1048
    %1050 = vmatmul.bf16.gmra.mxu0 %v261
    %v1051 = vpop.f32.mrf.mxu0
    %v1052 = vadd.f32 %v335, %v1051
    %v1053 = vpop.f32.mrf.mxu0
    %v1054 = vadd.f32 %v335, %v1053
    %1055 = vdwg.mxu0
    %v1056 = vmax.f32 %v674, 0.0
    %v1057 = vmax.f32 %v723, 0.0
    %v1058 = vmax.f32 %v772, 0.0
    %v1059 = vmax.f32 %v821, 0.0
    %v1060 = vmax.f32 %v870, 0.0
    %v1061 = vmax.f32 %v919, 0.0
    %v1062 = vmax.f32 %v968, 0.0
    %v1063 = vmax.f32 %v1017, 0.0
    %v1064 = vmax.f32 %v676, 0.0
    %v1065 = vmax.f32 %v725, 0.0
    %v1066 = vmax.f32 %v774, 0.0
    %v1067 = vmax.f32 %v823, 0.0
    %v1068 = vmax.f32 %v872, 0.0
    %v1069 = vmax.f32 %v921, 0.0
    %v1070 = vmax.f32 %v970, 0.0
    %v1071 = vmax.f32 %v1019, 0.0
    %v1072 = vmax.f32 %v679, 0.0
    %v1073 = vmax.f32 %v728, 0.0
    %v1074 = vmax.f32 %v777, 0.0
    %v1075 = vmax.f32 %v826, 0.0
    %v1076 = vmax.f32 %v875, 0.0
    %v1077 = vmax.f32 %v924, 0.0
    %v1078 = vmax.f32 %v973, 0.0
    %v1079 = vmax.f32 %v1022, 0.0
    %v1080 = vmax.f32 %v681, 0.0
    %v1081 = vmax.f32 %v730, 0.0
    %v1082 = vmax.f32 %v779, 0.0
    %v1083 = vmax.f32 %v828, 0.0
    %v1084 = vmax.f32 %v877, 0.0
    %v1085 = vmax.f32 %v926, 0.0
    %v1086 = vmax.f32 %v975, 0.0
    %v1087 = vmax.f32 %v1024, 0.0
    %v1088 = vmax.f32 %v684, 0.0
    %v1089 = vmax.f32 %v733, 0.0
    %v1090 = vmax.f32 %v782, 0.0
    %v1091 = vmax.f32 %v831, 0.0
    %v1092 = vmax.f32 %v880, 0.0
    %v1093 = vmax.f32 %v929, 0.0
    %v1094 = vmax.f32 %v978, 0.0
    %v1095 = vmax.f32 %v1027, 0.0
    %v1096 = vmax.f32 %v686, 0.0
    %v1097 = vmax.f32 %v735, 0.0
    %v1098 = vmax.f32 %v784, 0.0
    %v1099 = vmax.f32 %v833, 0.0
    %v1100 = vmax.f32 %v882, 0.0
    %v1101 = vmax.f32 %v931, 0.0
    %v1102 = vmax.f32 %v980, 0.0
    %v1103 = vmax.f32 %v1029, 0.0
    %v1104 = vmax.f32 %v689, 0.0
    %v1105 = vmax.f32 %v738, 0.0
    %v1106 = vmax.f32 %v787, 0.0
    %v1107 = vmax.f32 %v836, 0.0
    %v1108 = vmax.f32 %v885, 0.0
    %v1109 = vmax.f32 %v934, 0.0
    %v1110 = vmax.f32 %v983, 0.0
    %v1111 = vmax.f32 %v1032, 0.0
    %v1112 = vmax.f32 %v691, 0.0
    %v1113 = vmax.f32 %v740, 0.0
    %v1114 = vmax.f32 %v789, 0.0
    %v1115 = vmax.f32 %v838, 0.0
    %v1116 = vmax.f32 %v887, 0.0
    %v1117 = vmax.f32 %v936, 0.0
    %v1118 = vmax.f32 %v985, 0.0
    %v1119 = vmax.f32 %v1034, 0.0
    %v1120 = vmax.f32 %v694, 0.0
    %v1121 = vmax.f32 %v743, 0.0
    %v1122 = vmax.f32 %v792, 0.0
    %v1123 = vmax.f32 %v841, 0.0
    %v1124 = vmax.f32 %v890, 0.0
    %v1125 = vmax.f32 %v939, 0.0
    %v1126 = vmax.f32 %v988, 0.0
    %v1127 = vmax.f32 %v1037, 0.0
    %v1128 = vmax.f32 %v696, 0.0
    %v1129 = vmax.f32 %v745, 0.0
    %v1130 = vmax.f32 %v794, 0.0
    %v1131 = vmax.f32 %v843, 0.0
    %v1132 = vmax.f32 %v892, 0.0
    %v1133 = vmax.f32 %v941, 0.0
    %v1134 = vmax.f32 %v990, 0.0
    %v1135 = vmax.f32 %v1039, 0.0
    %v1136 = vmax.f32 %v699, 0.0
    %v1137 = vmax.f32 %v748, 0.0
    %v1138 = vmax.f32 %v797, 0.0
    %v1139 = vmax.f32 %v846, 0.0
    %v1140 = vmax.f32 %v895, 0.0
    %v1141 = vmax.f32 %v944, 0.0
    %v1142 = vmax.f32 %v993, 0.0
    %v1143 = vmax.f32 %v1042, 0.0
    %v1144 = vmax.f32 %v701, 0.0
    %v1145 = vmax.f32 %v750, 0.0
    %v1146 = vmax.f32 %v799, 0.0
    %v1147 = vmax.f32 %v848, 0.0
    %v1148 = vmax.f32 %v897, 0.0
    %v1149 = vmax.f32 %v946, 0.0
    %v1150 = vmax.f32 %v995, 0.0
    %v1151 = vmax.f32 %v1044, 0.0
    %v1152 = vmax.f32 %v704, 0.0
    %v1153 = vmax.f32 %v753, 0.0
    %v1154 = vmax.f32 %v802, 0.0
    %v1155 = vmax.f32 %v851, 0.0
    %v1156 = vmax.f32 %v900, 0.0
    %v1157 = vmax.f32 %v949, 0.0
    %v1158 = vmax.f32 %v998, 0.0
    %v1159 = vmax.f32 %v1047, 0.0
    %v1160 = vmax.f32 %v706, 0.0
    %v1161 = vmax.f32 %v755, 0.0
    %v1162 = vmax.f32 %v804, 0.0
    %v1163 = vmax.f32 %v853, 0.0
    %v1164 = vmax.f32 %v902, 0.0
    %v1165 = vmax.f32 %v951, 0.0
    %v1166 = vmax.f32 %v1000, 0.0
    %v1167 = vmax.f32 %v1049, 0.0
    %v1168 = vmax.f32 %v709, 0.0
    %v1169 = vmax.f32 %v758, 0.0
    %v1170 = vmax.f32 %v807, 0.0
    %v1171 = vmax.f32 %v856, 0.0
    %v1172 = vmax.f32 %v905, 0.0
    %v1173 = vmax.f32 %v954, 0.0
    %v1174 = vmax.f32 %v1003, 0.0
    %v1175 = vmax.f32 %v1052, 0.0
    %v1176 = vmax.f32 %v711, 0.0
    %v1177 = vmax.f32 %v760, 0.0
    %v1178 = vmax.f32 %v809, 0.0
    %v1179 = vmax.f32 %v858, 0.0
    %v1180 = vmax.f32 %v907, 0.0
    %v1181 = vmax.f32 %v956, 0.0
    %v1182 = vmax.f32 %v1005, 0.0
    %v1183 = vmax.f32 %v1054, 0.0
    %v1184 = vpack.c.bf16 %v1064, %v1056
    %v1185 = vpack.c.bf16 %v1065, %v1057
    %v1186 = vpack.c.bf16 %v1066, %v1058
    %v1187 = vpack.c.bf16 %v1067, %v1059
    %v1188 = vpack.c.bf16 %v1068, %v1060
    %v1189 = vpack.c.bf16 %v1069, %v1061
    %v1190 = vpack.c.bf16 %v1070, %v1062
    %v1191 = vpack.c.bf16 %v1071, %v1063
    %v1192 = vpack.c.bf16 %v1080, %v1072
    %v1193 = vpack.c.bf16 %v1081, %v1073
    %v1194 = vpack.c.bf16 %v1082, %v1074
    %v1195 = vpack.c.bf16 %v1083, %v1075
    %v1196 = vpack.c.bf16 %v1084, %v1076
    %v1197 = vpack.c.bf16 %v1085, %v1077
    %v1198 = vpack.c.bf16 %v1086, %v1078
    %v1199 = vpack.c.bf16 %v1087, %v1079
    %v1200 = vpack.c.bf16 %v1096, %v1088
    %v1201 = vpack.c.bf16 %v1097, %v1089
    %v1202 = vpack.c.bf16 %v1098, %v1090
    %v1203 = vpack.c.bf16 %v1099, %v1091
    %v1204 = vpack.c.bf16 %v1100, %v1092
    %v1205 = vpack.c.bf16 %v1101, %v1093
    %v1206 = vpack.c.bf16 %v1102, %v1094
    %v1207 = vpack.c.bf16 %v1103, %v1095
    %v1208 = vpack.c.bf16 %v1112, %v1104
    %v1209 = vpack.c.bf16 %v1113, %v1105
    %v1210 = vpack.c.bf16 %v1114, %v1106
    %v1211 = vpack.c.bf16 %v1115, %v1107
    %v1212 = vpack.c.bf16 %v1116, %v1108
    %v1213 = vpack.c.bf16 %v1117, %v1109
    %v1214 = vpack.c.bf16 %v1118, %v1110
    %v1215 = vpack.c.bf16 %v1119, %v1111
    %v1216 = vpack.c.bf16 %v1128, %v1120
    %v1217 = vpack.c.bf16 %v1129, %v1121
    %v1218 = vpack.c.bf16 %v1130, %v1122
    %v1219 = vpack.c.bf16 %v1131, %v1123
    %v1220 = vpack.c.bf16 %v1132, %v1124
    %v1221 = vpack.c.bf16 %v1133, %v1125
    %v1222 = vpack.c.bf16 %v1134, %v1126
    %v1223 = vpack.c.bf16 %v1135, %v1127
    %v1224 = vpack.c.bf16 %v1144, %v1136
    %v1225 = vpack.c.bf16 %v1145, %v1137
    %v1226 = vpack.c.bf16 %v1146, %v1138
    %v1227 = vpack.c.bf16 %v1147, %v1139
    %v1228 = vpack.c.bf16 %v1148, %v1140
    %v1229 = vpack.c.bf16 %v1149, %v1141
    %v1230 = vpack.c.bf16 %v1150, %v1142
    %v1231 = vpack.c.bf16 %v1151, %v1143
    %v1232 = vpack.c.bf16 %v1160, %v1152
    %v1233 = vpack.c.bf16 %v1161, %v1153
    %v1234 = vpack.c.bf16 %v1162, %v1154
    %v1235 = vpack.c.bf16 %v1163, %v1155
    %v1236 = vpack.c.bf16 %v1164, %v1156
    %v1237 = vpack.c.bf16 %v1165, %v1157
    %v1238 = vpack.c.bf16 %v1166, %v1158
    %v1239 = vpack.c.bf16 %v1167, %v1159
    %v1240 = vpack.c.bf16 %v1176, %v1168
    %v1241 = vpack.c.bf16 %v1177, %v1169
    %v1242 = vpack.c.bf16 %v1178, %v1170
    %v1243 = vpack.c.bf16 %v1179, %v1171
    %v1244 = vpack.c.bf16 %v1180, %v1172
    %v1245 = vpack.c.bf16 %v1181, %v1173
    %v1246 = vpack.c.bf16 %v1182, %v1174
    %v1247 = vpack.c.bf16 %v1183, %v1175
    %v1248 = vld [vmem:[#allocation6] sm:$0xff]
    %v1249 = vld [vmem:[#allocation6 + $0x8] sm:$0xff]
    %v1250 = vld [vmem:[#allocation6 + $0x10] sm:$0xff]
    %v1251 = vld [vmem:[#allocation6 + $0x18] sm:$0xff]
    %v1252 = vld [vmem:[#allocation6 + $0x20] sm:$0xff]
    %v1253 = vld [vmem:[#allocation6 + $0x28] sm:$0xff]
    %v1254 = vld [vmem:[#allocation6 + $0x30] sm:$0xff]
    %v1255 = vld [vmem:[#allocation6 + $0x38] sm:$0xff]
    %v1256 = vld [vmem:[#allocation6 + $0x40] sm:$0xff]
    %v1257 = vld [vmem:[#allocation6 + $0x48] sm:$0xff]
    %v1258 = vld [vmem:[#allocation6 + $0x50] sm:$0xff]
    %v1259 = vld [vmem:[#allocation6 + $0x58] sm:$0xff]
    %v1260 = vld [vmem:[#allocation6 + $0x60] sm:$0xff]
    %v1261 = vld [vmem:[#allocation6 + $0x68] sm:$0xff]
    %v1262 = vld [vmem:[#allocation6 + $0x70] sm:$0xff]
    %v1263 = vld [vmem:[#allocation6 + $0x78] sm:$0xff]
    %v1264 = vld [vmem:[#allocation6 + $0x80] sm:$0xff]
    %v1265 = vld [vmem:[#allocation6 + $0x88] sm:$0xff]
    %v1266 = vld [vmem:[#allocation6 + $0x90] sm:$0xff]
    %v1267 = vld [vmem:[#allocation6 + $0x98] sm:$0xff]
    %v1268 = vld [vmem:[#allocation6 + $0xa0] sm:$0xff]
    %v1269 = vld [vmem:[#allocation6 + $0xa8] sm:$0xff]
    %v1270 = vld [vmem:[#allocation6 + $0xb0] sm:$0xff]
    %v1271 = vld [vmem:[#allocation6 + $0xb8] sm:$0xff]
    %v1272 = vld [vmem:[#allocation6 + $0xc0] sm:$0xff]
    %v1273 = vld [vmem:[#allocation6 + $0xc8] sm:$0xff]
    %v1274 = vld [vmem:[#allocation6 + $0xd0] sm:$0xff]
    %v1275 = vld [vmem:[#allocation6 + $0xd8] sm:$0xff]
    %v1276 = vld [vmem:[#allocation6 + $0xe0] sm:$0xff]
    %v1277 = vld [vmem:[#allocation6 + $0xe8] sm:$0xff]
    %v1278 = vld [vmem:[#allocation6 + $0xf0] sm:$0xff]
    %v1279 = vld [vmem:[#allocation6 + $0xf8] sm:$0xff]
    %v1280 = vld [vmem:[#allocation6 + $0x100] sm:$0xff]
    %v1281 = vld [vmem:[#allocation6 + $0x108] sm:$0xff]
    %v1282 = vld [vmem:[#allocation6 + $0x110] sm:$0xff]
    %v1283 = vld [vmem:[#allocation6 + $0x118] sm:$0xff]
    %v1284 = vld [vmem:[#allocation6 + $0x120] sm:$0xff]
    %v1285 = vld [vmem:[#allocation6 + $0x128] sm:$0xff]
    %v1286 = vld [vmem:[#allocation6 + $0x130] sm:$0xff]
    %v1287 = vld [vmem:[#allocation6 + $0x138] sm:$0xff]
    %v1288 = vld [vmem:[#allocation6 + $0x140] sm:$0xff]
    %v1289 = vld [vmem:[#allocation6 + $0x148] sm:$0xff]
    %v1290 = vld [vmem:[#allocation6 + $0x150] sm:$0xff]
    %v1291 = vld [vmem:[#allocation6 + $0x158] sm:$0xff]
    %v1292 = vld [vmem:[#allocation6 + $0x160] sm:$0xff]
    %v1293 = vld [vmem:[#allocation6 + $0x168] sm:$0xff]
    %v1294 = vld [vmem:[#allocation6 + $0x170] sm:$0xff]
    %v1295 = vld [vmem:[#allocation6 + $0x178] sm:$0xff]
    %v1296 = vld [vmem:[#allocation6 + $0x180] sm:$0xff]
    %v1297 = vld [vmem:[#allocation6 + $0x188] sm:$0xff]
    %v1298 = vld [vmem:[#allocation6 + $0x190] sm:$0xff]
    %v1299 = vld [vmem:[#allocation6 + $0x198] sm:$0xff]
    %v1300 = vld [vmem:[#allocation6 + $0x1a0] sm:$0xff]
    %v1301 = vld [vmem:[#allocation6 + $0x1a8] sm:$0xff]
    %v1302 = vld [vmem:[#allocation6 + $0x1b0] sm:$0xff]
    %v1303 = vld [vmem:[#allocation6 + $0x1b8] sm:$0xff]
    %v1304 = vld [vmem:[#allocation6 + $0x1c0] sm:$0xff]
    %v1305 = vld [vmem:[#allocation6 + $0x1c8] sm:$0xff]
    %v1306 = vld [vmem:[#allocation6 + $0x1d0] sm:$0xff]
    %v1307 = vld [vmem:[#allocation6 + $0x1d8] sm:$0xff]
    %v1308 = vld [vmem:[#allocation6 + $0x1e0] sm:$0xff]
    %v1309 = vld [vmem:[#allocation6 + $0x1e8] sm:$0xff]
    %v1310 = vld [vmem:[#allocation6 + $0x1f0] sm:$0xff]
    %v1311 = vld [vmem:[#allocation6 + $0x1f8] sm:$0xff]
    %v1312 = vld [vmem:[#allocation6 + $0x200] sm:$0xff]
    %v1313 = vld [vmem:[#allocation6 + $0x208] sm:$0xff]
    %v1314 = vld [vmem:[#allocation6 + $0x210] sm:$0xff]
    %v1315 = vld [vmem:[#allocation6 + $0x218] sm:$0xff]
    %v1316 = vld [vmem:[#allocation6 + $0x220] sm:$0xff]
    %v1317 = vld [vmem:[#allocation6 + $0x228] sm:$0xff]
    %v1318 = vld [vmem:[#allocation6 + $0x230] sm:$0xff]
    %v1319 = vld [vmem:[#allocation6 + $0x238] sm:$0xff]
    %v1320 = vld [vmem:[#allocation6 + $0x240] sm:$0xff]
    %v1321 = vld [vmem:[#allocation6 + $0x248] sm:$0xff]
    %v1322 = vld [vmem:[#allocation6 + $0x250] sm:$0xff]
    %v1323 = vld [vmem:[#allocation6 + $0x258] sm:$0xff]
    %v1324 = vld [vmem:[#allocation6 + $0x260] sm:$0xff]
    %v1325 = vld [vmem:[#allocation6 + $0x268] sm:$0xff]
    %v1326 = vld [vmem:[#allocation6 + $0x270] sm:$0xff]
    %v1327 = vld [vmem:[#allocation6 + $0x278] sm:$0xff]
    %v1328 = vld [vmem:[#allocation6 + $0x280] sm:$0xff]
    %v1329 = vld [vmem:[#allocation6 + $0x288] sm:$0xff]
    %v1330 = vld [vmem:[#allocation6 + $0x290] sm:$0xff]
    %v1331 = vld [vmem:[#allocation6 + $0x298] sm:$0xff]
    %v1332 = vld [vmem:[#allocation6 + $0x2a0] sm:$0xff]
    %v1333 = vld [vmem:[#allocation6 + $0x2a8] sm:$0xff]
    %v1334 = vld [vmem:[#allocation6 + $0x2b0] sm:$0xff]
    %v1335 = vld [vmem:[#allocation6 + $0x2b8] sm:$0xff]
    %v1336 = vld [vmem:[#allocation6 + $0x2c0] sm:$0xff]
    %v1337 = vld [vmem:[#allocation6 + $0x2c8] sm:$0xff]
    %v1338 = vld [vmem:[#allocation6 + $0x2d0] sm:$0xff]
    %v1339 = vld [vmem:[#allocation6 + $0x2d8] sm:$0xff]
    %v1340 = vld [vmem:[#allocation6 + $0x2e0] sm:$0xff]
    %v1341 = vld [vmem:[#allocation6 + $0x2e8] sm:$0xff]
    %v1342 = vld [vmem:[#allocation6 + $0x2f0] sm:$0xff]
    %v1343 = vld [vmem:[#allocation6 + $0x2f8] sm:$0xff]
    %v1344 = vld [vmem:[#allocation6 + $0x300] sm:$0xff]
    %v1345 = vld [vmem:[#allocation6 + $0x308] sm:$0xff]
    %v1346 = vld [vmem:[#allocation6 + $0x310] sm:$0xff]
    %v1347 = vld [vmem:[#allocation6 + $0x318] sm:$0xff]
    %v1348 = vld [vmem:[#allocation6 + $0x320] sm:$0xff]
    %v1349 = vld [vmem:[#allocation6 + $0x328] sm:$0xff]
    %v1350 = vld [vmem:[#allocation6 + $0x330] sm:$0xff]
    %v1351 = vld [vmem:[#allocation6 + $0x338] sm:$0xff]
    %v1352 = vld [vmem:[#allocation6 + $0x340] sm:$0xff]
    %v1353 = vld [vmem:[#allocation6 + $0x348] sm:$0xff]
    %v1354 = vld [vmem:[#allocation6 + $0x350] sm:$0xff]
    %v1355 = vld [vmem:[#allocation6 + $0x358] sm:$0xff]
    %v1356 = vld [vmem:[#allocation6 + $0x360] sm:$0xff]
    %v1357 = vld [vmem:[#allocation6 + $0x368] sm:$0xff]
    %v1358 = vld [vmem:[#allocation6 + $0x370] sm:$0xff]
    %v1359 = vld [vmem:[#allocation6 + $0x378] sm:$0xff]
    %v1360 = vld [vmem:[#allocation6 + $0x380] sm:$0xff]
    %v1361 = vld [vmem:[#allocation6 + $0x388] sm:$0xff]
    %v1362 = vld [vmem:[#allocation6 + $0x390] sm:$0xff]
    %v1363 = vld [vmem:[#allocation6 + $0x398] sm:$0xff]
    %v1364 = vld [vmem:[#allocation6 + $0x3a0] sm:$0xff]
    %v1365 = vld [vmem:[#allocation6 + $0x3a8] sm:$0xff]
    %v1366 = vld [vmem:[#allocation6 + $0x3b0] sm:$0xff]
    %v1367 = vld [vmem:[#allocation6 + $0x3b8] sm:$0xff]
    %v1368 = vld [vmem:[#allocation6 + $0x3c0] sm:$0xff]
    %v1369 = vld [vmem:[#allocation6 + $0x3c8] sm:$0xff]
    %v1370 = vld [vmem:[#allocation6 + $0x3d0] sm:$0xff]
    %v1371 = vld [vmem:[#allocation6 + $0x3d8] sm:$0xff]
    %v1372 = vld [vmem:[#allocation6 + $0x3e0] sm:$0xff]
    %v1373 = vld [vmem:[#allocation6 + $0x3e8] sm:$0xff]
    %v1374 = vld [vmem:[#allocation6 + $0x3f0] sm:$0xff]
    %v1375 = vld [vmem:[#allocation6 + $0x3f8] sm:$0xff]
    %v1376 = vld [vmem:[#allocation6 + $0x400] sm:$0xff]
    %v1377 = vld [vmem:[#allocation6 + $0x408] sm:$0xff]
    %v1378 = vld [vmem:[#allocation6 + $0x410] sm:$0xff]
    %v1379 = vld [vmem:[#allocation6 + $0x418] sm:$0xff]
    %v1380 = vld [vmem:[#allocation6 + $0x420] sm:$0xff]
    %v1381 = vld [vmem:[#allocation6 + $0x428] sm:$0xff]
    %v1382 = vld [vmem:[#allocation6 + $0x430] sm:$0xff]
    %v1383 = vld [vmem:[#allocation6 + $0x438] sm:$0xff]
    %v1384 = vld [vmem:[#allocation6 + $0x440] sm:$0xff]
    %v1385 = vld [vmem:[#allocation6 + $0x448] sm:$0xff]
    %v1386 = vld [vmem:[#allocation6 + $0x450] sm:$0xff]
    %v1387 = vld [vmem:[#allocation6 + $0x458] sm:$0xff]
    %v1388 = vld [vmem:[#allocation6 + $0x460] sm:$0xff]
    %v1389 = vld [vmem:[#allocation6 + $0x468] sm:$0xff]
    %v1390 = vld [vmem:[#allocation6 + $0x470] sm:$0xff]
    %v1391 = vld [vmem:[#allocation6 + $0x478] sm:$0xff]
    %v1392 = vld [vmem:[#allocation6 + $0x480] sm:$0xff]
    %v1393 = vld [vmem:[#allocation6 + $0x488] sm:$0xff]
    %v1394 = vld [vmem:[#allocation6 + $0x490] sm:$0xff]
    %v1395 = vld [vmem:[#allocation6 + $0x498] sm:$0xff]
    %v1396 = vld [vmem:[#allocation6 + $0x4a0] sm:$0xff]
    %v1397 = vld [vmem:[#allocation6 + $0x4a8] sm:$0xff]
    %v1398 = vld [vmem:[#allocation6 + $0x4b0] sm:$0xff]
    %v1399 = vld [vmem:[#allocation6 + $0x4b8] sm:$0xff]
    %v1400 = vld [vmem:[#allocation6 + $0x4c0] sm:$0xff]
    %v1401 = vld [vmem:[#allocation6 + $0x4c8] sm:$0xff]
    %v1402 = vld [vmem:[#allocation6 + $0x4d0] sm:$0xff]
    %v1403 = vld [vmem:[#allocation6 + $0x4d8] sm:$0xff]
    %v1404 = vld [vmem:[#allocation6 + $0x4e0] sm:$0xff]
    %v1405 = vld [vmem:[#allocation6 + $0x4e8] sm:$0xff]
    %v1406 = vld [vmem:[#allocation6 + $0x4f0] sm:$0xff]
    %v1407 = vld [vmem:[#allocation6 + $0x4f8] sm:$0xff]
    %v1408 = vld [vmem:[#allocation6 + $0x500] sm:$0xff]
    %v1409 = vld [vmem:[#allocation6 + $0x508] sm:$0xff]
    %v1410 = vld [vmem:[#allocation6 + $0x510] sm:$0xff]
    %v1411 = vld [vmem:[#allocation6 + $0x518] sm:$0xff]
    %v1412 = vld [vmem:[#allocation6 + $0x520] sm:$0xff]
    %v1413 = vld [vmem:[#allocation6 + $0x528] sm:$0xff]
    %v1414 = vld [vmem:[#allocation6 + $0x530] sm:$0xff]
    %v1415 = vld [vmem:[#allocation6 + $0x538] sm:$0xff]
    %v1416 = vld [vmem:[#allocation6 + $0x540] sm:$0xff]
    %v1417 = vld [vmem:[#allocation6 + $0x548] sm:$0xff]
    %v1418 = vld [vmem:[#allocation6 + $0x550] sm:$0xff]
    %v1419 = vld [vmem:[#allocation6 + $0x558] sm:$0xff]
    %v1420 = vld [vmem:[#allocation6 + $0x560] sm:$0xff]
    %v1421 = vld [vmem:[#allocation6 + $0x568] sm:$0xff]
    %v1422 = vld [vmem:[#allocation6 + $0x570] sm:$0xff]
    %v1423 = vld [vmem:[#allocation6 + $0x578] sm:$0xff]
    %v1424 = vld [vmem:[#allocation6 + $0x580] sm:$0xff]
    %v1425 = vld [vmem:[#allocation6 + $0x588] sm:$0xff]
    %v1426 = vld [vmem:[#allocation6 + $0x590] sm:$0xff]
    %v1427 = vld [vmem:[#allocation6 + $0x598] sm:$0xff]
    %v1428 = vld [vmem:[#allocation6 + $0x5a0] sm:$0xff]
    %v1429 = vld [vmem:[#allocation6 + $0x5a8] sm:$0xff]
    %v1430 = vld [vmem:[#allocation6 + $0x5b0] sm:$0xff]
    %v1431 = vld [vmem:[#allocation6 + $0x5b8] sm:$0xff]
    %v1432 = vld [vmem:[#allocation6 + $0x5c0] sm:$0xff]
    %v1433 = vld [vmem:[#allocation6 + $0x5c8] sm:$0xff]
    %v1434 = vld [vmem:[#allocation6 + $0x5d0] sm:$0xff]
    %v1435 = vld [vmem:[#allocation6 + $0x5d8] sm:$0xff]
    %v1436 = vld [vmem:[#allocation6 + $0x5e0] sm:$0xff]
    %v1437 = vld [vmem:[#allocation6 + $0x5e8] sm:$0xff]
    %v1438 = vld [vmem:[#allocation6 + $0x5f0] sm:$0xff]
    %v1439 = vld [vmem:[#allocation6 + $0x5f8] sm:$0xff]
    %v1440 = vld [vmem:[#allocation6 + $0x600] sm:$0xff]
    %v1441 = vld [vmem:[#allocation6 + $0x608] sm:$0xff]
    %v1442 = vld [vmem:[#allocation6 + $0x610] sm:$0xff]
    %v1443 = vld [vmem:[#allocation6 + $0x618] sm:$0xff]
    %v1444 = vld [vmem:[#allocation6 + $0x620] sm:$0xff]
    %v1445 = vld [vmem:[#allocation6 + $0x628] sm:$0xff]
    %v1446 = vld [vmem:[#allocation6 + $0x630] sm:$0xff]
    %v1447 = vld [vmem:[#allocation6 + $0x638] sm:$0xff]
    %v1448 = vld [vmem:[#allocation6 + $0x640] sm:$0xff]
    %v1449 = vld [vmem:[#allocation6 + $0x648] sm:$0xff]
    %v1450 = vld [vmem:[#allocation6 + $0x650] sm:$0xff]
    %v1451 = vld [vmem:[#allocation6 + $0x658] sm:$0xff]
    %v1452 = vld [vmem:[#allocation6 + $0x660] sm:$0xff]
    %v1453 = vld [vmem:[#allocation6 + $0x668] sm:$0xff]
    %v1454 = vld [vmem:[#allocation6 + $0x670] sm:$0xff]
    %v1455 = vld [vmem:[#allocation6 + $0x678] sm:$0xff]
    %v1456 = vld [vmem:[#allocation6 + $0x680] sm:$0xff]
    %v1457 = vld [vmem:[#allocation6 + $0x688] sm:$0xff]
    %v1458 = vld [vmem:[#allocation6 + $0x690] sm:$0xff]
    %v1459 = vld [vmem:[#allocation6 + $0x698] sm:$0xff]
    %v1460 = vld [vmem:[#allocation6 + $0x6a0] sm:$0xff]
    %v1461 = vld [vmem:[#allocation6 + $0x6a8] sm:$0xff]
    %v1462 = vld [vmem:[#allocation6 + $0x6b0] sm:$0xff]
    %v1463 = vld [vmem:[#allocation6 + $0x6b8] sm:$0xff]
    %v1464 = vld [vmem:[#allocation6 + $0x6c0] sm:$0xff]
    %v1465 = vld [vmem:[#allocation6 + $0x6c8] sm:$0xff]
    %v1466 = vld [vmem:[#allocation6 + $0x6d0] sm:$0xff]
    %v1467 = vld [vmem:[#allocation6 + $0x6d8] sm:$0xff]
    %v1468 = vld [vmem:[#allocation6 + $0x6e0] sm:$0xff]
    %v1469 = vld [vmem:[#allocation6 + $0x6e8] sm:$0xff]
    %v1470 = vld [vmem:[#allocation6 + $0x6f0] sm:$0xff]
    %v1471 = vld [vmem:[#allocation6 + $0x6f8] sm:$0xff]
    %v1472 = vld [vmem:[#allocation6 + $0x700] sm:$0xff]
    %v1473 = vld [vmem:[#allocation6 + $0x708] sm:$0xff]
    %v1474 = vld [vmem:[#allocation6 + $0x710] sm:$0xff]
    %v1475 = vld [vmem:[#allocation6 + $0x718] sm:$0xff]
    %v1476 = vld [vmem:[#allocation6 + $0x720] sm:$0xff]
    %v1477 = vld [vmem:[#allocation6 + $0x728] sm:$0xff]
    %v1478 = vld [vmem:[#allocation6 + $0x730] sm:$0xff]
    %v1479 = vld [vmem:[#allocation6 + $0x738] sm:$0xff]
    %v1480 = vld [vmem:[#allocation6 + $0x740] sm:$0xff]
    %v1481 = vld [vmem:[#allocation6 + $0x748] sm:$0xff]
    %v1482 = vld [vmem:[#allocation6 + $0x750] sm:$0xff]
    %v1483 = vld [vmem:[#allocation6 + $0x758] sm:$0xff]
    %v1484 = vld [vmem:[#allocation6 + $0x760] sm:$0xff]
    %v1485 = vld [vmem:[#allocation6 + $0x768] sm:$0xff]
    %v1486 = vld [vmem:[#allocation6 + $0x770] sm:$0xff]
    %v1487 = vld [vmem:[#allocation6 + $0x778] sm:$0xff]
    %v1488 = vld [vmem:[#allocation6 + $0x780] sm:$0xff]
    %v1489 = vld [vmem:[#allocation6 + $0x788] sm:$0xff]
    %v1490 = vld [vmem:[#allocation6 + $0x790] sm:$0xff]
    %v1491 = vld [vmem:[#allocation6 + $0x798] sm:$0xff]
    %v1492 = vld [vmem:[#allocation6 + $0x7a0] sm:$0xff]
    %v1493 = vld [vmem:[#allocation6 + $0x7a8] sm:$0xff]
    %v1494 = vld [vmem:[#allocation6 + $0x7b0] sm:$0xff]
    %v1495 = vld [vmem:[#allocation6 + $0x7b8] sm:$0xff]
    %v1496 = vld [vmem:[#allocation6 + $0x7c0] sm:$0xff]
    %v1497 = vld [vmem:[#allocation6 + $0x7c8] sm:$0xff]
    %v1498 = vld [vmem:[#allocation6 + $0x7d0] sm:$0xff]
    %v1499 = vld [vmem:[#allocation6 + $0x7d8] sm:$0xff]
    %v1500 = vld [vmem:[#allocation6 + $0x7e0] sm:$0xff]
    %v1501 = vld [vmem:[#allocation6 + $0x7e8] sm:$0xff]
    %v1502 = vld [vmem:[#allocation6 + $0x7f0] sm:$0xff]
    %v1503 = vld [vmem:[#allocation6 + $0x7f8] sm:$0xff]
    %v1504 = vld [vmem:[#allocation6 + $0x800] sm:$0xff]
    %v1505 = vld [vmem:[#allocation6 + $0x808] sm:$0xff]
    %v1506 = vld [vmem:[#allocation6 + $0x810] sm:$0xff]
    %v1507 = vld [vmem:[#allocation6 + $0x818] sm:$0xff]
    %v1508 = vld [vmem:[#allocation6 + $0x820] sm:$0xff]
    %v1509 = vld [vmem:[#allocation6 + $0x828] sm:$0xff]
    %v1510 = vld [vmem:[#allocation6 + $0x830] sm:$0xff]
    %v1511 = vld [vmem:[#allocation6 + $0x838] sm:$0xff]
    %v1512 = vld [vmem:[#allocation6 + $0x840] sm:$0xff]
    %v1513 = vld [vmem:[#allocation6 + $0x848] sm:$0xff]
    %v1514 = vld [vmem:[#allocation6 + $0x850] sm:$0xff]
    %v1515 = vld [vmem:[#allocation6 + $0x858] sm:$0xff]
    %v1516 = vld [vmem:[#allocation6 + $0x860] sm:$0xff]
    %v1517 = vld [vmem:[#allocation6 + $0x868] sm:$0xff]
    %v1518 = vld [vmem:[#allocation6 + $0x870] sm:$0xff]
    %v1519 = vld [vmem:[#allocation6 + $0x878] sm:$0xff]
    %v1520 = vld [vmem:[#allocation6 + $0x880] sm:$0xff]
    %v1521 = vld [vmem:[#allocation6 + $0x888] sm:$0xff]
    %v1522 = vld [vmem:[#allocation6 + $0x890] sm:$0xff]
    %v1523 = vld [vmem:[#allocation6 + $0x898] sm:$0xff]
    %v1524 = vld [vmem:[#allocation6 + $0x8a0] sm:$0xff]
    %v1525 = vld [vmem:[#allocation6 + $0x8a8] sm:$0xff]
    %v1526 = vld [vmem:[#allocation6 + $0x8b0] sm:$0xff]
    %v1527 = vld [vmem:[#allocation6 + $0x8b8] sm:$0xff]
    %v1528 = vld [vmem:[#allocation6 + $0x8c0] sm:$0xff]
    %v1529 = vld [vmem:[#allocation6 + $0x8c8] sm:$0xff]
    %v1530 = vld [vmem:[#allocation6 + $0x8d0] sm:$0xff]
    %v1531 = vld [vmem:[#allocation6 + $0x8d8] sm:$0xff]
    %v1532 = vld [vmem:[#allocation6 + $0x8e0] sm:$0xff]
    %v1533 = vld [vmem:[#allocation6 + $0x8e8] sm:$0xff]
    %v1534 = vld [vmem:[#allocation6 + $0x8f0] sm:$0xff]
    %v1535 = vld [vmem:[#allocation6 + $0x8f8] sm:$0xff]
    %v1536 = vld [vmem:[#allocation6 + $0x900] sm:$0xff]
    %v1537 = vld [vmem:[#allocation6 + $0x908] sm:$0xff]
    %v1538 = vld [vmem:[#allocation6 + $0x910] sm:$0xff]
    %v1539 = vld [vmem:[#allocation6 + $0x918] sm:$0xff]
    %v1540 = vld [vmem:[#allocation6 + $0x920] sm:$0xff]
    %v1541 = vld [vmem:[#allocation6 + $0x928] sm:$0xff]
    %v1542 = vld [vmem:[#allocation6 + $0x930] sm:$0xff]
    %v1543 = vld [vmem:[#allocation6 + $0x938] sm:$0xff]
    %v1544 = vld [vmem:[#allocation6 + $0x940] sm:$0xff]
    %v1545 = vld [vmem:[#allocation6 + $0x948] sm:$0xff]
    %v1546 = vld [vmem:[#allocation6 + $0x950] sm:$0xff]
    %v1547 = vld [vmem:[#allocation6 + $0x958] sm:$0xff]
    %v1548 = vld [vmem:[#allocation6 + $0x960] sm:$0xff]
    %v1549 = vld [vmem:[#allocation6 + $0x968] sm:$0xff]
    %v1550 = vld [vmem:[#allocation6 + $0x970] sm:$0xff]
    %v1551 = vld [vmem:[#allocation6 + $0x978] sm:$0xff]
    %v1552 = vld [vmem:[#allocation6 + $0x980] sm:$0xff]
    %v1553 = vld [vmem:[#allocation6 + $0x988] sm:$0xff]
    %v1554 = vld [vmem:[#allocation6 + $0x990] sm:$0xff]
    %v1555 = vld [vmem:[#allocation6 + $0x998] sm:$0xff]
    %v1556 = vld [vmem:[#allocation6 + $0x9a0] sm:$0xff]
    %v1557 = vld [vmem:[#allocation6 + $0x9a8] sm:$0xff]
    %v1558 = vld [vmem:[#allocation6 + $0x9b0] sm:$0xff]
    %v1559 = vld [vmem:[#allocation6 + $0x9b8] sm:$0xff]
    %v1560 = vld [vmem:[#allocation6 + $0x9c0] sm:$0xff]
    %v1561 = vld [vmem:[#allocation6 + $0x9c8] sm:$0xff]
    %v1562 = vld [vmem:[#allocation6 + $0x9d0] sm:$0xff]
    %v1563 = vld [vmem:[#allocation6 + $0x9d8] sm:$0xff]
    %v1564 = vld [vmem:[#allocation6 + $0x9e0] sm:$0xff]
    %v1565 = vld [vmem:[#allocation6 + $0x9e8] sm:$0xff]
    %v1566 = vld [vmem:[#allocation6 + $0x9f0] sm:$0xff]
    %v1567 = vld [vmem:[#allocation6 + $0x9f8] sm:$0xff]
    %v1568 = vld [vmem:[#allocation6 + $0xa00] sm:$0xff]
    %v1569 = vld [vmem:[#allocation6 + $0xa08] sm:$0xff]
    %v1570 = vld [vmem:[#allocation6 + $0xa10] sm:$0xff]
    %v1571 = vld [vmem:[#allocation6 + $0xa18] sm:$0xff]
    %v1572 = vld [vmem:[#allocation6 + $0xa20] sm:$0xff]
    %v1573 = vld [vmem:[#allocation6 + $0xa28] sm:$0xff]
    %v1574 = vld [vmem:[#allocation6 + $0xa30] sm:$0xff]
    %v1575 = vld [vmem:[#allocation6 + $0xa38] sm:$0xff]
    %v1576 = vld [vmem:[#allocation6 + $0xa40] sm:$0xff]
    %v1577 = vld [vmem:[#allocation6 + $0xa48] sm:$0xff]
    %v1578 = vld [vmem:[#allocation6 + $0xa50] sm:$0xff]
    %v1579 = vld [vmem:[#allocation6 + $0xa58] sm:$0xff]
    %v1580 = vld [vmem:[#allocation6 + $0xa60] sm:$0xff]
    %v1581 = vld [vmem:[#allocation6 + $0xa68] sm:$0xff]
    %v1582 = vld [vmem:[#allocation6 + $0xa70] sm:$0xff]
    %v1583 = vld [vmem:[#allocation6 + $0xa78] sm:$0xff]
    %v1584 = vld [vmem:[#allocation6 + $0xa80] sm:$0xff]
    %v1585 = vld [vmem:[#allocation6 + $0xa88] sm:$0xff]
    %v1586 = vld [vmem:[#allocation6 + $0xa90] sm:$0xff]
    %v1587 = vld [vmem:[#allocation6 + $0xa98] sm:$0xff]
    %v1588 = vld [vmem:[#allocation6 + $0xaa0] sm:$0xff]
    %v1589 = vld [vmem:[#allocation6 + $0xaa8] sm:$0xff]
    %v1590 = vld [vmem:[#allocation6 + $0xab0] sm:$0xff]
    %v1591 = vld [vmem:[#allocation6 + $0xab8] sm:$0xff]
    %v1592 = vld [vmem:[#allocation6 + $0xac0] sm:$0xff]
    %v1593 = vld [vmem:[#allocation6 + $0xac8] sm:$0xff]
    %v1594 = vld [vmem:[#allocation6 + $0xad0] sm:$0xff]
    %v1595 = vld [vmem:[#allocation6 + $0xad8] sm:$0xff]
    %v1596 = vld [vmem:[#allocation6 + $0xae0] sm:$0xff]
    %v1597 = vld [vmem:[#allocation6 + $0xae8] sm:$0xff]
    %v1598 = vld [vmem:[#allocation6 + $0xaf0] sm:$0xff]
    %v1599 = vld [vmem:[#allocation6 + $0xaf8] sm:$0xff]
    %v1600 = vld [vmem:[#allocation6 + $0xb00] sm:$0xff]
    %v1601 = vld [vmem:[#allocation6 + $0xb08] sm:$0xff]
    %v1602 = vld [vmem:[#allocation6 + $0xb10] sm:$0xff]
    %v1603 = vld [vmem:[#allocation6 + $0xb18] sm:$0xff]
    %v1604 = vld [vmem:[#allocation6 + $0xb20] sm:$0xff]
    %v1605 = vld [vmem:[#allocation6 + $0xb28] sm:$0xff]
    %v1606 = vld [vmem:[#allocation6 + $0xb30] sm:$0xff]
    %v1607 = vld [vmem:[#allocation6 + $0xb38] sm:$0xff]
    %v1608 = vld [vmem:[#allocation6 + $0xb40] sm:$0xff]
    %v1609 = vld [vmem:[#allocation6 + $0xb48] sm:$0xff]
    %v1610 = vld [vmem:[#allocation6 + $0xb50] sm:$0xff]
    %v1611 = vld [vmem:[#allocation6 + $0xb58] sm:$0xff]
    %v1612 = vld [vmem:[#allocation6 + $0xb60] sm:$0xff]
    %v1613 = vld [vmem:[#allocation6 + $0xb68] sm:$0xff]
    %v1614 = vld [vmem:[#allocation6 + $0xb70] sm:$0xff]
    %v1615 = vld [vmem:[#allocation6 + $0xb78] sm:$0xff]
    %v1616 = vld [vmem:[#allocation6 + $0xb80] sm:$0xff]
    %v1617 = vld [vmem:[#allocation6 + $0xb88] sm:$0xff]
    %v1618 = vld [vmem:[#allocation6 + $0xb90] sm:$0xff]
    %v1619 = vld [vmem:[#allocation6 + $0xb98] sm:$0xff]
    %v1620 = vld [vmem:[#allocation6 + $0xba0] sm:$0xff]
    %v1621 = vld [vmem:[#allocation6 + $0xba8] sm:$0xff]
    %v1622 = vld [vmem:[#allocation6 + $0xbb0] sm:$0xff]
    %v1623 = vld [vmem:[#allocation6 + $0xbb8] sm:$0xff]
    %v1624 = vld [vmem:[#allocation6 + $0xbc0] sm:$0xff]
    %v1625 = vld [vmem:[#allocation6 + $0xbc8] sm:$0xff]
    %v1626 = vld [vmem:[#allocation6 + $0xbd0] sm:$0xff]
    %v1627 = vld [vmem:[#allocation6 + $0xbd8] sm:$0xff]
    %v1628 = vld [vmem:[#allocation6 + $0xbe0] sm:$0xff]
    %v1629 = vld [vmem:[#allocation6 + $0xbe8] sm:$0xff]
    %v1630 = vld [vmem:[#allocation6 + $0xbf0] sm:$0xff]
    %v1631 = vld [vmem:[#allocation6 + $0xbf8] sm:$0xff]
    %v1632 = vld [vmem:[#allocation6 + $0xc00] sm:$0xff]
    %v1633 = vld [vmem:[#allocation6 + $0xc08] sm:$0xff]
    %v1634 = vld [vmem:[#allocation6 + $0xc10] sm:$0xff]
    %v1635 = vld [vmem:[#allocation6 + $0xc18] sm:$0xff]
    %v1636 = vld [vmem:[#allocation6 + $0xc20] sm:$0xff]
    %v1637 = vld [vmem:[#allocation6 + $0xc28] sm:$0xff]
    %v1638 = vld [vmem:[#allocation6 + $0xc30] sm:$0xff]
    %v1639 = vld [vmem:[#allocation6 + $0xc38] sm:$0xff]
    %v1640 = vld [vmem:[#allocation6 + $0xc40] sm:$0xff]
    %v1641 = vld [vmem:[#allocation6 + $0xc48] sm:$0xff]
    %v1642 = vld [vmem:[#allocation6 + $0xc50] sm:$0xff]
    %v1643 = vld [vmem:[#allocation6 + $0xc58] sm:$0xff]
    %v1644 = vld [vmem:[#allocation6 + $0xc60] sm:$0xff]
    %v1645 = vld [vmem:[#allocation6 + $0xc68] sm:$0xff]
    %v1646 = vld [vmem:[#allocation6 + $0xc70] sm:$0xff]
    %v1647 = vld [vmem:[#allocation6 + $0xc78] sm:$0xff]
    %v1648 = vld [vmem:[#allocation6 + $0xc80] sm:$0xff]
    %v1649 = vld [vmem:[#allocation6 + $0xc88] sm:$0xff]
    %v1650 = vld [vmem:[#allocation6 + $0xc90] sm:$0xff]
    %v1651 = vld [vmem:[#allocation6 + $0xc98] sm:$0xff]
    %v1652 = vld [vmem:[#allocation6 + $0xca0] sm:$0xff]
    %v1653 = vld [vmem:[#allocation6 + $0xca8] sm:$0xff]
    %v1654 = vld [vmem:[#allocation6 + $0xcb0] sm:$0xff]
    %v1655 = vld [vmem:[#allocation6 + $0xcb8] sm:$0xff]
    %v1656 = vld [vmem:[#allocation6 + $0xcc0] sm:$0xff]
    %v1657 = vld [vmem:[#allocation6 + $0xcc8] sm:$0xff]
    %v1658 = vld [vmem:[#allocation6 + $0xcd0] sm:$0xff]
    %v1659 = vld [vmem:[#allocation6 + $0xcd8] sm:$0xff]
    %v1660 = vld [vmem:[#allocation6 + $0xce0] sm:$0xff]
    %v1661 = vld [vmem:[#allocation6 + $0xce8] sm:$0xff]
    %v1662 = vld [vmem:[#allocation6 + $0xcf0] sm:$0xff]
    %v1663 = vld [vmem:[#allocation6 + $0xcf8] sm:$0xff]
    %v1664 = vld [vmem:[#allocation6 + $0xd00] sm:$0xff]
    %v1665 = vld [vmem:[#allocation6 + $0xd08] sm:$0xff]
    %v1666 = vld [vmem:[#allocation6 + $0xd10] sm:$0xff]
    %v1667 = vld [vmem:[#allocation6 + $0xd18] sm:$0xff]
    %v1668 = vld [vmem:[#allocation6 + $0xd20] sm:$0xff]
    %v1669 = vld [vmem:[#allocation6 + $0xd28] sm:$0xff]
    %v1670 = vld [vmem:[#allocation6 + $0xd30] sm:$0xff]
    %v1671 = vld [vmem:[#allocation6 + $0xd38] sm:$0xff]
    %v1672 = vld [vmem:[#allocation6 + $0xd40] sm:$0xff]
    %v1673 = vld [vmem:[#allocation6 + $0xd48] sm:$0xff]
    %v1674 = vld [vmem:[#allocation6 + $0xd50] sm:$0xff]
    %v1675 = vld [vmem:[#allocation6 + $0xd58] sm:$0xff]
    %v1676 = vld [vmem:[#allocation6 + $0xd60] sm:$0xff]
    %v1677 = vld [vmem:[#allocation6 + $0xd68] sm:$0xff]
    %v1678 = vld [vmem:[#allocation6 + $0xd70] sm:$0xff]
    %v1679 = vld [vmem:[#allocation6 + $0xd78] sm:$0xff]
    %v1680 = vld [vmem:[#allocation6 + $0xd80] sm:$0xff]
    %v1681 = vld [vmem:[#allocation6 + $0xd88] sm:$0xff]
    %v1682 = vld [vmem:[#allocation6 + $0xd90] sm:$0xff]
    %v1683 = vld [vmem:[#allocation6 + $0xd98] sm:$0xff]
    %v1684 = vld [vmem:[#allocation6 + $0xda0] sm:$0xff]
    %v1685 = vld [vmem:[#allocation6 + $0xda8] sm:$0xff]
    %v1686 = vld [vmem:[#allocation6 + $0xdb0] sm:$0xff]
    %v1687 = vld [vmem:[#allocation6 + $0xdb8] sm:$0xff]
    %v1688 = vld [vmem:[#allocation6 + $0xdc0] sm:$0xff]
    %v1689 = vld [vmem:[#allocation6 + $0xdc8] sm:$0xff]
    %v1690 = vld [vmem:[#allocation6 + $0xdd0] sm:$0xff]
    %v1691 = vld [vmem:[#allocation6 + $0xdd8] sm:$0xff]
    %v1692 = vld [vmem:[#allocation6 + $0xde0] sm:$0xff]
    %v1693 = vld [vmem:[#allocation6 + $0xde8] sm:$0xff]
    %v1694 = vld [vmem:[#allocation6 + $0xdf0] sm:$0xff]
    %v1695 = vld [vmem:[#allocation6 + $0xdf8] sm:$0xff]
    %v1696 = vld [vmem:[#allocation6 + $0xe00] sm:$0xff]
    %v1697 = vld [vmem:[#allocation6 + $0xe08] sm:$0xff]
    %v1698 = vld [vmem:[#allocation6 + $0xe10] sm:$0xff]
    %v1699 = vld [vmem:[#allocation6 + $0xe18] sm:$0xff]
    %v1700 = vld [vmem:[#allocation6 + $0xe20] sm:$0xff]
    %v1701 = vld [vmem:[#allocation6 + $0xe28] sm:$0xff]
    %v1702 = vld [vmem:[#allocation6 + $0xe30] sm:$0xff]
    %v1703 = vld [vmem:[#allocation6 + $0xe38] sm:$0xff]
    %v1704 = vld [vmem:[#allocation6 + $0xe40] sm:$0xff]
    %v1705 = vld [vmem:[#allocation6 + $0xe48] sm:$0xff]
    %v1706 = vld [vmem:[#allocation6 + $0xe50] sm:$0xff]
    %v1707 = vld [vmem:[#allocation6 + $0xe58] sm:$0xff]
    %v1708 = vld [vmem:[#allocation6 + $0xe60] sm:$0xff]
    %v1709 = vld [vmem:[#allocation6 + $0xe68] sm:$0xff]
    %v1710 = vld [vmem:[#allocation6 + $0xe70] sm:$0xff]
    %v1711 = vld [vmem:[#allocation6 + $0xe78] sm:$0xff]
    %v1712 = vld [vmem:[#allocation6 + $0xe80] sm:$0xff]
    %v1713 = vld [vmem:[#allocation6 + $0xe88] sm:$0xff]
    %v1714 = vld [vmem:[#allocation6 + $0xe90] sm:$0xff]
    %v1715 = vld [vmem:[#allocation6 + $0xe98] sm:$0xff]
    %v1716 = vld [vmem:[#allocation6 + $0xea0] sm:$0xff]
    %v1717 = vld [vmem:[#allocation6 + $0xea8] sm:$0xff]
    %v1718 = vld [vmem:[#allocation6 + $0xeb0] sm:$0xff]
    %v1719 = vld [vmem:[#allocation6 + $0xeb8] sm:$0xff]
    %v1720 = vld [vmem:[#allocation6 + $0xec0] sm:$0xff]
    %v1721 = vld [vmem:[#allocation6 + $0xec8] sm:$0xff]
    %v1722 = vld [vmem:[#allocation6 + $0xed0] sm:$0xff]
    %v1723 = vld [vmem:[#allocation6 + $0xed8] sm:$0xff]
    %v1724 = vld [vmem:[#allocation6 + $0xee0] sm:$0xff]
    %v1725 = vld [vmem:[#allocation6 + $0xee8] sm:$0xff]
    %v1726 = vld [vmem:[#allocation6 + $0xef0] sm:$0xff]
    %v1727 = vld [vmem:[#allocation6 + $0xef8] sm:$0xff]
    %v1728 = vld [vmem:[#allocation6 + $0xf00] sm:$0xff]
    %v1729 = vld [vmem:[#allocation6 + $0xf08] sm:$0xff]
    %v1730 = vld [vmem:[#allocation6 + $0xf10] sm:$0xff]
    %v1731 = vld [vmem:[#allocation6 + $0xf18] sm:$0xff]
    %v1732 = vld [vmem:[#allocation6 + $0xf20] sm:$0xff]
    %v1733 = vld [vmem:[#allocation6 + $0xf28] sm:$0xff]
    %v1734 = vld [vmem:[#allocation6 + $0xf30] sm:$0xff]
    %v1735 = vld [vmem:[#allocation6 + $0xf38] sm:$0xff]
    %v1736 = vld [vmem:[#allocation6 + $0xf40] sm:$0xff]
    %v1737 = vld [vmem:[#allocation6 + $0xf48] sm:$0xff]
    %v1738 = vld [vmem:[#allocation6 + $0xf50] sm:$0xff]
    %v1739 = vld [vmem:[#allocation6 + $0xf58] sm:$0xff]
    %v1740 = vld [vmem:[#allocation6 + $0xf60] sm:$0xff]
    %v1741 = vld [vmem:[#allocation6 + $0xf68] sm:$0xff]
    %v1742 = vld [vmem:[#allocation6 + $0xf70] sm:$0xff]
    %v1743 = vld [vmem:[#allocation6 + $0xf78] sm:$0xff]
    %v1744 = vld [vmem:[#allocation6 + $0xf80] sm:$0xff]
    %v1745 = vld [vmem:[#allocation6 + $0xf88] sm:$0xff]
    %v1746 = vld [vmem:[#allocation6 + $0xf90] sm:$0xff]
    %v1747 = vld [vmem:[#allocation6 + $0xf98] sm:$0xff]
    %v1748 = vld [vmem:[#allocation6 + $0xfa0] sm:$0xff]
    %v1749 = vld [vmem:[#allocation6 + $0xfa8] sm:$0xff]
    %v1750 = vld [vmem:[#allocation6 + $0xfb0] sm:$0xff]
    %v1751 = vld [vmem:[#allocation6 + $0xfb8] sm:$0xff]
    %v1752 = vld [vmem:[#allocation6 + $0xfc0] sm:$0xff]
    %v1753 = vld [vmem:[#allocation6 + $0xfc8] sm:$0xff]
    %v1754 = vld [vmem:[#allocation6 + $0xfd0] sm:$0xff]
    %v1755 = vld [vmem:[#allocation6 + $0xfd8] sm:$0xff]
    %v1756 = vld [vmem:[#allocation6 + $0xfe0] sm:$0xff]
    %v1757 = vld [vmem:[#allocation6 + $0xfe8] sm:$0xff]
    %v1758 = vld [vmem:[#allocation6 + $0xff0] sm:$0xff]
    %v1759 = vld [vmem:[#allocation6 + $0xff8] sm:$0xff]
    %v1760 = vld [vmem:[#allocation7] sm:$0xff]
    %v1762 = vperm.slane %v1760, 0
    %v1763 = vperm.slane %v1760, 1
    %v1764 = vperm.slane %v1760, 2
    %v1765 = vperm.slane %v1760, 3
    %v1766 = vperm.slane %v1760, 4
    %v1767 = vperm.slane %v1760, 5
    %v1768 = vperm.slane %v1760, 6
    %v1769 = vperm.slane %v1760, 7
    %v2290 = vunpack.c.l.b16 %v1248
    %v2291 = vunpack.c.h.b16 %v1248
    %v2292 = vunpack.c.l.b16 %v1249
    %v2293 = vunpack.c.h.b16 %v1249
    %v2294 = vunpack.c.l.b16 %v1250
    %v2295 = vunpack.c.h.b16 %v1250
    %v2296 = vunpack.c.l.b16 %v1251
    %v2297 = vunpack.c.h.b16 %v1251
    %v2298 = vunpack.c.l.b16 %v1252
    %v2299 = vunpack.c.h.b16 %v1252
    %v2300 = vunpack.c.l.b16 %v1253
    %v2301 = vunpack.c.h.b16 %v1253
    %v2302 = vunpack.c.l.b16 %v1254
    %v2303 = vunpack.c.h.b16 %v1254
    %v2304 = vunpack.c.l.b16 %v1255
    %v2305 = vunpack.c.h.b16 %v1255
    %v2306 = vunpack.c.l.b16 %v1256
    %v2307 = vunpack.c.h.b16 %v1256
    %v2308 = vunpack.c.l.b16 %v1257
    %v2309 = vunpack.c.h.b16 %v1257
    %v2310 = vunpack.c.l.b16 %v1258
    %v2311 = vunpack.c.h.b16 %v1258
    %v2312 = vunpack.c.l.b16 %v1259
    %v2313 = vunpack.c.h.b16 %v1259
    %v2314 = vunpack.c.l.b16 %v1260
    %v2315 = vunpack.c.h.b16 %v1260
    %v2316 = vunpack.c.l.b16 %v1261
    %v2317 = vunpack.c.h.b16 %v1261
    %v2318 = vunpack.c.l.b16 %v1262
    %v2319 = vunpack.c.h.b16 %v1262
    %v2320 = vunpack.c.l.b16 %v1263
    %v2321 = vunpack.c.h.b16 %v1263
    %v2322 = vunpack.c.l.b16 %v1264
    %v2323 = vunpack.c.h.b16 %v1264
    %v2324 = vunpack.c.l.b16 %v1265
    %v2325 = vunpack.c.h.b16 %v1265
    %v2326 = vunpack.c.l.b16 %v1266
    %v2327 = vunpack.c.h.b16 %v1266
    %v2328 = vunpack.c.l.b16 %v1267
    %v2329 = vunpack.c.h.b16 %v1267
    %v2330 = vunpack.c.l.b16 %v1268
    %v2331 = vunpack.c.h.b16 %v1268
    %v2332 = vunpack.c.l.b16 %v1269
    %v2333 = vunpack.c.h.b16 %v1269
    %v2334 = vunpack.c.l.b16 %v1270
    %v2335 = vunpack.c.h.b16 %v1270
    %v2336 = vunpack.c.l.b16 %v1271
    %v2337 = vunpack.c.h.b16 %v1271
    %v2338 = vunpack.c.l.b16 %v1272
    %v2339 = vunpack.c.h.b16 %v1272
    %v2340 = vunpack.c.l.b16 %v1273
    %v2341 = vunpack.c.h.b16 %v1273
    %v2342 = vunpack.c.l.b16 %v1274
    %v2343 = vunpack.c.h.b16 %v1274
    %v2344 = vunpack.c.l.b16 %v1275
    %v2345 = vunpack.c.h.b16 %v1275
    %v2346 = vunpack.c.l.b16 %v1276
    %v2347 = vunpack.c.h.b16 %v1276
    %v2348 = vunpack.c.l.b16 %v1277
    %v2349 = vunpack.c.h.b16 %v1277
    %v2350 = vunpack.c.l.b16 %v1278
    %v2351 = vunpack.c.h.b16 %v1278
    %v2352 = vunpack.c.l.b16 %v1279
    %v2353 = vunpack.c.h.b16 %v1279
    %v2354 = vunpack.c.l.b16 %v1280
    %v2355 = vunpack.c.h.b16 %v1280
    %v2356 = vunpack.c.l.b16 %v1281
    %v2357 = vunpack.c.h.b16 %v1281
    %v2358 = vunpack.c.l.b16 %v1282
    %v2359 = vunpack.c.h.b16 %v1282
    %v2360 = vunpack.c.l.b16 %v1283
    %v2361 = vunpack.c.h.b16 %v1283
    %v2362 = vunpack.c.l.b16 %v1284
    %v2363 = vunpack.c.h.b16 %v1284
    %v2364 = vunpack.c.l.b16 %v1285
    %v2365 = vunpack.c.h.b16 %v1285
    %v2366 = vunpack.c.l.b16 %v1286
    %v2367 = vunpack.c.h.b16 %v1286
    %v2368 = vunpack.c.l.b16 %v1287
    %v2369 = vunpack.c.h.b16 %v1287
    %v2370 = vunpack.c.l.b16 %v1288
    %v2371 = vunpack.c.h.b16 %v1288
    %v2372 = vunpack.c.l.b16 %v1289
    %v2373 = vunpack.c.h.b16 %v1289
    %v2374 = vunpack.c.l.b16 %v1290
    %v2375 = vunpack.c.h.b16 %v1290
    %v2376 = vunpack.c.l.b16 %v1291
    %v2377 = vunpack.c.h.b16 %v1291
    %v2378 = vunpack.c.l.b16 %v1292
    %v2379 = vunpack.c.h.b16 %v1292
    %v2380 = vunpack.c.l.b16 %v1293
    %v2381 = vunpack.c.h.b16 %v1293
    %v2382 = vunpack.c.l.b16 %v1294
    %v2383 = vunpack.c.h.b16 %v1294
    %v2384 = vunpack.c.l.b16 %v1295
    %v2385 = vunpack.c.h.b16 %v1295
    %v2386 = vunpack.c.l.b16 %v1296
    %v2387 = vunpack.c.h.b16 %v1296
    %v2388 = vunpack.c.l.b16 %v1297
    %v2389 = vunpack.c.h.b16 %v1297
    %v2390 = vunpack.c.l.b16 %v1298
    %v2391 = vunpack.c.h.b16 %v1298
    %v2392 = vunpack.c.l.b16 %v1299
    %v2393 = vunpack.c.h.b16 %v1299
    %v2394 = vunpack.c.l.b16 %v1300
    %v2395 = vunpack.c.h.b16 %v1300
    %v2396 = vunpack.c.l.b16 %v1301
    %v2397 = vunpack.c.h.b16 %v1301
    %v2398 = vunpack.c.l.b16 %v1302
    %v2399 = vunpack.c.h.b16 %v1302
    %v2400 = vunpack.c.l.b16 %v1303
    %v2401 = vunpack.c.h.b16 %v1303
    %v2402 = vunpack.c.l.b16 %v1304
    %v2403 = vunpack.c.h.b16 %v1304
    %v2404 = vunpack.c.l.b16 %v1305
    %v2405 = vunpack.c.h.b16 %v1305
    %v2406 = vunpack.c.l.b16 %v1306
    %v2407 = vunpack.c.h.b16 %v1306
    %v2408 = vunpack.c.l.b16 %v1307
    %v2409 = vunpack.c.h.b16 %v1307
    %v2410 = vunpack.c.l.b16 %v1308
    %v2411 = vunpack.c.h.b16 %v1308
    %v2412 = vunpack.c.l.b16 %v1309
    %v2413 = vunpack.c.h.b16 %v1309
    %v2414 = vunpack.c.l.b16 %v1310
    %v2415 = vunpack.c.h.b16 %v1310
    %v2416 = vunpack.c.l.b16 %v1311
    %v2417 = vunpack.c.h.b16 %v1311
    %v2418 = vunpack.c.l.b16 %v1312
    %v2419 = vunpack.c.h.b16 %v1312
    %v2420 = vunpack.c.l.b16 %v1313
    %v2421 = vunpack.c.h.b16 %v1313
    %v2422 = vunpack.c.l.b16 %v1314
    %v2423 = vunpack.c.h.b16 %v1314
    %v2424 = vunpack.c.l.b16 %v1315
    %v2425 = vunpack.c.h.b16 %v1315
    %v2426 = vunpack.c.l.b16 %v1316
    %v2427 = vunpack.c.h.b16 %v1316
    %v2428 = vunpack.c.l.b16 %v1317
    %v2429 = vunpack.c.h.b16 %v1317
    %v2430 = vunpack.c.l.b16 %v1318
    %v2431 = vunpack.c.h.b16 %v1318
    %v2432 = vunpack.c.l.b16 %v1319
    %v2433 = vunpack.c.h.b16 %v1319
    %v2434 = vunpack.c.l.b16 %v1320
    %v2435 = vunpack.c.h.b16 %v1320
    %v2436 = vunpack.c.l.b16 %v1321
    %v2437 = vunpack.c.h.b16 %v1321
    %v2438 = vunpack.c.l.b16 %v1322
    %v2439 = vunpack.c.h.b16 %v1322
    %v2440 = vunpack.c.l.b16 %v1323
    %v2441 = vunpack.c.h.b16 %v1323
    %v2442 = vunpack.c.l.b16 %v1324
    %v2443 = vunpack.c.h.b16 %v1324
    %v2444 = vunpack.c.l.b16 %v1325
    %v2445 = vunpack.c.h.b16 %v1325
    %v2446 = vunpack.c.l.b16 %v1326
    %v2447 = vunpack.c.h.b16 %v1326
    %v2448 = vunpack.c.l.b16 %v1327
    %v2449 = vunpack.c.h.b16 %v1327
    %v2450 = vunpack.c.l.b16 %v1328
    %v2451 = vunpack.c.h.b16 %v1328
    %v2452 = vunpack.c.l.b16 %v1329
    %v2453 = vunpack.c.h.b16 %v1329
    %v2454 = vunpack.c.l.b16 %v1330
    %v2455 = vunpack.c.h.b16 %v1330
    %v2456 = vunpack.c.l.b16 %v1331
    %v2457 = vunpack.c.h.b16 %v1331
    %v2458 = vunpack.c.l.b16 %v1332
    %v2459 = vunpack.c.h.b16 %v1332
    %v2460 = vunpack.c.l.b16 %v1333
    %v2461 = vunpack.c.h.b16 %v1333
    %v2462 = vunpack.c.l.b16 %v1334
    %v2463 = vunpack.c.h.b16 %v1334
    %v2464 = vunpack.c.l.b16 %v1335
    %v2465 = vunpack.c.h.b16 %v1335
    %v2466 = vunpack.c.l.b16 %v1336
    %v2467 = vunpack.c.h.b16 %v1336
    %v2468 = vunpack.c.l.b16 %v1337
    %v2469 = vunpack.c.h.b16 %v1337
    %v2470 = vunpack.c.l.b16 %v1338
    %v2471 = vunpack.c.h.b16 %v1338
    %v2472 = vunpack.c.l.b16 %v1339
    %v2473 = vunpack.c.h.b16 %v1339
    %v2474 = vunpack.c.l.b16 %v1340
    %v2475 = vunpack.c.h.b16 %v1340
    %v2476 = vunpack.c.l.b16 %v1341
    %v2477 = vunpack.c.h.b16 %v1341
    %v2478 = vunpack.c.l.b16 %v1342
    %v2479 = vunpack.c.h.b16 %v1342
    %v2480 = vunpack.c.l.b16 %v1343
    %v2481 = vunpack.c.h.b16 %v1343
    %v2482 = vunpack.c.l.b16 %v1344
    %v2483 = vunpack.c.h.b16 %v1344
    %v2484 = vunpack.c.l.b16 %v1345
    %v2485 = vunpack.c.h.b16 %v1345
    %v2486 = vunpack.c.l.b16 %v1346
    %v2487 = vunpack.c.h.b16 %v1346
    %v2488 = vunpack.c.l.b16 %v1347
    %v2489 = vunpack.c.h.b16 %v1347
    %v2490 = vunpack.c.l.b16 %v1348
    %v2491 = vunpack.c.h.b16 %v1348
    %v2492 = vunpack.c.l.b16 %v1349
    %v2493 = vunpack.c.h.b16 %v1349
    %v2494 = vunpack.c.l.b16 %v1350
    %v2495 = vunpack.c.h.b16 %v1350
    %v2496 = vunpack.c.l.b16 %v1351
    %v2497 = vunpack.c.h.b16 %v1351
    %v2498 = vunpack.c.l.b16 %v1352
    %v2499 = vunpack.c.h.b16 %v1352
    %v2500 = vunpack.c.l.b16 %v1353
    %v2501 = vunpack.c.h.b16 %v1353
    %v2502 = vunpack.c.l.b16 %v1354
    %v2503 = vunpack.c.h.b16 %v1354
    %v2504 = vunpack.c.l.b16 %v1355
    %v2505 = vunpack.c.h.b16 %v1355
    %v2506 = vunpack.c.l.b16 %v1356
    %v2507 = vunpack.c.h.b16 %v1356
    %v2508 = vunpack.c.l.b16 %v1357
    %v2509 = vunpack.c.h.b16 %v1357
    %v2510 = vunpack.c.l.b16 %v1358
    %v2511 = vunpack.c.h.b16 %v1358
    %v2512 = vunpack.c.l.b16 %v1359
    %v2513 = vunpack.c.h.b16 %v1359
    %v2514 = vunpack.c.l.b16 %v1360
    %v2515 = vunpack.c.h.b16 %v1360
    %v2516 = vunpack.c.l.b16 %v1361
    %v2517 = vunpack.c.h.b16 %v1361
    %v2518 = vunpack.c.l.b16 %v1362
    %v2519 = vunpack.c.h.b16 %v1362
    %v2520 = vunpack.c.l.b16 %v1363
    %v2521 = vunpack.c.h.b16 %v1363
    %v2522 = vunpack.c.l.b16 %v1364
    %v2523 = vunpack.c.h.b16 %v1364
    %v2524 = vunpack.c.l.b16 %v1365
    %v2525 = vunpack.c.h.b16 %v1365
    %v2526 = vunpack.c.l.b16 %v1366
    %v2527 = vunpack.c.h.b16 %v1366
    %v2528 = vunpack.c.l.b16 %v1367
    %v2529 = vunpack.c.h.b16 %v1367
    %v2530 = vunpack.c.l.b16 %v1368
    %v2531 = vunpack.c.h.b16 %v1368
    %v2532 = vunpack.c.l.b16 %v1369
    %v2533 = vunpack.c.h.b16 %v1369
    %v2534 = vunpack.c.l.b16 %v1370
    %v2535 = vunpack.c.h.b16 %v1370
    %v2536 = vunpack.c.l.b16 %v1371
    %v2537 = vunpack.c.h.b16 %v1371
    %v2538 = vunpack.c.l.b16 %v1372
    %v2539 = vunpack.c.h.b16 %v1372
    %v2540 = vunpack.c.l.b16 %v1373
    %v2541 = vunpack.c.h.b16 %v1373
    %v2542 = vunpack.c.l.b16 %v1374
    %v2543 = vunpack.c.h.b16 %v1374
    %v2544 = vunpack.c.l.b16 %v1375
    %v2545 = vunpack.c.h.b16 %v1375
    %v2546 = vunpack.c.l.b16 %v1376
    %v2547 = vunpack.c.h.b16 %v1376
    %v2548 = vunpack.c.l.b16 %v1377
    %v2549 = vunpack.c.h.b16 %v1377
    %v2550 = vunpack.c.l.b16 %v1378
    %v2551 = vunpack.c.h.b16 %v1378
    %v2552 = vunpack.c.l.b16 %v1379
    %v2553 = vunpack.c.h.b16 %v1379
    %v2554 = vunpack.c.l.b16 %v1380
    %v2555 = vunpack.c.h.b16 %v1380
    %v2556 = vunpack.c.l.b16 %v1381
    %v2557 = vunpack.c.h.b16 %v1381
    %v2558 = vunpack.c.l.b16 %v1382
    %v2559 = vunpack.c.h.b16 %v1382
    %v2560 = vunpack.c.l.b16 %v1383
    %v2561 = vunpack.c.h.b16 %v1383
    %v2562 = vunpack.c.l.b16 %v1384
    %v2563 = vunpack.c.h.b16 %v1384
    %v2564 = vunpack.c.l.b16 %v1385
    %v2565 = vunpack.c.h.b16 %v1385
    %v2566 = vunpack.c.l.b16 %v1386
    %v2567 = vunpack.c.h.b16 %v1386
    %v2568 = vunpack.c.l.b16 %v1387
    %v2569 = vunpack.c.h.b16 %v1387
    %v2570 = vunpack.c.l.b16 %v1388
    %v2571 = vunpack.c.h.b16 %v1388
    %v2572 = vunpack.c.l.b16 %v1389
    %v2573 = vunpack.c.h.b16 %v1389
    %v2574 = vunpack.c.l.b16 %v1390
    %v2575 = vunpack.c.h.b16 %v1390
    %v2576 = vunpack.c.l.b16 %v1391
    %v2577 = vunpack.c.h.b16 %v1391
    %v2578 = vunpack.c.l.b16 %v1392
    %v2579 = vunpack.c.h.b16 %v1392
    %v2580 = vunpack.c.l.b16 %v1393
    %v2581 = vunpack.c.h.b16 %v1393
    %v2582 = vunpack.c.l.b16 %v1394
    %v2583 = vunpack.c.h.b16 %v1394
    %v2584 = vunpack.c.l.b16 %v1395
    %v2585 = vunpack.c.h.b16 %v1395
    %v2586 = vunpack.c.l.b16 %v1396
    %v2587 = vunpack.c.h.b16 %v1396
    %v2588 = vunpack.c.l.b16 %v1397
    %v2589 = vunpack.c.h.b16 %v1397
    %v2590 = vunpack.c.l.b16 %v1398
    %v2591 = vunpack.c.h.b16 %v1398
    %v2592 = vunpack.c.l.b16 %v1399
    %v2593 = vunpack.c.h.b16 %v1399
    %v2594 = vunpack.c.l.b16 %v1400
    %v2595 = vunpack.c.h.b16 %v1400
    %v2596 = vunpack.c.l.b16 %v1401
    %v2597 = vunpack.c.h.b16 %v1401
    %v2598 = vunpack.c.l.b16 %v1402
    %v2599 = vunpack.c.h.b16 %v1402
    %v2600 = vunpack.c.l.b16 %v1403
    %v2601 = vunpack.c.h.b16 %v1403
    %v2602 = vunpack.c.l.b16 %v1404
    %v2603 = vunpack.c.h.b16 %v1404
    %v2604 = vunpack.c.l.b16 %v1405
    %v2605 = vunpack.c.h.b16 %v1405
    %v2606 = vunpack.c.l.b16 %v1406
    %v2607 = vunpack.c.h.b16 %v1406
    %v2608 = vunpack.c.l.b16 %v1407
    %v2609 = vunpack.c.h.b16 %v1407
    %v2610 = vunpack.c.l.b16 %v1408
    %v2611 = vunpack.c.h.b16 %v1408
    %v2612 = vunpack.c.l.b16 %v1409
    %v2613 = vunpack.c.h.b16 %v1409
    %v2614 = vunpack.c.l.b16 %v1410
    %v2615 = vunpack.c.h.b16 %v1410
    %v2616 = vunpack.c.l.b16 %v1411
    %v2617 = vunpack.c.h.b16 %v1411
    %v2618 = vunpack.c.l.b16 %v1412
    %v2619 = vunpack.c.h.b16 %v1412
    %v2620 = vunpack.c.l.b16 %v1413
    %v2621 = vunpack.c.h.b16 %v1413
    %v2622 = vunpack.c.l.b16 %v1414
    %v2623 = vunpack.c.h.b16 %v1414
    %v2624 = vunpack.c.l.b16 %v1415
    %v2625 = vunpack.c.h.b16 %v1415
    %v2626 = vunpack.c.l.b16 %v1416
    %v2627 = vunpack.c.h.b16 %v1416
    %v2628 = vunpack.c.l.b16 %v1417
    %v2629 = vunpack.c.h.b16 %v1417
    %v2630 = vunpack.c.l.b16 %v1418
    %v2631 = vunpack.c.h.b16 %v1418
    %v2632 = vunpack.c.l.b16 %v1419
    %v2633 = vunpack.c.h.b16 %v1419
    %v2634 = vunpack.c.l.b16 %v1420
    %v2635 = vunpack.c.h.b16 %v1420
    %v2636 = vunpack.c.l.b16 %v1421
    %v2637 = vunpack.c.h.b16 %v1421
    %v2638 = vunpack.c.l.b16 %v1422
    %v2639 = vunpack.c.h.b16 %v1422
    %v2640 = vunpack.c.l.b16 %v1423
    %v2641 = vunpack.c.h.b16 %v1423
    %v2642 = vunpack.c.l.b16 %v1424
    %v2643 = vunpack.c.h.b16 %v1424
    %v2644 = vunpack.c.l.b16 %v1425
    %v2645 = vunpack.c.h.b16 %v1425
    %v2646 = vunpack.c.l.b16 %v1426
    %v2647 = vunpack.c.h.b16 %v1426
    %v2648 = vunpack.c.l.b16 %v1427
    %v2649 = vunpack.c.h.b16 %v1427
    %v2650 = vunpack.c.l.b16 %v1428
    %v2651 = vunpack.c.h.b16 %v1428
    %v2652 = vunpack.c.l.b16 %v1429
    %v2653 = vunpack.c.h.b16 %v1429
    %v2654 = vunpack.c.l.b16 %v1430
    %v2655 = vunpack.c.h.b16 %v1430
    %v2656 = vunpack.c.l.b16 %v1431
    %v2657 = vunpack.c.h.b16 %v1431
    %v2658 = vunpack.c.l.b16 %v1432
    %v2659 = vunpack.c.h.b16 %v1432
    %v2660 = vunpack.c.l.b16 %v1433
    %v2661 = vunpack.c.h.b16 %v1433
    %v2662 = vunpack.c.l.b16 %v1434
    %v2663 = vunpack.c.h.b16 %v1434
    %v2664 = vunpack.c.l.b16 %v1435
    %v2665 = vunpack.c.h.b16 %v1435
    %v2666 = vunpack.c.l.b16 %v1436
    %v2667 = vunpack.c.h.b16 %v1436
    %v2668 = vunpack.c.l.b16 %v1437
    %v2669 = vunpack.c.h.b16 %v1437
    %v2670 = vunpack.c.l.b16 %v1438
    %v2671 = vunpack.c.h.b16 %v1438
    %v2672 = vunpack.c.l.b16 %v1439
    %v2673 = vunpack.c.h.b16 %v1439
    %v2674 = vunpack.c.l.b16 %v1440
    %v2675 = vunpack.c.h.b16 %v1440
    %v2676 = vunpack.c.l.b16 %v1441
    %v2677 = vunpack.c.h.b16 %v1441
    %v2678 = vunpack.c.l.b16 %v1442
    %v2679 = vunpack.c.h.b16 %v1442
    %v2680 = vunpack.c.l.b16 %v1443
    %v2681 = vunpack.c.h.b16 %v1443
    %v2682 = vunpack.c.l.b16 %v1444
    %v2683 = vunpack.c.h.b16 %v1444
    %v2684 = vunpack.c.l.b16 %v1445
    %v2685 = vunpack.c.h.b16 %v1445
    %v2686 = vunpack.c.l.b16 %v1446
    %v2687 = vunpack.c.h.b16 %v1446
    %v2688 = vunpack.c.l.b16 %v1447
    %v2689 = vunpack.c.h.b16 %v1447
    %v2690 = vunpack.c.l.b16 %v1448
    %v2691 = vunpack.c.h.b16 %v1448
    %v2692 = vunpack.c.l.b16 %v1449
    %v2693 = vunpack.c.h.b16 %v1449
    %v2694 = vunpack.c.l.b16 %v1450
    %v2695 = vunpack.c.h.b16 %v1450
    %v2696 = vunpack.c.l.b16 %v1451
    %v2697 = vunpack.c.h.b16 %v1451
    %v2698 = vunpack.c.l.b16 %v1452
    %v2699 = vunpack.c.h.b16 %v1452
    %v2700 = vunpack.c.l.b16 %v1453
    %v2701 = vunpack.c.h.b16 %v1453
    %v2702 = vunpack.c.l.b16 %v1454
    %v2703 = vunpack.c.h.b16 %v1454
    %v2704 = vunpack.c.l.b16 %v1455
    %v2705 = vunpack.c.h.b16 %v1455
    %v2706 = vunpack.c.l.b16 %v1456
    %v2707 = vunpack.c.h.b16 %v1456
    %v2708 = vunpack.c.l.b16 %v1457
    %v2709 = vunpack.c.h.b16 %v1457
    %v2710 = vunpack.c.l.b16 %v1458
    %v2711 = vunpack.c.h.b16 %v1458
    %v2712 = vunpack.c.l.b16 %v1459
    %v2713 = vunpack.c.h.b16 %v1459
    %v2714 = vunpack.c.l.b16 %v1460
    %v2715 = vunpack.c.h.b16 %v1460
    %v2716 = vunpack.c.l.b16 %v1461
    %v2717 = vunpack.c.h.b16 %v1461
    %v2718 = vunpack.c.l.b16 %v1462
    %v2719 = vunpack.c.h.b16 %v1462
    %v2720 = vunpack.c.l.b16 %v1463
    %v2721 = vunpack.c.h.b16 %v1463
    %v2722 = vunpack.c.l.b16 %v1464
    %v2723 = vunpack.c.h.b16 %v1464
    %v2724 = vunpack.c.l.b16 %v1465
    %v2725 = vunpack.c.h.b16 %v1465
    %v2726 = vunpack.c.l.b16 %v1466
    %v2727 = vunpack.c.h.b16 %v1466
    %v2728 = vunpack.c.l.b16 %v1467
    %v2729 = vunpack.c.h.b16 %v1467
    %v2730 = vunpack.c.l.b16 %v1468
    %v2731 = vunpack.c.h.b16 %v1468
    %v2732 = vunpack.c.l.b16 %v1469
    %v2733 = vunpack.c.h.b16 %v1469
    %v2734 = vunpack.c.l.b16 %v1470
    %v2735 = vunpack.c.h.b16 %v1470
    %v2736 = vunpack.c.l.b16 %v1471
    %v2737 = vunpack.c.h.b16 %v1471
    %v2738 = vunpack.c.l.b16 %v1472
    %v2739 = vunpack.c.h.b16 %v1472
    %v2740 = vunpack.c.l.b16 %v1473
    %v2741 = vunpack.c.h.b16 %v1473
    %v2742 = vunpack.c.l.b16 %v1474
    %v2743 = vunpack.c.h.b16 %v1474
    %v2744 = vunpack.c.l.b16 %v1475
    %v2745 = vunpack.c.h.b16 %v1475
    %v2746 = vunpack.c.l.b16 %v1476
    %v2747 = vunpack.c.h.b16 %v1476
    %v2748 = vunpack.c.l.b16 %v1477
    %v2749 = vunpack.c.h.b16 %v1477
    %v2750 = vunpack.c.l.b16 %v1478
    %v2751 = vunpack.c.h.b16 %v1478
    %v2752 = vunpack.c.l.b16 %v1479
    %v2753 = vunpack.c.h.b16 %v1479
    %v2754 = vunpack.c.l.b16 %v1480
    %v2755 = vunpack.c.h.b16 %v1480
    %v2756 = vunpack.c.l.b16 %v1481
    %v2757 = vunpack.c.h.b16 %v1481
    %v2758 = vunpack.c.l.b16 %v1482
    %v2759 = vunpack.c.h.b16 %v1482
    %v2760 = vunpack.c.l.b16 %v1483
    %v2761 = vunpack.c.h.b16 %v1483
    %v2762 = vunpack.c.l.b16 %v1484
    %v2763 = vunpack.c.h.b16 %v1484
    %v2764 = vunpack.c.l.b16 %v1485
    %v2765 = vunpack.c.h.b16 %v1485
    %v2766 = vunpack.c.l.b16 %v1486
    %v2767 = vunpack.c.h.b16 %v1486
    %v2768 = vunpack.c.l.b16 %v1487
    %v2769 = vunpack.c.h.b16 %v1487
    %v2770 = vunpack.c.l.b16 %v1488
    %v2771 = vunpack.c.h.b16 %v1488
    %v2772 = vunpack.c.l.b16 %v1489
    %v2773 = vunpack.c.h.b16 %v1489
    %v2774 = vunpack.c.l.b16 %v1490
    %v2775 = vunpack.c.h.b16 %v1490
    %v2776 = vunpack.c.l.b16 %v1491
    %v2777 = vunpack.c.h.b16 %v1491
    %v2778 = vunpack.c.l.b16 %v1492
    %v2779 = vunpack.c.h.b16 %v1492
    %v2780 = vunpack.c.l.b16 %v1493
    %v2781 = vunpack.c.h.b16 %v1493
    %v2782 = vunpack.c.l.b16 %v1494
    %v2783 = vunpack.c.h.b16 %v1494
    %v2784 = vunpack.c.l.b16 %v1495
    %v2785 = vunpack.c.h.b16 %v1495
    %v2786 = vunpack.c.l.b16 %v1496
    %v2787 = vunpack.c.h.b16 %v1496
    %v2788 = vunpack.c.l.b16 %v1497
    %v2789 = vunpack.c.h.b16 %v1497
    %v2790 = vunpack.c.l.b16 %v1498
    %v2791 = vunpack.c.h.b16 %v1498
    %v2792 = vunpack.c.l.b16 %v1499
    %v2793 = vunpack.c.h.b16 %v1499
    %v2794 = vunpack.c.l.b16 %v1500
    %v2795 = vunpack.c.h.b16 %v1500
    %v2796 = vunpack.c.l.b16 %v1501
    %v2797 = vunpack.c.h.b16 %v1501
    %v2798 = vunpack.c.l.b16 %v1502
    %v2799 = vunpack.c.h.b16 %v1502
    %v2800 = vunpack.c.l.b16 %v1503
    %v2801 = vunpack.c.h.b16 %v1503
    %v2802 = vunpack.c.l.b16 %v1504
    %v2803 = vunpack.c.h.b16 %v1504
    %v2804 = vunpack.c.l.b16 %v1505
    %v2805 = vunpack.c.h.b16 %v1505
    %v2806 = vunpack.c.l.b16 %v1506
    %v2807 = vunpack.c.h.b16 %v1506
    %v2808 = vunpack.c.l.b16 %v1507
    %v2809 = vunpack.c.h.b16 %v1507
    %v2810 = vunpack.c.l.b16 %v1508
    %v2811 = vunpack.c.h.b16 %v1508
    %v2812 = vunpack.c.l.b16 %v1509
    %v2813 = vunpack.c.h.b16 %v1509
    %v2814 = vunpack.c.l.b16 %v1510
    %v2815 = vunpack.c.h.b16 %v1510
    %v2816 = vunpack.c.l.b16 %v1511
    %v2817 = vunpack.c.h.b16 %v1511
    %v2818 = vunpack.c.l.b16 %v1512
    %v2819 = vunpack.c.h.b16 %v1512
    %v2820 = vunpack.c.l.b16 %v1513
    %v2821 = vunpack.c.h.b16 %v1513
    %v2822 = vunpack.c.l.b16 %v1514
    %v2823 = vunpack.c.h.b16 %v1514
    %v2824 = vunpack.c.l.b16 %v1515
    %v2825 = vunpack.c.h.b16 %v1515
    %v2826 = vunpack.c.l.b16 %v1516
    %v2827 = vunpack.c.h.b16 %v1516
    %v2828 = vunpack.c.l.b16 %v1517
    %v2829 = vunpack.c.h.b16 %v1517
    %v2830 = vunpack.c.l.b16 %v1518
    %v2831 = vunpack.c.h.b16 %v1518
    %v2832 = vunpack.c.l.b16 %v1519
    %v2833 = vunpack.c.h.b16 %v1519
    %v2834 = vunpack.c.l.b16 %v1520
    %v2835 = vunpack.c.h.b16 %v1520
    %v2836 = vunpack.c.l.b16 %v1521
    %v2837 = vunpack.c.h.b16 %v1521
    %v2838 = vunpack.c.l.b16 %v1522
    %v2839 = vunpack.c.h.b16 %v1522
    %v2840 = vunpack.c.l.b16 %v1523
    %v2841 = vunpack.c.h.b16 %v1523
    %v2842 = vunpack.c.l.b16 %v1524
    %v2843 = vunpack.c.h.b16 %v1524
    %v2844 = vunpack.c.l.b16 %v1525
    %v2845 = vunpack.c.h.b16 %v1525
    %v2846 = vunpack.c.l.b16 %v1526
    %v2847 = vunpack.c.h.b16 %v1526
    %v2848 = vunpack.c.l.b16 %v1527
    %v2849 = vunpack.c.h.b16 %v1527
    %v2850 = vunpack.c.l.b16 %v1528
    %v2851 = vunpack.c.h.b16 %v1528
    %v2852 = vunpack.c.l.b16 %v1529
    %v2853 = vunpack.c.h.b16 %v1529
    %v2854 = vunpack.c.l.b16 %v1530
    %v2855 = vunpack.c.h.b16 %v1530
    %v2856 = vunpack.c.l.b16 %v1531
    %v2857 = vunpack.c.h.b16 %v1531
    %v2858 = vunpack.c.l.b16 %v1532
    %v2859 = vunpack.c.h.b16 %v1532
    %v2860 = vunpack.c.l.b16 %v1533
    %v2861 = vunpack.c.h.b16 %v1533
    %v2862 = vunpack.c.l.b16 %v1534
    %v2863 = vunpack.c.h.b16 %v1534
    %v2864 = vunpack.c.l.b16 %v1535
    %v2865 = vunpack.c.h.b16 %v1535
    %v2866 = vunpack.c.l.b16 %v1536
    %v2867 = vunpack.c.h.b16 %v1536
    %v2868 = vunpack.c.l.b16 %v1537
    %v2869 = vunpack.c.h.b16 %v1537
    %v2870 = vunpack.c.l.b16 %v1538
    %v2871 = vunpack.c.h.b16 %v1538
    %v2872 = vunpack.c.l.b16 %v1539
    %v2873 = vunpack.c.h.b16 %v1539
    %v2874 = vunpack.c.l.b16 %v1540
    %v2875 = vunpack.c.h.b16 %v1540
    %v2876 = vunpack.c.l.b16 %v1541
    %v2877 = vunpack.c.h.b16 %v1541
    %v2878 = vunpack.c.l.b16 %v1542
    %v2879 = vunpack.c.h.b16 %v1542
    %v2880 = vunpack.c.l.b16 %v1543
    %v2881 = vunpack.c.h.b16 %v1543
    %v2882 = vunpack.c.l.b16 %v1544
    %v2883 = vunpack.c.h.b16 %v1544
    %v2884 = vunpack.c.l.b16 %v1545
    %v2885 = vunpack.c.h.b16 %v1545
    %v2886 = vunpack.c.l.b16 %v1546
    %v2887 = vunpack.c.h.b16 %v1546
    %v2888 = vunpack.c.l.b16 %v1547
    %v2889 = vunpack.c.h.b16 %v1547
    %v2890 = vunpack.c.l.b16 %v1548
    %v2891 = vunpack.c.h.b16 %v1548
    %v2892 = vunpack.c.l.b16 %v1549
    %v2893 = vunpack.c.h.b16 %v1549
    %v2894 = vunpack.c.l.b16 %v1550
    %v2895 = vunpack.c.h.b16 %v1550
    %v2896 = vunpack.c.l.b16 %v1551
    %v2897 = vunpack.c.h.b16 %v1551
    %v2898 = vunpack.c.l.b16 %v1552
    %v2899 = vunpack.c.h.b16 %v1552
    %v2900 = vunpack.c.l.b16 %v1553
    %v2901 = vunpack.c.h.b16 %v1553
    %v2902 = vunpack.c.l.b16 %v1554
    %v2903 = vunpack.c.h.b16 %v1554
    %v2904 = vunpack.c.l.b16 %v1555
    %v2905 = vunpack.c.h.b16 %v1555
    %v2906 = vunpack.c.l.b16 %v1556
    %v2907 = vunpack.c.h.b16 %v1556
    %v2908 = vunpack.c.l.b16 %v1557
    %v2909 = vunpack.c.h.b16 %v1557
    %v2910 = vunpack.c.l.b16 %v1558
    %v2911 = vunpack.c.h.b16 %v1558
    %v2912 = vunpack.c.l.b16 %v1559
    %v2913 = vunpack.c.h.b16 %v1559
    %v2914 = vunpack.c.l.b16 %v1560
    %v2915 = vunpack.c.h.b16 %v1560
    %v2916 = vunpack.c.l.b16 %v1561
    %v2917 = vunpack.c.h.b16 %v1561
    %v2918 = vunpack.c.l.b16 %v1562
    %v2919 = vunpack.c.h.b16 %v1562
    %v2920 = vunpack.c.l.b16 %v1563
    %v2921 = vunpack.c.h.b16 %v1563
    %v2922 = vunpack.c.l.b16 %v1564
    %v2923 = vunpack.c.h.b16 %v1564
    %v2924 = vunpack.c.l.b16 %v1565
    %v2925 = vunpack.c.h.b16 %v1565
    %v2926 = vunpack.c.l.b16 %v1566
    %v2927 = vunpack.c.h.b16 %v1566
    %v2928 = vunpack.c.l.b16 %v1567
    %v2929 = vunpack.c.h.b16 %v1567
    %v2930 = vunpack.c.l.b16 %v1568
    %v2931 = vunpack.c.h.b16 %v1568
    %v2932 = vunpack.c.l.b16 %v1569
    %v2933 = vunpack.c.h.b16 %v1569
    %v2934 = vunpack.c.l.b16 %v1570
    %v2935 = vunpack.c.h.b16 %v1570
    %v2936 = vunpack.c.l.b16 %v1571
    %v2937 = vunpack.c.h.b16 %v1571
    %v2938 = vunpack.c.l.b16 %v1572
    %v2939 = vunpack.c.h.b16 %v1572
    %v2940 = vunpack.c.l.b16 %v1573
    %v2941 = vunpack.c.h.b16 %v1573
    %v2942 = vunpack.c.l.b16 %v1574
    %v2943 = vunpack.c.h.b16 %v1574
    %v2944 = vunpack.c.l.b16 %v1575
    %v2945 = vunpack.c.h.b16 %v1575
    %v2946 = vunpack.c.l.b16 %v1576
    %v2947 = vunpack.c.h.b16 %v1576
    %v2948 = vunpack.c.l.b16 %v1577
    %v2949 = vunpack.c.h.b16 %v1577
    %v2950 = vunpack.c.l.b16 %v1578
    %v2951 = vunpack.c.h.b16 %v1578
    %v2952 = vunpack.c.l.b16 %v1579
    %v2953 = vunpack.c.h.b16 %v1579
    %v2954 = vunpack.c.l.b16 %v1580
    %v2955 = vunpack.c.h.b16 %v1580
    %v2956 = vunpack.c.l.b16 %v1581
    %v2957 = vunpack.c.h.b16 %v1581
    %v2958 = vunpack.c.l.b16 %v1582
    %v2959 = vunpack.c.h.b16 %v1582
    %v2960 = vunpack.c.l.b16 %v1583
    %v2961 = vunpack.c.h.b16 %v1583
    %v2962 = vunpack.c.l.b16 %v1584
    %v2963 = vunpack.c.h.b16 %v1584
    %v2964 = vunpack.c.l.b16 %v1585
    %v2965 = vunpack.c.h.b16 %v1585
    %v2966 = vunpack.c.l.b16 %v1586
    %v2967 = vunpack.c.h.b16 %v1586
    %v2968 = vunpack.c.l.b16 %v1587
    %v2969 = vunpack.c.h.b16 %v1587
    %v2970 = vunpack.c.l.b16 %v1588
    %v2971 = vunpack.c.h.b16 %v1588
    %v2972 = vunpack.c.l.b16 %v1589
    %v2973 = vunpack.c.h.b16 %v1589
    %v2974 = vunpack.c.l.b16 %v1590
    %v2975 = vunpack.c.h.b16 %v1590
    %v2976 = vunpack.c.l.b16 %v1591
    %v2977 = vunpack.c.h.b16 %v1591
    %v2978 = vunpack.c.l.b16 %v1592
    %v2979 = vunpack.c.h.b16 %v1592
    %v2980 = vunpack.c.l.b16 %v1593
    %v2981 = vunpack.c.h.b16 %v1593
    %v2982 = vunpack.c.l.b16 %v1594
    %v2983 = vunpack.c.h.b16 %v1594
    %v2984 = vunpack.c.l.b16 %v1595
    %v2985 = vunpack.c.h.b16 %v1595
    %v2986 = vunpack.c.l.b16 %v1596
    %v2987 = vunpack.c.h.b16 %v1596
    %v2988 = vunpack.c.l.b16 %v1597
    %v2989 = vunpack.c.h.b16 %v1597
    %v2990 = vunpack.c.l.b16 %v1598
    %v2991 = vunpack.c.h.b16 %v1598
    %v2992 = vunpack.c.l.b16 %v1599
    %v2993 = vunpack.c.h.b16 %v1599
    %v2994 = vunpack.c.l.b16 %v1600
    %v2995 = vunpack.c.h.b16 %v1600
    %v2996 = vunpack.c.l.b16 %v1601
    %v2997 = vunpack.c.h.b16 %v1601
    %v2998 = vunpack.c.l.b16 %v1602
    %v2999 = vunpack.c.h.b16 %v1602
    %v3000 = vunpack.c.l.b16 %v1603
    %v3001 = vunpack.c.h.b16 %v1603
    %v3002 = vunpack.c.l.b16 %v1604
    %v3003 = vunpack.c.h.b16 %v1604
    %v3004 = vunpack.c.l.b16 %v1605
    %v3005 = vunpack.c.h.b16 %v1605
    %v3006 = vunpack.c.l.b16 %v1606
    %v3007 = vunpack.c.h.b16 %v1606
    %v3008 = vunpack.c.l.b16 %v1607
    %v3009 = vunpack.c.h.b16 %v1607
    %v3010 = vunpack.c.l.b16 %v1608
    %v3011 = vunpack.c.h.b16 %v1608
    %v3012 = vunpack.c.l.b16 %v1609
    %v3013 = vunpack.c.h.b16 %v1609
    %v3014 = vunpack.c.l.b16 %v1610
    %v3015 = vunpack.c.h.b16 %v1610
    %v3016 = vunpack.c.l.b16 %v1611
    %v3017 = vunpack.c.h.b16 %v1611
    %v3018 = vunpack.c.l.b16 %v1612
    %v3019 = vunpack.c.h.b16 %v1612
    %v3020 = vunpack.c.l.b16 %v1613
    %v3021 = vunpack.c.h.b16 %v1613
    %v3022 = vunpack.c.l.b16 %v1614
    %v3023 = vunpack.c.h.b16 %v1614
    %v3024 = vunpack.c.l.b16 %v1615
    %v3025 = vunpack.c.h.b16 %v1615
    %v3026 = vunpack.c.l.b16 %v1616
    %v3027 = vunpack.c.h.b16 %v1616
    %v3028 = vunpack.c.l.b16 %v1617
    %v3029 = vunpack.c.h.b16 %v1617
    %v3030 = vunpack.c.l.b16 %v1618
    %v3031 = vunpack.c.h.b16 %v1618
    %v3032 = vunpack.c.l.b16 %v1619
    %v3033 = vunpack.c.h.b16 %v1619
    %v3034 = vunpack.c.l.b16 %v1620
    %v3035 = vunpack.c.h.b16 %v1620
    %v3036 = vunpack.c.l.b16 %v1621
    %v3037 = vunpack.c.h.b16 %v1621
    %v3038 = vunpack.c.l.b16 %v1622
    %v3039 = vunpack.c.h.b16 %v1622
    %v3040 = vunpack.c.l.b16 %v1623
    %v3041 = vunpack.c.h.b16 %v1623
    %v3042 = vunpack.c.l.b16 %v1624
    %v3043 = vunpack.c.h.b16 %v1624
    %v3044 = vunpack.c.l.b16 %v1625
    %v3045 = vunpack.c.h.b16 %v1625
    %v3046 = vunpack.c.l.b16 %v1626
    %v3047 = vunpack.c.h.b16 %v1626
    %v3048 = vunpack.c.l.b16 %v1627
    %v3049 = vunpack.c.h.b16 %v1627
    %v3050 = vunpack.c.l.b16 %v1628
    %v3051 = vunpack.c.h.b16 %v1628
    %v3052 = vunpack.c.l.b16 %v1629
    %v3053 = vunpack.c.h.b16 %v1629
    %v3054 = vunpack.c.l.b16 %v1630
    %v3055 = vunpack.c.h.b16 %v1630
    %v3056 = vunpack.c.l.b16 %v1631
    %v3057 = vunpack.c.h.b16 %v1631
    %v3058 = vunpack.c.l.b16 %v1632
    %v3059 = vunpack.c.h.b16 %v1632
    %v3060 = vunpack.c.l.b16 %v1633
    %v3061 = vunpack.c.h.b16 %v1633
    %v3062 = vunpack.c.l.b16 %v1634
    %v3063 = vunpack.c.h.b16 %v1634
    %v3064 = vunpack.c.l.b16 %v1635
    %v3065 = vunpack.c.h.b16 %v1635
    %v3066 = vunpack.c.l.b16 %v1636
    %v3067 = vunpack.c.h.b16 %v1636
    %v3068 = vunpack.c.l.b16 %v1637
    %v3069 = vunpack.c.h.b16 %v1637
    %v3070 = vunpack.c.l.b16 %v1638
    %v3071 = vunpack.c.h.b16 %v1638
    %v3072 = vunpack.c.l.b16 %v1639
    %v3073 = vunpack.c.h.b16 %v1639
    %v3074 = vunpack.c.l.b16 %v1640
    %v3075 = vunpack.c.h.b16 %v1640
    %v3076 = vunpack.c.l.b16 %v1641
    %v3077 = vunpack.c.h.b16 %v1641
    %v3078 = vunpack.c.l.b16 %v1642
    %v3079 = vunpack.c.h.b16 %v1642
    %v3080 = vunpack.c.l.b16 %v1643
    %v3081 = vunpack.c.h.b16 %v1643
    %v3082 = vunpack.c.l.b16 %v1644
    %v3083 = vunpack.c.h.b16 %v1644
    %v3084 = vunpack.c.l.b16 %v1645
    %v3085 = vunpack.c.h.b16 %v1645
    %v3086 = vunpack.c.l.b16 %v1646
    %v3087 = vunpack.c.h.b16 %v1646
    %v3088 = vunpack.c.l.b16 %v1647
    %v3089 = vunpack.c.h.b16 %v1647
    %v3090 = vunpack.c.l.b16 %v1648
    %v3091 = vunpack.c.h.b16 %v1648
    %v3092 = vunpack.c.l.b16 %v1649
    %v3093 = vunpack.c.h.b16 %v1649
    %v3094 = vunpack.c.l.b16 %v1650
    %v3095 = vunpack.c.h.b16 %v1650
    %v3096 = vunpack.c.l.b16 %v1651
    %v3097 = vunpack.c.h.b16 %v1651
    %v3098 = vunpack.c.l.b16 %v1652
    %v3099 = vunpack.c.h.b16 %v1652
    %v3100 = vunpack.c.l.b16 %v1653
    %v3101 = vunpack.c.h.b16 %v1653
    %v3102 = vunpack.c.l.b16 %v1654
    %v3103 = vunpack.c.h.b16 %v1654
    %v3104 = vunpack.c.l.b16 %v1655
    %v3105 = vunpack.c.h.b16 %v1655
    %v3106 = vunpack.c.l.b16 %v1656
    %v3107 = vunpack.c.h.b16 %v1656
    %v3108 = vunpack.c.l.b16 %v1657
    %v3109 = vunpack.c.h.b16 %v1657
    %v3110 = vunpack.c.l.b16 %v1658
    %v3111 = vunpack.c.h.b16 %v1658
    %v3112 = vunpack.c.l.b16 %v1659
    %v3113 = vunpack.c.h.b16 %v1659
    %v3114 = vunpack.c.l.b16 %v1660
    %v3115 = vunpack.c.h.b16 %v1660
    %v3116 = vunpack.c.l.b16 %v1661
    %v3117 = vunpack.c.h.b16 %v1661
    %v3118 = vunpack.c.l.b16 %v1662
    %v3119 = vunpack.c.h.b16 %v1662
    %v3120 = vunpack.c.l.b16 %v1663
    %v3121 = vunpack.c.h.b16 %v1663
    %v3122 = vunpack.c.l.b16 %v1664
    %v3123 = vunpack.c.h.b16 %v1664
    %v3124 = vunpack.c.l.b16 %v1665
    %v3125 = vunpack.c.h.b16 %v1665
    %v3126 = vunpack.c.l.b16 %v1666
    %v3127 = vunpack.c.h.b16 %v1666
    %v3128 = vunpack.c.l.b16 %v1667
    %v3129 = vunpack.c.h.b16 %v1667
    %v3130 = vunpack.c.l.b16 %v1668
    %v3131 = vunpack.c.h.b16 %v1668
    %v3132 = vunpack.c.l.b16 %v1669
    %v3133 = vunpack.c.h.b16 %v1669
    %v3134 = vunpack.c.l.b16 %v1670
    %v3135 = vunpack.c.h.b16 %v1670
    %v3136 = vunpack.c.l.b16 %v1671
    %v3137 = vunpack.c.h.b16 %v1671
    %v3138 = vunpack.c.l.b16 %v1672
    %v3139 = vunpack.c.h.b16 %v1672
    %v3140 = vunpack.c.l.b16 %v1673
    %v3141 = vunpack.c.h.b16 %v1673
    %v3142 = vunpack.c.l.b16 %v1674
    %v3143 = vunpack.c.h.b16 %v1674
    %v3144 = vunpack.c.l.b16 %v1675
    %v3145 = vunpack.c.h.b16 %v1675
    %v3146 = vunpack.c.l.b16 %v1676
    %v3147 = vunpack.c.h.b16 %v1676
    %v3148 = vunpack.c.l.b16 %v1677
    %v3149 = vunpack.c.h.b16 %v1677
    %v3150 = vunpack.c.l.b16 %v1678
    %v3151 = vunpack.c.h.b16 %v1678
    %v3152 = vunpack.c.l.b16 %v1679
    %v3153 = vunpack.c.h.b16 %v1679
    %v3154 = vunpack.c.l.b16 %v1680
    %v3155 = vunpack.c.h.b16 %v1680
    %v3156 = vunpack.c.l.b16 %v1681
    %v3157 = vunpack.c.h.b16 %v1681
    %v3158 = vunpack.c.l.b16 %v1682
    %v3159 = vunpack.c.h.b16 %v1682
    %v3160 = vunpack.c.l.b16 %v1683
    %v3161 = vunpack.c.h.b16 %v1683
    %v3162 = vunpack.c.l.b16 %v1684
    %v3163 = vunpack.c.h.b16 %v1684
    %v3164 = vunpack.c.l.b16 %v1685
    %v3165 = vunpack.c.h.b16 %v1685
    %v3166 = vunpack.c.l.b16 %v1686
    %v3167 = vunpack.c.h.b16 %v1686
    %v3168 = vunpack.c.l.b16 %v1687
    %v3169 = vunpack.c.h.b16 %v1687
    %v3170 = vunpack.c.l.b16 %v1688
    %v3171 = vunpack.c.h.b16 %v1688
    %v3172 = vunpack.c.l.b16 %v1689
    %v3173 = vunpack.c.h.b16 %v1689
    %v3174 = vunpack.c.l.b16 %v1690
    %v3175 = vunpack.c.h.b16 %v1690
    %v3176 = vunpack.c.l.b16 %v1691
    %v3177 = vunpack.c.h.b16 %v1691
    %v3178 = vunpack.c.l.b16 %v1692
    %v3179 = vunpack.c.h.b16 %v1692
    %v3180 = vunpack.c.l.b16 %v1693
    %v3181 = vunpack.c.h.b16 %v1693
    %v3182 = vunpack.c.l.b16 %v1694
    %v3183 = vunpack.c.h.b16 %v1694
    %v3184 = vunpack.c.l.b16 %v1695
    %v3185 = vunpack.c.h.b16 %v1695
    %v3186 = vunpack.c.l.b16 %v1696
    %v3187 = vunpack.c.h.b16 %v1696
    %v3188 = vunpack.c.l.b16 %v1697
    %v3189 = vunpack.c.h.b16 %v1697
    %v3190 = vunpack.c.l.b16 %v1698
    %v3191 = vunpack.c.h.b16 %v1698
    %v3192 = vunpack.c.l.b16 %v1699
    %v3193 = vunpack.c.h.b16 %v1699
    %v3194 = vunpack.c.l.b16 %v1700
    %v3195 = vunpack.c.h.b16 %v1700
    %v3196 = vunpack.c.l.b16 %v1701
    %v3197 = vunpack.c.h.b16 %v1701
    %v3198 = vunpack.c.l.b16 %v1702
    %v3199 = vunpack.c.h.b16 %v1702
    %v3200 = vunpack.c.l.b16 %v1703
    %v3201 = vunpack.c.h.b16 %v1703
    %v3202 = vunpack.c.l.b16 %v1704
    %v3203 = vunpack.c.h.b16 %v1704
    %v3204 = vunpack.c.l.b16 %v1705
    %v3205 = vunpack.c.h.b16 %v1705
    %v3206 = vunpack.c.l.b16 %v1706
    %v3207 = vunpack.c.h.b16 %v1706
    %v3208 = vunpack.c.l.b16 %v1707
    %v3209 = vunpack.c.h.b16 %v1707
    %v3210 = vunpack.c.l.b16 %v1708
    %v3211 = vunpack.c.h.b16 %v1708
    %v3212 = vunpack.c.l.b16 %v1709
    %v3213 = vunpack.c.h.b16 %v1709
    %v3214 = vunpack.c.l.b16 %v1710
    %v3215 = vunpack.c.h.b16 %v1710
    %v3216 = vunpack.c.l.b16 %v1711
    %v3217 = vunpack.c.h.b16 %v1711
    %v3218 = vunpack.c.l.b16 %v1712
    %v3219 = vunpack.c.h.b16 %v1712
    %v3220 = vunpack.c.l.b16 %v1713
    %v3221 = vunpack.c.h.b16 %v1713
    %v3222 = vunpack.c.l.b16 %v1714
    %v3223 = vunpack.c.h.b16 %v1714
    %v3224 = vunpack.c.l.b16 %v1715
    %v3225 = vunpack.c.h.b16 %v1715
    %v3226 = vunpack.c.l.b16 %v1716
    %v3227 = vunpack.c.h.b16 %v1716
    %v3228 = vunpack.c.l.b16 %v1717
    %v3229 = vunpack.c.h.b16 %v1717
    %v3230 = vunpack.c.l.b16 %v1718
    %v3231 = vunpack.c.h.b16 %v1718
    %v3232 = vunpack.c.l.b16 %v1719
    %v3233 = vunpack.c.h.b16 %v1719
    %v3234 = vunpack.c.l.b16 %v1720
    %v3235 = vunpack.c.h.b16 %v1720
    %v3236 = vunpack.c.l.b16 %v1721
    %v3237 = vunpack.c.h.b16 %v1721
    %v3238 = vunpack.c.l.b16 %v1722
    %v3239 = vunpack.c.h.b16 %v1722
    %v3240 = vunpack.c.l.b16 %v1723
    %v3241 = vunpack.c.h.b16 %v1723
    %v3242 = vunpack.c.l.b16 %v1724
    %v3243 = vunpack.c.h.b16 %v1724
    %v3244 = vunpack.c.l.b16 %v1725
    %v3245 = vunpack.c.h.b16 %v1725
    %v3246 = vunpack.c.l.b16 %v1726
    %v3247 = vunpack.c.h.b16 %v1726
    %v3248 = vunpack.c.l.b16 %v1727
    %v3249 = vunpack.c.h.b16 %v1727
    %v3250 = vunpack.c.l.b16 %v1728
    %v3251 = vunpack.c.h.b16 %v1728
    %v3252 = vunpack.c.l.b16 %v1729
    %v3253 = vunpack.c.h.b16 %v1729
    %v3254 = vunpack.c.l.b16 %v1730
    %v3255 = vunpack.c.h.b16 %v1730
    %v3256 = vunpack.c.l.b16 %v1731
    %v3257 = vunpack.c.h.b16 %v1731
    %v3258 = vunpack.c.l.b16 %v1732
    %v3259 = vunpack.c.h.b16 %v1732
    %v3260 = vunpack.c.l.b16 %v1733
    %v3261 = vunpack.c.h.b16 %v1733
    %v3262 = vunpack.c.l.b16 %v1734
    %v3263 = vunpack.c.h.b16 %v1734
    %v3264 = vunpack.c.l.b16 %v1735
    %v3265 = vunpack.c.h.b16 %v1735
    %v3266 = vunpack.c.l.b16 %v1736
    %v3267 = vunpack.c.h.b16 %v1736
    %v3268 = vunpack.c.l.b16 %v1737
    %v3269 = vunpack.c.h.b16 %v1737
    %v3270 = vunpack.c.l.b16 %v1738
    %v3271 = vunpack.c.h.b16 %v1738
    %v3272 = vunpack.c.l.b16 %v1739
    %v3273 = vunpack.c.h.b16 %v1739
    %v3274 = vunpack.c.l.b16 %v1740
    %v3275 = vunpack.c.h.b16 %v1740
    %v3276 = vunpack.c.l.b16 %v1741
    %v3277 = vunpack.c.h.b16 %v1741
    %v3278 = vunpack.c.l.b16 %v1742
    %v3279 = vunpack.c.h.b16 %v1742
    %v3280 = vunpack.c.l.b16 %v1743
    %v3281 = vunpack.c.h.b16 %v1743
    %v3282 = vunpack.c.l.b16 %v1744
    %v3283 = vunpack.c.h.b16 %v1744
    %v3284 = vunpack.c.l.b16 %v1745
    %v3285 = vunpack.c.h.b16 %v1745
    %v3286 = vunpack.c.l.b16 %v1746
    %v3287 = vunpack.c.h.b16 %v1746
    %v3288 = vunpack.c.l.b16 %v1747
    %v3289 = vunpack.c.h.b16 %v1747
    %v3290 = vunpack.c.l.b16 %v1748
    %v3291 = vunpack.c.h.b16 %v1748
    %v3292 = vunpack.c.l.b16 %v1749
    %v3293 = vunpack.c.h.b16 %v1749
    %v3294 = vunpack.c.l.b16 %v1750
    %v3295 = vunpack.c.h.b16 %v1750
    %v3296 = vunpack.c.l.b16 %v1751
    %v3297 = vunpack.c.h.b16 %v1751
    %v3298 = vunpack.c.l.b16 %v1752
    %v3299 = vunpack.c.h.b16 %v1752
    %v3300 = vunpack.c.l.b16 %v1753
    %v3301 = vunpack.c.h.b16 %v1753
    %v3302 = vunpack.c.l.b16 %v1754
    %v3303 = vunpack.c.h.b16 %v1754
    %v3304 = vunpack.c.l.b16 %v1755
    %v3305 = vunpack.c.h.b16 %v1755
    %v3306 = vunpack.c.l.b16 %v1756
    %v3307 = vunpack.c.h.b16 %v1756
    %v3308 = vunpack.c.l.b16 %v1757
    %v3309 = vunpack.c.h.b16 %v1757
    %v3310 = vunpack.c.l.b16 %v1758
    %v3311 = vunpack.c.h.b16 %v1758
    %v3312 = vunpack.c.l.b16 %v1759
    %v3313 = vunpack.c.h.b16 %v1759
    %v3314 = vpack.c.b16 %v2298, %v2290
    %v3315 = vpack.c.b16 %v2299, %v2291
    %v3316 = vpack.c.b16 %v2300, %v2292
    %v3317 = vpack.c.b16 %v2301, %v2293
    %v3318 = vpack.c.b16 %v2302, %v2294
    %v3319 = vpack.c.b16 %v2303, %v2295
    %v3320 = vpack.c.b16 %v2304, %v2296
    %v3321 = vpack.c.b16 %v2305, %v2297
    %v3322 = vpack.c.b16 %v2314, %v2306
    %v3323 = vpack.c.b16 %v2315, %v2307
    %v3324 = vpack.c.b16 %v2316, %v2308
    %v3325 = vpack.c.b16 %v2317, %v2309
    %v3326 = vpack.c.b16 %v2318, %v2310
    %v3327 = vpack.c.b16 %v2319, %v2311
    %v3328 = vpack.c.b16 %v2320, %v2312
    %v3329 = vpack.c.b16 %v2321, %v2313
    %v3330 = vpack.c.b16 %v2330, %v2322
    %v3331 = vpack.c.b16 %v2331, %v2323
    %v3332 = vpack.c.b16 %v2332, %v2324
    %v3333 = vpack.c.b16 %v2333, %v2325
    %v3334 = vpack.c.b16 %v2334, %v2326
    %v3335 = vpack.c.b16 %v2335, %v2327
    %v3336 = vpack.c.b16 %v2336, %v2328
    %v3337 = vpack.c.b16 %v2337, %v2329
    %v3338 = vpack.c.b16 %v2346, %v2338
    %v3339 = vpack.c.b16 %v2347, %v2339
    %v3340 = vpack.c.b16 %v2348, %v2340
    %v3341 = vpack.c.b16 %v2349, %v2341
    %v3342 = vpack.c.b16 %v2350, %v2342
    %v3343 = vpack.c.b16 %v2351, %v2343
    %v3344 = vpack.c.b16 %v2352, %v2344
    %v3345 = vpack.c.b16 %v2353, %v2345
    %v3346 = vpack.c.b16 %v2362, %v2354
    %v3347 = vpack.c.b16 %v2363, %v2355
    %v3348 = vpack.c.b16 %v2364, %v2356
    %v3349 = vpack.c.b16 %v2365, %v2357
    %v3350 = vpack.c.b16 %v2366, %v2358
    %v3351 = vpack.c.b16 %v2367, %v2359
    %v3352 = vpack.c.b16 %v2368, %v2360
    %v3353 = vpack.c.b16 %v2369, %v2361
    %v3354 = vpack.c.b16 %v2378, %v2370
    %v3355 = vpack.c.b16 %v2379, %v2371
    %v3356 = vpack.c.b16 %v2380, %v2372
    %v3357 = vpack.c.b16 %v2381, %v2373
    %v3358 = vpack.c.b16 %v2382, %v2374
    %v3359 = vpack.c.b16 %v2383, %v2375
    %v3360 = vpack.c.b16 %v2384, %v2376
    %v3361 = vpack.c.b16 %v2385, %v2377
    %v3362 = vpack.c.b16 %v2394, %v2386
    %v3363 = vpack.c.b16 %v2395, %v2387
    %v3364 = vpack.c.b16 %v2396, %v2388
    %v3365 = vpack.c.b16 %v2397, %v2389
    %v3366 = vpack.c.b16 %v2398, %v2390
    %v3367 = vpack.c.b16 %v2399, %v2391
    %v3368 = vpack.c.b16 %v2400, %v2392
    %v3369 = vpack.c.b16 %v2401, %v2393
    %v3370 = vpack.c.b16 %v2410, %v2402
    %v3371 = vpack.c.b16 %v2411, %v2403
    %v3372 = vpack.c.b16 %v2412, %v2404
    %v3373 = vpack.c.b16 %v2413, %v2405
    %v3374 = vpack.c.b16 %v2414, %v2406
    %v3375 = vpack.c.b16 %v2415, %v2407
    %v3376 = vpack.c.b16 %v2416, %v2408
    %v3377 = vpack.c.b16 %v2417, %v2409
    %v3378 = vpack.c.b16 %v2426, %v2418
    %v3379 = vpack.c.b16 %v2427, %v2419
    %v3380 = vpack.c.b16 %v2428, %v2420
    %v3381 = vpack.c.b16 %v2429, %v2421
    %v3382 = vpack.c.b16 %v2430, %v2422
    %v3383 = vpack.c.b16 %v2431, %v2423
    %v3384 = vpack.c.b16 %v2432, %v2424
    %v3385 = vpack.c.b16 %v2433, %v2425
    %v3386 = vpack.c.b16 %v2442, %v2434
    %v3387 = vpack.c.b16 %v2443, %v2435
    %v3388 = vpack.c.b16 %v2444, %v2436
    %v3389 = vpack.c.b16 %v2445, %v2437
    %v3390 = vpack.c.b16 %v2446, %v2438
    %v3391 = vpack.c.b16 %v2447, %v2439
    %v3392 = vpack.c.b16 %v2448, %v2440
    %v3393 = vpack.c.b16 %v2449, %v2441
    %v3394 = vpack.c.b16 %v2458, %v2450
    %v3395 = vpack.c.b16 %v2459, %v2451
    %v3396 = vpack.c.b16 %v2460, %v2452
    %v3397 = vpack.c.b16 %v2461, %v2453
    %v3398 = vpack.c.b16 %v2462, %v2454
    %v3399 = vpack.c.b16 %v2463, %v2455
    %v3400 = vpack.c.b16 %v2464, %v2456
    %v3401 = vpack.c.b16 %v2465, %v2457
    %v3402 = vpack.c.b16 %v2474, %v2466
    %v3403 = vpack.c.b16 %v2475, %v2467
    %v3404 = vpack.c.b16 %v2476, %v2468
    %v3405 = vpack.c.b16 %v2477, %v2469
    %v3406 = vpack.c.b16 %v2478, %v2470
    %v3407 = vpack.c.b16 %v2479, %v2471
    %v3408 = vpack.c.b16 %v2480, %v2472
    %v3409 = vpack.c.b16 %v2481, %v2473
    %v3410 = vpack.c.b16 %v2490, %v2482
    %v3411 = vpack.c.b16 %v2491, %v2483
    %v3412 = vpack.c.b16 %v2492, %v2484
    %v3413 = vpack.c.b16 %v2493, %v2485
    %v3414 = vpack.c.b16 %v2494, %v2486
    %v3415 = vpack.c.b16 %v2495, %v2487
    %v3416 = vpack.c.b16 %v2496, %v2488
    %v3417 = vpack.c.b16 %v2497, %v2489
    %v3418 = vpack.c.b16 %v2506, %v2498
    %v3419 = vpack.c.b16 %v2507, %v2499
    %v3420 = vpack.c.b16 %v2508, %v2500
    %v3421 = vpack.c.b16 %v2509, %v2501
    %v3422 = vpack.c.b16 %v2510, %v2502
    %v3423 = vpack.c.b16 %v2511, %v2503
    %v3424 = vpack.c.b16 %v2512, %v2504
    %v3425 = vpack.c.b16 %v2513, %v2505
    %v3426 = vpack.c.b16 %v2522, %v2514
    %v3427 = vpack.c.b16 %v2523, %v2515
    %v3428 = vpack.c.b16 %v2524, %v2516
    %v3429 = vpack.c.b16 %v2525, %v2517
    %v3430 = vpack.c.b16 %v2526, %v2518
    %v3431 = vpack.c.b16 %v2527, %v2519
    %v3432 = vpack.c.b16 %v2528, %v2520
    %v3433 = vpack.c.b16 %v2529, %v2521
    %v3434 = vpack.c.b16 %v2538, %v2530
    %v3435 = vpack.c.b16 %v2539, %v2531
    %v3436 = vpack.c.b16 %v2540, %v2532
    %v3437 = vpack.c.b16 %v2541, %v2533
    %v3438 = vpack.c.b16 %v2542, %v2534
    %v3439 = vpack.c.b16 %v2543, %v2535
    %v3440 = vpack.c.b16 %v2544, %v2536
    %v3441 = vpack.c.b16 %v2545, %v2537
    %v3442 = vpack.c.b16 %v2554, %v2546
    %v3443 = vpack.c.b16 %v2555, %v2547
    %v3444 = vpack.c.b16 %v2556, %v2548
    %v3445 = vpack.c.b16 %v2557, %v2549
    %v3446 = vpack.c.b16 %v2558, %v2550
    %v3447 = vpack.c.b16 %v2559, %v2551
    %v3448 = vpack.c.b16 %v2560, %v2552
    %v3449 = vpack.c.b16 %v2561, %v2553
    %v3450 = vpack.c.b16 %v2570, %v2562
    %v3451 = vpack.c.b16 %v2571, %v2563
    %v3452 = vpack.c.b16 %v2572, %v2564
    %v3453 = vpack.c.b16 %v2573, %v2565
    %v3454 = vpack.c.b16 %v2574, %v2566
    %v3455 = vpack.c.b16 %v2575, %v2567
    %v3456 = vpack.c.b16 %v2576, %v2568
    %v3457 = vpack.c.b16 %v2577, %v2569
    %v3458 = vpack.c.b16 %v2586, %v2578
    %v3459 = vpack.c.b16 %v2587, %v2579
    %v3460 = vpack.c.b16 %v2588, %v2580
    %v3461 = vpack.c.b16 %v2589, %v2581
    %v3462 = vpack.c.b16 %v2590, %v2582
    %v3463 = vpack.c.b16 %v2591, %v2583
    %v3464 = vpack.c.b16 %v2592, %v2584
    %v3465 = vpack.c.b16 %v2593, %v2585
    %v3466 = vpack.c.b16 %v2602, %v2594
    %v3467 = vpack.c.b16 %v2603, %v2595
    %v3468 = vpack.c.b16 %v2604, %v2596
    %v3469 = vpack.c.b16 %v2605, %v2597
    %v3470 = vpack.c.b16 %v2606, %v2598
    %v3471 = vpack.c.b16 %v2607, %v2599
    %v3472 = vpack.c.b16 %v2608, %v2600
    %v3473 = vpack.c.b16 %v2609, %v2601
    %v3474 = vpack.c.b16 %v2618, %v2610
    %v3475 = vpack.c.b16 %v2619, %v2611
    %v3476 = vpack.c.b16 %v2620, %v2612
    %v3477 = vpack.c.b16 %v2621, %v2613
    %v3478 = vpack.c.b16 %v2622, %v2614
    %v3479 = vpack.c.b16 %v2623, %v2615
    %v3480 = vpack.c.b16 %v2624, %v2616
    %v3481 = vpack.c.b16 %v2625, %v2617
    %v3482 = vpack.c.b16 %v2634, %v2626
    %v3483 = vpack.c.b16 %v2635, %v2627
    %v3484 = vpack.c.b16 %v2636, %v2628
    %v3485 = vpack.c.b16 %v2637, %v2629
    %v3486 = vpack.c.b16 %v2638, %v2630
    %v3487 = vpack.c.b16 %v2639, %v2631
    %v3488 = vpack.c.b16 %v2640, %v2632
    %v3489 = vpack.c.b16 %v2641, %v2633
    %v3490 = vpack.c.b16 %v2650, %v2642
    %v3491 = vpack.c.b16 %v2651, %v2643
    %v3492 = vpack.c.b16 %v2652, %v2644
    %v3493 = vpack.c.b16 %v2653, %v2645
    %v3494 = vpack.c.b16 %v2654, %v2646
    %v3495 = vpack.c.b16 %v2655, %v2647
    %v3496 = vpack.c.b16 %v2656, %v2648
    %v3497 = vpack.c.b16 %v2657, %v2649
    %v3498 = vpack.c.b16 %v2666, %v2658
    %v3499 = vpack.c.b16 %v2667, %v2659
    %v3500 = vpack.c.b16 %v2668, %v2660
    %v3501 = vpack.c.b16 %v2669, %v2661
    %v3502 = vpack.c.b16 %v2670, %v2662
    %v3503 = vpack.c.b16 %v2671, %v2663
    %v3504 = vpack.c.b16 %v2672, %v2664
    %v3505 = vpack.c.b16 %v2673, %v2665
    %v3506 = vpack.c.b16 %v2682, %v2674
    %v3507 = vpack.c.b16 %v2683, %v2675
    %v3508 = vpack.c.b16 %v2684, %v2676
    %v3509 = vpack.c.b16 %v2685, %v2677
    %v3510 = vpack.c.b16 %v2686, %v2678
    %v3511 = vpack.c.b16 %v2687, %v2679
    %v3512 = vpack.c.b16 %v2688, %v2680
    %v3513 = vpack.c.b16 %v2689, %v2681
    %v3514 = vpack.c.b16 %v2698, %v2690
    %v3515 = vpack.c.b16 %v2699, %v2691
    %v3516 = vpack.c.b16 %v2700, %v2692
    %v3517 = vpack.c.b16 %v2701, %v2693
    %v3518 = vpack.c.b16 %v2702, %v2694
    %v3519 = vpack.c.b16 %v2703, %v2695
    %v3520 = vpack.c.b16 %v2704, %v2696
    %v3521 = vpack.c.b16 %v2705, %v2697
    %v3522 = vpack.c.b16 %v2714, %v2706
    %v3523 = vpack.c.b16 %v2715, %v2707
    %v3524 = vpack.c.b16 %v2716, %v2708
    %v3525 = vpack.c.b16 %v2717, %v2709
    %v3526 = vpack.c.b16 %v2718, %v2710
    %v3527 = vpack.c.b16 %v2719, %v2711
    %v3528 = vpack.c.b16 %v2720, %v2712
    %v3529 = vpack.c.b16 %v2721, %v2713
    %v3530 = vpack.c.b16 %v2730, %v2722
    %v3531 = vpack.c.b16 %v2731, %v2723
    %v3532 = vpack.c.b16 %v2732, %v2724
    %v3533 = vpack.c.b16 %v2733, %v2725
    %v3534 = vpack.c.b16 %v2734, %v2726
    %v3535 = vpack.c.b16 %v2735, %v2727
    %v3536 = vpack.c.b16 %v2736, %v2728
    %v3537 = vpack.c.b16 %v2737, %v2729
    %v3538 = vpack.c.b16 %v2746, %v2738
    %v3539 = vpack.c.b16 %v2747, %v2739
    %v3540 = vpack.c.b16 %v2748, %v2740
    %v3541 = vpack.c.b16 %v2749, %v2741
    %v3542 = vpack.c.b16 %v2750, %v2742
    %v3543 = vpack.c.b16 %v2751, %v2743
    %v3544 = vpack.c.b16 %v2752, %v2744
    %v3545 = vpack.c.b16 %v2753, %v2745
    %v3546 = vpack.c.b16 %v2762, %v2754
    %v3547 = vpack.c.b16 %v2763, %v2755
    %v3548 = vpack.c.b16 %v2764, %v2756
    %v3549 = vpack.c.b16 %v2765, %v2757
    %v3550 = vpack.c.b16 %v2766, %v2758
    %v3551 = vpack.c.b16 %v2767, %v2759
    %v3552 = vpack.c.b16 %v2768, %v2760
    %v3553 = vpack.c.b16 %v2769, %v2761
    %v3554 = vpack.c.b16 %v2778, %v2770
    %v3555 = vpack.c.b16 %v2779, %v2771
    %v3556 = vpack.c.b16 %v2780, %v2772
    %v3557 = vpack.c.b16 %v2781, %v2773
    %v3558 = vpack.c.b16 %v2782, %v2774
    %v3559 = vpack.c.b16 %v2783, %v2775
    %v3560 = vpack.c.b16 %v2784, %v2776
    %v3561 = vpack.c.b16 %v2785, %v2777
    %v3562 = vpack.c.b16 %v2794, %v2786
    %v3563 = vpack.c.b16 %v2795, %v2787
    %v3564 = vpack.c.b16 %v2796, %v2788
    %v3565 = vpack.c.b16 %v2797, %v2789
    %v3566 = vpack.c.b16 %v2798, %v2790
    %v3567 = vpack.c.b16 %v2799, %v2791
    %v3568 = vpack.c.b16 %v2800, %v2792
    %v3569 = vpack.c.b16 %v2801, %v2793
    %v3570 = vpack.c.b16 %v2810, %v2802
    %v3571 = vpack.c.b16 %v2811, %v2803
    %v3572 = vpack.c.b16 %v2812, %v2804
    %v3573 = vpack.c.b16 %v2813, %v2805
    %v3574 = vpack.c.b16 %v2814, %v2806
    %v3575 = vpack.c.b16 %v2815, %v2807
    %v3576 = vpack.c.b16 %v2816, %v2808
    %v3577 = vpack.c.b16 %v2817, %v2809
    %v3578 = vpack.c.b16 %v2826, %v2818
    %v3579 = vpack.c.b16 %v2827, %v2819
    %v3580 = vpack.c.b16 %v2828, %v2820
    %v3581 = vpack.c.b16 %v2829, %v2821
    %v3582 = vpack.c.b16 %v2830, %v2822
    %v3583 = vpack.c.b16 %v2831, %v2823
    %v3584 = vpack.c.b16 %v2832, %v2824
    %v3585 = vpack.c.b16 %v2833, %v2825
    %v3586 = vpack.c.b16 %v2842, %v2834
    %v3587 = vpack.c.b16 %v2843, %v2835
    %v3588 = vpack.c.b16 %v2844, %v2836
    %v3589 = vpack.c.b16 %v2845, %v2837
    %v3590 = vpack.c.b16 %v2846, %v2838
    %v3591 = vpack.c.b16 %v2847, %v2839
    %v3592 = vpack.c.b16 %v2848, %v2840
    %v3593 = vpack.c.b16 %v2849, %v2841
    %v3594 = vpack.c.b16 %v2858, %v2850
    %v3595 = vpack.c.b16 %v2859, %v2851
    %v3596 = vpack.c.b16 %v2860, %v2852
    %v3597 = vpack.c.b16 %v2861, %v2853
    %v3598 = vpack.c.b16 %v2862, %v2854
    %v3599 = vpack.c.b16 %v2863, %v2855
    %v3600 = vpack.c.b16 %v2864, %v2856
    %v3601 = vpack.c.b16 %v2865, %v2857
    %v3602 = vpack.c.b16 %v2874, %v2866
    %v3603 = vpack.c.b16 %v2875, %v2867
    %v3604 = vpack.c.b16 %v2876, %v2868
    %v3605 = vpack.c.b16 %v2877, %v2869
    %v3606 = vpack.c.b16 %v2878, %v2870
    %v3607 = vpack.c.b16 %v2879, %v2871
    %v3608 = vpack.c.b16 %v2880, %v2872
    %v3609 = vpack.c.b16 %v2881, %v2873
    %v3610 = vpack.c.b16 %v2890, %v2882
    %v3611 = vpack.c.b16 %v2891, %v2883
    %v3612 = vpack.c.b16 %v2892, %v2884
    %v3613 = vpack.c.b16 %v2893, %v2885
    %v3614 = vpack.c.b16 %v2894, %v2886
    %v3615 = vpack.c.b16 %v2895, %v2887
    %v3616 = vpack.c.b16 %v2896, %v2888
    %v3617 = vpack.c.b16 %v2897, %v2889
    %v3618 = vpack.c.b16 %v2906, %v2898
    %v3619 = vpack.c.b16 %v2907, %v2899
    %v3620 = vpack.c.b16 %v2908, %v2900
    %v3621 = vpack.c.b16 %v2909, %v2901
    %v3622 = vpack.c.b16 %v2910, %v2902
    %v3623 = vpack.c.b16 %v2911, %v2903
    %v3624 = vpack.c.b16 %v2912, %v2904
    %v3625 = vpack.c.b16 %v2913, %v2905
    %v3626 = vpack.c.b16 %v2922, %v2914
    %v3627 = vpack.c.b16 %v2923, %v2915
    %v3628 = vpack.c.b16 %v2924, %v2916
    %v3629 = vpack.c.b16 %v2925, %v2917
    %v3630 = vpack.c.b16 %v2926, %v2918
    %v3631 = vpack.c.b16 %v2927, %v2919
    %v3632 = vpack.c.b16 %v2928, %v2920
    %v3633 = vpack.c.b16 %v2929, %v2921
    %v3634 = vpack.c.b16 %v2938, %v2930
    %v3635 = vpack.c.b16 %v2939, %v2931
    %v3636 = vpack.c.b16 %v2940, %v2932
    %v3637 = vpack.c.b16 %v2941, %v2933
    %v3638 = vpack.c.b16 %v2942, %v2934
    %v3639 = vpack.c.b16 %v2943, %v2935
    %v3640 = vpack.c.b16 %v2944, %v2936
    %v3641 = vpack.c.b16 %v2945, %v2937
    %v3642 = vpack.c.b16 %v2954, %v2946
    %v3643 = vpack.c.b16 %v2955, %v2947
    %v3644 = vpack.c.b16 %v2956, %v2948
    %v3645 = vpack.c.b16 %v2957, %v2949
    %v3646 = vpack.c.b16 %v2958, %v2950
    %v3647 = vpack.c.b16 %v2959, %v2951
    %v3648 = vpack.c.b16 %v2960, %v2952
    %v3649 = vpack.c.b16 %v2961, %v2953
    %v3650 = vpack.c.b16 %v2970, %v2962
    %v3651 = vpack.c.b16 %v2971, %v2963
    %v3652 = vpack.c.b16 %v2972, %v2964
    %v3653 = vpack.c.b16 %v2973, %v2965
    %v3654 = vpack.c.b16 %v2974, %v2966
    %v3655 = vpack.c.b16 %v2975, %v2967
    %v3656 = vpack.c.b16 %v2976, %v2968
    %v3657 = vpack.c.b16 %v2977, %v2969
    %v3658 = vpack.c.b16 %v2986, %v2978
    %v3659 = vpack.c.b16 %v2987, %v2979
    %v3660 = vpack.c.b16 %v2988, %v2980
    %v3661 = vpack.c.b16 %v2989, %v2981
    %v3662 = vpack.c.b16 %v2990, %v2982
    %v3663 = vpack.c.b16 %v2991, %v2983
    %v3664 = vpack.c.b16 %v2992, %v2984
    %v3665 = vpack.c.b16 %v2993, %v2985
    %v3666 = vpack.c.b16 %v3002, %v2994
    %v3667 = vpack.c.b16 %v3003, %v2995
    %v3668 = vpack.c.b16 %v3004, %v2996
    %v3669 = vpack.c.b16 %v3005, %v2997
    %v3670 = vpack.c.b16 %v3006, %v2998
    %v3671 = vpack.c.b16 %v3007, %v2999
    %v3672 = vpack.c.b16 %v3008, %v3000
    %v3673 = vpack.c.b16 %v3009, %v3001
    %v3674 = vpack.c.b16 %v3018, %v3010
    %v3675 = vpack.c.b16 %v3019, %v3011
    %v3676 = vpack.c.b16 %v3020, %v3012
    %v3677 = vpack.c.b16 %v3021, %v3013
    %v3678 = vpack.c.b16 %v3022, %v3014
    %v3679 = vpack.c.b16 %v3023, %v3015
    %v3680 = vpack.c.b16 %v3024, %v3016
    %v3681 = vpack.c.b16 %v3025, %v3017
    %v3682 = vpack.c.b16 %v3034, %v3026
    %v3683 = vpack.c.b16 %v3035, %v3027
    %v3684 = vpack.c.b16 %v3036, %v3028
    %v3685 = vpack.c.b16 %v3037, %v3029
    %v3686 = vpack.c.b16 %v3038, %v3030
    %v3687 = vpack.c.b16 %v3039, %v3031
    %v3688 = vpack.c.b16 %v3040, %v3032
    %v3689 = vpack.c.b16 %v3041, %v3033
    %v3690 = vpack.c.b16 %v3050, %v3042
    %v3691 = vpack.c.b16 %v3051, %v3043
    %v3692 = vpack.c.b16 %v3052, %v3044
    %v3693 = vpack.c.b16 %v3053, %v3045
    %v3694 = vpack.c.b16 %v3054, %v3046
    %v3695 = vpack.c.b16 %v3055, %v3047
    %v3696 = vpack.c.b16 %v3056, %v3048
    %v3697 = vpack.c.b16 %v3057, %v3049
    %v3698 = vpack.c.b16 %v3066, %v3058
    %v3699 = vpack.c.b16 %v3067, %v3059
    %v3700 = vpack.c.b16 %v3068, %v3060
    %v3701 = vpack.c.b16 %v3069, %v3061
    %v3702 = vpack.c.b16 %v3070, %v3062
    %v3703 = vpack.c.b16 %v3071, %v3063
    %v3704 = vpack.c.b16 %v3072, %v3064
    %v3705 = vpack.c.b16 %v3073, %v3065
    %v3706 = vpack.c.b16 %v3082, %v3074
    %v3707 = vpack.c.b16 %v3083, %v3075
    %v3708 = vpack.c.b16 %v3084, %v3076
    %v3709 = vpack.c.b16 %v3085, %v3077
    %v3710 = vpack.c.b16 %v3086, %v3078
    %v3711 = vpack.c.b16 %v3087, %v3079
    %v3712 = vpack.c.b16 %v3088, %v3080
    %v3713 = vpack.c.b16 %v3089, %v3081
    %v3714 = vpack.c.b16 %v3098, %v3090
    %v3715 = vpack.c.b16 %v3099, %v3091
    %v3716 = vpack.c.b16 %v3100, %v3092
    %v3717 = vpack.c.b16 %v3101, %v3093
    %v3718 = vpack.c.b16 %v3102, %v3094
    %v3719 = vpack.c.b16 %v3103, %v3095
    %v3720 = vpack.c.b16 %v3104, %v3096
    %v3721 = vpack.c.b16 %v3105, %v3097
    %v3722 = vpack.c.b16 %v3114, %v3106
    %v3723 = vpack.c.b16 %v3115, %v3107
    %v3724 = vpack.c.b16 %v3116, %v3108
    %v3725 = vpack.c.b16 %v3117, %v3109
    %v3726 = vpack.c.b16 %v3118, %v3110
    %v3727 = vpack.c.b16 %v3119, %v3111
    %v3728 = vpack.c.b16 %v3120, %v3112
    %v3729 = vpack.c.b16 %v3121, %v3113
    %v3730 = vpack.c.b16 %v3130, %v3122
    %v3731 = vpack.c.b16 %v3131, %v3123
    %v3732 = vpack.c.b16 %v3132, %v3124
    %v3733 = vpack.c.b16 %v3133, %v3125
    %v3734 = vpack.c.b16 %v3134, %v3126
    %v3735 = vpack.c.b16 %v3135, %v3127
    %v3736 = vpack.c.b16 %v3136, %v3128
    %v3737 = vpack.c.b16 %v3137, %v3129
    %v3738 = vpack.c.b16 %v3146, %v3138
    %v3739 = vpack.c.b16 %v3147, %v3139
    %v3740 = vpack.c.b16 %v3148, %v3140
    %v3741 = vpack.c.b16 %v3149, %v3141
    %v3742 = vpack.c.b16 %v3150, %v3142
    %v3743 = vpack.c.b16 %v3151, %v3143
    %v3744 = vpack.c.b16 %v3152, %v3144
    %v3745 = vpack.c.b16 %v3153, %v3145
    %v3746 = vpack.c.b16 %v3162, %v3154
    %v3747 = vpack.c.b16 %v3163, %v3155
    %v3748 = vpack.c.b16 %v3164, %v3156
    %v3749 = vpack.c.b16 %v3165, %v3157
    %v3750 = vpack.c.b16 %v3166, %v3158
    %v3751 = vpack.c.b16 %v3167, %v3159
    %v3752 = vpack.c.b16 %v3168, %v3160
    %v3753 = vpack.c.b16 %v3169, %v3161
    %v3754 = vpack.c.b16 %v3178, %v3170
    %v3755 = vpack.c.b16 %v3179, %v3171
    %v3756 = vpack.c.b16 %v3180, %v3172
    %v3757 = vpack.c.b16 %v3181, %v3173
    %v3758 = vpack.c.b16 %v3182, %v3174
    %v3759 = vpack.c.b16 %v3183, %v3175
    %v3760 = vpack.c.b16 %v3184, %v3176
    %v3761 = vpack.c.b16 %v3185, %v3177
    %v3762 = vpack.c.b16 %v3194, %v3186
    %v3763 = vpack.c.b16 %v3195, %v3187
    %v3764 = vpack.c.b16 %v3196, %v3188
    %v3765 = vpack.c.b16 %v3197, %v3189
    %v3766 = vpack.c.b16 %v3198, %v3190
    %v3767 = vpack.c.b16 %v3199, %v3191
    %v3768 = vpack.c.b16 %v3200, %v3192
    %v3769 = vpack.c.b16 %v3201, %v3193
    %v3770 = vpack.c.b16 %v3210, %v3202
    %v3771 = vpack.c.b16 %v3211, %v3203
    %v3772 = vpack.c.b16 %v3212, %v3204
    %v3773 = vpack.c.b16 %v3213, %v3205
    %v3774 = vpack.c.b16 %v3214, %v3206
    %v3775 = vpack.c.b16 %v3215, %v3207
    %v3776 = vpack.c.b16 %v3216, %v3208
    %v3777 = vpack.c.b16 %v3217, %v3209
    %v3778 = vpack.c.b16 %v3226, %v3218
    %v3779 = vpack.c.b16 %v3227, %v3219
    %v3780 = vpack.c.b16 %v3228, %v3220
    %v3781 = vpack.c.b16 %v3229, %v3221
    %v3782 = vpack.c.b16 %v3230, %v3222
    %v3783 = vpack.c.b16 %v3231, %v3223
    %v3784 = vpack.c.b16 %v3232, %v3224
    %v3785 = vpack.c.b16 %v3233, %v3225
    %v3786 = vpack.c.b16 %v3242, %v3234
    %v3787 = vpack.c.b16 %v3243, %v3235
    %v3788 = vpack.c.b16 %v3244, %v3236
    %v3789 = vpack.c.b16 %v3245, %v3237
    %v3790 = vpack.c.b16 %v3246, %v3238
    %v3791 = vpack.c.b16 %v3247, %v3239
    %v3792 = vpack.c.b16 %v3248, %v3240
    %v3793 = vpack.c.b16 %v3249, %v3241
    %v3794 = vpack.c.b16 %v3258, %v3250
    %v3795 = vpack.c.b16 %v3259, %v3251
    %v3796 = vpack.c.b16 %v3260, %v3252
    %v3797 = vpack.c.b16 %v3261, %v3253
    %v3798 = vpack.c.b16 %v3262, %v3254
    %v3799 = vpack.c.b16 %v3263, %v3255
    %v3800 = vpack.c.b16 %v3264, %v3256
    %v3801 = vpack.c.b16 %v3265, %v3257
    %v3802 = vpack.c.b16 %v3274, %v3266
    %v3803 = vpack.c.b16 %v3275, %v3267
    %v3804 = vpack.c.b16 %v3276, %v3268
    %v3805 = vpack.c.b16 %v3277, %v3269
    %v3806 = vpack.c.b16 %v3278, %v3270
    %v3807 = vpack.c.b16 %v3279, %v3271
    %v3808 = vpack.c.b16 %v3280, %v3272
    %v3809 = vpack.c.b16 %v3281, %v3273
    %v3810 = vpack.c.b16 %v3290, %v3282
    %v3811 = vpack.c.b16 %v3291, %v3283
    %v3812 = vpack.c.b16 %v3292, %v3284
    %v3813 = vpack.c.b16 %v3293, %v3285
    %v3814 = vpack.c.b16 %v3294, %v3286
    %v3815 = vpack.c.b16 %v3295, %v3287
    %v3816 = vpack.c.b16 %v3296, %v3288
    %v3817 = vpack.c.b16 %v3297, %v3289
    %v3818 = vpack.c.b16 %v3306, %v3298
    %v3819 = vpack.c.b16 %v3307, %v3299
    %v3820 = vpack.c.b16 %v3308, %v3300
    %v3821 = vpack.c.b16 %v3309, %v3301
    %v3822 = vpack.c.b16 %v3310, %v3302
    %v3823 = vpack.c.b16 %v3311, %v3303
    %v3824 = vpack.c.b16 %v3312, %v3304
    %v3825 = vpack.c.b16 %v3313, %v3305
    %4338 = vmatpush.bf16.msra.mxu0 %v3370
    %4339 = vmatpush.bf16.msra.mxu0 %v3362
    %4340 = vmatpush.bf16.msra.mxu0 %v3354
    %4341 = vmatpush.bf16.msra.mxu0 %v3346
    %4342 = vmatpush.bf16.msra.mxu0 %v3338
    %4343 = vmatpush.bf16.msra.mxu0 %v3330
    %4344 = vmatpush.bf16.msra.mxu0 %v3322
    %4345 = vmatpush.bf16.msra.mxu0 %v3314
    %4346 = vmatmul.bf16.gmra.mxu0 %v1184
    %v4347 = vpop.f32.mrf.mxu0
    %v4348 = vadd.f32 %v1762, %v4347
    %v4349 = vpop.f32.mrf.mxu0
    %v4350 = vadd.f32 %v1762, %v4349
    %4351 = vmatmul.bf16.gmra.mxu0 %v1192
    %v4352 = vpop.f32.mrf.mxu0
    %v4353 = vadd.f32 %v1762, %v4352
    %v4354 = vpop.f32.mrf.mxu0
    %v4355 = vadd.f32 %v1762, %v4354
    %4356 = vmatmul.bf16.gmra.mxu0 %v1200
    %v4357 = vpop.f32.mrf.mxu0
    %v4358 = vadd.f32 %v1762, %v4357
    %v4359 = vpop.f32.mrf.mxu0
    %v4360 = vadd.f32 %v1762, %v4359
    %4361 = vmatmul.bf16.gmra.mxu0 %v1208
    %v4362 = vpop.f32.mrf.mxu0
    %v4363 = vadd.f32 %v1762, %v4362
    %v4364 = vpop.f32.mrf.mxu0
    %v4365 = vadd.f32 %v1762, %v4364
    %4366 = vmatmul.bf16.gmra.mxu0 %v1216
    %v4367 = vpop.f32.mrf.mxu0
    %v4368 = vadd.f32 %v1762, %v4367
    %v4369 = vpop.f32.mrf.mxu0
    %v4370 = vadd.f32 %v1762, %v4369
    %4371 = vmatmul.bf16.gmra.mxu0 %v1224
    %v4372 = vpop.f32.mrf.mxu0
    %v4373 = vadd.f32 %v1762, %v4372
    %v4374 = vpop.f32.mrf.mxu0
    %v4375 = vadd.f32 %v1762, %v4374
    %4376 = vmatmul.bf16.gmra.mxu0 %v1232
    %v4377 = vpop.f32.mrf.mxu0
    %v4378 = vadd.f32 %v1762, %v4377
    %v4379 = vpop.f32.mrf.mxu0
    %v4380 = vadd.f32 %v1762, %v4379
    %4381 = vmatmul.bf16.gmra.mxu0 %v1240
    %v4382 = vpop.f32.mrf.mxu0
    %v4383 = vadd.f32 %v1762, %v4382
    %v4384 = vpop.f32.mrf.mxu0
    %v4385 = vadd.f32 %v1762, %v4384
    %4386 = vdwg.mxu0
    %4387 = vmatpush.bf16.msra.mxu0 %v3434
    %4388 = vmatpush.bf16.msra.mxu0 %v3426
    %4389 = vmatpush.bf16.msra.mxu0 %v3418
    %4390 = vmatpush.bf16.msra.mxu0 %v3410
    %4391 = vmatpush.bf16.msra.mxu0 %v3402
    %4392 = vmatpush.bf16.msra.mxu0 %v3394
    %4393 = vmatpush.bf16.msra.mxu0 %v3386
    %4394 = vmatpush.bf16.msra.mxu0 %v3378
    %4395 = vmatmul.bf16.gmra.mxu0 %v1185
    %v4396 = vpop.f32.mrf.mxu0
    %v4397 = vadd.f32 %v4348, %v4396
    %v4398 = vpop.f32.mrf.mxu0
    %v4399 = vadd.f32 %v4350, %v4398
    %4400 = vmatmul.bf16.gmra.mxu0 %v1193
    %v4401 = vpop.f32.mrf.mxu0
    %v4402 = vadd.f32 %v4353, %v4401
    %v4403 = vpop.f32.mrf.mxu0
    %v4404 = vadd.f32 %v4355, %v4403
    %4405 = vmatmul.bf16.gmra.mxu0 %v1201
    %v4406 = vpop.f32.mrf.mxu0
    %v4407 = vadd.f32 %v4358, %v4406
    %v4408 = vpop.f32.mrf.mxu0
    %v4409 = vadd.f32 %v4360, %v4408
    %4410 = vmatmul.bf16.gmra.mxu0 %v1209
    %v4411 = vpop.f32.mrf.mxu0
    %v4412 = vadd.f32 %v4363, %v4411
    %v4413 = vpop.f32.mrf.mxu0
    %v4414 = vadd.f32 %v4365, %v4413
    %4415 = vmatmul.bf16.gmra.mxu0 %v1217
    %v4416 = vpop.f32.mrf.mxu0
    %v4417 = vadd.f32 %v4368, %v4416
    %v4418 = vpop.f32.mrf.mxu0
    %v4419 = vadd.f32 %v4370, %v4418
    %4420 = vmatmul.bf16.gmra.mxu0 %v1225
    %v4421 = vpop.f32.mrf.mxu0
    %v4422 = vadd.f32 %v4373, %v4421
    %v4423 = vpop.f32.mrf.mxu0
    %v4424 = vadd.f32 %v4375, %v4423
    %4425 = vmatmul.bf16.gmra.mxu0 %v1233
    %v4426 = vpop.f32.mrf.mxu0
    %v4427 = vadd.f32 %v4378, %v4426
    %v4428 = vpop.f32.mrf.mxu0
    %v4429 = vadd.f32 %v4380, %v4428
    %4430 = vmatmul.bf16.gmra.mxu0 %v1241
    %v4431 = vpop.f32.mrf.mxu0
    %v4432 = vadd.f32 %v4383, %v4431
    %v4433 = vpop.f32.mrf.mxu0
    %v4434 = vadd.f32 %v4385, %v4433
    %4435 = vdwg.mxu0
    %4436 = vmatpush.bf16.msra.mxu0 %v3498
    %4437 = vmatpush.bf16.msra.mxu0 %v3490
    %4438 = vmatpush.bf16.msra.mxu0 %v3482
    %4439 = vmatpush.bf16.msra.mxu0 %v3474
    %4440 = vmatpush.bf16.msra.mxu0 %v3466
    %4441 = vmatpush.bf16.msra.mxu0 %v3458
    %4442 = vmatpush.bf16.msra.mxu0 %v3450
    %4443 = vmatpush.bf16.msra.mxu0 %v3442
    %4444 = vmatmul.bf16.gmra.mxu0 %v1186
    %v4445 = vpop.f32.mrf.mxu0
    %v4446 = vadd.f32 %v4397, %v4445
    %v4447 = vpop.f32.mrf.mxu0
    %v4448 = vadd.f32 %v4399, %v4447
    %4449 = vmatmul.bf16.gmra.mxu0 %v1194
    %v4450 = vpop.f32.mrf.mxu0
    %v4451 = vadd.f32 %v4402, %v4450
    %v4452 = vpop.f32.mrf.mxu0
    %v4453 = vadd.f32 %v4404, %v4452
    %4454 = vmatmul.bf16.gmra.mxu0 %v1202
    %v4455 = vpop.f32.mrf.mxu0
    %v4456 = vadd.f32 %v4407, %v4455
    %v4457 = vpop.f32.mrf.mxu0
    %v4458 = vadd.f32 %v4409, %v4457
    %4459 = vmatmul.bf16.gmra.mxu0 %v1210
    %v4460 = vpop.f32.mrf.mxu0
    %v4461 = vadd.f32 %v4412, %v4460
    %v4462 = vpop.f32.mrf.mxu0
    %v4463 = vadd.f32 %v4414, %v4462
    %4464 = vmatmul.bf16.gmra.mxu0 %v1218
    %v4465 = vpop.f32.mrf.mxu0
    %v4466 = vadd.f32 %v4417, %v4465
    %v4467 = vpop.f32.mrf.mxu0
    %v4468 = vadd.f32 %v4419, %v4467
    %4469 = vmatmul.bf16.gmra.mxu0 %v1226
    %v4470 = vpop.f32.mrf.mxu0
    %v4471 = vadd.f32 %v4422, %v4470
    %v4472 = vpop.f32.mrf.mxu0
    %v4473 = vadd.f32 %v4424, %v4472
    %4474 = vmatmul.bf16.gmra.mxu0 %v1234
    %v4475 = vpop.f32.mrf.mxu0
    %v4476 = vadd.f32 %v4427, %v4475
    %v4477 = vpop.f32.mrf.mxu0
    %v4478 = vadd.f32 %v4429, %v4477
    %4479 = vmatmul.bf16.gmra.mxu0 %v1242
    %v4480 = vpop.f32.mrf.mxu0
    %v4481 = vadd.f32 %v4432, %v4480
    %v4482 = vpop.f32.mrf.mxu0
    %v4483 = vadd.f32 %v4434, %v4482
    %4484 = vdwg.mxu0
    %4485 = vmatpush.bf16.msra.mxu0 %v3562
    %4486 = vmatpush.bf16.msra.mxu0 %v3554
    %4487 = vmatpush.bf16.msra.mxu0 %v3546
    %4488 = vmatpush.bf16.msra.mxu0 %v3538
    %4489 = vmatpush.bf16.msra.mxu0 %v3530
    %4490 = vmatpush.bf16.msra.mxu0 %v3522
    %4491 = vmatpush.bf16.msra.mxu0 %v3514
    %4492 = vmatpush.bf16.msra.mxu0 %v3506
    %4493 = vmatmul.bf16.gmra.mxu0 %v1187
    %v4494 = vpop.f32.mrf.mxu0
    %v4495 = vadd.f32 %v4446, %v4494
    %v4496 = vpop.f32.mrf.mxu0
    %v4497 = vadd.f32 %v4448, %v4496
    %4498 = vmatmul.bf16.gmra.mxu0 %v1195
    %v4499 = vpop.f32.mrf.mxu0
    %v4500 = vadd.f32 %v4451, %v4499
    %v4501 = vpop.f32.mrf.mxu0
    %v4502 = vadd.f32 %v4453, %v4501
    %4503 = vmatmul.bf16.gmra.mxu0 %v1203
    %v4504 = vpop.f32.mrf.mxu0
    %v4505 = vadd.f32 %v4456, %v4504
    %v4506 = vpop.f32.mrf.mxu0
    %v4507 = vadd.f32 %v4458, %v4506
    %4508 = vmatmul.bf16.gmra.mxu0 %v1211
    %v4509 = vpop.f32.mrf.mxu0
    %v4510 = vadd.f32 %v4461, %v4509
    %v4511 = vpop.f32.mrf.mxu0
    %v4512 = vadd.f32 %v4463, %v4511
    %4513 = vmatmul.bf16.gmra.mxu0 %v1219
    %v4514 = vpop.f32.mrf.mxu0
    %v4515 = vadd.f32 %v4466, %v4514
    %v4516 = vpop.f32.mrf.mxu0
    %v4517 = vadd.f32 %v4468, %v4516
    %4518 = vmatmul.bf16.gmra.mxu0 %v1227
    %v4519 = vpop.f32.mrf.mxu0
    %v4520 = vadd.f32 %v4471, %v4519
    %v4521 = vpop.f32.mrf.mxu0
    %v4522 = vadd.f32 %v4473, %v4521
    %4523 = vmatmul.bf16.gmra.mxu0 %v1235
    %v4524 = vpop.f32.mrf.mxu0
    %v4525 = vadd.f32 %v4476, %v4524
    %v4526 = vpop.f32.mrf.mxu0
    %v4527 = vadd.f32 %v4478, %v4526
    %4528 = vmatmul.bf16.gmra.mxu0 %v1243
    %v4529 = vpop.f32.mrf.mxu0
    %v4530 = vadd.f32 %v4481, %v4529
    %v4531 = vpop.f32.mrf.mxu0
    %v4532 = vadd.f32 %v4483, %v4531
    %4533 = vdwg.mxu0
    %4534 = vmatpush.bf16.msra.mxu0 %v3626
    %4535 = vmatpush.bf16.msra.mxu0 %v3618
    %4536 = vmatpush.bf16.msra.mxu0 %v3610
    %4537 = vmatpush.bf16.msra.mxu0 %v3602
    %4538 = vmatpush.bf16.msra.mxu0 %v3594
    %4539 = vmatpush.bf16.msra.mxu0 %v3586
    %4540 = vmatpush.bf16.msra.mxu0 %v3578
    %4541 = vmatpush.bf16.msra.mxu0 %v3570
    %4542 = vmatmul.bf16.gmra.mxu0 %v1188
    %v4543 = vpop.f32.mrf.mxu0
    %v4544 = vadd.f32 %v4495, %v4543
    %v4545 = vpop.f32.mrf.mxu0
    %v4546 = vadd.f32 %v4497, %v4545
    %4547 = vmatmul.bf16.gmra.mxu0 %v1196
    %v4548 = vpop.f32.mrf.mxu0
    %v4549 = vadd.f32 %v4500, %v4548
    %v4550 = vpop.f32.mrf.mxu0
    %v4551 = vadd.f32 %v4502, %v4550
    %4552 = vmatmul.bf16.gmra.mxu0 %v1204
    %v4553 = vpop.f32.mrf.mxu0
    %v4554 = vadd.f32 %v4505, %v4553
    %v4555 = vpop.f32.mrf.mxu0
    %v4556 = vadd.f32 %v4507, %v4555
    %4557 = vmatmul.bf16.gmra.mxu0 %v1212
    %v4558 = vpop.f32.mrf.mxu0
    %v4559 = vadd.f32 %v4510, %v4558
    %v4560 = vpop.f32.mrf.mxu0
    %v4561 = vadd.f32 %v4512, %v4560
    %4562 = vmatmul.bf16.gmra.mxu0 %v1220
    %v4563 = vpop.f32.mrf.mxu0
    %v4564 = vadd.f32 %v4515, %v4563
    %v4565 = vpop.f32.mrf.mxu0
    %v4566 = vadd.f32 %v4517, %v4565
    %4567 = vmatmul.bf16.gmra.mxu0 %v1228
    %v4568 = vpop.f32.mrf.mxu0
    %v4569 = vadd.f32 %v4520, %v4568
    %v4570 = vpop.f32.mrf.mxu0
    %v4571 = vadd.f32 %v4522, %v4570
    %4572 = vmatmul.bf16.gmra.mxu0 %v1236
    %v4573 = vpop.f32.mrf.mxu0
    %v4574 = vadd.f32 %v4525, %v4573
    %v4575 = vpop.f32.mrf.mxu0
    %v4576 = vadd.f32 %v4527, %v4575
    %4577 = vmatmul.bf16.gmra.mxu0 %v1244
    %v4578 = vpop.f32.mrf.mxu0
    %v4579 = vadd.f32 %v4530, %v4578
    %v4580 = vpop.f32.mrf.mxu0
    %v4581 = vadd.f32 %v4532, %v4580
    %4582 = vdwg.mxu0
    %4583 = vmatpush.bf16.msra.mxu0 %v3690
    %4584 = vmatpush.bf16.msra.mxu0 %v3682
    %4585 = vmatpush.bf16.msra.mxu0 %v3674
    %4586 = vmatpush.bf16.msra.mxu0 %v3666
    %4587 = vmatpush.bf16.msra.mxu0 %v3658
    %4588 = vmatpush.bf16.msra.mxu0 %v3650
    %4589 = vmatpush.bf16.msra.mxu0 %v3642
    %4590 = vmatpush.bf16.msra.mxu0 %v3634
    %4591 = vmatmul.bf16.gmra.mxu0 %v1189
    %v4592 = vpop.f32.mrf.mxu0
    %v4593 = vadd.f32 %v4544, %v4592
    %v4594 = vpop.f32.mrf.mxu0
    %v4595 = vadd.f32 %v4546, %v4594
    %4596 = vmatmul.bf16.gmra.mxu0 %v1197
    %v4597 = vpop.f32.mrf.mxu0
    %v4598 = vadd.f32 %v4549, %v4597
    %v4599 = vpop.f32.mrf.mxu0
    %v4600 = vadd.f32 %v4551, %v4599
    %4601 = vmatmul.bf16.gmra.mxu0 %v1205
    %v4602 = vpop.f32.mrf.mxu0
    %v4603 = vadd.f32 %v4554, %v4602
    %v4604 = vpop.f32.mrf.mxu0
    %v4605 = vadd.f32 %v4556, %v4604
    %4606 = vmatmul.bf16.gmra.mxu0 %v1213
    %v4607 = vpop.f32.mrf.mxu0
    %v4608 = vadd.f32 %v4559, %v4607
    %v4609 = vpop.f32.mrf.mxu0
    %v4610 = vadd.f32 %v4561, %v4609
    %4611 = vmatmul.bf16.gmra.mxu0 %v1221
    %v4612 = vpop.f32.mrf.mxu0
    %v4613 = vadd.f32 %v4564, %v4612
    %v4614 = vpop.f32.mrf.mxu0
    %v4615 = vadd.f32 %v4566, %v4614
    %4616 = vmatmul.bf16.gmra.mxu0 %v1229
    %v4617 = vpop.f32.mrf.mxu0
    %v4618 = vadd.f32 %v4569, %v4617
    %v4619 = vpop.f32.mrf.mxu0
    %v4620 = vadd.f32 %v4571, %v4619
    %4621 = vmatmul.bf16.gmra.mxu0 %v1237
    %v4622 = vpop.f32.mrf.mxu0
    %v4623 = vadd.f32 %v4574, %v4622
    %v4624 = vpop.f32.mrf.mxu0
    %v4625 = vadd.f32 %v4576, %v4624
    %4626 = vmatmul.bf16.gmra.mxu0 %v1245
    %v4627 = vpop.f32.mrf.mxu0
    %v4628 = vadd.f32 %v4579, %v4627
    %v4629 = vpop.f32.mrf.mxu0
    %v4630 = vadd.f32 %v4581, %v4629
    %4631 = vdwg.mxu0
    %4632 = vmatpush.bf16.msra.mxu0 %v3754
    %4633 = vmatpush.bf16.msra.mxu0 %v3746
    %4634 = vmatpush.bf16.msra.mxu0 %v3738
    %4635 = vmatpush.bf16.msra.mxu0 %v3730
    %4636 = vmatpush.bf16.msra.mxu0 %v3722
    %4637 = vmatpush.bf16.msra.mxu0 %v3714
    %4638 = vmatpush.bf16.msra.mxu0 %v3706
    %4639 = vmatpush.bf16.msra.mxu0 %v3698
    %4640 = vmatmul.bf16.gmra.mxu0 %v1190
    %v4641 = vpop.f32.mrf.mxu0
    %v4642 = vadd.f32 %v4593, %v4641
    %v4643 = vpop.f32.mrf.mxu0
    %v4644 = vadd.f32 %v4595, %v4643
    %4645 = vmatmul.bf16.gmra.mxu0 %v1198
    %v4646 = vpop.f32.mrf.mxu0
    %v4647 = vadd.f32 %v4598, %v4646
    %v4648 = vpop.f32.mrf.mxu0
    %v4649 = vadd.f32 %v4600, %v4648
    %4650 = vmatmul.bf16.gmra.mxu0 %v1206
    %v4651 = vpop.f32.mrf.mxu0
    %v4652 = vadd.f32 %v4603, %v4651
    %v4653 = vpop.f32.mrf.mxu0
    %v4654 = vadd.f32 %v4605, %v4653
    %4655 = vmatmul.bf16.gmra.mxu0 %v1214
    %v4656 = vpop.f32.mrf.mxu0
    %v4657 = vadd.f32 %v4608, %v4656
    %v4658 = vpop.f32.mrf.mxu0
    %v4659 = vadd.f32 %v4610, %v4658
    %4660 = vmatmul.bf16.gmra.mxu0 %v1222
    %v4661 = vpop.f32.mrf.mxu0
    %v4662 = vadd.f32 %v4613, %v4661
    %v4663 = vpop.f32.mrf.mxu0
    %v4664 = vadd.f32 %v4615, %v4663
    %4665 = vmatmul.bf16.gmra.mxu0 %v1230
    %v4666 = vpop.f32.mrf.mxu0
    %v4667 = vadd.f32 %v4618, %v4666
    %v4668 = vpop.f32.mrf.mxu0
    %v4669 = vadd.f32 %v4620, %v4668
    %4670 = vmatmul.bf16.gmra.mxu0 %v1238
    %v4671 = vpop.f32.mrf.mxu0
    %v4672 = vadd.f32 %v4623, %v4671
    %v4673 = vpop.f32.mrf.mxu0
    %v4674 = vadd.f32 %v4625, %v4673
    %4675 = vmatmul.bf16.gmra.mxu0 %v1246
    %v4676 = vpop.f32.mrf.mxu0
    %v4677 = vadd.f32 %v4628, %v4676
    %v4678 = vpop.f32.mrf.mxu0
    %v4679 = vadd.f32 %v4630, %v4678
    %4680 = vdwg.mxu0
    %4681 = vmatpush.bf16.msra.mxu0 %v3818
    %4682 = vmatpush.bf16.msra.mxu0 %v3810
    %4683 = vmatpush.bf16.msra.mxu0 %v3802
    %4684 = vmatpush.bf16.msra.mxu0 %v3794
    %4685 = vmatpush.bf16.msra.mxu0 %v3786
    %4686 = vmatpush.bf16.msra.mxu0 %v3778
    %4687 = vmatpush.bf16.msra.mxu0 %v3770
    %4688 = vmatpush.bf16.msra.mxu0 %v3762
    %4689 = vmatmul.bf16.gmra.mxu0 %v1191
    %v4690 = vpop.f32.mrf.mxu0
    %v4691 = vadd.f32 %v4642, %v4690
    %v4692 = vpop.f32.mrf.mxu0
    %v4693 = vadd.f32 %v4644, %v4692
    %4694 = vmatmul.bf16.gmra.mxu0 %v1199
    %v4695 = vpop.f32.mrf.mxu0
    %v4696 = vadd.f32 %v4647, %v4695
    %v4697 = vpop.f32.mrf.mxu0
    %v4698 = vadd.f32 %v4649, %v4697
    %4699 = vmatmul.bf16.gmra.mxu0 %v1207
    %v4700 = vpop.f32.mrf.mxu0
    %v4701 = vadd.f32 %v4652, %v4700
    %v4702 = vpop.f32.mrf.mxu0
    %v4703 = vadd.f32 %v4654, %v4702
    %4704 = vmatmul.bf16.gmra.mxu0 %v1215
    %v4705 = vpop.f32.mrf.mxu0
    %v4706 = vadd.f32 %v4657, %v4705
    %v4707 = vpop.f32.mrf.mxu0
    %v4708 = vadd.f32 %v4659, %v4707
    %4709 = vmatmul.bf16.gmra.mxu0 %v1223
    %v4710 = vpop.f32.mrf.mxu0
    %v4711 = vadd.f32 %v4662, %v4710
    %v4712 = vpop.f32.mrf.mxu0
    %v4713 = vadd.f32 %v4664, %v4712
    %4714 = vmatmul.bf16.gmra.mxu0 %v1231
    %v4715 = vpop.f32.mrf.mxu0
    %v4716 = vadd.f32 %v4667, %v4715
    %v4717 = vpop.f32.mrf.mxu0
    %v4718 = vadd.f32 %v4669, %v4717
    %4719 = vmatmul.bf16.gmra.mxu0 %v1239
    %v4720 = vpop.f32.mrf.mxu0
    %v4721 = vadd.f32 %v4672, %v4720
    %v4722 = vpop.f32.mrf.mxu0
    %v4723 = vadd.f32 %v4674, %v4722
    %4724 = vmatmul.bf16.gmra.mxu0 %v1247
    %v4725 = vpop.f32.mrf.mxu0
    %v4726 = vadd.f32 %v4677, %v4725
    %v4727 = vpop.f32.mrf.mxu0
    %v4728 = vadd.f32 %v4679, %v4727
    %4729 = vdwg.mxu0
    %4730 = vmatpush.bf16.msra.mxu0 %v3371
    %4731 = vmatpush.bf16.msra.mxu0 %v3363
    %4732 = vmatpush.bf16.msra.mxu0 %v3355
    %4733 = vmatpush.bf16.msra.mxu0 %v3347
    %4734 = vmatpush.bf16.msra.mxu0 %v3339
    %4735 = vmatpush.bf16.msra.mxu0 %v3331
    %4736 = vmatpush.bf16.msra.mxu0 %v3323
    %4737 = vmatpush.bf16.msra.mxu0 %v3315
    %4738 = vmatmul.bf16.gmra.mxu0 %v1184
    %v4739 = vpop.f32.mrf.mxu0
    %v4740 = vadd.f32 %v1763, %v4739
    %v4741 = vpop.f32.mrf.mxu0
    %v4742 = vadd.f32 %v1763, %v4741
    %4743 = vmatmul.bf16.gmra.mxu0 %v1192
    %v4744 = vpop.f32.mrf.mxu0
    %v4745 = vadd.f32 %v1763, %v4744
    %v4746 = vpop.f32.mrf.mxu0
    %v4747 = vadd.f32 %v1763, %v4746
    %4748 = vmatmul.bf16.gmra.mxu0 %v1200
    %v4749 = vpop.f32.mrf.mxu0
    %v4750 = vadd.f32 %v1763, %v4749
    %v4751 = vpop.f32.mrf.mxu0
    %v4752 = vadd.f32 %v1763, %v4751
    %4753 = vmatmul.bf16.gmra.mxu0 %v1208
    %v4754 = vpop.f32.mrf.mxu0
    %v4755 = vadd.f32 %v1763, %v4754
    %v4756 = vpop.f32.mrf.mxu0
    %v4757 = vadd.f32 %v1763, %v4756
    %4758 = vmatmul.bf16.gmra.mxu0 %v1216
    %v4759 = vpop.f32.mrf.mxu0
    %v4760 = vadd.f32 %v1763, %v4759
    %v4761 = vpop.f32.mrf.mxu0
    %v4762 = vadd.f32 %v1763, %v4761
    %4763 = vmatmul.bf16.gmra.mxu0 %v1224
    %v4764 = vpop.f32.mrf.mxu0
    %v4765 = vadd.f32 %v1763, %v4764
    %v4766 = vpop.f32.mrf.mxu0
    %v4767 = vadd.f32 %v1763, %v4766
    %4768 = vmatmul.bf16.gmra.mxu0 %v1232
    %v4769 = vpop.f32.mrf.mxu0
    %v4770 = vadd.f32 %v1763, %v4769
    %v4771 = vpop.f32.mrf.mxu0
    %v4772 = vadd.f32 %v1763, %v4771
    %4773 = vmatmul.bf16.gmra.mxu0 %v1240
    %v4774 = vpop.f32.mrf.mxu0
    %v4775 = vadd.f32 %v1763, %v4774
    %v4776 = vpop.f32.mrf.mxu0
    %v4777 = vadd.f32 %v1763, %v4776
    %4778 = vdwg.mxu0
    %4779 = vmatpush.bf16.msra.mxu0 %v3435
    %4780 = vmatpush.bf16.msra.mxu0 %v3427
    %4781 = vmatpush.bf16.msra.mxu0 %v3419
    %4782 = vmatpush.bf16.msra.mxu0 %v3411
    %4783 = vmatpush.bf16.msra.mxu0 %v3403
    %4784 = vmatpush.bf16.msra.mxu0 %v3395
    %4785 = vmatpush.bf16.msra.mxu0 %v3387
    %4786 = vmatpush.bf16.msra.mxu0 %v3379
    %4787 = vmatmul.bf16.gmra.mxu0 %v1185
    %v4788 = vpop.f32.mrf.mxu0
    %v4789 = vadd.f32 %v4740, %v4788
    %v4790 = vpop.f32.mrf.mxu0
    %v4791 = vadd.f32 %v4742, %v4790
    %4792 = vmatmul.bf16.gmra.mxu0 %v1193
    %v4793 = vpop.f32.mrf.mxu0
    %v4794 = vadd.f32 %v4745, %v4793
    %v4795 = vpop.f32.mrf.mxu0
    %v4796 = vadd.f32 %v4747, %v4795
    %4797 = vmatmul.bf16.gmra.mxu0 %v1201
    %v4798 = vpop.f32.mrf.mxu0
    %v4799 = vadd.f32 %v4750, %v4798
    %v4800 = vpop.f32.mrf.mxu0
    %v4801 = vadd.f32 %v4752, %v4800
    %4802 = vmatmul.bf16.gmra.mxu0 %v1209
    %v4803 = vpop.f32.mrf.mxu0
    %v4804 = vadd.f32 %v4755, %v4803
    %v4805 = vpop.f32.mrf.mxu0
    %v4806 = vadd.f32 %v4757, %v4805
    %4807 = vmatmul.bf16.gmra.mxu0 %v1217
    %v4808 = vpop.f32.mrf.mxu0
    %v4809 = vadd.f32 %v4760, %v4808
    %v4810 = vpop.f32.mrf.mxu0
    %v4811 = vadd.f32 %v4762, %v4810
    %4812 = vmatmul.bf16.gmra.mxu0 %v1225
    %v4813 = vpop.f32.mrf.mxu0
    %v4814 = vadd.f32 %v4765, %v4813
    %v4815 = vpop.f32.mrf.mxu0
    %v4816 = vadd.f32 %v4767, %v4815
    %4817 = vmatmul.bf16.gmra.mxu0 %v1233
    %v4818 = vpop.f32.mrf.mxu0
    %v4819 = vadd.f32 %v4770, %v4818
    %v4820 = vpop.f32.mrf.mxu0
    %v4821 = vadd.f32 %v4772, %v4820
    %4822 = vmatmul.bf16.gmra.mxu0 %v1241
    %v4823 = vpop.f32.mrf.mxu0
    %v4824 = vadd.f32 %v4775, %v4823
    %v4825 = vpop.f32.mrf.mxu0
    %v4826 = vadd.f32 %v4777, %v4825
    %4827 = vdwg.mxu0
    %4828 = vmatpush.bf16.msra.mxu0 %v3499
    %4829 = vmatpush.bf16.msra.mxu0 %v3491
    %4830 = vmatpush.bf16.msra.mxu0 %v3483
    %4831 = vmatpush.bf16.msra.mxu0 %v3475
    %4832 = vmatpush.bf16.msra.mxu0 %v3467
    %4833 = vmatpush.bf16.msra.mxu0 %v3459
    %4834 = vmatpush.bf16.msra.mxu0 %v3451
    %4835 = vmatpush.bf16.msra.mxu0 %v3443
    %4836 = vmatmul.bf16.gmra.mxu0 %v1186
    %v4837 = vpop.f32.mrf.mxu0
    %v4838 = vadd.f32 %v4789, %v4837
    %v4839 = vpop.f32.mrf.mxu0
    %v4840 = vadd.f32 %v4791, %v4839
    %4841 = vmatmul.bf16.gmra.mxu0 %v1194
    %v4842 = vpop.f32.mrf.mxu0
    %v4843 = vadd.f32 %v4794, %v4842
    %v4844 = vpop.f32.mrf.mxu0
    %v4845 = vadd.f32 %v4796, %v4844
    %4846 = vmatmul.bf16.gmra.mxu0 %v1202
    %v4847 = vpop.f32.mrf.mxu0
    %v4848 = vadd.f32 %v4799, %v4847
    %v4849 = vpop.f32.mrf.mxu0
    %v4850 = vadd.f32 %v4801, %v4849
    %4851 = vmatmul.bf16.gmra.mxu0 %v1210
    %v4852 = vpop.f32.mrf.mxu0
    %v4853 = vadd.f32 %v4804, %v4852
    %v4854 = vpop.f32.mrf.mxu0
    %v4855 = vadd.f32 %v4806, %v4854
    %4856 = vmatmul.bf16.gmra.mxu0 %v1218
    %v4857 = vpop.f32.mrf.mxu0
    %v4858 = vadd.f32 %v4809, %v4857
    %v4859 = vpop.f32.mrf.mxu0
    %v4860 = vadd.f32 %v4811, %v4859
    %4861 = vmatmul.bf16.gmra.mxu0 %v1226
    %v4862 = vpop.f32.mrf.mxu0
    %v4863 = vadd.f32 %v4814, %v4862
    %v4864 = vpop.f32.mrf.mxu0
    %v4865 = vadd.f32 %v4816, %v4864
    %4866 = vmatmul.bf16.gmra.mxu0 %v1234
    %v4867 = vpop.f32.mrf.mxu0
    %v4868 = vadd.f32 %v4819, %v4867
    %v4869 = vpop.f32.mrf.mxu0
    %v4870 = vadd.f32 %v4821, %v4869
    %4871 = vmatmul.bf16.gmra.mxu0 %v1242
    %v4872 = vpop.f32.mrf.mxu0
    %v4873 = vadd.f32 %v4824, %v4872
    %v4874 = vpop.f32.mrf.mxu0
    %v4875 = vadd.f32 %v4826, %v4874
    %4876 = vdwg.mxu0
    %4877 = vmatpush.bf16.msra.mxu0 %v3563
    %4878 = vmatpush.bf16.msra.mxu0 %v3555
    %4879 = vmatpush.bf16.msra.mxu0 %v3547
    %4880 = vmatpush.bf16.msra.mxu0 %v3539
    %4881 = vmatpush.bf16.msra.mxu0 %v3531
    %4882 = vmatpush.bf16.msra.mxu0 %v3523
    %4883 = vmatpush.bf16.msra.mxu0 %v3515
    %4884 = vmatpush.bf16.msra.mxu0 %v3507
    %4885 = vmatmul.bf16.gmra.mxu0 %v1187
    %v4886 = vpop.f32.mrf.mxu0
    %v4887 = vadd.f32 %v4838, %v4886
    %v4888 = vpop.f32.mrf.mxu0
    %v4889 = vadd.f32 %v4840, %v4888
    %4890 = vmatmul.bf16.gmra.mxu0 %v1195
    %v4891 = vpop.f32.mrf.mxu0
    %v4892 = vadd.f32 %v4843, %v4891
    %v4893 = vpop.f32.mrf.mxu0
    %v4894 = vadd.f32 %v4845, %v4893
    %4895 = vmatmul.bf16.gmra.mxu0 %v1203
    %v4896 = vpop.f32.mrf.mxu0
    %v4897 = vadd.f32 %v4848, %v4896
    %v4898 = vpop.f32.mrf.mxu0
    %v4899 = vadd.f32 %v4850, %v4898
    %4900 = vmatmul.bf16.gmra.mxu0 %v1211
    %v4901 = vpop.f32.mrf.mxu0
    %v4902 = vadd.f32 %v4853, %v4901
    %v4903 = vpop.f32.mrf.mxu0
    %v4904 = vadd.f32 %v4855, %v4903
    %4905 = vmatmul.bf16.gmra.mxu0 %v1219
    %v4906 = vpop.f32.mrf.mxu0
    %v4907 = vadd.f32 %v4858, %v4906
    %v4908 = vpop.f32.mrf.mxu0
    %v4909 = vadd.f32 %v4860, %v4908
    %4910 = vmatmul.bf16.gmra.mxu0 %v1227
    %v4911 = vpop.f32.mrf.mxu0
    %v4912 = vadd.f32 %v4863, %v4911
    %v4913 = vpop.f32.mrf.mxu0
    %v4914 = vadd.f32 %v4865, %v4913
    %4915 = vmatmul.bf16.gmra.mxu0 %v1235
    %v4916 = vpop.f32.mrf.mxu0
    %v4917 = vadd.f32 %v4868, %v4916
    %v4918 = vpop.f32.mrf.mxu0
    %v4919 = vadd.f32 %v4870, %v4918
    %4920 = vmatmul.bf16.gmra.mxu0 %v1243
    %v4921 = vpop.f32.mrf.mxu0
    %v4922 = vadd.f32 %v4873, %v4921
    %v4923 = vpop.f32.mrf.mxu0
    %v4924 = vadd.f32 %v4875, %v4923
    %4925 = vdwg.mxu0
    %4926 = vmatpush.bf16.msra.mxu0 %v3627
    %4927 = vmatpush.bf16.msra.mxu0 %v3619
    %4928 = vmatpush.bf16.msra.mxu0 %v3611
    %4929 = vmatpush.bf16.msra.mxu0 %v3603
    %4930 = vmatpush.bf16.msra.mxu0 %v3595
    %4931 = vmatpush.bf16.msra.mxu0 %v3587
    %4932 = vmatpush.bf16.msra.mxu0 %v3579
    %4933 = vmatpush.bf16.msra.mxu0 %v3571
    %4934 = vmatmul.bf16.gmra.mxu0 %v1188
    %v4935 = vpop.f32.mrf.mxu0
    %v4936 = vadd.f32 %v4887, %v4935
    %v4937 = vpop.f32.mrf.mxu0
    %v4938 = vadd.f32 %v4889, %v4937
    %4939 = vmatmul.bf16.gmra.mxu0 %v1196
    %v4940 = vpop.f32.mrf.mxu0
    %v4941 = vadd.f32 %v4892, %v4940
    %v4942 = vpop.f32.mrf.mxu0
    %v4943 = vadd.f32 %v4894, %v4942
    %4944 = vmatmul.bf16.gmra.mxu0 %v1204
    %v4945 = vpop.f32.mrf.mxu0
    %v4946 = vadd.f32 %v4897, %v4945
    %v4947 = vpop.f32.mrf.mxu0
    %v4948 = vadd.f32 %v4899, %v4947
    %4949 = vmatmul.bf16.gmra.mxu0 %v1212
    %v4950 = vpop.f32.mrf.mxu0
    %v4951 = vadd.f32 %v4902, %v4950
    %v4952 = vpop.f32.mrf.mxu0
    %v4953 = vadd.f32 %v4904, %v4952
    %4954 = vmatmul.bf16.gmra.mxu0 %v1220
    %v4955 = vpop.f32.mrf.mxu0
    %v4956 = vadd.f32 %v4907, %v4955
    %v4957 = vpop.f32.mrf.mxu0
    %v4958 = vadd.f32 %v4909, %v4957
    %4959 = vmatmul.bf16.gmra.mxu0 %v1228
    %v4960 = vpop.f32.mrf.mxu0
    %v4961 = vadd.f32 %v4912, %v4960
    %v4962 = vpop.f32.mrf.mxu0
    %v4963 = vadd.f32 %v4914, %v4962
    %4964 = vmatmul.bf16.gmra.mxu0 %v1236
    %v4965 = vpop.f32.mrf.mxu0
    %v4966 = vadd.f32 %v4917, %v4965
    %v4967 = vpop.f32.mrf.mxu0
    %v4968 = vadd.f32 %v4919, %v4967
    %4969 = vmatmul.bf16.gmra.mxu0 %v1244
    %v4970 = vpop.f32.mrf.mxu0
    %v4971 = vadd.f32 %v4922, %v4970
    %v4972 = vpop.f32.mrf.mxu0
    %v4973 = vadd.f32 %v4924, %v4972
    %4974 = vdwg.mxu0
    %4975 = vmatpush.bf16.msra.mxu0 %v3691
    %4976 = vmatpush.bf16.msra.mxu0 %v3683
    %4977 = vmatpush.bf16.msra.mxu0 %v3675
    %4978 = vmatpush.bf16.msra.mxu0 %v3667
    %4979 = vmatpush.bf16.msra.mxu0 %v3659
    %4980 = vmatpush.bf16.msra.mxu0 %v3651
    %4981 = vmatpush.bf16.msra.mxu0 %v3643
    %4982 = vmatpush.bf16.msra.mxu0 %v3635
    %4983 = vmatmul.bf16.gmra.mxu0 %v1189
    %v4984 = vpop.f32.mrf.mxu0
    %v4985 = vadd.f32 %v4936, %v4984
    %v4986 = vpop.f32.mrf.mxu0
    %v4987 = vadd.f32 %v4938, %v4986
    %4988 = vmatmul.bf16.gmra.mxu0 %v1197
    %v4989 = vpop.f32.mrf.mxu0
    %v4990 = vadd.f32 %v4941, %v4989
    %v4991 = vpop.f32.mrf.mxu0
    %v4992 = vadd.f32 %v4943, %v4991
    %4993 = vmatmul.bf16.gmra.mxu0 %v1205
    %v4994 = vpop.f32.mrf.mxu0
    %v4995 = vadd.f32 %v4946, %v4994
    %v4996 = vpop.f32.mrf.mxu0
    %v4997 = vadd.f32 %v4948, %v4996
    %4998 = vmatmul.bf16.gmra.mxu0 %v1213
    %v4999 = vpop.f32.mrf.mxu0
    %v5000 = vadd.f32 %v4951, %v4999
    %v5001 = vpop.f32.mrf.mxu0
    %v5002 = vadd.f32 %v4953, %v5001
    %5003 = vmatmul.bf16.gmra.mxu0 %v1221
    %v5004 = vpop.f32.mrf.mxu0
    %v5005 = vadd.f32 %v4956, %v5004
    %v5006 = vpop.f32.mrf.mxu0
    %v5007 = vadd.f32 %v4958, %v5006
    %5008 = vmatmul.bf16.gmra.mxu0 %v1229
    %v5009 = vpop.f32.mrf.mxu0
    %v5010 = vadd.f32 %v4961, %v5009
    %v5011 = vpop.f32.mrf.mxu0
    %v5012 = vadd.f32 %v4963, %v5011
    %5013 = vmatmul.bf16.gmra.mxu0 %v1237
    %v5014 = vpop.f32.mrf.mxu0
    %v5015 = vadd.f32 %v4966, %v5014
    %v5016 = vpop.f32.mrf.mxu0
    %v5017 = vadd.f32 %v4968, %v5016
    %5018 = vmatmul.bf16.gmra.mxu0 %v1245
    %v5019 = vpop.f32.mrf.mxu0
    %v5020 = vadd.f32 %v4971, %v5019
    %v5021 = vpop.f32.mrf.mxu0
    %v5022 = vadd.f32 %v4973, %v5021
    %5023 = vdwg.mxu0
    %5024 = vmatpush.bf16.msra.mxu0 %v3755
    %5025 = vmatpush.bf16.msra.mxu0 %v3747
    %5026 = vmatpush.bf16.msra.mxu0 %v3739
    %5027 = vmatpush.bf16.msra.mxu0 %v3731
    %5028 = vmatpush.bf16.msra.mxu0 %v3723
    %5029 = vmatpush.bf16.msra.mxu0 %v3715
    %5030 = vmatpush.bf16.msra.mxu0 %v3707
    %5031 = vmatpush.bf16.msra.mxu0 %v3699
    %5032 = vmatmul.bf16.gmra.mxu0 %v1190
    %v5033 = vpop.f32.mrf.mxu0
    %v5034 = vadd.f32 %v4985, %v5033
    %v5035 = vpop.f32.mrf.mxu0
    %v5036 = vadd.f32 %v4987, %v5035
    %5037 = vmatmul.bf16.gmra.mxu0 %v1198
    %v5038 = vpop.f32.mrf.mxu0
    %v5039 = vadd.f32 %v4990, %v5038
    %v5040 = vpop.f32.mrf.mxu0
    %v5041 = vadd.f32 %v4992, %v5040
    %5042 = vmatmul.bf16.gmra.mxu0 %v1206
    %v5043 = vpop.f32.mrf.mxu0
    %v5044 = vadd.f32 %v4995, %v5043
    %v5045 = vpop.f32.mrf.mxu0
    %v5046 = vadd.f32 %v4997, %v5045
    %5047 = vmatmul.bf16.gmra.mxu0 %v1214
    %v5048 = vpop.f32.mrf.mxu0
    %v5049 = vadd.f32 %v5000, %v5048
    %v5050 = vpop.f32.mrf.mxu0
    %v5051 = vadd.f32 %v5002, %v5050
    %5052 = vmatmul.bf16.gmra.mxu0 %v1222
    %v5053 = vpop.f32.mrf.mxu0
    %v5054 = vadd.f32 %v5005, %v5053
    %v5055 = vpop.f32.mrf.mxu0
    %v5056 = vadd.f32 %v5007, %v5055
    %5057 = vmatmul.bf16.gmra.mxu0 %v1230
    %v5058 = vpop.f32.mrf.mxu0
    %v5059 = vadd.f32 %v5010, %v5058
    %v5060 = vpop.f32.mrf.mxu0
    %v5061 = vadd.f32 %v5012, %v5060
    %5062 = vmatmul.bf16.gmra.mxu0 %v1238
    %v5063 = vpop.f32.mrf.mxu0
    %v5064 = vadd.f32 %v5015, %v5063
    %v5065 = vpop.f32.mrf.mxu0
    %v5066 = vadd.f32 %v5017, %v5065
    %5067 = vmatmul.bf16.gmra.mxu0 %v1246
    %v5068 = vpop.f32.mrf.mxu0
    %v5069 = vadd.f32 %v5020, %v5068
    %v5070 = vpop.f32.mrf.mxu0
    %v5071 = vadd.f32 %v5022, %v5070
    %5072 = vdwg.mxu0
    %5073 = vmatpush.bf16.msra.mxu0 %v3819
    %5074 = vmatpush.bf16.msra.mxu0 %v3811
    %5075 = vmatpush.bf16.msra.mxu0 %v3803
    %5076 = vmatpush.bf16.msra.mxu0 %v3795
    %5077 = vmatpush.bf16.msra.mxu0 %v3787
    %5078 = vmatpush.bf16.msra.mxu0 %v3779
    %5079 = vmatpush.bf16.msra.mxu0 %v3771
    %5080 = vmatpush.bf16.msra.mxu0 %v3763
    %5081 = vmatmul.bf16.gmra.mxu0 %v1191
    %v5082 = vpop.f32.mrf.mxu0
    %v5083 = vadd.f32 %v5034, %v5082
    %v5084 = vpop.f32.mrf.mxu0
    %v5085 = vadd.f32 %v5036, %v5084
    %5086 = vmatmul.bf16.gmra.mxu0 %v1199
    %v5087 = vpop.f32.mrf.mxu0
    %v5088 = vadd.f32 %v5039, %v5087
    %v5089 = vpop.f32.mrf.mxu0
    %v5090 = vadd.f32 %v5041, %v5089
    %5091 = vmatmul.bf16.gmra.mxu0 %v1207
    %v5092 = vpop.f32.mrf.mxu0
    %v5093 = vadd.f32 %v5044, %v5092
    %v5094 = vpop.f32.mrf.mxu0
    %v5095 = vadd.f32 %v5046, %v5094
    %5096 = vmatmul.bf16.gmra.mxu0 %v1215
    %v5097 = vpop.f32.mrf.mxu0
    %v5098 = vadd.f32 %v5049, %v5097
    %v5099 = vpop.f32.mrf.mxu0
    %v5100 = vadd.f32 %v5051, %v5099
    %5101 = vmatmul.bf16.gmra.mxu0 %v1223
    %v5102 = vpop.f32.mrf.mxu0
    %v5103 = vadd.f32 %v5054, %v5102
    %v5104 = vpop.f32.mrf.mxu0
    %v5105 = vadd.f32 %v5056, %v5104
    %5106 = vmatmul.bf16.gmra.mxu0 %v1231
    %v5107 = vpop.f32.mrf.mxu0
    %v5108 = vadd.f32 %v5059, %v5107
    %v5109 = vpop.f32.mrf.mxu0
    %v5110 = vadd.f32 %v5061, %v5109
    %5111 = vmatmul.bf16.gmra.mxu0 %v1239
    %v5112 = vpop.f32.mrf.mxu0
    %v5113 = vadd.f32 %v5064, %v5112
    %v5114 = vpop.f32.mrf.mxu0
    %v5115 = vadd.f32 %v5066, %v5114
    %5116 = vmatmul.bf16.gmra.mxu0 %v1247
    %v5117 = vpop.f32.mrf.mxu0
    %v5118 = vadd.f32 %v5069, %v5117
    %v5119 = vpop.f32.mrf.mxu0
    %v5120 = vadd.f32 %v5071, %v5119
    %5121 = vdwg.mxu0
    %5122 = vmatpush.bf16.msra.mxu0 %v3372
    %5123 = vmatpush.bf16.msra.mxu0 %v3364
    %5124 = vmatpush.bf16.msra.mxu0 %v3356
    %5125 = vmatpush.bf16.msra.mxu0 %v3348
    %5126 = vmatpush.bf16.msra.mxu0 %v3340
    %5127 = vmatpush.bf16.msra.mxu0 %v3332
    %5128 = vmatpush.bf16.msra.mxu0 %v3324
    %5129 = vmatpush.bf16.msra.mxu0 %v3316
    %5130 = vmatmul.bf16.gmra.mxu0 %v1184
    %v5131 = vpop.f32.mrf.mxu0
    %v5132 = vadd.f32 %v1764, %v5131
    %v5133 = vpop.f32.mrf.mxu0
    %v5134 = vadd.f32 %v1764, %v5133
    %5135 = vmatmul.bf16.gmra.mxu0 %v1192
    %v5136 = vpop.f32.mrf.mxu0
    %v5137 = vadd.f32 %v1764, %v5136
    %v5138 = vpop.f32.mrf.mxu0
    %v5139 = vadd.f32 %v1764, %v5138
    %5140 = vmatmul.bf16.gmra.mxu0 %v1200
    %v5141 = vpop.f32.mrf.mxu0
    %v5142 = vadd.f32 %v1764, %v5141
    %v5143 = vpop.f32.mrf.mxu0
    %v5144 = vadd.f32 %v1764, %v5143
    %5145 = vmatmul.bf16.gmra.mxu0 %v1208
    %v5146 = vpop.f32.mrf.mxu0
    %v5147 = vadd.f32 %v1764, %v5146
    %v5148 = vpop.f32.mrf.mxu0
    %v5149 = vadd.f32 %v1764, %v5148
    %5150 = vmatmul.bf16.gmra.mxu0 %v1216
    %v5151 = vpop.f32.mrf.mxu0
    %v5152 = vadd.f32 %v1764, %v5151
    %v5153 = vpop.f32.mrf.mxu0
    %v5154 = vadd.f32 %v1764, %v5153
    %5155 = vmatmul.bf16.gmra.mxu0 %v1224
    %v5156 = vpop.f32.mrf.mxu0
    %v5157 = vadd.f32 %v1764, %v5156
    %v5158 = vpop.f32.mrf.mxu0
    %v5159 = vadd.f32 %v1764, %v5158
    %5160 = vmatmul.bf16.gmra.mxu0 %v1232
    %v5161 = vpop.f32.mrf.mxu0
    %v5162 = vadd.f32 %v1764, %v5161
    %v5163 = vpop.f32.mrf.mxu0
    %v5164 = vadd.f32 %v1764, %v5163
    %5165 = vmatmul.bf16.gmra.mxu0 %v1240
    %v5166 = vpop.f32.mrf.mxu0
    %v5167 = vadd.f32 %v1764, %v5166
    %v5168 = vpop.f32.mrf.mxu0
    %v5169 = vadd.f32 %v1764, %v5168
    %5170 = vdwg.mxu0
    %5171 = vmatpush.bf16.msra.mxu0 %v3436
    %5172 = vmatpush.bf16.msra.mxu0 %v3428
    %5173 = vmatpush.bf16.msra.mxu0 %v3420
    %5174 = vmatpush.bf16.msra.mxu0 %v3412
    %5175 = vmatpush.bf16.msra.mxu0 %v3404
    %5176 = vmatpush.bf16.msra.mxu0 %v3396
    %5177 = vmatpush.bf16.msra.mxu0 %v3388
    %5178 = vmatpush.bf16.msra.mxu0 %v3380
    %5179 = vmatmul.bf16.gmra.mxu0 %v1185
    %v5180 = vpop.f32.mrf.mxu0
    %v5181 = vadd.f32 %v5132, %v5180
    %v5182 = vpop.f32.mrf.mxu0
    %v5183 = vadd.f32 %v5134, %v5182
    %5184 = vmatmul.bf16.gmra.mxu0 %v1193
    %v5185 = vpop.f32.mrf.mxu0
    %v5186 = vadd.f32 %v5137, %v5185
    %v5187 = vpop.f32.mrf.mxu0
    %v5188 = vadd.f32 %v5139, %v5187
    %5189 = vmatmul.bf16.gmra.mxu0 %v1201
    %v5190 = vpop.f32.mrf.mxu0
    %v5191 = vadd.f32 %v5142, %v5190
    %v5192 = vpop.f32.mrf.mxu0
    %v5193 = vadd.f32 %v5144, %v5192
    %5194 = vmatmul.bf16.gmra.mxu0 %v1209
    %v5195 = vpop.f32.mrf.mxu0
    %v5196 = vadd.f32 %v5147, %v5195
    %v5197 = vpop.f32.mrf.mxu0
    %v5198 = vadd.f32 %v5149, %v5197
    %5199 = vmatmul.bf16.gmra.mxu0 %v1217
    %v5200 = vpop.f32.mrf.mxu0
    %v5201 = vadd.f32 %v5152, %v5200
    %v5202 = vpop.f32.mrf.mxu0
    %v5203 = vadd.f32 %v5154, %v5202
    %5204 = vmatmul.bf16.gmra.mxu0 %v1225
    %v5205 = vpop.f32.mrf.mxu0
    %v5206 = vadd.f32 %v5157, %v5205
    %v5207 = vpop.f32.mrf.mxu0
    %v5208 = vadd.f32 %v5159, %v5207
    %5209 = vmatmul.bf16.gmra.mxu0 %v1233
    %v5210 = vpop.f32.mrf.mxu0
    %v5211 = vadd.f32 %v5162, %v5210
    %v5212 = vpop.f32.mrf.mxu0
    %v5213 = vadd.f32 %v5164, %v5212
    %5214 = vmatmul.bf16.gmra.mxu0 %v1241
    %v5215 = vpop.f32.mrf.mxu0
    %v5216 = vadd.f32 %v5167, %v5215
    %v5217 = vpop.f32.mrf.mxu0
    %v5218 = vadd.f32 %v5169, %v5217
    %5219 = vdwg.mxu0
    %5220 = vmatpush.bf16.msra.mxu0 %v3500
    %5221 = vmatpush.bf16.msra.mxu0 %v3492
    %5222 = vmatpush.bf16.msra.mxu0 %v3484
    %5223 = vmatpush.bf16.msra.mxu0 %v3476
    %5224 = vmatpush.bf16.msra.mxu0 %v3468
    %5225 = vmatpush.bf16.msra.mxu0 %v3460
    %5226 = vmatpush.bf16.msra.mxu0 %v3452
    %5227 = vmatpush.bf16.msra.mxu0 %v3444
    %5228 = vmatmul.bf16.gmra.mxu0 %v1186
    %v5229 = vpop.f32.mrf.mxu0
    %v5230 = vadd.f32 %v5181, %v5229
    %v5231 = vpop.f32.mrf.mxu0
    %v5232 = vadd.f32 %v5183, %v5231
    %5233 = vmatmul.bf16.gmra.mxu0 %v1194
    %v5234 = vpop.f32.mrf.mxu0
    %v5235 = vadd.f32 %v5186, %v5234
    %v5236 = vpop.f32.mrf.mxu0
    %v5237 = vadd.f32 %v5188, %v5236
    %5238 = vmatmul.bf16.gmra.mxu0 %v1202
    %v5239 = vpop.f32.mrf.mxu0
    %v5240 = vadd.f32 %v5191, %v5239
    %v5241 = vpop.f32.mrf.mxu0
    %v5242 = vadd.f32 %v5193, %v5241
    %5243 = vmatmul.bf16.gmra.mxu0 %v1210
    %v5244 = vpop.f32.mrf.mxu0
    %v5245 = vadd.f32 %v5196, %v5244
    %v5246 = vpop.f32.mrf.mxu0
    %v5247 = vadd.f32 %v5198, %v5246
    %5248 = vmatmul.bf16.gmra.mxu0 %v1218
    %v5249 = vpop.f32.mrf.mxu0
    %v5250 = vadd.f32 %v5201, %v5249
    %v5251 = vpop.f32.mrf.mxu0
    %v5252 = vadd.f32 %v5203, %v5251
    %5253 = vmatmul.bf16.gmra.mxu0 %v1226
    %v5254 = vpop.f32.mrf.mxu0
    %v5255 = vadd.f32 %v5206, %v5254
    %v5256 = vpop.f32.mrf.mxu0
    %v5257 = vadd.f32 %v5208, %v5256
    %5258 = vmatmul.bf16.gmra.mxu0 %v1234
    %v5259 = vpop.f32.mrf.mxu0
    %v5260 = vadd.f32 %v5211, %v5259
    %v5261 = vpop.f32.mrf.mxu0
    %v5262 = vadd.f32 %v5213, %v5261
    %5263 = vmatmul.bf16.gmra.mxu0 %v1242
    %v5264 = vpop.f32.mrf.mxu0
    %v5265 = vadd.f32 %v5216, %v5264
    %v5266 = vpop.f32.mrf.mxu0
    %v5267 = vadd.f32 %v5218, %v5266
    %5268 = vdwg.mxu0
    %5269 = vmatpush.bf16.msra.mxu0 %v3564
    %5270 = vmatpush.bf16.msra.mxu0 %v3556
    %5271 = vmatpush.bf16.msra.mxu0 %v3548
    %5272 = vmatpush.bf16.msra.mxu0 %v3540
    %5273 = vmatpush.bf16.msra.mxu0 %v3532
    %5274 = vmatpush.bf16.msra.mxu0 %v3524
    %5275 = vmatpush.bf16.msra.mxu0 %v3516
    %5276 = vmatpush.bf16.msra.mxu0 %v3508
    %5277 = vmatmul.bf16.gmra.mxu0 %v1187
    %v5278 = vpop.f32.mrf.mxu0
    %v5279 = vadd.f32 %v5230, %v5278
    %v5280 = vpop.f32.mrf.mxu0
    %v5281 = vadd.f32 %v5232, %v5280
    %5282 = vmatmul.bf16.gmra.mxu0 %v1195
    %v5283 = vpop.f32.mrf.mxu0
    %v5284 = vadd.f32 %v5235, %v5283
    %v5285 = vpop.f32.mrf.mxu0
    %v5286 = vadd.f32 %v5237, %v5285
    %5287 = vmatmul.bf16.gmra.mxu0 %v1203
    %v5288 = vpop.f32.mrf.mxu0
    %v5289 = vadd.f32 %v5240, %v5288
    %v5290 = vpop.f32.mrf.mxu0
    %v5291 = vadd.f32 %v5242, %v5290
    %5292 = vmatmul.bf16.gmra.mxu0 %v1211
    %v5293 = vpop.f32.mrf.mxu0
    %v5294 = vadd.f32 %v5245, %v5293
    %v5295 = vpop.f32.mrf.mxu0
    %v5296 = vadd.f32 %v5247, %v5295
    %5297 = vmatmul.bf16.gmra.mxu0 %v1219
    %v5298 = vpop.f32.mrf.mxu0
    %v5299 = vadd.f32 %v5250, %v5298
    %v5300 = vpop.f32.mrf.mxu0
    %v5301 = vadd.f32 %v5252, %v5300
    %5302 = vmatmul.bf16.gmra.mxu0 %v1227
    %v5303 = vpop.f32.mrf.mxu0
    %v5304 = vadd.f32 %v5255, %v5303
    %v5305 = vpop.f32.mrf.mxu0
    %v5306 = vadd.f32 %v5257, %v5305
    %5307 = vmatmul.bf16.gmra.mxu0 %v1235
    %v5308 = vpop.f32.mrf.mxu0
    %v5309 = vadd.f32 %v5260, %v5308
    %v5310 = vpop.f32.mrf.mxu0
    %v5311 = vadd.f32 %v5262, %v5310
    %5312 = vmatmul.bf16.gmra.mxu0 %v1243
    %v5313 = vpop.f32.mrf.mxu0
    %v5314 = vadd.f32 %v5265, %v5313
    %v5315 = vpop.f32.mrf.mxu0
    %v5316 = vadd.f32 %v5267, %v5315
    %5317 = vdwg.mxu0
    %5318 = vmatpush.bf16.msra.mxu0 %v3628
    %5319 = vmatpush.bf16.msra.mxu0 %v3620
    %5320 = vmatpush.bf16.msra.mxu0 %v3612
    %5321 = vmatpush.bf16.msra.mxu0 %v3604
    %5322 = vmatpush.bf16.msra.mxu0 %v3596
    %5323 = vmatpush.bf16.msra.mxu0 %v3588
    %5324 = vmatpush.bf16.msra.mxu0 %v3580
    %5325 = vmatpush.bf16.msra.mxu0 %v3572
    %5326 = vmatmul.bf16.gmra.mxu0 %v1188
    %v5327 = vpop.f32.mrf.mxu0
    %v5328 = vadd.f32 %v5279, %v5327
    %v5329 = vpop.f32.mrf.mxu0
    %v5330 = vadd.f32 %v5281, %v5329
    %5331 = vmatmul.bf16.gmra.mxu0 %v1196
    %v5332 = vpop.f32.mrf.mxu0
    %v5333 = vadd.f32 %v5284, %v5332
    %v5334 = vpop.f32.mrf.mxu0
    %v5335 = vadd.f32 %v5286, %v5334
    %5336 = vmatmul.bf16.gmra.mxu0 %v1204
    %v5337 = vpop.f32.mrf.mxu0
    %v5338 = vadd.f32 %v5289, %v5337
    %v5339 = vpop.f32.mrf.mxu0
    %v5340 = vadd.f32 %v5291, %v5339
    %5341 = vmatmul.bf16.gmra.mxu0 %v1212
    %v5342 = vpop.f32.mrf.mxu0
    %v5343 = vadd.f32 %v5294, %v5342
    %v5344 = vpop.f32.mrf.mxu0
    %v5345 = vadd.f32 %v5296, %v5344
    %5346 = vmatmul.bf16.gmra.mxu0 %v1220
    %v5347 = vpop.f32.mrf.mxu0
    %v5348 = vadd.f32 %v5299, %v5347
    %v5349 = vpop.f32.mrf.mxu0
    %v5350 = vadd.f32 %v5301, %v5349
    %5351 = vmatmul.bf16.gmra.mxu0 %v1228
    %v5352 = vpop.f32.mrf.mxu0
    %v5353 = vadd.f32 %v5304, %v5352
    %v5354 = vpop.f32.mrf.mxu0
    %v5355 = vadd.f32 %v5306, %v5354
    %5356 = vmatmul.bf16.gmra.mxu0 %v1236
    %v5357 = vpop.f32.mrf.mxu0
    %v5358 = vadd.f32 %v5309, %v5357
    %v5359 = vpop.f32.mrf.mxu0
    %v5360 = vadd.f32 %v5311, %v5359
    %5361 = vmatmul.bf16.gmra.mxu0 %v1244
    %v5362 = vpop.f32.mrf.mxu0
    %v5363 = vadd.f32 %v5314, %v5362
    %v5364 = vpop.f32.mrf.mxu0
    %v5365 = vadd.f32 %v5316, %v5364
    %5366 = vdwg.mxu0
    %5367 = vmatpush.bf16.msra.mxu0 %v3692
    %5368 = vmatpush.bf16.msra.mxu0 %v3684
    %5369 = vmatpush.bf16.msra.mxu0 %v3676
    %5370 = vmatpush.bf16.msra.mxu0 %v3668
    %5371 = vmatpush.bf16.msra.mxu0 %v3660
    %5372 = vmatpush.bf16.msra.mxu0 %v3652
    %5373 = vmatpush.bf16.msra.mxu0 %v3644
    %5374 = vmatpush.bf16.msra.mxu0 %v3636
    %5375 = vmatmul.bf16.gmra.mxu0 %v1189
    %v5376 = vpop.f32.mrf.mxu0
    %v5377 = vadd.f32 %v5328, %v5376
    %v5378 = vpop.f32.mrf.mxu0
    %v5379 = vadd.f32 %v5330, %v5378
    %5380 = vmatmul.bf16.gmra.mxu0 %v1197
    %v5381 = vpop.f32.mrf.mxu0
    %v5382 = vadd.f32 %v5333, %v5381
    %v5383 = vpop.f32.mrf.mxu0
    %v5384 = vadd.f32 %v5335, %v5383
    %5385 = vmatmul.bf16.gmra.mxu0 %v1205
    %v5386 = vpop.f32.mrf.mxu0
    %v5387 = vadd.f32 %v5338, %v5386
    %v5388 = vpop.f32.mrf.mxu0
    %v5389 = vadd.f32 %v5340, %v5388
    %5390 = vmatmul.bf16.gmra.mxu0 %v1213
    %v5391 = vpop.f32.mrf.mxu0
    %v5392 = vadd.f32 %v5343, %v5391
    %v5393 = vpop.f32.mrf.mxu0
    %v5394 = vadd.f32 %v5345, %v5393
    %5395 = vmatmul.bf16.gmra.mxu0 %v1221
    %v5396 = vpop.f32.mrf.mxu0
    %v5397 = vadd.f32 %v5348, %v5396
    %v5398 = vpop.f32.mrf.mxu0
    %v5399 = vadd.f32 %v5350, %v5398
    %5400 = vmatmul.bf16.gmra.mxu0 %v1229
    %v5401 = vpop.f32.mrf.mxu0
    %v5402 = vadd.f32 %v5353, %v5401
    %v5403 = vpop.f32.mrf.mxu0
    %v5404 = vadd.f32 %v5355, %v5403
    %5405 = vmatmul.bf16.gmra.mxu0 %v1237
    %v5406 = vpop.f32.mrf.mxu0
    %v5407 = vadd.f32 %v5358, %v5406
    %v5408 = vpop.f32.mrf.mxu0
    %v5409 = vadd.f32 %v5360, %v5408
    %5410 = vmatmul.bf16.gmra.mxu0 %v1245
    %v5411 = vpop.f32.mrf.mxu0
    %v5412 = vadd.f32 %v5363, %v5411
    %v5413 = vpop.f32.mrf.mxu0
    %v5414 = vadd.f32 %v5365, %v5413
    %5415 = vdwg.mxu0
    %5416 = vmatpush.bf16.msra.mxu0 %v3756
    %5417 = vmatpush.bf16.msra.mxu0 %v3748
    %5418 = vmatpush.bf16.msra.mxu0 %v3740
    %5419 = vmatpush.bf16.msra.mxu0 %v3732
    %5420 = vmatpush.bf16.msra.mxu0 %v3724
    %5421 = vmatpush.bf16.msra.mxu0 %v3716
    %5422 = vmatpush.bf16.msra.mxu0 %v3708
    %5423 = vmatpush.bf16.msra.mxu0 %v3700
    %5424 = vmatmul.bf16.gmra.mxu0 %v1190
    %v5425 = vpop.f32.mrf.mxu0
    %v5426 = vadd.f32 %v5377, %v5425
    %v5427 = vpop.f32.mrf.mxu0
    %v5428 = vadd.f32 %v5379, %v5427
    %5429 = vmatmul.bf16.gmra.mxu0 %v1198
    %v5430 = vpop.f32.mrf.mxu0
    %v5431 = vadd.f32 %v5382, %v5430
    %v5432 = vpop.f32.mrf.mxu0
    %v5433 = vadd.f32 %v5384, %v5432
    %5434 = vmatmul.bf16.gmra.mxu0 %v1206
    %v5435 = vpop.f32.mrf.mxu0
    %v5436 = vadd.f32 %v5387, %v5435
    %v5437 = vpop.f32.mrf.mxu0
    %v5438 = vadd.f32 %v5389, %v5437
    %5439 = vmatmul.bf16.gmra.mxu0 %v1214
    %v5440 = vpop.f32.mrf.mxu0
    %v5441 = vadd.f32 %v5392, %v5440
    %v5442 = vpop.f32.mrf.mxu0
    %v5443 = vadd.f32 %v5394, %v5442
    %5444 = vmatmul.bf16.gmra.mxu0 %v1222
    %v5445 = vpop.f32.mrf.mxu0
    %v5446 = vadd.f32 %v5397, %v5445
    %v5447 = vpop.f32.mrf.mxu0
    %v5448 = vadd.f32 %v5399, %v5447
    %5449 = vmatmul.bf16.gmra.mxu0 %v1230
    %v5450 = vpop.f32.mrf.mxu0
    %v5451 = vadd.f32 %v5402, %v5450
    %v5452 = vpop.f32.mrf.mxu0
    %v5453 = vadd.f32 %v5404, %v5452
    %5454 = vmatmul.bf16.gmra.mxu0 %v1238
    %v5455 = vpop.f32.mrf.mxu0
    %v5456 = vadd.f32 %v5407, %v5455
    %v5457 = vpop.f32.mrf.mxu0
    %v5458 = vadd.f32 %v5409, %v5457
    %5459 = vmatmul.bf16.gmra.mxu0 %v1246
    %v5460 = vpop.f32.mrf.mxu0
    %v5461 = vadd.f32 %v5412, %v5460
    %v5462 = vpop.f32.mrf.mxu0
    %v5463 = vadd.f32 %v5414, %v5462
    %5464 = vdwg.mxu0
    %5465 = vmatpush.bf16.msra.mxu0 %v3820
    %5466 = vmatpush.bf16.msra.mxu0 %v3812
    %5467 = vmatpush.bf16.msra.mxu0 %v3804
    %5468 = vmatpush.bf16.msra.mxu0 %v3796
    %5469 = vmatpush.bf16.msra.mxu0 %v3788
    %5470 = vmatpush.bf16.msra.mxu0 %v3780
    %5471 = vmatpush.bf16.msra.mxu0 %v3772
    %5472 = vmatpush.bf16.msra.mxu0 %v3764
    %5473 = vmatmul.bf16.gmra.mxu0 %v1191
    %v5474 = vpop.f32.mrf.mxu0
    %v5475 = vadd.f32 %v5426, %v5474
    %v5476 = vpop.f32.mrf.mxu0
    %v5477 = vadd.f32 %v5428, %v5476
    %5478 = vmatmul.bf16.gmra.mxu0 %v1199
    %v5479 = vpop.f32.mrf.mxu0
    %v5480 = vadd.f32 %v5431, %v5479
    %v5481 = vpop.f32.mrf.mxu0
    %v5482 = vadd.f32 %v5433, %v5481
    %5483 = vmatmul.bf16.gmra.mxu0 %v1207
    %v5484 = vpop.f32.mrf.mxu0
    %v5485 = vadd.f32 %v5436, %v5484
    %v5486 = vpop.f32.mrf.mxu0
    %v5487 = vadd.f32 %v5438, %v5486
    %5488 = vmatmul.bf16.gmra.mxu0 %v1215
    %v5489 = vpop.f32.mrf.mxu0
    %v5490 = vadd.f32 %v5441, %v5489
    %v5491 = vpop.f32.mrf.mxu0
    %v5492 = vadd.f32 %v5443, %v5491
    %5493 = vmatmul.bf16.gmra.mxu0 %v1223
    %v5494 = vpop.f32.mrf.mxu0
    %v5495 = vadd.f32 %v5446, %v5494
    %v5496 = vpop.f32.mrf.mxu0
    %v5497 = vadd.f32 %v5448, %v5496
    %5498 = vmatmul.bf16.gmra.mxu0 %v1231
    %v5499 = vpop.f32.mrf.mxu0
    %v5500 = vadd.f32 %v5451, %v5499
    %v5501 = vpop.f32.mrf.mxu0
    %v5502 = vadd.f32 %v5453, %v5501
    %5503 = vmatmul.bf16.gmra.mxu0 %v1239
    %v5504 = vpop.f32.mrf.mxu0
    %v5505 = vadd.f32 %v5456, %v5504
    %v5506 = vpop.f32.mrf.mxu0
    %v5507 = vadd.f32 %v5458, %v5506
    %5508 = vmatmul.bf16.gmra.mxu0 %v1247
    %v5509 = vpop.f32.mrf.mxu0
    %v5510 = vadd.f32 %v5461, %v5509
    %v5511 = vpop.f32.mrf.mxu0
    %v5512 = vadd.f32 %v5463, %v5511
    %5513 = vdwg.mxu0
    %5514 = vmatpush.bf16.msra.mxu0 %v3373
    %5515 = vmatpush.bf16.msra.mxu0 %v3365
    %5516 = vmatpush.bf16.msra.mxu0 %v3357
    %5517 = vmatpush.bf16.msra.mxu0 %v3349
    %5518 = vmatpush.bf16.msra.mxu0 %v3341
    %5519 = vmatpush.bf16.msra.mxu0 %v3333
    %5520 = vmatpush.bf16.msra.mxu0 %v3325
    %5521 = vmatpush.bf16.msra.mxu0 %v3317
    %5522 = vmatmul.bf16.gmra.mxu0 %v1184
    %v5523 = vpop.f32.mrf.mxu0
    %v5524 = vadd.f32 %v1765, %v5523
    %v5525 = vpop.f32.mrf.mxu0
    %v5526 = vadd.f32 %v1765, %v5525
    %5527 = vmatmul.bf16.gmra.mxu0 %v1192
    %v5528 = vpop.f32.mrf.mxu0
    %v5529 = vadd.f32 %v1765, %v5528
    %v5530 = vpop.f32.mrf.mxu0
    %v5531 = vadd.f32 %v1765, %v5530
    %5532 = vmatmul.bf16.gmra.mxu0 %v1200
    %v5533 = vpop.f32.mrf.mxu0
    %v5534 = vadd.f32 %v1765, %v5533
    %v5535 = vpop.f32.mrf.mxu0
    %v5536 = vadd.f32 %v1765, %v5535
    %5537 = vmatmul.bf16.gmra.mxu0 %v1208
    %v5538 = vpop.f32.mrf.mxu0
    %v5539 = vadd.f32 %v1765, %v5538
    %v5540 = vpop.f32.mrf.mxu0
    %v5541 = vadd.f32 %v1765, %v5540
    %5542 = vmatmul.bf16.gmra.mxu0 %v1216
    %v5543 = vpop.f32.mrf.mxu0
    %v5544 = vadd.f32 %v1765, %v5543
    %v5545 = vpop.f32.mrf.mxu0
    %v5546 = vadd.f32 %v1765, %v5545
    %5547 = vmatmul.bf16.gmra.mxu0 %v1224
    %v5548 = vpop.f32.mrf.mxu0
    %v5549 = vadd.f32 %v1765, %v5548
    %v5550 = vpop.f32.mrf.mxu0
    %v5551 = vadd.f32 %v1765, %v5550
    %5552 = vmatmul.bf16.gmra.mxu0 %v1232
    %v5553 = vpop.f32.mrf.mxu0
    %v5554 = vadd.f32 %v1765, %v5553
    %v5555 = vpop.f32.mrf.mxu0
    %v5556 = vadd.f32 %v1765, %v5555
    %5557 = vmatmul.bf16.gmra.mxu0 %v1240
    %v5558 = vpop.f32.mrf.mxu0
    %v5559 = vadd.f32 %v1765, %v5558
    %v5560 = vpop.f32.mrf.mxu0
    %v5561 = vadd.f32 %v1765, %v5560
    %5562 = vdwg.mxu0
    %5563 = vmatpush.bf16.msra.mxu0 %v3437
    %5564 = vmatpush.bf16.msra.mxu0 %v3429
    %5565 = vmatpush.bf16.msra.mxu0 %v3421
    %5566 = vmatpush.bf16.msra.mxu0 %v3413
    %5567 = vmatpush.bf16.msra.mxu0 %v3405
    %5568 = vmatpush.bf16.msra.mxu0 %v3397
    %5569 = vmatpush.bf16.msra.mxu0 %v3389
    %5570 = vmatpush.bf16.msra.mxu0 %v3381
    %5571 = vmatmul.bf16.gmra.mxu0 %v1185
    %v5572 = vpop.f32.mrf.mxu0
    %v5573 = vadd.f32 %v5524, %v5572
    %v5574 = vpop.f32.mrf.mxu0
    %v5575 = vadd.f32 %v5526, %v5574
    %5576 = vmatmul.bf16.gmra.mxu0 %v1193
    %v5577 = vpop.f32.mrf.mxu0
    %v5578 = vadd.f32 %v5529, %v5577
    %v5579 = vpop.f32.mrf.mxu0
    %v5580 = vadd.f32 %v5531, %v5579
    %5581 = vmatmul.bf16.gmra.mxu0 %v1201
    %v5582 = vpop.f32.mrf.mxu0
    %v5583 = vadd.f32 %v5534, %v5582
    %v5584 = vpop.f32.mrf.mxu0
    %v5585 = vadd.f32 %v5536, %v5584
    %5586 = vmatmul.bf16.gmra.mxu0 %v1209
    %v5587 = vpop.f32.mrf.mxu0
    %v5588 = vadd.f32 %v5539, %v5587
    %v5589 = vpop.f32.mrf.mxu0
    %v5590 = vadd.f32 %v5541, %v5589
    %5591 = vmatmul.bf16.gmra.mxu0 %v1217
    %v5592 = vpop.f32.mrf.mxu0
    %v5593 = vadd.f32 %v5544, %v5592
    %v5594 = vpop.f32.mrf.mxu0
    %v5595 = vadd.f32 %v5546, %v5594
    %5596 = vmatmul.bf16.gmra.mxu0 %v1225
    %v5597 = vpop.f32.mrf.mxu0
    %v5598 = vadd.f32 %v5549, %v5597
    %v5599 = vpop.f32.mrf.mxu0
    %v5600 = vadd.f32 %v5551, %v5599
    %5601 = vmatmul.bf16.gmra.mxu0 %v1233
    %v5602 = vpop.f32.mrf.mxu0
    %v5603 = vadd.f32 %v5554, %v5602
    %v5604 = vpop.f32.mrf.mxu0
    %v5605 = vadd.f32 %v5556, %v5604
    %5606 = vmatmul.bf16.gmra.mxu0 %v1241
    %v5607 = vpop.f32.mrf.mxu0
    %v5608 = vadd.f32 %v5559, %v5607
    %v5609 = vpop.f32.mrf.mxu0
    %v5610 = vadd.f32 %v5561, %v5609
    %5611 = vdwg.mxu0
    %5612 = vmatpush.bf16.msra.mxu0 %v3501
    %5613 = vmatpush.bf16.msra.mxu0 %v3493
    %5614 = vmatpush.bf16.msra.mxu0 %v3485
    %5615 = vmatpush.bf16.msra.mxu0 %v3477
    %5616 = vmatpush.bf16.msra.mxu0 %v3469
    %5617 = vmatpush.bf16.msra.mxu0 %v3461
    %5618 = vmatpush.bf16.msra.mxu0 %v3453
    %5619 = vmatpush.bf16.msra.mxu0 %v3445
    %5620 = vmatmul.bf16.gmra.mxu0 %v1186
    %v5621 = vpop.f32.mrf.mxu0
    %v5622 = vadd.f32 %v5573, %v5621
    %v5623 = vpop.f32.mrf.mxu0
    %v5624 = vadd.f32 %v5575, %v5623
    %5625 = vmatmul.bf16.gmra.mxu0 %v1194
    %v5626 = vpop.f32.mrf.mxu0
    %v5627 = vadd.f32 %v5578, %v5626
    %v5628 = vpop.f32.mrf.mxu0
    %v5629 = vadd.f32 %v5580, %v5628
    %5630 = vmatmul.bf16.gmra.mxu0 %v1202
    %v5631 = vpop.f32.mrf.mxu0
    %v5632 = vadd.f32 %v5583, %v5631
    %v5633 = vpop.f32.mrf.mxu0
    %v5634 = vadd.f32 %v5585, %v5633
    %5635 = vmatmul.bf16.gmra.mxu0 %v1210
    %v5636 = vpop.f32.mrf.mxu0
    %v5637 = vadd.f32 %v5588, %v5636
    %v5638 = vpop.f32.mrf.mxu0
    %v5639 = vadd.f32 %v5590, %v5638
    %5640 = vmatmul.bf16.gmra.mxu0 %v1218
    %v5641 = vpop.f32.mrf.mxu0
    %v5642 = vadd.f32 %v5593, %v5641
    %v5643 = vpop.f32.mrf.mxu0
    %v5644 = vadd.f32 %v5595, %v5643
    %5645 = vmatmul.bf16.gmra.mxu0 %v1226
    %v5646 = vpop.f32.mrf.mxu0
    %v5647 = vadd.f32 %v5598, %v5646
    %v5648 = vpop.f32.mrf.mxu0
    %v5649 = vadd.f32 %v5600, %v5648
    %5650 = vmatmul.bf16.gmra.mxu0 %v1234
    %v5651 = vpop.f32.mrf.mxu0
    %v5652 = vadd.f32 %v5603, %v5651
    %v5653 = vpop.f32.mrf.mxu0
    %v5654 = vadd.f32 %v5605, %v5653
    %5655 = vmatmul.bf16.gmra.mxu0 %v1242
    %v5656 = vpop.f32.mrf.mxu0
    %v5657 = vadd.f32 %v5608, %v5656
    %v5658 = vpop.f32.mrf.mxu0
    %v5659 = vadd.f32 %v5610, %v5658
    %5660 = vdwg.mxu0
    %5661 = vmatpush.bf16.msra.mxu0 %v3565
    %5662 = vmatpush.bf16.msra.mxu0 %v3557
    %5663 = vmatpush.bf16.msra.mxu0 %v3549
    %5664 = vmatpush.bf16.msra.mxu0 %v3541
    %5665 = vmatpush.bf16.msra.mxu0 %v3533
    %5666 = vmatpush.bf16.msra.mxu0 %v3525
    %5667 = vmatpush.bf16.msra.mxu0 %v3517
    %5668 = vmatpush.bf16.msra.mxu0 %v3509
    %5669 = vmatmul.bf16.gmra.mxu0 %v1187
    %v5670 = vpop.f32.mrf.mxu0
    %v5671 = vadd.f32 %v5622, %v5670
    %v5672 = vpop.f32.mrf.mxu0
    %v5673 = vadd.f32 %v5624, %v5672
    %5674 = vmatmul.bf16.gmra.mxu0 %v1195
    %v5675 = vpop.f32.mrf.mxu0
    %v5676 = vadd.f32 %v5627, %v5675
    %v5677 = vpop.f32.mrf.mxu0
    %v5678 = vadd.f32 %v5629, %v5677
    %5679 = vmatmul.bf16.gmra.mxu0 %v1203
    %v5680 = vpop.f32.mrf.mxu0
    %v5681 = vadd.f32 %v5632, %v5680
    %v5682 = vpop.f32.mrf.mxu0
    %v5683 = vadd.f32 %v5634, %v5682
    %5684 = vmatmul.bf16.gmra.mxu0 %v1211
    %v5685 = vpop.f32.mrf.mxu0
    %v5686 = vadd.f32 %v5637, %v5685
    %v5687 = vpop.f32.mrf.mxu0
    %v5688 = vadd.f32 %v5639, %v5687
    %5689 = vmatmul.bf16.gmra.mxu0 %v1219
    %v5690 = vpop.f32.mrf.mxu0
    %v5691 = vadd.f32 %v5642, %v5690
    %v5692 = vpop.f32.mrf.mxu0
    %v5693 = vadd.f32 %v5644, %v5692
    %5694 = vmatmul.bf16.gmra.mxu0 %v1227
    %v5695 = vpop.f32.mrf.mxu0
    %v5696 = vadd.f32 %v5647, %v5695
    %v5697 = vpop.f32.mrf.mxu0
    %v5698 = vadd.f32 %v5649, %v5697
    %5699 = vmatmul.bf16.gmra.mxu0 %v1235
    %v5700 = vpop.f32.mrf.mxu0
    %v5701 = vadd.f32 %v5652, %v5700
    %v5702 = vpop.f32.mrf.mxu0
    %v5703 = vadd.f32 %v5654, %v5702
    %5704 = vmatmul.bf16.gmra.mxu0 %v1243
    %v5705 = vpop.f32.mrf.mxu0
    %v5706 = vadd.f32 %v5657, %v5705
    %v5707 = vpop.f32.mrf.mxu0
    %v5708 = vadd.f32 %v5659, %v5707
    %5709 = vdwg.mxu0
    %5710 = vmatpush.bf16.msra.mxu0 %v3629
    %5711 = vmatpush.bf16.msra.mxu0 %v3621
    %5712 = vmatpush.bf16.msra.mxu0 %v3613
    %5713 = vmatpush.bf16.msra.mxu0 %v3605
    %5714 = vmatpush.bf16.msra.mxu0 %v3597
    %5715 = vmatpush.bf16.msra.mxu0 %v3589
    %5716 = vmatpush.bf16.msra.mxu0 %v3581
    %5717 = vmatpush.bf16.msra.mxu0 %v3573
    %5718 = vmatmul.bf16.gmra.mxu0 %v1188
    %v5719 = vpop.f32.mrf.mxu0
    %v5720 = vadd.f32 %v5671, %v5719
    %v5721 = vpop.f32.mrf.mxu0
    %v5722 = vadd.f32 %v5673, %v5721
    %5723 = vmatmul.bf16.gmra.mxu0 %v1196
    %v5724 = vpop.f32.mrf.mxu0
    %v5725 = vadd.f32 %v5676, %v5724
    %v5726 = vpop.f32.mrf.mxu0
    %v5727 = vadd.f32 %v5678, %v5726
    %5728 = vmatmul.bf16.gmra.mxu0 %v1204
    %v5729 = vpop.f32.mrf.mxu0
    %v5730 = vadd.f32 %v5681, %v5729
    %v5731 = vpop.f32.mrf.mxu0
    %v5732 = vadd.f32 %v5683, %v5731
    %5733 = vmatmul.bf16.gmra.mxu0 %v1212
    %v5734 = vpop.f32.mrf.mxu0
    %v5735 = vadd.f32 %v5686, %v5734
    %v5736 = vpop.f32.mrf.mxu0
    %v5737 = vadd.f32 %v5688, %v5736
    %5738 = vmatmul.bf16.gmra.mxu0 %v1220
    %v5739 = vpop.f32.mrf.mxu0
    %v5740 = vadd.f32 %v5691, %v5739
    %v5741 = vpop.f32.mrf.mxu0
    %v5742 = vadd.f32 %v5693, %v5741
    %5743 = vmatmul.bf16.gmra.mxu0 %v1228
    %v5744 = vpop.f32.mrf.mxu0
    %v5745 = vadd.f32 %v5696, %v5744
    %v5746 = vpop.f32.mrf.mxu0
    %v5747 = vadd.f32 %v5698, %v5746
    %5748 = vmatmul.bf16.gmra.mxu0 %v1236
    %v5749 = vpop.f32.mrf.mxu0
    %v5750 = vadd.f32 %v5701, %v5749
    %v5751 = vpop.f32.mrf.mxu0
    %v5752 = vadd.f32 %v5703, %v5751
    %5753 = vmatmul.bf16.gmra.mxu0 %v1244
    %v5754 = vpop.f32.mrf.mxu0
    %v5755 = vadd.f32 %v5706, %v5754
    %v5756 = vpop.f32.mrf.mxu0
    %v5757 = vadd.f32 %v5708, %v5756
    %5758 = vdwg.mxu0
    %5759 = vmatpush.bf16.msra.mxu0 %v3693
    %5760 = vmatpush.bf16.msra.mxu0 %v3685
    %5761 = vmatpush.bf16.msra.mxu0 %v3677
    %5762 = vmatpush.bf16.msra.mxu0 %v3669
    %5763 = vmatpush.bf16.msra.mxu0 %v3661
    %5764 = vmatpush.bf16.msra.mxu0 %v3653
    %5765 = vmatpush.bf16.msra.mxu0 %v3645
    %5766 = vmatpush.bf16.msra.mxu0 %v3637
    %5767 = vmatmul.bf16.gmra.mxu0 %v1189
    %v5768 = vpop.f32.mrf.mxu0
    %v5769 = vadd.f32 %v5720, %v5768
    %v5770 = vpop.f32.mrf.mxu0
    %v5771 = vadd.f32 %v5722, %v5770
    %5772 = vmatmul.bf16.gmra.mxu0 %v1197
    %v5773 = vpop.f32.mrf.mxu0
    %v5774 = vadd.f32 %v5725, %v5773
    %v5775 = vpop.f32.mrf.mxu0
    %v5776 = vadd.f32 %v5727, %v5775
    %5777 = vmatmul.bf16.gmra.mxu0 %v1205
    %v5778 = vpop.f32.mrf.mxu0
    %v5779 = vadd.f32 %v5730, %v5778
    %v5780 = vpop.f32.mrf.mxu0
    %v5781 = vadd.f32 %v5732, %v5780
    %5782 = vmatmul.bf16.gmra.mxu0 %v1213
    %v5783 = vpop.f32.mrf.mxu0
    %v5784 = vadd.f32 %v5735, %v5783
    %v5785 = vpop.f32.mrf.mxu0
    %v5786 = vadd.f32 %v5737, %v5785
    %5787 = vmatmul.bf16.gmra.mxu0 %v1221
    %v5788 = vpop.f32.mrf.mxu0
    %v5789 = vadd.f32 %v5740, %v5788
    %v5790 = vpop.f32.mrf.mxu0
    %v5791 = vadd.f32 %v5742, %v5790
    %5792 = vmatmul.bf16.gmra.mxu0 %v1229
    %v5793 = vpop.f32.mrf.mxu0
    %v5794 = vadd.f32 %v5745, %v5793
    %v5795 = vpop.f32.mrf.mxu0
    %v5796 = vadd.f32 %v5747, %v5795
    %5797 = vmatmul.bf16.gmra.mxu0 %v1237
    %v5798 = vpop.f32.mrf.mxu0
    %v5799 = vadd.f32 %v5750, %v5798
    %v5800 = vpop.f32.mrf.mxu0
    %v5801 = vadd.f32 %v5752, %v5800
    %5802 = vmatmul.bf16.gmra.mxu0 %v1245
    %v5803 = vpop.f32.mrf.mxu0
    %v5804 = vadd.f32 %v5755, %v5803
    %v5805 = vpop.f32.mrf.mxu0
    %v5806 = vadd.f32 %v5757, %v5805
    %5807 = vdwg.mxu0
    %5808 = vmatpush.bf16.msra.mxu0 %v3757
    %5809 = vmatpush.bf16.msra.mxu0 %v3749
    %5810 = vmatpush.bf16.msra.mxu0 %v3741
    %5811 = vmatpush.bf16.msra.mxu0 %v3733
    %5812 = vmatpush.bf16.msra.mxu0 %v3725
    %5813 = vmatpush.bf16.msra.mxu0 %v3717
    %5814 = vmatpush.bf16.msra.mxu0 %v3709
    %5815 = vmatpush.bf16.msra.mxu0 %v3701
    %5816 = vmatmul.bf16.gmra.mxu0 %v1190
    %v5817 = vpop.f32.mrf.mxu0
    %v5818 = vadd.f32 %v5769, %v5817
    %v5819 = vpop.f32.mrf.mxu0
    %v5820 = vadd.f32 %v5771, %v5819
    %5821 = vmatmul.bf16.gmra.mxu0 %v1198
    %v5822 = vpop.f32.mrf.mxu0
    %v5823 = vadd.f32 %v5774, %v5822
    %v5824 = vpop.f32.mrf.mxu0
    %v5825 = vadd.f32 %v5776, %v5824
    %5826 = vmatmul.bf16.gmra.mxu0 %v1206
    %v5827 = vpop.f32.mrf.mxu0
    %v5828 = vadd.f32 %v5779, %v5827
    %v5829 = vpop.f32.mrf.mxu0
    %v5830 = vadd.f32 %v5781, %v5829
    %5831 = vmatmul.bf16.gmra.mxu0 %v1214
    %v5832 = vpop.f32.mrf.mxu0
    %v5833 = vadd.f32 %v5784, %v5832
    %v5834 = vpop.f32.mrf.mxu0
    %v5835 = vadd.f32 %v5786, %v5834
    %5836 = vmatmul.bf16.gmra.mxu0 %v1222
    %v5837 = vpop.f32.mrf.mxu0
    %v5838 = vadd.f32 %v5789, %v5837
    %v5839 = vpop.f32.mrf.mxu0
    %v5840 = vadd.f32 %v5791, %v5839
    %5841 = vmatmul.bf16.gmra.mxu0 %v1230
    %v5842 = vpop.f32.mrf.mxu0
    %v5843 = vadd.f32 %v5794, %v5842
    %v5844 = vpop.f32.mrf.mxu0
    %v5845 = vadd.f32 %v5796, %v5844
    %5846 = vmatmul.bf16.gmra.mxu0 %v1238
    %v5847 = vpop.f32.mrf.mxu0
    %v5848 = vadd.f32 %v5799, %v5847
    %v5849 = vpop.f32.mrf.mxu0
    %v5850 = vadd.f32 %v5801, %v5849
    %5851 = vmatmul.bf16.gmra.mxu0 %v1246
    %v5852 = vpop.f32.mrf.mxu0
    %v5853 = vadd.f32 %v5804, %v5852
    %v5854 = vpop.f32.mrf.mxu0
    %v5855 = vadd.f32 %v5806, %v5854
    %5856 = vdwg.mxu0
    %5857 = vmatpush.bf16.msra.mxu0 %v3821
    %5858 = vmatpush.bf16.msra.mxu0 %v3813
    %5859 = vmatpush.bf16.msra.mxu0 %v3805
    %5860 = vmatpush.bf16.msra.mxu0 %v3797
    %5861 = vmatpush.bf16.msra.mxu0 %v3789
    %5862 = vmatpush.bf16.msra.mxu0 %v3781
    %5863 = vmatpush.bf16.msra.mxu0 %v3773
    %5864 = vmatpush.bf16.msra.mxu0 %v3765
    %5865 = vmatmul.bf16.gmra.mxu0 %v1191
    %v5866 = vpop.f32.mrf.mxu0
    %v5867 = vadd.f32 %v5818, %v5866
    %v5868 = vpop.f32.mrf.mxu0
    %v5869 = vadd.f32 %v5820, %v5868
    %5870 = vmatmul.bf16.gmra.mxu0 %v1199
    %v5871 = vpop.f32.mrf.mxu0
    %v5872 = vadd.f32 %v5823, %v5871
    %v5873 = vpop.f32.mrf.mxu0
    %v5874 = vadd.f32 %v5825, %v5873
    %5875 = vmatmul.bf16.gmra.mxu0 %v1207
    %v5876 = vpop.f32.mrf.mxu0
    %v5877 = vadd.f32 %v5828, %v5876
    %v5878 = vpop.f32.mrf.mxu0
    %v5879 = vadd.f32 %v5830, %v5878
    %5880 = vmatmul.bf16.gmra.mxu0 %v1215
    %v5881 = vpop.f32.mrf.mxu0
    %v5882 = vadd.f32 %v5833, %v5881
    %v5883 = vpop.f32.mrf.mxu0
    %v5884 = vadd.f32 %v5835, %v5883
    %5885 = vmatmul.bf16.gmra.mxu0 %v1223
    %v5886 = vpop.f32.mrf.mxu0
    %v5887 = vadd.f32 %v5838, %v5886
    %v5888 = vpop.f32.mrf.mxu0
    %v5889 = vadd.f32 %v5840, %v5888
    %5890 = vmatmul.bf16.gmra.mxu0 %v1231
    %v5891 = vpop.f32.mrf.mxu0
    %v5892 = vadd.f32 %v5843, %v5891
    %v5893 = vpop.f32.mrf.mxu0
    %v5894 = vadd.f32 %v5845, %v5893
    %5895 = vmatmul.bf16.gmra.mxu0 %v1239
    %v5896 = vpop.f32.mrf.mxu0
    %v5897 = vadd.f32 %v5848, %v5896
    %v5898 = vpop.f32.mrf.mxu0
    %v5899 = vadd.f32 %v5850, %v5898
    %5900 = vmatmul.bf16.gmra.mxu0 %v1247
    %v5901 = vpop.f32.mrf.mxu0
    %v5902 = vadd.f32 %v5853, %v5901
    %v5903 = vpop.f32.mrf.mxu0
    %v5904 = vadd.f32 %v5855, %v5903
    %5905 = vdwg.mxu0
    %5906 = vmatpush.bf16.msra.mxu0 %v3374
    %5907 = vmatpush.bf16.msra.mxu0 %v3366
    %5908 = vmatpush.bf16.msra.mxu0 %v3358
    %5909 = vmatpush.bf16.msra.mxu0 %v3350
    %5910 = vmatpush.bf16.msra.mxu0 %v3342
    %5911 = vmatpush.bf16.msra.mxu0 %v3334
    %5912 = vmatpush.bf16.msra.mxu0 %v3326
    %5913 = vmatpush.bf16.msra.mxu0 %v3318
    %5914 = vmatmul.bf16.gmra.mxu0 %v1184
    %v5915 = vpop.f32.mrf.mxu0
    %v5916 = vadd.f32 %v1766, %v5915
    %v5917 = vpop.f32.mrf.mxu0
    %v5918 = vadd.f32 %v1766, %v5917
    %5919 = vmatmul.bf16.gmra.mxu0 %v1192
    %v5920 = vpop.f32.mrf.mxu0
    %v5921 = vadd.f32 %v1766, %v5920
    %v5922 = vpop.f32.mrf.mxu0
    %v5923 = vadd.f32 %v1766, %v5922
    %5924 = vmatmul.bf16.gmra.mxu0 %v1200
    %v5925 = vpop.f32.mrf.mxu0
    %v5926 = vadd.f32 %v1766, %v5925
    %v5927 = vpop.f32.mrf.mxu0
    %v5928 = vadd.f32 %v1766, %v5927
    %5929 = vmatmul.bf16.gmra.mxu0 %v1208
    %v5930 = vpop.f32.mrf.mxu0
    %v5931 = vadd.f32 %v1766, %v5930
    %v5932 = vpop.f32.mrf.mxu0
    %v5933 = vadd.f32 %v1766, %v5932
    %5934 = vmatmul.bf16.gmra.mxu0 %v1216
    %v5935 = vpop.f32.mrf.mxu0
    %v5936 = vadd.f32 %v1766, %v5935
    %v5937 = vpop.f32.mrf.mxu0
    %v5938 = vadd.f32 %v1766, %v5937
    %5939 = vmatmul.bf16.gmra.mxu0 %v1224
    %v5940 = vpop.f32.mrf.mxu0
    %v5941 = vadd.f32 %v1766, %v5940
    %v5942 = vpop.f32.mrf.mxu0
    %v5943 = vadd.f32 %v1766, %v5942
    %5944 = vmatmul.bf16.gmra.mxu0 %v1232
    %v5945 = vpop.f32.mrf.mxu0
    %v5946 = vadd.f32 %v1766, %v5945
    %v5947 = vpop.f32.mrf.mxu0
    %v5948 = vadd.f32 %v1766, %v5947
    %5949 = vmatmul.bf16.gmra.mxu0 %v1240
    %v5950 = vpop.f32.mrf.mxu0
    %v5951 = vadd.f32 %v1766, %v5950
    %v5952 = vpop.f32.mrf.mxu0
    %v5953 = vadd.f32 %v1766, %v5952
    %5954 = vdwg.mxu0
    %5955 = vmatpush.bf16.msra.mxu0 %v3438
    %5956 = vmatpush.bf16.msra.mxu0 %v3430
    %5957 = vmatpush.bf16.msra.mxu0 %v3422
    %5958 = vmatpush.bf16.msra.mxu0 %v3414
    %5959 = vmatpush.bf16.msra.mxu0 %v3406
    %5960 = vmatpush.bf16.msra.mxu0 %v3398
    %5961 = vmatpush.bf16.msra.mxu0 %v3390
    %5962 = vmatpush.bf16.msra.mxu0 %v3382
    %5963 = vmatmul.bf16.gmra.mxu0 %v1185
    %v5964 = vpop.f32.mrf.mxu0
    %v5965 = vadd.f32 %v5916, %v5964
    %v5966 = vpop.f32.mrf.mxu0
    %v5967 = vadd.f32 %v5918, %v5966
    %5968 = vmatmul.bf16.gmra.mxu0 %v1193
    %v5969 = vpop.f32.mrf.mxu0
    %v5970 = vadd.f32 %v5921, %v5969
    %v5971 = vpop.f32.mrf.mxu0
    %v5972 = vadd.f32 %v5923, %v5971
    %5973 = vmatmul.bf16.gmra.mxu0 %v1201
    %v5974 = vpop.f32.mrf.mxu0
    %v5975 = vadd.f32 %v5926, %v5974
    %v5976 = vpop.f32.mrf.mxu0
    %v5977 = vadd.f32 %v5928, %v5976
    %5978 = vmatmul.bf16.gmra.mxu0 %v1209
    %v5979 = vpop.f32.mrf.mxu0
    %v5980 = vadd.f32 %v5931, %v5979
    %v5981 = vpop.f32.mrf.mxu0
    %v5982 = vadd.f32 %v5933, %v5981
    %5983 = vmatmul.bf16.gmra.mxu0 %v1217
    %v5984 = vpop.f32.mrf.mxu0
    %v5985 = vadd.f32 %v5936, %v5984
    %v5986 = vpop.f32.mrf.mxu0
    %v5987 = vadd.f32 %v5938, %v5986
    %5988 = vmatmul.bf16.gmra.mxu0 %v1225
    %v5989 = vpop.f32.mrf.mxu0
    %v5990 = vadd.f32 %v5941, %v5989
    %v5991 = vpop.f32.mrf.mxu0
    %v5992 = vadd.f32 %v5943, %v5991
    %5993 = vmatmul.bf16.gmra.mxu0 %v1233
    %v5994 = vpop.f32.mrf.mxu0
    %v5995 = vadd.f32 %v5946, %v5994
    %v5996 = vpop.f32.mrf.mxu0
    %v5997 = vadd.f32 %v5948, %v5996
    %5998 = vmatmul.bf16.gmra.mxu0 %v1241
    %v5999 = vpop.f32.mrf.mxu0
    %v6000 = vadd.f32 %v5951, %v5999
    %v6001 = vpop.f32.mrf.mxu0
    %v6002 = vadd.f32 %v5953, %v6001
    %6003 = vdwg.mxu0
    %6004 = vmatpush.bf16.msra.mxu0 %v3502
    %6005 = vmatpush.bf16.msra.mxu0 %v3494
    %6006 = vmatpush.bf16.msra.mxu0 %v3486
    %6007 = vmatpush.bf16.msra.mxu0 %v3478
    %6008 = vmatpush.bf16.msra.mxu0 %v3470
    %6009 = vmatpush.bf16.msra.mxu0 %v3462
    %6010 = vmatpush.bf16.msra.mxu0 %v3454
    %6011 = vmatpush.bf16.msra.mxu0 %v3446
    %6012 = vmatmul.bf16.gmra.mxu0 %v1186
    %v6013 = vpop.f32.mrf.mxu0
    %v6014 = vadd.f32 %v5965, %v6013
    %v6015 = vpop.f32.mrf.mxu0
    %v6016 = vadd.f32 %v5967, %v6015
    %6017 = vmatmul.bf16.gmra.mxu0 %v1194
    %v6018 = vpop.f32.mrf.mxu0
    %v6019 = vadd.f32 %v5970, %v6018
    %v6020 = vpop.f32.mrf.mxu0
    %v6021 = vadd.f32 %v5972, %v6020
    %6022 = vmatmul.bf16.gmra.mxu0 %v1202
    %v6023 = vpop.f32.mrf.mxu0
    %v6024 = vadd.f32 %v5975, %v6023
    %v6025 = vpop.f32.mrf.mxu0
    %v6026 = vadd.f32 %v5977, %v6025
    %6027 = vmatmul.bf16.gmra.mxu0 %v1210
    %v6028 = vpop.f32.mrf.mxu0
    %v6029 = vadd.f32 %v5980, %v6028
    %v6030 = vpop.f32.mrf.mxu0
    %v6031 = vadd.f32 %v5982, %v6030
    %6032 = vmatmul.bf16.gmra.mxu0 %v1218
    %v6033 = vpop.f32.mrf.mxu0
    %v6034 = vadd.f32 %v5985, %v6033
    %v6035 = vpop.f32.mrf.mxu0
    %v6036 = vadd.f32 %v5987, %v6035
    %6037 = vmatmul.bf16.gmra.mxu0 %v1226
    %v6038 = vpop.f32.mrf.mxu0
    %v6039 = vadd.f32 %v5990, %v6038
    %v6040 = vpop.f32.mrf.mxu0
    %v6041 = vadd.f32 %v5992, %v6040
    %6042 = vmatmul.bf16.gmra.mxu0 %v1234
    %v6043 = vpop.f32.mrf.mxu0
    %v6044 = vadd.f32 %v5995, %v6043
    %v6045 = vpop.f32.mrf.mxu0
    %v6046 = vadd.f32 %v5997, %v6045
    %6047 = vmatmul.bf16.gmra.mxu0 %v1242
    %v6048 = vpop.f32.mrf.mxu0
    %v6049 = vadd.f32 %v6000, %v6048
    %v6050 = vpop.f32.mrf.mxu0
    %v6051 = vadd.f32 %v6002, %v6050
    %6052 = vdwg.mxu0
    %6053 = vmatpush.bf16.msra.mxu0 %v3566
    %6054 = vmatpush.bf16.msra.mxu0 %v3558
    %6055 = vmatpush.bf16.msra.mxu0 %v3550
    %6056 = vmatpush.bf16.msra.mxu0 %v3542
    %6057 = vmatpush.bf16.msra.mxu0 %v3534
    %6058 = vmatpush.bf16.msra.mxu0 %v3526
    %6059 = vmatpush.bf16.msra.mxu0 %v3518
    %6060 = vmatpush.bf16.msra.mxu0 %v3510
    %6061 = vmatmul.bf16.gmra.mxu0 %v1187
    %v6062 = vpop.f32.mrf.mxu0
    %v6063 = vadd.f32 %v6014, %v6062
    %v6064 = vpop.f32.mrf.mxu0
    %v6065 = vadd.f32 %v6016, %v6064
    %6066 = vmatmul.bf16.gmra.mxu0 %v1195
    %v6067 = vpop.f32.mrf.mxu0
    %v6068 = vadd.f32 %v6019, %v6067
    %v6069 = vpop.f32.mrf.mxu0
    %v6070 = vadd.f32 %v6021, %v6069
    %6071 = vmatmul.bf16.gmra.mxu0 %v1203
    %v6072 = vpop.f32.mrf.mxu0
    %v6073 = vadd.f32 %v6024, %v6072
    %v6074 = vpop.f32.mrf.mxu0
    %v6075 = vadd.f32 %v6026, %v6074
    %6076 = vmatmul.bf16.gmra.mxu0 %v1211
    %v6077 = vpop.f32.mrf.mxu0
    %v6078 = vadd.f32 %v6029, %v6077
    %v6079 = vpop.f32.mrf.mxu0
    %v6080 = vadd.f32 %v6031, %v6079
    %6081 = vmatmul.bf16.gmra.mxu0 %v1219
    %v6082 = vpop.f32.mrf.mxu0
    %v6083 = vadd.f32 %v6034, %v6082
    %v6084 = vpop.f32.mrf.mxu0
    %v6085 = vadd.f32 %v6036, %v6084
    %6086 = vmatmul.bf16.gmra.mxu0 %v1227
    %v6087 = vpop.f32.mrf.mxu0
    %v6088 = vadd.f32 %v6039, %v6087
    %v6089 = vpop.f32.mrf.mxu0
    %v6090 = vadd.f32 %v6041, %v6089
    %6091 = vmatmul.bf16.gmra.mxu0 %v1235
    %v6092 = vpop.f32.mrf.mxu0
    %v6093 = vadd.f32 %v6044, %v6092
    %v6094 = vpop.f32.mrf.mxu0
    %v6095 = vadd.f32 %v6046, %v6094
    %6096 = vmatmul.bf16.gmra.mxu0 %v1243
    %v6097 = vpop.f32.mrf.mxu0
    %v6098 = vadd.f32 %v6049, %v6097
    %v6099 = vpop.f32.mrf.mxu0
    %v6100 = vadd.f32 %v6051, %v6099
    %6101 = vdwg.mxu0
    %6102 = vmatpush.bf16.msra.mxu0 %v3630
    %6103 = vmatpush.bf16.msra.mxu0 %v3622
    %6104 = vmatpush.bf16.msra.mxu0 %v3614
    %6105 = vmatpush.bf16.msra.mxu0 %v3606
    %6106 = vmatpush.bf16.msra.mxu0 %v3598
    %6107 = vmatpush.bf16.msra.mxu0 %v3590
    %6108 = vmatpush.bf16.msra.mxu0 %v3582
    %6109 = vmatpush.bf16.msra.mxu0 %v3574
    %6110 = vmatmul.bf16.gmra.mxu0 %v1188
    %v6111 = vpop.f32.mrf.mxu0
    %v6112 = vadd.f32 %v6063, %v6111
    %v6113 = vpop.f32.mrf.mxu0
    %v6114 = vadd.f32 %v6065, %v6113
    %6115 = vmatmul.bf16.gmra.mxu0 %v1196
    %v6116 = vpop.f32.mrf.mxu0
    %v6117 = vadd.f32 %v6068, %v6116
    %v6118 = vpop.f32.mrf.mxu0
    %v6119 = vadd.f32 %v6070, %v6118
    %6120 = vmatmul.bf16.gmra.mxu0 %v1204
    %v6121 = vpop.f32.mrf.mxu0
    %v6122 = vadd.f32 %v6073, %v6121
    %v6123 = vpop.f32.mrf.mxu0
    %v6124 = vadd.f32 %v6075, %v6123
    %6125 = vmatmul.bf16.gmra.mxu0 %v1212
    %v6126 = vpop.f32.mrf.mxu0
    %v6127 = vadd.f32 %v6078, %v6126
    %v6128 = vpop.f32.mrf.mxu0
    %v6129 = vadd.f32 %v6080, %v6128
    %6130 = vmatmul.bf16.gmra.mxu0 %v1220
    %v6131 = vpop.f32.mrf.mxu0
    %v6132 = vadd.f32 %v6083, %v6131
    %v6133 = vpop.f32.mrf.mxu0
    %v6134 = vadd.f32 %v6085, %v6133
    %6135 = vmatmul.bf16.gmra.mxu0 %v1228
    %v6136 = vpop.f32.mrf.mxu0
    %v6137 = vadd.f32 %v6088, %v6136
    %v6138 = vpop.f32.mrf.mxu0
    %v6139 = vadd.f32 %v6090, %v6138
    %6140 = vmatmul.bf16.gmra.mxu0 %v1236
    %v6141 = vpop.f32.mrf.mxu0
    %v6142 = vadd.f32 %v6093, %v6141
    %v6143 = vpop.f32.mrf.mxu0
    %v6144 = vadd.f32 %v6095, %v6143
    %6145 = vmatmul.bf16.gmra.mxu0 %v1244
    %v6146 = vpop.f32.mrf.mxu0
    %v6147 = vadd.f32 %v6098, %v6146
    %v6148 = vpop.f32.mrf.mxu0
    %v6149 = vadd.f32 %v6100, %v6148
    %6150 = vdwg.mxu0
    %6151 = vmatpush.bf16.msra.mxu0 %v3694
    %6152 = vmatpush.bf16.msra.mxu0 %v3686
    %6153 = vmatpush.bf16.msra.mxu0 %v3678
    %6154 = vmatpush.bf16.msra.mxu0 %v3670
    %6155 = vmatpush.bf16.msra.mxu0 %v3662
    %6156 = vmatpush.bf16.msra.mxu0 %v3654
    %6157 = vmatpush.bf16.msra.mxu0 %v3646
    %6158 = vmatpush.bf16.msra.mxu0 %v3638
    %6159 = vmatmul.bf16.gmra.mxu0 %v1189
    %v6160 = vpop.f32.mrf.mxu0
    %v6161 = vadd.f32 %v6112, %v6160
    %v6162 = vpop.f32.mrf.mxu0
    %v6163 = vadd.f32 %v6114, %v6162
    %6164 = vmatmul.bf16.gmra.mxu0 %v1197
    %v6165 = vpop.f32.mrf.mxu0
    %v6166 = vadd.f32 %v6117, %v6165
    %v6167 = vpop.f32.mrf.mxu0
    %v6168 = vadd.f32 %v6119, %v6167
    %6169 = vmatmul.bf16.gmra.mxu0 %v1205
    %v6170 = vpop.f32.mrf.mxu0
    %v6171 = vadd.f32 %v6122, %v6170
    %v6172 = vpop.f32.mrf.mxu0
    %v6173 = vadd.f32 %v6124, %v6172
    %6174 = vmatmul.bf16.gmra.mxu0 %v1213
    %v6175 = vpop.f32.mrf.mxu0
    %v6176 = vadd.f32 %v6127, %v6175
    %v6177 = vpop.f32.mrf.mxu0
    %v6178 = vadd.f32 %v6129, %v6177
    %6179 = vmatmul.bf16.gmra.mxu0 %v1221
    %v6180 = vpop.f32.mrf.mxu0
    %v6181 = vadd.f32 %v6132, %v6180
    %v6182 = vpop.f32.mrf.mxu0
    %v6183 = vadd.f32 %v6134, %v6182
    %6184 = vmatmul.bf16.gmra.mxu0 %v1229
    %v6185 = vpop.f32.mrf.mxu0
    %v6186 = vadd.f32 %v6137, %v6185
    %v6187 = vpop.f32.mrf.mxu0
    %v6188 = vadd.f32 %v6139, %v6187
    %6189 = vmatmul.bf16.gmra.mxu0 %v1237
    %v6190 = vpop.f32.mrf.mxu0
    %v6191 = vadd.f32 %v6142, %v6190
    %v6192 = vpop.f32.mrf.mxu0
    %v6193 = vadd.f32 %v6144, %v6192
    %6194 = vmatmul.bf16.gmra.mxu0 %v1245
    %v6195 = vpop.f32.mrf.mxu0
    %v6196 = vadd.f32 %v6147, %v6195
    %v6197 = vpop.f32.mrf.mxu0
    %v6198 = vadd.f32 %v6149, %v6197
    %6199 = vdwg.mxu0
    %6200 = vmatpush.bf16.msra.mxu0 %v3758
    %6201 = vmatpush.bf16.msra.mxu0 %v3750
    %6202 = vmatpush.bf16.msra.mxu0 %v3742
    %6203 = vmatpush.bf16.msra.mxu0 %v3734
    %6204 = vmatpush.bf16.msra.mxu0 %v3726
    %6205 = vmatpush.bf16.msra.mxu0 %v3718
    %6206 = vmatpush.bf16.msra.mxu0 %v3710
    %6207 = vmatpush.bf16.msra.mxu0 %v3702
    %6208 = vmatmul.bf16.gmra.mxu0 %v1190
    %v6209 = vpop.f32.mrf.mxu0
    %v6210 = vadd.f32 %v6161, %v6209
    %v6211 = vpop.f32.mrf.mxu0
    %v6212 = vadd.f32 %v6163, %v6211
    %6213 = vmatmul.bf16.gmra.mxu0 %v1198
    %v6214 = vpop.f32.mrf.mxu0
    %v6215 = vadd.f32 %v6166, %v6214
    %v6216 = vpop.f32.mrf.mxu0
    %v6217 = vadd.f32 %v6168, %v6216
    %6218 = vmatmul.bf16.gmra.mxu0 %v1206
    %v6219 = vpop.f32.mrf.mxu0
    %v6220 = vadd.f32 %v6171, %v6219
    %v6221 = vpop.f32.mrf.mxu0
    %v6222 = vadd.f32 %v6173, %v6221
    %6223 = vmatmul.bf16.gmra.mxu0 %v1214
    %v6224 = vpop.f32.mrf.mxu0
    %v6225 = vadd.f32 %v6176, %v6224
    %v6226 = vpop.f32.mrf.mxu0
    %v6227 = vadd.f32 %v6178, %v6226
    %6228 = vmatmul.bf16.gmra.mxu0 %v1222
    %v6229 = vpop.f32.mrf.mxu0
    %v6230 = vadd.f32 %v6181, %v6229
    %v6231 = vpop.f32.mrf.mxu0
    %v6232 = vadd.f32 %v6183, %v6231
    %6233 = vmatmul.bf16.gmra.mxu0 %v1230
    %v6234 = vpop.f32.mrf.mxu0
    %v6235 = vadd.f32 %v6186, %v6234
    %v6236 = vpop.f32.mrf.mxu0
    %v6237 = vadd.f32 %v6188, %v6236
    %6238 = vmatmul.bf16.gmra.mxu0 %v1238
    %v6239 = vpop.f32.mrf.mxu0
    %v6240 = vadd.f32 %v6191, %v6239
    %v6241 = vpop.f32.mrf.mxu0
    %v6242 = vadd.f32 %v6193, %v6241
    %6243 = vmatmul.bf16.gmra.mxu0 %v1246
    %v6244 = vpop.f32.mrf.mxu0
    %v6245 = vadd.f32 %v6196, %v6244
    %v6246 = vpop.f32.mrf.mxu0
    %v6247 = vadd.f32 %v6198, %v6246
    %6248 = vdwg.mxu0
    %6249 = vmatpush.bf16.msra.mxu0 %v3822
    %6250 = vmatpush.bf16.msra.mxu0 %v3814
    %6251 = vmatpush.bf16.msra.mxu0 %v3806
    %6252 = vmatpush.bf16.msra.mxu0 %v3798
    %6253 = vmatpush.bf16.msra.mxu0 %v3790
    %6254 = vmatpush.bf16.msra.mxu0 %v3782
    %6255 = vmatpush.bf16.msra.mxu0 %v3774
    %6256 = vmatpush.bf16.msra.mxu0 %v3766
    %6257 = vmatmul.bf16.gmra.mxu0 %v1191
    %v6258 = vpop.f32.mrf.mxu0
    %v6259 = vadd.f32 %v6210, %v6258
    %v6260 = vpop.f32.mrf.mxu0
    %v6261 = vadd.f32 %v6212, %v6260
    %6262 = vmatmul.bf16.gmra.mxu0 %v1199
    %v6263 = vpop.f32.mrf.mxu0
    %v6264 = vadd.f32 %v6215, %v6263
    %v6265 = vpop.f32.mrf.mxu0
    %v6266 = vadd.f32 %v6217, %v6265
    %6267 = vmatmul.bf16.gmra.mxu0 %v1207
    %v6268 = vpop.f32.mrf.mxu0
    %v6269 = vadd.f32 %v6220, %v6268
    %v6270 = vpop.f32.mrf.mxu0
    %v6271 = vadd.f32 %v6222, %v6270
    %6272 = vmatmul.bf16.gmra.mxu0 %v1215
    %v6273 = vpop.f32.mrf.mxu0
    %v6274 = vadd.f32 %v6225, %v6273
    %v6275 = vpop.f32.mrf.mxu0
    %v6276 = vadd.f32 %v6227, %v6275
    %6277 = vmatmul.bf16.gmra.mxu0 %v1223
    %v6278 = vpop.f32.mrf.mxu0
    %v6279 = vadd.f32 %v6230, %v6278
    %v6280 = vpop.f32.mrf.mxu0
    %v6281 = vadd.f32 %v6232, %v6280
    %6282 = vmatmul.bf16.gmra.mxu0 %v1231
    %v6283 = vpop.f32.mrf.mxu0
    %v6284 = vadd.f32 %v6235, %v6283
    %v6285 = vpop.f32.mrf.mxu0
    %v6286 = vadd.f32 %v6237, %v6285
    %6287 = vmatmul.bf16.gmra.mxu0 %v1239
    %v6288 = vpop.f32.mrf.mxu0
    %v6289 = vadd.f32 %v6240, %v6288
    %v6290 = vpop.f32.mrf.mxu0
    %v6291 = vadd.f32 %v6242, %v6290
    %6292 = vmatmul.bf16.gmra.mxu0 %v1247
    %v6293 = vpop.f32.mrf.mxu0
    %v6294 = vadd.f32 %v6245, %v6293
    %v6295 = vpop.f32.mrf.mxu0
    %v6296 = vadd.f32 %v6247, %v6295
    %6297 = vdwg.mxu0
    %6298 = vmatpush.bf16.msra.mxu0 %v3375
    %6299 = vmatpush.bf16.msra.mxu0 %v3367
    %6300 = vmatpush.bf16.msra.mxu0 %v3359
    %6301 = vmatpush.bf16.msra.mxu0 %v3351
    %6302 = vmatpush.bf16.msra.mxu0 %v3343
    %6303 = vmatpush.bf16.msra.mxu0 %v3335
    %6304 = vmatpush.bf16.msra.mxu0 %v3327
    %6305 = vmatpush.bf16.msra.mxu0 %v3319
    %6306 = vmatmul.bf16.gmra.mxu0 %v1184
    %v6307 = vpop.f32.mrf.mxu0
    %v6308 = vadd.f32 %v1767, %v6307
    %v6309 = vpop.f32.mrf.mxu0
    %v6310 = vadd.f32 %v1767, %v6309
    %6311 = vmatmul.bf16.gmra.mxu0 %v1192
    %v6312 = vpop.f32.mrf.mxu0
    %v6313 = vadd.f32 %v1767, %v6312
    %v6314 = vpop.f32.mrf.mxu0
    %v6315 = vadd.f32 %v1767, %v6314
    %6316 = vmatmul.bf16.gmra.mxu0 %v1200
    %v6317 = vpop.f32.mrf.mxu0
    %v6318 = vadd.f32 %v1767, %v6317
    %v6319 = vpop.f32.mrf.mxu0
    %v6320 = vadd.f32 %v1767, %v6319
    %6321 = vmatmul.bf16.gmra.mxu0 %v1208
    %v6322 = vpop.f32.mrf.mxu0
    %v6323 = vadd.f32 %v1767, %v6322
    %v6324 = vpop.f32.mrf.mxu0
    %v6325 = vadd.f32 %v1767, %v6324
    %6326 = vmatmul.bf16.gmra.mxu0 %v1216
    %v6327 = vpop.f32.mrf.mxu0
    %v6328 = vadd.f32 %v1767, %v6327
    %v6329 = vpop.f32.mrf.mxu0
    %v6330 = vadd.f32 %v1767, %v6329
    %6331 = vmatmul.bf16.gmra.mxu0 %v1224
    %v6332 = vpop.f32.mrf.mxu0
    %v6333 = vadd.f32 %v1767, %v6332
    %v6334 = vpop.f32.mrf.mxu0
    %v6335 = vadd.f32 %v1767, %v6334
    %6336 = vmatmul.bf16.gmra.mxu0 %v1232
    %v6337 = vpop.f32.mrf.mxu0
    %v6338 = vadd.f32 %v1767, %v6337
    %v6339 = vpop.f32.mrf.mxu0
    %v6340 = vadd.f32 %v1767, %v6339
    %6341 = vmatmul.bf16.gmra.mxu0 %v1240
    %v6342 = vpop.f32.mrf.mxu0
    %v6343 = vadd.f32 %v1767, %v6342
    %v6344 = vpop.f32.mrf.mxu0
    %v6345 = vadd.f32 %v1767, %v6344
    %6346 = vdwg.mxu0
    %6347 = vmatpush.bf16.msra.mxu0 %v3439
    %6348 = vmatpush.bf16.msra.mxu0 %v3431
    %6349 = vmatpush.bf16.msra.mxu0 %v3423
    %6350 = vmatpush.bf16.msra.mxu0 %v3415
    %6351 = vmatpush.bf16.msra.mxu0 %v3407
    %6352 = vmatpush.bf16.msra.mxu0 %v3399
    %6353 = vmatpush.bf16.msra.mxu0 %v3391
    %6354 = vmatpush.bf16.msra.mxu0 %v3383
    %6355 = vmatmul.bf16.gmra.mxu0 %v1185
    %v6356 = vpop.f32.mrf.mxu0
    %v6357 = vadd.f32 %v6308, %v6356
    %v6358 = vpop.f32.mrf.mxu0
    %v6359 = vadd.f32 %v6310, %v6358
    %6360 = vmatmul.bf16.gmra.mxu0 %v1193
    %v6361 = vpop.f32.mrf.mxu0
    %v6362 = vadd.f32 %v6313, %v6361
    %v6363 = vpop.f32.mrf.mxu0
    %v6364 = vadd.f32 %v6315, %v6363
    %6365 = vmatmul.bf16.gmra.mxu0 %v1201
    %v6366 = vpop.f32.mrf.mxu0
    %v6367 = vadd.f32 %v6318, %v6366
    %v6368 = vpop.f32.mrf.mxu0
    %v6369 = vadd.f32 %v6320, %v6368
    %6370 = vmatmul.bf16.gmra.mxu0 %v1209
    %v6371 = vpop.f32.mrf.mxu0
    %v6372 = vadd.f32 %v6323, %v6371
    %v6373 = vpop.f32.mrf.mxu0
    %v6374 = vadd.f32 %v6325, %v6373
    %6375 = vmatmul.bf16.gmra.mxu0 %v1217
    %v6376 = vpop.f32.mrf.mxu0
    %v6377 = vadd.f32 %v6328, %v6376
    %v6378 = vpop.f32.mrf.mxu0
    %v6379 = vadd.f32 %v6330, %v6378
    %6380 = vmatmul.bf16.gmra.mxu0 %v1225
    %v6381 = vpop.f32.mrf.mxu0
    %v6382 = vadd.f32 %v6333, %v6381
    %v6383 = vpop.f32.mrf.mxu0
    %v6384 = vadd.f32 %v6335, %v6383
    %6385 = vmatmul.bf16.gmra.mxu0 %v1233
    %v6386 = vpop.f32.mrf.mxu0
    %v6387 = vadd.f32 %v6338, %v6386
    %v6388 = vpop.f32.mrf.mxu0
    %v6389 = vadd.f32 %v6340, %v6388
    %6390 = vmatmul.bf16.gmra.mxu0 %v1241
    %v6391 = vpop.f32.mrf.mxu0
    %v6392 = vadd.f32 %v6343, %v6391
    %v6393 = vpop.f32.mrf.mxu0
    %v6394 = vadd.f32 %v6345, %v6393
    %6395 = vdwg.mxu0
    %6396 = vmatpush.bf16.msra.mxu0 %v3503
    %6397 = vmatpush.bf16.msra.mxu0 %v3495
    %6398 = vmatpush.bf16.msra.mxu0 %v3487
    %6399 = vmatpush.bf16.msra.mxu0 %v3479
    %6400 = vmatpush.bf16.msra.mxu0 %v3471
    %6401 = vmatpush.bf16.msra.mxu0 %v3463
    %6402 = vmatpush.bf16.msra.mxu0 %v3455
    %6403 = vmatpush.bf16.msra.mxu0 %v3447
    %6404 = vmatmul.bf16.gmra.mxu0 %v1186
    %v6405 = vpop.f32.mrf.mxu0
    %v6406 = vadd.f32 %v6357, %v6405
    %v6407 = vpop.f32.mrf.mxu0
    %v6408 = vadd.f32 %v6359, %v6407
    %6409 = vmatmul.bf16.gmra.mxu0 %v1194
    %v6410 = vpop.f32.mrf.mxu0
    %v6411 = vadd.f32 %v6362, %v6410
    %v6412 = vpop.f32.mrf.mxu0
    %v6413 = vadd.f32 %v6364, %v6412
    %6414 = vmatmul.bf16.gmra.mxu0 %v1202
    %v6415 = vpop.f32.mrf.mxu0
    %v6416 = vadd.f32 %v6367, %v6415
    %v6417 = vpop.f32.mrf.mxu0
    %v6418 = vadd.f32 %v6369, %v6417
    %6419 = vmatmul.bf16.gmra.mxu0 %v1210
    %v6420 = vpop.f32.mrf.mxu0
    %v6421 = vadd.f32 %v6372, %v6420
    %v6422 = vpop.f32.mrf.mxu0
    %v6423 = vadd.f32 %v6374, %v6422
    %6424 = vmatmul.bf16.gmra.mxu0 %v1218
    %v6425 = vpop.f32.mrf.mxu0
    %v6426 = vadd.f32 %v6377, %v6425
    %v6427 = vpop.f32.mrf.mxu0
    %v6428 = vadd.f32 %v6379, %v6427
    %6429 = vmatmul.bf16.gmra.mxu0 %v1226
    %v6430 = vpop.f32.mrf.mxu0
    %v6431 = vadd.f32 %v6382, %v6430
    %v6432 = vpop.f32.mrf.mxu0
    %v6433 = vadd.f32 %v6384, %v6432
    %6434 = vmatmul.bf16.gmra.mxu0 %v1234
    %v6435 = vpop.f32.mrf.mxu0
    %v6436 = vadd.f32 %v6387, %v6435
    %v6437 = vpop.f32.mrf.mxu0
    %v6438 = vadd.f32 %v6389, %v6437
    %6439 = vmatmul.bf16.gmra.mxu0 %v1242
    %v6440 = vpop.f32.mrf.mxu0
    %v6441 = vadd.f32 %v6392, %v6440
    %v6442 = vpop.f32.mrf.mxu0
    %v6443 = vadd.f32 %v6394, %v6442
    %6444 = vdwg.mxu0
    %6445 = vmatpush.bf16.msra.mxu0 %v3567
    %6446 = vmatpush.bf16.msra.mxu0 %v3559
    %6447 = vmatpush.bf16.msra.mxu0 %v3551
    %6448 = vmatpush.bf16.msra.mxu0 %v3543
    %6449 = vmatpush.bf16.msra.mxu0 %v3535
    %6450 = vmatpush.bf16.msra.mxu0 %v3527
    %6451 = vmatpush.bf16.msra.mxu0 %v3519
    %6452 = vmatpush.bf16.msra.mxu0 %v3511
    %6453 = vmatmul.bf16.gmra.mxu0 %v1187
    %v6454 = vpop.f32.mrf.mxu0
    %v6455 = vadd.f32 %v6406, %v6454
    %v6456 = vpop.f32.mrf.mxu0
    %v6457 = vadd.f32 %v6408, %v6456
    %6458 = vmatmul.bf16.gmra.mxu0 %v1195
    %v6459 = vpop.f32.mrf.mxu0
    %v6460 = vadd.f32 %v6411, %v6459
    %v6461 = vpop.f32.mrf.mxu0
    %v6462 = vadd.f32 %v6413, %v6461
    %6463 = vmatmul.bf16.gmra.mxu0 %v1203
    %v6464 = vpop.f32.mrf.mxu0
    %v6465 = vadd.f32 %v6416, %v6464
    %v6466 = vpop.f32.mrf.mxu0
    %v6467 = vadd.f32 %v6418, %v6466
    %6468 = vmatmul.bf16.gmra.mxu0 %v1211
    %v6469 = vpop.f32.mrf.mxu0
    %v6470 = vadd.f32 %v6421, %v6469
    %v6471 = vpop.f32.mrf.mxu0
    %v6472 = vadd.f32 %v6423, %v6471
    %6473 = vmatmul.bf16.gmra.mxu0 %v1219
    %v6474 = vpop.f32.mrf.mxu0
    %v6475 = vadd.f32 %v6426, %v6474
    %v6476 = vpop.f32.mrf.mxu0
    %v6477 = vadd.f32 %v6428, %v6476
    %6478 = vmatmul.bf16.gmra.mxu0 %v1227
    %v6479 = vpop.f32.mrf.mxu0
    %v6480 = vadd.f32 %v6431, %v6479
    %v6481 = vpop.f32.mrf.mxu0
    %v6482 = vadd.f32 %v6433, %v6481
    %6483 = vmatmul.bf16.gmra.mxu0 %v1235
    %v6484 = vpop.f32.mrf.mxu0
    %v6485 = vadd.f32 %v6436, %v6484
    %v6486 = vpop.f32.mrf.mxu0
    %v6487 = vadd.f32 %v6438, %v6486
    %6488 = vmatmul.bf16.gmra.mxu0 %v1243
    %v6489 = vpop.f32.mrf.mxu0
    %v6490 = vadd.f32 %v6441, %v6489
    %v6491 = vpop.f32.mrf.mxu0
    %v6492 = vadd.f32 %v6443, %v6491
    %6493 = vdwg.mxu0
    %6494 = vmatpush.bf16.msra.mxu0 %v3631
    %6495 = vmatpush.bf16.msra.mxu0 %v3623
    %6496 = vmatpush.bf16.msra.mxu0 %v3615
    %6497 = vmatpush.bf16.msra.mxu0 %v3607
    %6498 = vmatpush.bf16.msra.mxu0 %v3599
    %6499 = vmatpush.bf16.msra.mxu0 %v3591
    %6500 = vmatpush.bf16.msra.mxu0 %v3583
    %6501 = vmatpush.bf16.msra.mxu0 %v3575
    %6502 = vmatmul.bf16.gmra.mxu0 %v1188
    %v6503 = vpop.f32.mrf.mxu0
    %v6504 = vadd.f32 %v6455, %v6503
    %v6505 = vpop.f32.mrf.mxu0
    %v6506 = vadd.f32 %v6457, %v6505
    %6507 = vmatmul.bf16.gmra.mxu0 %v1196
    %v6508 = vpop.f32.mrf.mxu0
    %v6509 = vadd.f32 %v6460, %v6508
    %v6510 = vpop.f32.mrf.mxu0
    %v6511 = vadd.f32 %v6462, %v6510
    %6512 = vmatmul.bf16.gmra.mxu0 %v1204
    %v6513 = vpop.f32.mrf.mxu0
    %v6514 = vadd.f32 %v6465, %v6513
    %v6515 = vpop.f32.mrf.mxu0
    %v6516 = vadd.f32 %v6467, %v6515
    %6517 = vmatmul.bf16.gmra.mxu0 %v1212
    %v6518 = vpop.f32.mrf.mxu0
    %v6519 = vadd.f32 %v6470, %v6518
    %v6520 = vpop.f32.mrf.mxu0
    %v6521 = vadd.f32 %v6472, %v6520
    %6522 = vmatmul.bf16.gmra.mxu0 %v1220
    %v6523 = vpop.f32.mrf.mxu0
    %v6524 = vadd.f32 %v6475, %v6523
    %v6525 = vpop.f32.mrf.mxu0
    %v6526 = vadd.f32 %v6477, %v6525
    %6527 = vmatmul.bf16.gmra.mxu0 %v1228
    %v6528 = vpop.f32.mrf.mxu0
    %v6529 = vadd.f32 %v6480, %v6528
    %v6530 = vpop.f32.mrf.mxu0
    %v6531 = vadd.f32 %v6482, %v6530
    %6532 = vmatmul.bf16.gmra.mxu0 %v1236
    %v6533 = vpop.f32.mrf.mxu0
    %v6534 = vadd.f32 %v6485, %v6533
    %v6535 = vpop.f32.mrf.mxu0
    %v6536 = vadd.f32 %v6487, %v6535
    %6537 = vmatmul.bf16.gmra.mxu0 %v1244
    %v6538 = vpop.f32.mrf.mxu0
    %v6539 = vadd.f32 %v6490, %v6538
    %v6540 = vpop.f32.mrf.mxu0
    %v6541 = vadd.f32 %v6492, %v6540
    %6542 = vdwg.mxu0
    %6543 = vmatpush.bf16.msra.mxu0 %v3695
    %6544 = vmatpush.bf16.msra.mxu0 %v3687
    %6545 = vmatpush.bf16.msra.mxu0 %v3679
    %6546 = vmatpush.bf16.msra.mxu0 %v3671
    %6547 = vmatpush.bf16.msra.mxu0 %v3663
    %6548 = vmatpush.bf16.msra.mxu0 %v3655
    %6549 = vmatpush.bf16.msra.mxu0 %v3647
    %6550 = vmatpush.bf16.msra.mxu0 %v3639
    %6551 = vmatmul.bf16.gmra.mxu0 %v1189
    %v6552 = vpop.f32.mrf.mxu0
    %v6553 = vadd.f32 %v6504, %v6552
    %v6554 = vpop.f32.mrf.mxu0
    %v6555 = vadd.f32 %v6506, %v6554
    %6556 = vmatmul.bf16.gmra.mxu0 %v1197
    %v6557 = vpop.f32.mrf.mxu0
    %v6558 = vadd.f32 %v6509, %v6557
    %v6559 = vpop.f32.mrf.mxu0
    %v6560 = vadd.f32 %v6511, %v6559
    %6561 = vmatmul.bf16.gmra.mxu0 %v1205
    %v6562 = vpop.f32.mrf.mxu0
    %v6563 = vadd.f32 %v6514, %v6562
    %v6564 = vpop.f32.mrf.mxu0
    %v6565 = vadd.f32 %v6516, %v6564
    %6566 = vmatmul.bf16.gmra.mxu0 %v1213
    %v6567 = vpop.f32.mrf.mxu0
    %v6568 = vadd.f32 %v6519, %v6567
    %v6569 = vpop.f32.mrf.mxu0
    %v6570 = vadd.f32 %v6521, %v6569
    %6571 = vmatmul.bf16.gmra.mxu0 %v1221
    %v6572 = vpop.f32.mrf.mxu0
    %v6573 = vadd.f32 %v6524, %v6572
    %v6574 = vpop.f32.mrf.mxu0
    %v6575 = vadd.f32 %v6526, %v6574
    %6576 = vmatmul.bf16.gmra.mxu0 %v1229
    %v6577 = vpop.f32.mrf.mxu0
    %v6578 = vadd.f32 %v6529, %v6577
    %v6579 = vpop.f32.mrf.mxu0
    %v6580 = vadd.f32 %v6531, %v6579
    %6581 = vmatmul.bf16.gmra.mxu0 %v1237
    %v6582 = vpop.f32.mrf.mxu0
    %v6583 = vadd.f32 %v6534, %v6582
    %v6584 = vpop.f32.mrf.mxu0
    %v6585 = vadd.f32 %v6536, %v6584
    %6586 = vmatmul.bf16.gmra.mxu0 %v1245
    %v6587 = vpop.f32.mrf.mxu0
    %v6588 = vadd.f32 %v6539, %v6587
    %v6589 = vpop.f32.mrf.mxu0
    %v6590 = vadd.f32 %v6541, %v6589
    %6591 = vdwg.mxu0
    %6592 = vmatpush.bf16.msra.mxu0 %v3759
    %6593 = vmatpush.bf16.msra.mxu0 %v3751
    %6594 = vmatpush.bf16.msra.mxu0 %v3743
    %6595 = vmatpush.bf16.msra.mxu0 %v3735
    %6596 = vmatpush.bf16.msra.mxu0 %v3727
    %6597 = vmatpush.bf16.msra.mxu0 %v3719
    %6598 = vmatpush.bf16.msra.mxu0 %v3711
    %6599 = vmatpush.bf16.msra.mxu0 %v3703
    %6600 = vmatmul.bf16.gmra.mxu0 %v1190
    %v6601 = vpop.f32.mrf.mxu0
    %v6602 = vadd.f32 %v6553, %v6601
    %v6603 = vpop.f32.mrf.mxu0
    %v6604 = vadd.f32 %v6555, %v6603
    %6605 = vmatmul.bf16.gmra.mxu0 %v1198
    %v6606 = vpop.f32.mrf.mxu0
    %v6607 = vadd.f32 %v6558, %v6606
    %v6608 = vpop.f32.mrf.mxu0
    %v6609 = vadd.f32 %v6560, %v6608
    %6610 = vmatmul.bf16.gmra.mxu0 %v1206
    %v6611 = vpop.f32.mrf.mxu0
    %v6612 = vadd.f32 %v6563, %v6611
    %v6613 = vpop.f32.mrf.mxu0
    %v6614 = vadd.f32 %v6565, %v6613
    %6615 = vmatmul.bf16.gmra.mxu0 %v1214
    %v6616 = vpop.f32.mrf.mxu0
    %v6617 = vadd.f32 %v6568, %v6616
    %v6618 = vpop.f32.mrf.mxu0
    %v6619 = vadd.f32 %v6570, %v6618
    %6620 = vmatmul.bf16.gmra.mxu0 %v1222
    %v6621 = vpop.f32.mrf.mxu0
    %v6622 = vadd.f32 %v6573, %v6621
    %v6623 = vpop.f32.mrf.mxu0
    %v6624 = vadd.f32 %v6575, %v6623
    %6625 = vmatmul.bf16.gmra.mxu0 %v1230
    %v6626 = vpop.f32.mrf.mxu0
    %v6627 = vadd.f32 %v6578, %v6626
    %v6628 = vpop.f32.mrf.mxu0
    %v6629 = vadd.f32 %v6580, %v6628
    %6630 = vmatmul.bf16.gmra.mxu0 %v1238
    %v6631 = vpop.f32.mrf.mxu0
    %v6632 = vadd.f32 %v6583, %v6631
    %v6633 = vpop.f32.mrf.mxu0
    %v6634 = vadd.f32 %v6585, %v6633
    %6635 = vmatmul.bf16.gmra.mxu0 %v1246
    %v6636 = vpop.f32.mrf.mxu0
    %v6637 = vadd.f32 %v6588, %v6636
    %v6638 = vpop.f32.mrf.mxu0
    %v6639 = vadd.f32 %v6590, %v6638
    %6640 = vdwg.mxu0
    %6641 = vmatpush.bf16.msra.mxu0 %v3823
    %6642 = vmatpush.bf16.msra.mxu0 %v3815
    %6643 = vmatpush.bf16.msra.mxu0 %v3807
    %6644 = vmatpush.bf16.msra.mxu0 %v3799
    %6645 = vmatpush.bf16.msra.mxu0 %v3791
    %6646 = vmatpush.bf16.msra.mxu0 %v3783
    %6647 = vmatpush.bf16.msra.mxu0 %v3775
    %6648 = vmatpush.bf16.msra.mxu0 %v3767
    %6649 = vmatmul.bf16.gmra.mxu0 %v1191
    %v6650 = vpop.f32.mrf.mxu0
    %v6651 = vadd.f32 %v6602, %v6650
    %v6652 = vpop.f32.mrf.mxu0
    %v6653 = vadd.f32 %v6604, %v6652
    %6654 = vmatmul.bf16.gmra.mxu0 %v1199
    %v6655 = vpop.f32.mrf.mxu0
    %v6656 = vadd.f32 %v6607, %v6655
    %v6657 = vpop.f32.mrf.mxu0
    %v6658 = vadd.f32 %v6609, %v6657
    %6659 = vmatmul.bf16.gmra.mxu0 %v1207
    %v6660 = vpop.f32.mrf.mxu0
    %v6661 = vadd.f32 %v6612, %v6660
    %v6662 = vpop.f32.mrf.mxu0
    %v6663 = vadd.f32 %v6614, %v6662
    %6664 = vmatmul.bf16.gmra.mxu0 %v1215
    %v6665 = vpop.f32.mrf.mxu0
    %v6666 = vadd.f32 %v6617, %v6665
    %v6667 = vpop.f32.mrf.mxu0
    %v6668 = vadd.f32 %v6619, %v6667
    %6669 = vmatmul.bf16.gmra.mxu0 %v1223
    %v6670 = vpop.f32.mrf.mxu0
    %v6671 = vadd.f32 %v6622, %v6670
    %v6672 = vpop.f32.mrf.mxu0
    %v6673 = vadd.f32 %v6624, %v6672
    %6674 = vmatmul.bf16.gmra.mxu0 %v1231
    %v6675 = vpop.f32.mrf.mxu0
    %v6676 = vadd.f32 %v6627, %v6675
    %v6677 = vpop.f32.mrf.mxu0
    %v6678 = vadd.f32 %v6629, %v6677
    %6679 = vmatmul.bf16.gmra.mxu0 %v1239
    %v6680 = vpop.f32.mrf.mxu0
    %v6681 = vadd.f32 %v6632, %v6680
    %v6682 = vpop.f32.mrf.mxu0
    %v6683 = vadd.f32 %v6634, %v6682
    %6684 = vmatmul.bf16.gmra.mxu0 %v1247
    %v6685 = vpop.f32.mrf.mxu0
    %v6686 = vadd.f32 %v6637, %v6685
    %v6687 = vpop.f32.mrf.mxu0
    %v6688 = vadd.f32 %v6639, %v6687
    %6689 = vdwg.mxu0
    %6690 = vmatpush.bf16.msra.mxu0 %v3376
    %6691 = vmatpush.bf16.msra.mxu0 %v3368
    %6692 = vmatpush.bf16.msra.mxu0 %v3360
    %6693 = vmatpush.bf16.msra.mxu0 %v3352
    %6694 = vmatpush.bf16.msra.mxu0 %v3344
    %6695 = vmatpush.bf16.msra.mxu0 %v3336
    %6696 = vmatpush.bf16.msra.mxu0 %v3328
    %6697 = vmatpush.bf16.msra.mxu0 %v3320
    %6698 = vmatmul.bf16.gmra.mxu0 %v1184
    %v6699 = vpop.f32.mrf.mxu0
    %v6700 = vadd.f32 %v1768, %v6699
    %v6701 = vpop.f32.mrf.mxu0
    %v6702 = vadd.f32 %v1768, %v6701
    %6703 = vmatmul.bf16.gmra.mxu0 %v1192
    %v6704 = vpop.f32.mrf.mxu0
    %v6705 = vadd.f32 %v1768, %v6704
    %v6706 = vpop.f32.mrf.mxu0
    %v6707 = vadd.f32 %v1768, %v6706
    %6708 = vmatmul.bf16.gmra.mxu0 %v1200
    %v6709 = vpop.f32.mrf.mxu0
    %v6710 = vadd.f32 %v1768, %v6709
    %v6711 = vpop.f32.mrf.mxu0
    %v6712 = vadd.f32 %v1768, %v6711
    %6713 = vmatmul.bf16.gmra.mxu0 %v1208
    %v6714 = vpop.f32.mrf.mxu0
    %v6715 = vadd.f32 %v1768, %v6714
    %v6716 = vpop.f32.mrf.mxu0
    %v6717 = vadd.f32 %v1768, %v6716
    %6718 = vmatmul.bf16.gmra.mxu0 %v1216
    %v6719 = vpop.f32.mrf.mxu0
    %v6720 = vadd.f32 %v1768, %v6719
    %v6721 = vpop.f32.mrf.mxu0
    %v6722 = vadd.f32 %v1768, %v6721
    %6723 = vmatmul.bf16.gmra.mxu0 %v1224
    %v6724 = vpop.f32.mrf.mxu0
    %v6725 = vadd.f32 %v1768, %v6724
    %v6726 = vpop.f32.mrf.mxu0
    %v6727 = vadd.f32 %v1768, %v6726
    %6728 = vmatmul.bf16.gmra.mxu0 %v1232
    %v6729 = vpop.f32.mrf.mxu0
    %v6730 = vadd.f32 %v1768, %v6729
    %v6731 = vpop.f32.mrf.mxu0
    %v6732 = vadd.f32 %v1768, %v6731
    %6733 = vmatmul.bf16.gmra.mxu0 %v1240
    %v6734 = vpop.f32.mrf.mxu0
    %v6735 = vadd.f32 %v1768, %v6734
    %v6736 = vpop.f32.mrf.mxu0
    %v6737 = vadd.f32 %v1768, %v6736
    %6738 = vdwg.mxu0
    %6739 = vmatpush.bf16.msra.mxu0 %v3440
    %6740 = vmatpush.bf16.msra.mxu0 %v3432
    %6741 = vmatpush.bf16.msra.mxu0 %v3424
    %6742 = vmatpush.bf16.msra.mxu0 %v3416
    %6743 = vmatpush.bf16.msra.mxu0 %v3408
    %6744 = vmatpush.bf16.msra.mxu0 %v3400
    %6745 = vmatpush.bf16.msra.mxu0 %v3392
    %6746 = vmatpush.bf16.msra.mxu0 %v3384
    %6747 = vmatmul.bf16.gmra.mxu0 %v1185
    %v6748 = vpop.f32.mrf.mxu0
    %v6749 = vadd.f32 %v6700, %v6748
    %v6750 = vpop.f32.mrf.mxu0
    %v6751 = vadd.f32 %v6702, %v6750
    %6752 = vmatmul.bf16.gmra.mxu0 %v1193
    %v6753 = vpop.f32.mrf.mxu0
    %v6754 = vadd.f32 %v6705, %v6753
    %v6755 = vpop.f32.mrf.mxu0
    %v6756 = vadd.f32 %v6707, %v6755
    %6757 = vmatmul.bf16.gmra.mxu0 %v1201
    %v6758 = vpop.f32.mrf.mxu0
    %v6759 = vadd.f32 %v6710, %v6758
    %v6760 = vpop.f32.mrf.mxu0
    %v6761 = vadd.f32 %v6712, %v6760
    %6762 = vmatmul.bf16.gmra.mxu0 %v1209
    %v6763 = vpop.f32.mrf.mxu0
    %v6764 = vadd.f32 %v6715, %v6763
    %v6765 = vpop.f32.mrf.mxu0
    %v6766 = vadd.f32 %v6717, %v6765
    %6767 = vmatmul.bf16.gmra.mxu0 %v1217
    %v6768 = vpop.f32.mrf.mxu0
    %v6769 = vadd.f32 %v6720, %v6768
    %v6770 = vpop.f32.mrf.mxu0
    %v6771 = vadd.f32 %v6722, %v6770
    %6772 = vmatmul.bf16.gmra.mxu0 %v1225
    %v6773 = vpop.f32.mrf.mxu0
    %v6774 = vadd.f32 %v6725, %v6773
    %v6775 = vpop.f32.mrf.mxu0
    %v6776 = vadd.f32 %v6727, %v6775
    %6777 = vmatmul.bf16.gmra.mxu0 %v1233
    %v6778 = vpop.f32.mrf.mxu0
    %v6779 = vadd.f32 %v6730, %v6778
    %v6780 = vpop.f32.mrf.mxu0
    %v6781 = vadd.f32 %v6732, %v6780
    %6782 = vmatmul.bf16.gmra.mxu0 %v1241
    %v6783 = vpop.f32.mrf.mxu0
    %v6784 = vadd.f32 %v6735, %v6783
    %v6785 = vpop.f32.mrf.mxu0
    %v6786 = vadd.f32 %v6737, %v6785
    %6787 = vdwg.mxu0
    %6788 = vmatpush.bf16.msra.mxu0 %v3504
    %6789 = vmatpush.bf16.msra.mxu0 %v3496
    %6790 = vmatpush.bf16.msra.mxu0 %v3488
    %6791 = vmatpush.bf16.msra.mxu0 %v3480
    %6792 = vmatpush.bf16.msra.mxu0 %v3472
    %6793 = vmatpush.bf16.msra.mxu0 %v3464
    %6794 = vmatpush.bf16.msra.mxu0 %v3456
    %6795 = vmatpush.bf16.msra.mxu0 %v3448
    %6796 = vmatmul.bf16.gmra.mxu0 %v1186
    %v6797 = vpop.f32.mrf.mxu0
    %v6798 = vadd.f32 %v6749, %v6797
    %v6799 = vpop.f32.mrf.mxu0
    %v6800 = vadd.f32 %v6751, %v6799
    %6801 = vmatmul.bf16.gmra.mxu0 %v1194
    %v6802 = vpop.f32.mrf.mxu0
    %v6803 = vadd.f32 %v6754, %v6802
    %v6804 = vpop.f32.mrf.mxu0
    %v6805 = vadd.f32 %v6756, %v6804
    %6806 = vmatmul.bf16.gmra.mxu0 %v1202
    %v6807 = vpop.f32.mrf.mxu0
    %v6808 = vadd.f32 %v6759, %v6807
    %v6809 = vpop.f32.mrf.mxu0
    %v6810 = vadd.f32 %v6761, %v6809
    %6811 = vmatmul.bf16.gmra.mxu0 %v1210
    %v6812 = vpop.f32.mrf.mxu0
    %v6813 = vadd.f32 %v6764, %v6812
    %v6814 = vpop.f32.mrf.mxu0
    %v6815 = vadd.f32 %v6766, %v6814
    %6816 = vmatmul.bf16.gmra.mxu0 %v1218
    %v6817 = vpop.f32.mrf.mxu0
    %v6818 = vadd.f32 %v6769, %v6817
    %v6819 = vpop.f32.mrf.mxu0
    %v6820 = vadd.f32 %v6771, %v6819
    %6821 = vmatmul.bf16.gmra.mxu0 %v1226
    %v6822 = vpop.f32.mrf.mxu0
    %v6823 = vadd.f32 %v6774, %v6822
    %v6824 = vpop.f32.mrf.mxu0
    %v6825 = vadd.f32 %v6776, %v6824
    %6826 = vmatmul.bf16.gmra.mxu0 %v1234
    %v6827 = vpop.f32.mrf.mxu0
    %v6828 = vadd.f32 %v6779, %v6827
    %v6829 = vpop.f32.mrf.mxu0
    %v6830 = vadd.f32 %v6781, %v6829
    %6831 = vmatmul.bf16.gmra.mxu0 %v1242
    %v6832 = vpop.f32.mrf.mxu0
    %v6833 = vadd.f32 %v6784, %v6832
    %v6834 = vpop.f32.mrf.mxu0
    %v6835 = vadd.f32 %v6786, %v6834
    %6836 = vdwg.mxu0
    %6837 = vmatpush.bf16.msra.mxu0 %v3568
    %6838 = vmatpush.bf16.msra.mxu0 %v3560
    %6839 = vmatpush.bf16.msra.mxu0 %v3552
    %6840 = vmatpush.bf16.msra.mxu0 %v3544
    %6841 = vmatpush.bf16.msra.mxu0 %v3536
    %6842 = vmatpush.bf16.msra.mxu0 %v3528
    %6843 = vmatpush.bf16.msra.mxu0 %v3520
    %6844 = vmatpush.bf16.msra.mxu0 %v3512
    %6845 = vmatmul.bf16.gmra.mxu0 %v1187
    %v6846 = vpop.f32.mrf.mxu0
    %v6847 = vadd.f32 %v6798, %v6846
    %v6848 = vpop.f32.mrf.mxu0
    %v6849 = vadd.f32 %v6800, %v6848
    %6850 = vmatmul.bf16.gmra.mxu0 %v1195
    %v6851 = vpop.f32.mrf.mxu0
    %v6852 = vadd.f32 %v6803, %v6851
    %v6853 = vpop.f32.mrf.mxu0
    %v6854 = vadd.f32 %v6805, %v6853
    %6855 = vmatmul.bf16.gmra.mxu0 %v1203
    %v6856 = vpop.f32.mrf.mxu0
    %v6857 = vadd.f32 %v6808, %v6856
    %v6858 = vpop.f32.mrf.mxu0
    %v6859 = vadd.f32 %v6810, %v6858
    %6860 = vmatmul.bf16.gmra.mxu0 %v1211
    %v6861 = vpop.f32.mrf.mxu0
    %v6862 = vadd.f32 %v6813, %v6861
    %v6863 = vpop.f32.mrf.mxu0
    %v6864 = vadd.f32 %v6815, %v6863
    %6865 = vmatmul.bf16.gmra.mxu0 %v1219
    %v6866 = vpop.f32.mrf.mxu0
    %v6867 = vadd.f32 %v6818, %v6866
    %v6868 = vpop.f32.mrf.mxu0
    %v6869 = vadd.f32 %v6820, %v6868
    %6870 = vmatmul.bf16.gmra.mxu0 %v1227
    %v6871 = vpop.f32.mrf.mxu0
    %v6872 = vadd.f32 %v6823, %v6871
    %v6873 = vpop.f32.mrf.mxu0
    %v6874 = vadd.f32 %v6825, %v6873
    %6875 = vmatmul.bf16.gmra.mxu0 %v1235
    %v6876 = vpop.f32.mrf.mxu0
    %v6877 = vadd.f32 %v6828, %v6876
    %v6878 = vpop.f32.mrf.mxu0
    %v6879 = vadd.f32 %v6830, %v6878
    %6880 = vmatmul.bf16.gmra.mxu0 %v1243
    %v6881 = vpop.f32.mrf.mxu0
    %v6882 = vadd.f32 %v6833, %v6881
    %v6883 = vpop.f32.mrf.mxu0
    %v6884 = vadd.f32 %v6835, %v6883
    %6885 = vdwg.mxu0
    %6886 = vmatpush.bf16.msra.mxu0 %v3632
    %6887 = vmatpush.bf16.msra.mxu0 %v3624
    %6888 = vmatpush.bf16.msra.mxu0 %v3616
    %6889 = vmatpush.bf16.msra.mxu0 %v3608
    %6890 = vmatpush.bf16.msra.mxu0 %v3600
    %6891 = vmatpush.bf16.msra.mxu0 %v3592
    %6892 = vmatpush.bf16.msra.mxu0 %v3584
    %6893 = vmatpush.bf16.msra.mxu0 %v3576
    %6894 = vmatmul.bf16.gmra.mxu0 %v1188
    %v6895 = vpop.f32.mrf.mxu0
    %v6896 = vadd.f32 %v6847, %v6895
    %v6897 = vpop.f32.mrf.mxu0
    %v6898 = vadd.f32 %v6849, %v6897
    %6899 = vmatmul.bf16.gmra.mxu0 %v1196
    %v6900 = vpop.f32.mrf.mxu0
    %v6901 = vadd.f32 %v6852, %v6900
    %v6902 = vpop.f32.mrf.mxu0
    %v6903 = vadd.f32 %v6854, %v6902
    %6904 = vmatmul.bf16.gmra.mxu0 %v1204
    %v6905 = vpop.f32.mrf.mxu0
    %v6906 = vadd.f32 %v6857, %v6905
    %v6907 = vpop.f32.mrf.mxu0
    %v6908 = vadd.f32 %v6859, %v6907
    %6909 = vmatmul.bf16.gmra.mxu0 %v1212
    %v6910 = vpop.f32.mrf.mxu0
    %v6911 = vadd.f32 %v6862, %v6910
    %v6912 = vpop.f32.mrf.mxu0
    %v6913 = vadd.f32 %v6864, %v6912
    %6914 = vmatmul.bf16.gmra.mxu0 %v1220
    %v6915 = vpop.f32.mrf.mxu0
    %v6916 = vadd.f32 %v6867, %v6915
    %v6917 = vpop.f32.mrf.mxu0
    %v6918 = vadd.f32 %v6869, %v6917
    %6919 = vmatmul.bf16.gmra.mxu0 %v1228
    %v6920 = vpop.f32.mrf.mxu0
    %v6921 = vadd.f32 %v6872, %v6920
    %v6922 = vpop.f32.mrf.mxu0
    %v6923 = vadd.f32 %v6874, %v6922
    %6924 = vmatmul.bf16.gmra.mxu0 %v1236
    %v6925 = vpop.f32.mrf.mxu0
    %v6926 = vadd.f32 %v6877, %v6925
    %v6927 = vpop.f32.mrf.mxu0
    %v6928 = vadd.f32 %v6879, %v6927
    %6929 = vmatmul.bf16.gmra.mxu0 %v1244
    %v6930 = vpop.f32.mrf.mxu0
    %v6931 = vadd.f32 %v6882, %v6930
    %v6932 = vpop.f32.mrf.mxu0
    %v6933 = vadd.f32 %v6884, %v6932
    %6934 = vdwg.mxu0
    %6935 = vmatpush.bf16.msra.mxu0 %v3696
    %6936 = vmatpush.bf16.msra.mxu0 %v3688
    %6937 = vmatpush.bf16.msra.mxu0 %v3680
    %6938 = vmatpush.bf16.msra.mxu0 %v3672
    %6939 = vmatpush.bf16.msra.mxu0 %v3664
    %6940 = vmatpush.bf16.msra.mxu0 %v3656
    %6941 = vmatpush.bf16.msra.mxu0 %v3648
    %6942 = vmatpush.bf16.msra.mxu0 %v3640
    %6943 = vmatmul.bf16.gmra.mxu0 %v1189
    %v6944 = vpop.f32.mrf.mxu0
    %v6945 = vadd.f32 %v6896, %v6944
    %v6946 = vpop.f32.mrf.mxu0
    %v6947 = vadd.f32 %v6898, %v6946
    %6948 = vmatmul.bf16.gmra.mxu0 %v1197
    %v6949 = vpop.f32.mrf.mxu0
    %v6950 = vadd.f32 %v6901, %v6949
    %v6951 = vpop.f32.mrf.mxu0
    %v6952 = vadd.f32 %v6903, %v6951
    %6953 = vmatmul.bf16.gmra.mxu0 %v1205
    %v6954 = vpop.f32.mrf.mxu0
    %v6955 = vadd.f32 %v6906, %v6954
    %v6956 = vpop.f32.mrf.mxu0
    %v6957 = vadd.f32 %v6908, %v6956
    %6958 = vmatmul.bf16.gmra.mxu0 %v1213
    %v6959 = vpop.f32.mrf.mxu0
    %v6960 = vadd.f32 %v6911, %v6959
    %v6961 = vpop.f32.mrf.mxu0
    %v6962 = vadd.f32 %v6913, %v6961
    %6963 = vmatmul.bf16.gmra.mxu0 %v1221
    %v6964 = vpop.f32.mrf.mxu0
    %v6965 = vadd.f32 %v6916, %v6964
    %v6966 = vpop.f32.mrf.mxu0
    %v6967 = vadd.f32 %v6918, %v6966
    %6968 = vmatmul.bf16.gmra.mxu0 %v1229
    %v6969 = vpop.f32.mrf.mxu0
    %v6970 = vadd.f32 %v6921, %v6969
    %v6971 = vpop.f32.mrf.mxu0
    %v6972 = vadd.f32 %v6923, %v6971
    %6973 = vmatmul.bf16.gmra.mxu0 %v1237
    %v6974 = vpop.f32.mrf.mxu0
    %v6975 = vadd.f32 %v6926, %v6974
    %v6976 = vpop.f32.mrf.mxu0
    %v6977 = vadd.f32 %v6928, %v6976
    %6978 = vmatmul.bf16.gmra.mxu0 %v1245
    %v6979 = vpop.f32.mrf.mxu0
    %v6980 = vadd.f32 %v6931, %v6979
    %v6981 = vpop.f32.mrf.mxu0
    %v6982 = vadd.f32 %v6933, %v6981
    %6983 = vdwg.mxu0
    %6984 = vmatpush.bf16.msra.mxu0 %v3760
    %6985 = vmatpush.bf16.msra.mxu0 %v3752
    %6986 = vmatpush.bf16.msra.mxu0 %v3744
    %6987 = vmatpush.bf16.msra.mxu0 %v3736
    %6988 = vmatpush.bf16.msra.mxu0 %v3728
    %6989 = vmatpush.bf16.msra.mxu0 %v3720
    %6990 = vmatpush.bf16.msra.mxu0 %v3712
    %6991 = vmatpush.bf16.msra.mxu0 %v3704
    %6992 = vmatmul.bf16.gmra.mxu0 %v1190
    %v6993 = vpop.f32.mrf.mxu0
    %v6994 = vadd.f32 %v6945, %v6993
    %v6995 = vpop.f32.mrf.mxu0
    %v6996 = vadd.f32 %v6947, %v6995
    %6997 = vmatmul.bf16.gmra.mxu0 %v1198
    %v6998 = vpop.f32.mrf.mxu0
    %v6999 = vadd.f32 %v6950, %v6998
    %v7000 = vpop.f32.mrf.mxu0
    %v7001 = vadd.f32 %v6952, %v7000
    %7002 = vmatmul.bf16.gmra.mxu0 %v1206
    %v7003 = vpop.f32.mrf.mxu0
    %v7004 = vadd.f32 %v6955, %v7003
    %v7005 = vpop.f32.mrf.mxu0
    %v7006 = vadd.f32 %v6957, %v7005
    %7007 = vmatmul.bf16.gmra.mxu0 %v1214
    %v7008 = vpop.f32.mrf.mxu0
    %v7009 = vadd.f32 %v6960, %v7008
    %v7010 = vpop.f32.mrf.mxu0
    %v7011 = vadd.f32 %v6962, %v7010
    %7012 = vmatmul.bf16.gmra.mxu0 %v1222
    %v7013 = vpop.f32.mrf.mxu0
    %v7014 = vadd.f32 %v6965, %v7013
    %v7015 = vpop.f32.mrf.mxu0
    %v7016 = vadd.f32 %v6967, %v7015
    %7017 = vmatmul.bf16.gmra.mxu0 %v1230
    %v7018 = vpop.f32.mrf.mxu0
    %v7019 = vadd.f32 %v6970, %v7018
    %v7020 = vpop.f32.mrf.mxu0
    %v7021 = vadd.f32 %v6972, %v7020
    %7022 = vmatmul.bf16.gmra.mxu0 %v1238
    %v7023 = vpop.f32.mrf.mxu0
    %v7024 = vadd.f32 %v6975, %v7023
    %v7025 = vpop.f32.mrf.mxu0
    %v7026 = vadd.f32 %v6977, %v7025
    %7027 = vmatmul.bf16.gmra.mxu0 %v1246
    %v7028 = vpop.f32.mrf.mxu0
    %v7029 = vadd.f32 %v6980, %v7028
    %v7030 = vpop.f32.mrf.mxu0
    %v7031 = vadd.f32 %v6982, %v7030
    %7032 = vdwg.mxu0
    %7033 = vmatpush.bf16.msra.mxu0 %v3824
    %7034 = vmatpush.bf16.msra.mxu0 %v3816
    %7035 = vmatpush.bf16.msra.mxu0 %v3808
    %7036 = vmatpush.bf16.msra.mxu0 %v3800
    %7037 = vmatpush.bf16.msra.mxu0 %v3792
    %7038 = vmatpush.bf16.msra.mxu0 %v3784
    %7039 = vmatpush.bf16.msra.mxu0 %v3776
    %7040 = vmatpush.bf16.msra.mxu0 %v3768
    %7041 = vmatmul.bf16.gmra.mxu0 %v1191
    %v7042 = vpop.f32.mrf.mxu0
    %v7043 = vadd.f32 %v6994, %v7042
    %v7044 = vpop.f32.mrf.mxu0
    %v7045 = vadd.f32 %v6996, %v7044
    %7046 = vmatmul.bf16.gmra.mxu0 %v1199
    %v7047 = vpop.f32.mrf.mxu0
    %v7048 = vadd.f32 %v6999, %v7047
    %v7049 = vpop.f32.mrf.mxu0
    %v7050 = vadd.f32 %v7001, %v7049
    %7051 = vmatmul.bf16.gmra.mxu0 %v1207
    %v7052 = vpop.f32.mrf.mxu0
    %v7053 = vadd.f32 %v7004, %v7052
    %v7054 = vpop.f32.mrf.mxu0
    %v7055 = vadd.f32 %v7006, %v7054
    %7056 = vmatmul.bf16.gmra.mxu0 %v1215
    %v7057 = vpop.f32.mrf.mxu0
    %v7058 = vadd.f32 %v7009, %v7057
    %v7059 = vpop.f32.mrf.mxu0
    %v7060 = vadd.f32 %v7011, %v7059
    %7061 = vmatmul.bf16.gmra.mxu0 %v1223
    %v7062 = vpop.f32.mrf.mxu0
    %v7063 = vadd.f32 %v7014, %v7062
    %v7064 = vpop.f32.mrf.mxu0
    %v7065 = vadd.f32 %v7016, %v7064
    %7066 = vmatmul.bf16.gmra.mxu0 %v1231
    %v7067 = vpop.f32.mrf.mxu0
    %v7068 = vadd.f32 %v7019, %v7067
    %v7069 = vpop.f32.mrf.mxu0
    %v7070 = vadd.f32 %v7021, %v7069
    %7071 = vmatmul.bf16.gmra.mxu0 %v1239
    %v7072 = vpop.f32.mrf.mxu0
    %v7073 = vadd.f32 %v7024, %v7072
    %v7074 = vpop.f32.mrf.mxu0
    %v7075 = vadd.f32 %v7026, %v7074
    %7076 = vmatmul.bf16.gmra.mxu0 %v1247
    %v7077 = vpop.f32.mrf.mxu0
    %v7078 = vadd.f32 %v7029, %v7077
    %v7079 = vpop.f32.mrf.mxu0
    %v7080 = vadd.f32 %v7031, %v7079
    %7081 = vdwg.mxu0
    %7082 = vmatpush.bf16.msra.mxu0 %v3377
    %7083 = vmatpush.bf16.msra.mxu0 %v3369
    %7084 = vmatpush.bf16.msra.mxu0 %v3361
    %7085 = vmatpush.bf16.msra.mxu0 %v3353
    %7086 = vmatpush.bf16.msra.mxu0 %v3345
    %7087 = vmatpush.bf16.msra.mxu0 %v3337
    %7088 = vmatpush.bf16.msra.mxu0 %v3329
    %7089 = vmatpush.bf16.msra.mxu0 %v3321
    %7090 = vmatmul.bf16.gmra.mxu0 %v1184
    %v7091 = vpop.f32.mrf.mxu0
    %v7092 = vadd.f32 %v1769, %v7091
    %v7093 = vpop.f32.mrf.mxu0
    %v7094 = vadd.f32 %v1769, %v7093
    %7095 = vmatmul.bf16.gmra.mxu0 %v1192
    %v7096 = vpop.f32.mrf.mxu0
    %v7097 = vadd.f32 %v1769, %v7096
    %v7098 = vpop.f32.mrf.mxu0
    %v7099 = vadd.f32 %v1769, %v7098
    %7100 = vmatmul.bf16.gmra.mxu0 %v1200
    %v7101 = vpop.f32.mrf.mxu0
    %v7102 = vadd.f32 %v1769, %v7101
    %v7103 = vpop.f32.mrf.mxu0
    %v7104 = vadd.f32 %v1769, %v7103
    %7105 = vmatmul.bf16.gmra.mxu0 %v1208
    %v7106 = vpop.f32.mrf.mxu0
    %v7107 = vadd.f32 %v1769, %v7106
    %v7108 = vpop.f32.mrf.mxu0
    %v7109 = vadd.f32 %v1769, %v7108
    %7110 = vmatmul.bf16.gmra.mxu0 %v1216
    %v7111 = vpop.f32.mrf.mxu0
    %v7112 = vadd.f32 %v1769, %v7111
    %v7113 = vpop.f32.mrf.mxu0
    %v7114 = vadd.f32 %v1769, %v7113
    %7115 = vmatmul.bf16.gmra.mxu0 %v1224
    %v7116 = vpop.f32.mrf.mxu0
    %v7117 = vadd.f32 %v1769, %v7116
    %v7118 = vpop.f32.mrf.mxu0
    %v7119 = vadd.f32 %v1769, %v7118
    %7120 = vmatmul.bf16.gmra.mxu0 %v1232
    %v7121 = vpop.f32.mrf.mxu0
    %v7122 = vadd.f32 %v1769, %v7121
    %v7123 = vpop.f32.mrf.mxu0
    %v7124 = vadd.f32 %v1769, %v7123
    %7125 = vmatmul.bf16.gmra.mxu0 %v1240
    %v7126 = vpop.f32.mrf.mxu0
    %v7127 = vadd.f32 %v1769, %v7126
    %v7128 = vpop.f32.mrf.mxu0
    %v7129 = vadd.f32 %v1769, %v7128
    %7130 = vdwg.mxu0
    %7131 = vmatpush.bf16.msra.mxu0 %v3441
    %7132 = vmatpush.bf16.msra.mxu0 %v3433
    %7133 = vmatpush.bf16.msra.mxu0 %v3425
    %7134 = vmatpush.bf16.msra.mxu0 %v3417
    %7135 = vmatpush.bf16.msra.mxu0 %v3409
    %7136 = vmatpush.bf16.msra.mxu0 %v3401
    %7137 = vmatpush.bf16.msra.mxu0 %v3393
    %7138 = vmatpush.bf16.msra.mxu0 %v3385
    %7139 = vmatmul.bf16.gmra.mxu0 %v1185
    %v7140 = vpop.f32.mrf.mxu0
    %v7141 = vadd.f32 %v7092, %v7140
    %v7142 = vpop.f32.mrf.mxu0
    %v7143 = vadd.f32 %v7094, %v7142
    %7144 = vmatmul.bf16.gmra.mxu0 %v1193
    %v7145 = vpop.f32.mrf.mxu0
    %v7146 = vadd.f32 %v7097, %v7145
    %v7147 = vpop.f32.mrf.mxu0
    %v7148 = vadd.f32 %v7099, %v7147
    %7149 = vmatmul.bf16.gmra.mxu0 %v1201
    %v7150 = vpop.f32.mrf.mxu0
    %v7151 = vadd.f32 %v7102, %v7150
    %v7152 = vpop.f32.mrf.mxu0
    %v7153 = vadd.f32 %v7104, %v7152
    %7154 = vmatmul.bf16.gmra.mxu0 %v1209
    %v7155 = vpop.f32.mrf.mxu0
    %v7156 = vadd.f32 %v7107, %v7155
    %v7157 = vpop.f32.mrf.mxu0
    %v7158 = vadd.f32 %v7109, %v7157
    %7159 = vmatmul.bf16.gmra.mxu0 %v1217
    %v7160 = vpop.f32.mrf.mxu0
    %v7161 = vadd.f32 %v7112, %v7160
    %v7162 = vpop.f32.mrf.mxu0
    %v7163 = vadd.f32 %v7114, %v7162
    %7164 = vmatmul.bf16.gmra.mxu0 %v1225
    %v7165 = vpop.f32.mrf.mxu0
    %v7166 = vadd.f32 %v7117, %v7165
    %v7167 = vpop.f32.mrf.mxu0
    %v7168 = vadd.f32 %v7119, %v7167
    %7169 = vmatmul.bf16.gmra.mxu0 %v1233
    %v7170 = vpop.f32.mrf.mxu0
    %v7171 = vadd.f32 %v7122, %v7170
    %v7172 = vpop.f32.mrf.mxu0
    %v7173 = vadd.f32 %v7124, %v7172
    %7174 = vmatmul.bf16.gmra.mxu0 %v1241
    %v7175 = vpop.f32.mrf.mxu0
    %v7176 = vadd.f32 %v7127, %v7175
    %v7177 = vpop.f32.mrf.mxu0
    %v7178 = vadd.f32 %v7129, %v7177
    %7179 = vdwg.mxu0
    %7180 = vmatpush.bf16.msra.mxu0 %v3505
    %7181 = vmatpush.bf16.msra.mxu0 %v3497
    %7182 = vmatpush.bf16.msra.mxu0 %v3489
    %7183 = vmatpush.bf16.msra.mxu0 %v3481
    %7184 = vmatpush.bf16.msra.mxu0 %v3473
    %7185 = vmatpush.bf16.msra.mxu0 %v3465
    %7186 = vmatpush.bf16.msra.mxu0 %v3457
    %7187 = vmatpush.bf16.msra.mxu0 %v3449
    %7188 = vmatmul.bf16.gmra.mxu0 %v1186
    %v7189 = vpop.f32.mrf.mxu0
    %v7190 = vadd.f32 %v7141, %v7189
    %v7191 = vpop.f32.mrf.mxu0
    %v7192 = vadd.f32 %v7143, %v7191
    %7193 = vmatmul.bf16.gmra.mxu0 %v1194
    %v7194 = vpop.f32.mrf.mxu0
    %v7195 = vadd.f32 %v7146, %v7194
    %v7196 = vpop.f32.mrf.mxu0
    %v7197 = vadd.f32 %v7148, %v7196
    %7198 = vmatmul.bf16.gmra.mxu0 %v1202
    %v7199 = vpop.f32.mrf.mxu0
    %v7200 = vadd.f32 %v7151, %v7199
    %v7201 = vpop.f32.mrf.mxu0
    %v7202 = vadd.f32 %v7153, %v7201
    %7203 = vmatmul.bf16.gmra.mxu0 %v1210
    %v7204 = vpop.f32.mrf.mxu0
    %v7205 = vadd.f32 %v7156, %v7204
    %v7206 = vpop.f32.mrf.mxu0
    %v7207 = vadd.f32 %v7158, %v7206
    %7208 = vmatmul.bf16.gmra.mxu0 %v1218
    %v7209 = vpop.f32.mrf.mxu0
    %v7210 = vadd.f32 %v7161, %v7209
    %v7211 = vpop.f32.mrf.mxu0
    %v7212 = vadd.f32 %v7163, %v7211
    %7213 = vmatmul.bf16.gmra.mxu0 %v1226
    %v7214 = vpop.f32.mrf.mxu0
    %v7215 = vadd.f32 %v7166, %v7214
    %v7216 = vpop.f32.mrf.mxu0
    %v7217 = vadd.f32 %v7168, %v7216
    %7218 = vmatmul.bf16.gmra.mxu0 %v1234
    %v7219 = vpop.f32.mrf.mxu0
    %v7220 = vadd.f32 %v7171, %v7219
    %v7221 = vpop.f32.mrf.mxu0
    %v7222 = vadd.f32 %v7173, %v7221
    %7223 = vmatmul.bf16.gmra.mxu0 %v1242
    %v7224 = vpop.f32.mrf.mxu0
    %v7225 = vadd.f32 %v7176, %v7224
    %v7226 = vpop.f32.mrf.mxu0
    %v7227 = vadd.f32 %v7178, %v7226
    %7228 = vdwg.mxu0
    %7229 = vmatpush.bf16.msra.mxu0 %v3569
    %7230 = vmatpush.bf16.msra.mxu0 %v3561
    %7231 = vmatpush.bf16.msra.mxu0 %v3553
    %7232 = vmatpush.bf16.msra.mxu0 %v3545
    %7233 = vmatpush.bf16.msra.mxu0 %v3537
    %7234 = vmatpush.bf16.msra.mxu0 %v3529
    %7235 = vmatpush.bf16.msra.mxu0 %v3521
    %7236 = vmatpush.bf16.msra.mxu0 %v3513
    %7237 = vmatmul.bf16.gmra.mxu0 %v1187
    %v7238 = vpop.f32.mrf.mxu0
    %v7239 = vadd.f32 %v7190, %v7238
    %v7240 = vpop.f32.mrf.mxu0
    %v7241 = vadd.f32 %v7192, %v7240
    %7242 = vmatmul.bf16.gmra.mxu0 %v1195
    %v7243 = vpop.f32.mrf.mxu0
    %v7244 = vadd.f32 %v7195, %v7243
    %v7245 = vpop.f32.mrf.mxu0
    %v7246 = vadd.f32 %v7197, %v7245
    %7247 = vmatmul.bf16.gmra.mxu0 %v1203
    %v7248 = vpop.f32.mrf.mxu0
    %v7249 = vadd.f32 %v7200, %v7248
    %v7250 = vpop.f32.mrf.mxu0
    %v7251 = vadd.f32 %v7202, %v7250
    %7252 = vmatmul.bf16.gmra.mxu0 %v1211
    %v7253 = vpop.f32.mrf.mxu0
    %v7254 = vadd.f32 %v7205, %v7253
    %v7255 = vpop.f32.mrf.mxu0
    %v7256 = vadd.f32 %v7207, %v7255
    %7257 = vmatmul.bf16.gmra.mxu0 %v1219
    %v7258 = vpop.f32.mrf.mxu0
    %v7259 = vadd.f32 %v7210, %v7258
    %v7260 = vpop.f32.mrf.mxu0
    %v7261 = vadd.f32 %v7212, %v7260
    %7262 = vmatmul.bf16.gmra.mxu0 %v1227
    %v7263 = vpop.f32.mrf.mxu0
    %v7264 = vadd.f32 %v7215, %v7263
    %v7265 = vpop.f32.mrf.mxu0
    %v7266 = vadd.f32 %v7217, %v7265
    %7267 = vmatmul.bf16.gmra.mxu0 %v1235
    %v7268 = vpop.f32.mrf.mxu0
    %v7269 = vadd.f32 %v7220, %v7268
    %v7270 = vpop.f32.mrf.mxu0
    %v7271 = vadd.f32 %v7222, %v7270
    %7272 = vmatmul.bf16.gmra.mxu0 %v1243
    %v7273 = vpop.f32.mrf.mxu0
    %v7274 = vadd.f32 %v7225, %v7273
    %v7275 = vpop.f32.mrf.mxu0
    %v7276 = vadd.f32 %v7227, %v7275
    %7277 = vdwg.mxu0
    %7278 = vmatpush.bf16.msra.mxu0 %v3633
    %7279 = vmatpush.bf16.msra.mxu0 %v3625
    %7280 = vmatpush.bf16.msra.mxu0 %v3617
    %7281 = vmatpush.bf16.msra.mxu0 %v3609
    %7282 = vmatpush.bf16.msra.mxu0 %v3601
    %7283 = vmatpush.bf16.msra.mxu0 %v3593
    %7284 = vmatpush.bf16.msra.mxu0 %v3585
    %7285 = vmatpush.bf16.msra.mxu0 %v3577
    %7286 = vmatmul.bf16.gmra.mxu0 %v1188
    %v7287 = vpop.f32.mrf.mxu0
    %v7288 = vadd.f32 %v7239, %v7287
    %v7289 = vpop.f32.mrf.mxu0
    %v7290 = vadd.f32 %v7241, %v7289
    %7291 = vmatmul.bf16.gmra.mxu0 %v1196
    %v7292 = vpop.f32.mrf.mxu0
    %v7293 = vadd.f32 %v7244, %v7292
    %v7294 = vpop.f32.mrf.mxu0
    %v7295 = vadd.f32 %v7246, %v7294
    %7296 = vmatmul.bf16.gmra.mxu0 %v1204
    %v7297 = vpop.f32.mrf.mxu0
    %v7298 = vadd.f32 %v7249, %v7297
    %v7299 = vpop.f32.mrf.mxu0
    %v7300 = vadd.f32 %v7251, %v7299
    %7301 = vmatmul.bf16.gmra.mxu0 %v1212
    %v7302 = vpop.f32.mrf.mxu0
    %v7303 = vadd.f32 %v7254, %v7302
    %v7304 = vpop.f32.mrf.mxu0
    %v7305 = vadd.f32 %v7256, %v7304
    %7306 = vmatmul.bf16.gmra.mxu0 %v1220
    %v7307 = vpop.f32.mrf.mxu0
    %v7308 = vadd.f32 %v7259, %v7307
    %v7309 = vpop.f32.mrf.mxu0
    %v7310 = vadd.f32 %v7261, %v7309
    %7311 = vmatmul.bf16.gmra.mxu0 %v1228
    %v7312 = vpop.f32.mrf.mxu0
    %v7313 = vadd.f32 %v7264, %v7312
    %v7314 = vpop.f32.mrf.mxu0
    %v7315 = vadd.f32 %v7266, %v7314
    %7316 = vmatmul.bf16.gmra.mxu0 %v1236
    %v7317 = vpop.f32.mrf.mxu0
    %v7318 = vadd.f32 %v7269, %v7317
    %v7319 = vpop.f32.mrf.mxu0
    %v7320 = vadd.f32 %v7271, %v7319
    %7321 = vmatmul.bf16.gmra.mxu0 %v1244
    %v7322 = vpop.f32.mrf.mxu0
    %v7323 = vadd.f32 %v7274, %v7322
    %v7324 = vpop.f32.mrf.mxu0
    %v7325 = vadd.f32 %v7276, %v7324
    %7326 = vdwg.mxu0
    %7327 = vmatpush.bf16.msra.mxu0 %v3697
    %7328 = vmatpush.bf16.msra.mxu0 %v3689
    %7329 = vmatpush.bf16.msra.mxu0 %v3681
    %7330 = vmatpush.bf16.msra.mxu0 %v3673
    %7331 = vmatpush.bf16.msra.mxu0 %v3665
    %7332 = vmatpush.bf16.msra.mxu0 %v3657
    %7333 = vmatpush.bf16.msra.mxu0 %v3649
    %7334 = vmatpush.bf16.msra.mxu0 %v3641
    %7335 = vmatmul.bf16.gmra.mxu0 %v1189
    %v7336 = vpop.f32.mrf.mxu0
    %v7337 = vadd.f32 %v7288, %v7336
    %v7338 = vpop.f32.mrf.mxu0
    %v7339 = vadd.f32 %v7290, %v7338
    %7340 = vmatmul.bf16.gmra.mxu0 %v1197
    %v7341 = vpop.f32.mrf.mxu0
    %v7342 = vadd.f32 %v7293, %v7341
    %v7343 = vpop.f32.mrf.mxu0
    %v7344 = vadd.f32 %v7295, %v7343
    %7345 = vmatmul.bf16.gmra.mxu0 %v1205
    %v7346 = vpop.f32.mrf.mxu0
    %v7347 = vadd.f32 %v7298, %v7346
    %v7348 = vpop.f32.mrf.mxu0
    %v7349 = vadd.f32 %v7300, %v7348
    %7350 = vmatmul.bf16.gmra.mxu0 %v1213
    %v7351 = vpop.f32.mrf.mxu0
    %v7352 = vadd.f32 %v7303, %v7351
    %v7353 = vpop.f32.mrf.mxu0
    %v7354 = vadd.f32 %v7305, %v7353
    %7355 = vmatmul.bf16.gmra.mxu0 %v1221
    %v7356 = vpop.f32.mrf.mxu0
    %v7357 = vadd.f32 %v7308, %v7356
    %v7358 = vpop.f32.mrf.mxu0
    %v7359 = vadd.f32 %v7310, %v7358
    %7360 = vmatmul.bf16.gmra.mxu0 %v1229
    %v7361 = vpop.f32.mrf.mxu0
    %v7362 = vadd.f32 %v7313, %v7361
    %v7363 = vpop.f32.mrf.mxu0
    %v7364 = vadd.f32 %v7315, %v7363
    %7365 = vmatmul.bf16.gmra.mxu0 %v1237
    %v7366 = vpop.f32.mrf.mxu0
    %v7367 = vadd.f32 %v7318, %v7366
    %v7368 = vpop.f32.mrf.mxu0
    %v7369 = vadd.f32 %v7320, %v7368
    %7370 = vmatmul.bf16.gmra.mxu0 %v1245
    %v7371 = vpop.f32.mrf.mxu0
    %v7372 = vadd.f32 %v7323, %v7371
    %v7373 = vpop.f32.mrf.mxu0
    %v7374 = vadd.f32 %v7325, %v7373
    %7375 = vdwg.mxu0
    %7376 = vmatpush.bf16.msra.mxu0 %v3761
    %7377 = vmatpush.bf16.msra.mxu0 %v3753
    %7378 = vmatpush.bf16.msra.mxu0 %v3745
    %7379 = vmatpush.bf16.msra.mxu0 %v3737
    %7380 = vmatpush.bf16.msra.mxu0 %v3729
    %7381 = vmatpush.bf16.msra.mxu0 %v3721
    %7382 = vmatpush.bf16.msra.mxu0 %v3713
    %7383 = vmatpush.bf16.msra.mxu0 %v3705
    %7384 = vmatmul.bf16.gmra.mxu0 %v1190
    %v7385 = vpop.f32.mrf.mxu0
    %v7386 = vadd.f32 %v7337, %v7385
    %v7387 = vpop.f32.mrf.mxu0
    %v7388 = vadd.f32 %v7339, %v7387
    %7389 = vmatmul.bf16.gmra.mxu0 %v1198
    %v7390 = vpop.f32.mrf.mxu0
    %v7391 = vadd.f32 %v7342, %v7390
    %v7392 = vpop.f32.mrf.mxu0
    %v7393 = vadd.f32 %v7344, %v7392
    %7394 = vmatmul.bf16.gmra.mxu0 %v1206
    %v7395 = vpop.f32.mrf.mxu0
    %v7396 = vadd.f32 %v7347, %v7395
    %v7397 = vpop.f32.mrf.mxu0
    %v7398 = vadd.f32 %v7349, %v7397
    %7399 = vmatmul.bf16.gmra.mxu0 %v1214
    %v7400 = vpop.f32.mrf.mxu0
    %v7401 = vadd.f32 %v7352, %v7400
    %v7402 = vpop.f32.mrf.mxu0
    %v7403 = vadd.f32 %v7354, %v7402
    %7404 = vmatmul.bf16.gmra.mxu0 %v1222
    %v7405 = vpop.f32.mrf.mxu0
    %v7406 = vadd.f32 %v7357, %v7405
    %v7407 = vpop.f32.mrf.mxu0
    %v7408 = vadd.f32 %v7359, %v7407
    %7409 = vmatmul.bf16.gmra.mxu0 %v1230
    %v7410 = vpop.f32.mrf.mxu0
    %v7411 = vadd.f32 %v7362, %v7410
    %v7412 = vpop.f32.mrf.mxu0
    %v7413 = vadd.f32 %v7364, %v7412
    %7414 = vmatmul.bf16.gmra.mxu0 %v1238
    %v7415 = vpop.f32.mrf.mxu0
    %v7416 = vadd.f32 %v7367, %v7415
    %v7417 = vpop.f32.mrf.mxu0
    %v7418 = vadd.f32 %v7369, %v7417
    %7419 = vmatmul.bf16.gmra.mxu0 %v1246
    %v7420 = vpop.f32.mrf.mxu0
    %v7421 = vadd.f32 %v7372, %v7420
    %v7422 = vpop.f32.mrf.mxu0
    %v7423 = vadd.f32 %v7374, %v7422
    %7424 = vdwg.mxu0
    %7425 = vmatpush.bf16.msra.mxu0 %v3825
    %7426 = vmatpush.bf16.msra.mxu0 %v3817
    %7427 = vmatpush.bf16.msra.mxu0 %v3809
    %7428 = vmatpush.bf16.msra.mxu0 %v3801
    %7429 = vmatpush.bf16.msra.mxu0 %v3793
    %7430 = vmatpush.bf16.msra.mxu0 %v3785
    %7431 = vmatpush.bf16.msra.mxu0 %v3777
    %7432 = vmatpush.bf16.msra.mxu0 %v3769
    %7433 = vmatmul.bf16.gmra.mxu0 %v1191
    %v7434 = vpop.f32.mrf.mxu0
    %v7435 = vadd.f32 %v7386, %v7434
    %v7436 = vpop.f32.mrf.mxu0
    %v7437 = vadd.f32 %v7388, %v7436
    %7438 = vmatmul.bf16.gmra.mxu0 %v1199
    %v7439 = vpop.f32.mrf.mxu0
    %v7440 = vadd.f32 %v7391, %v7439
    %v7441 = vpop.f32.mrf.mxu0
    %v7442 = vadd.f32 %v7393, %v7441
    %7443 = vmatmul.bf16.gmra.mxu0 %v1207
    %v7444 = vpop.f32.mrf.mxu0
    %v7445 = vadd.f32 %v7396, %v7444
    %v7446 = vpop.f32.mrf.mxu0
    %v7447 = vadd.f32 %v7398, %v7446
    %7448 = vmatmul.bf16.gmra.mxu0 %v1215
    %v7449 = vpop.f32.mrf.mxu0
    %v7450 = vadd.f32 %v7401, %v7449
    %v7451 = vpop.f32.mrf.mxu0
    %v7452 = vadd.f32 %v7403, %v7451
    %7453 = vmatmul.bf16.gmra.mxu0 %v1223
    %v7454 = vpop.f32.mrf.mxu0
    %v7455 = vadd.f32 %v7406, %v7454
    %v7456 = vpop.f32.mrf.mxu0
    %v7457 = vadd.f32 %v7408, %v7456
    %7458 = vmatmul.bf16.gmra.mxu0 %v1231
    %v7459 = vpop.f32.mrf.mxu0
    %v7460 = vadd.f32 %v7411, %v7459
    %v7461 = vpop.f32.mrf.mxu0
    %v7462 = vadd.f32 %v7413, %v7461
    %7463 = vmatmul.bf16.gmra.mxu0 %v1239
    %v7464 = vpop.f32.mrf.mxu0
    %v7465 = vadd.f32 %v7416, %v7464
    %v7466 = vpop.f32.mrf.mxu0
    %v7467 = vadd.f32 %v7418, %v7466
    %7468 = vmatmul.bf16.gmra.mxu0 %v1247
    %v7469 = vpop.f32.mrf.mxu0
    %v7470 = vadd.f32 %v7421, %v7469
    %v7471 = vpop.f32.mrf.mxu0
    %v7472 = vadd.f32 %v7423, %v7471
    %7473 = vdwg.mxu0
    %v7474 = vmax.f32 %v4691, 0.0
    %v7475 = vmax.f32 %v5083, 0.0
    %v7476 = vmax.f32 %v5475, 0.0
    %v7477 = vmax.f32 %v5867, 0.0
    %v7478 = vmax.f32 %v6259, 0.0
    %v7479 = vmax.f32 %v6651, 0.0
    %v7480 = vmax.f32 %v7043, 0.0
    %v7481 = vmax.f32 %v7435, 0.0
    %v7482 = vmax.f32 %v4693, 0.0
    %v7483 = vmax.f32 %v5085, 0.0
    %v7484 = vmax.f32 %v5477, 0.0
    %v7485 = vmax.f32 %v5869, 0.0
    %v7486 = vmax.f32 %v6261, 0.0
    %v7487 = vmax.f32 %v6653, 0.0
    %v7488 = vmax.f32 %v7045, 0.0
    %v7489 = vmax.f32 %v7437, 0.0
    %v7490 = vmax.f32 %v4696, 0.0
    %v7491 = vmax.f32 %v5088, 0.0
    %v7492 = vmax.f32 %v5480, 0.0
    %v7493 = vmax.f32 %v5872, 0.0
    %v7494 = vmax.f32 %v6264, 0.0
    %v7495 = vmax.f32 %v6656, 0.0
    %v7496 = vmax.f32 %v7048, 0.0
    %v7497 = vmax.f32 %v7440, 0.0
    %v7498 = vmax.f32 %v4698, 0.0
    %v7499 = vmax.f32 %v5090, 0.0
    %v7500 = vmax.f32 %v5482, 0.0
    %v7501 = vmax.f32 %v5874, 0.0
    %v7502 = vmax.f32 %v6266, 0.0
    %v7503 = vmax.f32 %v6658, 0.0
    %v7504 = vmax.f32 %v7050, 0.0
    %v7505 = vmax.f32 %v7442, 0.0
    %v7506 = vmax.f32 %v4701, 0.0
    %v7507 = vmax.f32 %v5093, 0.0
    %v7508 = vmax.f32 %v5485, 0.0
    %v7509 = vmax.f32 %v5877, 0.0
    %v7510 = vmax.f32 %v6269, 0.0
    %v7511 = vmax.f32 %v6661, 0.0
    %v7512 = vmax.f32 %v7053, 0.0
    %v7513 = vmax.f32 %v7445, 0.0
    %v7514 = vmax.f32 %v4703, 0.0
    %v7515 = vmax.f32 %v5095, 0.0
    %v7516 = vmax.f32 %v5487, 0.0
    %v7517 = vmax.f32 %v5879, 0.0
    %v7518 = vmax.f32 %v6271, 0.0
    %v7519 = vmax.f32 %v6663, 0.0
    %v7520 = vmax.f32 %v7055, 0.0
    %v7521 = vmax.f32 %v7447, 0.0
    %v7522 = vmax.f32 %v4706, 0.0
    %v7523 = vmax.f32 %v5098, 0.0
    %v7524 = vmax.f32 %v5490, 0.0
    %v7525 = vmax.f32 %v5882, 0.0
    %v7526 = vmax.f32 %v6274, 0.0
    %v7527 = vmax.f32 %v6666, 0.0
    %v7528 = vmax.f32 %v7058, 0.0
    %v7529 = vmax.f32 %v7450, 0.0
    %v7530 = vmax.f32 %v4708, 0.0
    %v7531 = vmax.f32 %v5100, 0.0
    %v7532 = vmax.f32 %v5492, 0.0
    %v7533 = vmax.f32 %v5884, 0.0
    %v7534 = vmax.f32 %v6276, 0.0
    %v7535 = vmax.f32 %v6668, 0.0
    %v7536 = vmax.f32 %v7060, 0.0
    %v7537 = vmax.f32 %v7452, 0.0
    %v7538 = vmax.f32 %v4711, 0.0
    %v7539 = vmax.f32 %v5103, 0.0
    %v7540 = vmax.f32 %v5495, 0.0
    %v7541 = vmax.f32 %v5887, 0.0
    %v7542 = vmax.f32 %v6279, 0.0
    %v7543 = vmax.f32 %v6671, 0.0
    %v7544 = vmax.f32 %v7063, 0.0
    %v7545 = vmax.f32 %v7455, 0.0
    %v7546 = vmax.f32 %v4713, 0.0
    %v7547 = vmax.f32 %v5105, 0.0
    %v7548 = vmax.f32 %v5497, 0.0
    %v7549 = vmax.f32 %v5889, 0.0
    %v7550 = vmax.f32 %v6281, 0.0
    %v7551 = vmax.f32 %v6673, 0.0
    %v7552 = vmax.f32 %v7065, 0.0
    %v7553 = vmax.f32 %v7457, 0.0
    %v7554 = vmax.f32 %v4716, 0.0
    %v7555 = vmax.f32 %v5108, 0.0
    %v7556 = vmax.f32 %v5500, 0.0
    %v7557 = vmax.f32 %v5892, 0.0
    %v7558 = vmax.f32 %v6284, 0.0
    %v7559 = vmax.f32 %v6676, 0.0
    %v7560 = vmax.f32 %v7068, 0.0
    %v7561 = vmax.f32 %v7460, 0.0
    %v7562 = vmax.f32 %v4718, 0.0
    %v7563 = vmax.f32 %v5110, 0.0
    %v7564 = vmax.f32 %v5502, 0.0
    %v7565 = vmax.f32 %v5894, 0.0
    %v7566 = vmax.f32 %v6286, 0.0
    %v7567 = vmax.f32 %v6678, 0.0
    %v7568 = vmax.f32 %v7070, 0.0
    %v7569 = vmax.f32 %v7462, 0.0
    %v7570 = vmax.f32 %v4721, 0.0
    %v7571 = vmax.f32 %v5113, 0.0
    %v7572 = vmax.f32 %v5505, 0.0
    %v7573 = vmax.f32 %v5897, 0.0
    %v7574 = vmax.f32 %v6289, 0.0
    %v7575 = vmax.f32 %v6681, 0.0
    %v7576 = vmax.f32 %v7073, 0.0
    %v7577 = vmax.f32 %v7465, 0.0
    %v7578 = vmax.f32 %v4723, 0.0
    %v7579 = vmax.f32 %v5115, 0.0
    %v7580 = vmax.f32 %v5507, 0.0
    %v7581 = vmax.f32 %v5899, 0.0
    %v7582 = vmax.f32 %v6291, 0.0
    %v7583 = vmax.f32 %v6683, 0.0
    %v7584 = vmax.f32 %v7075, 0.0
    %v7585 = vmax.f32 %v7467, 0.0
    %v7586 = vmax.f32 %v4726, 0.0
    %v7587 = vmax.f32 %v5118, 0.0
    %v7588 = vmax.f32 %v5510, 0.0
    %v7589 = vmax.f32 %v5902, 0.0
    %v7590 = vmax.f32 %v6294, 0.0
    %v7591 = vmax.f32 %v6686, 0.0
    %v7592 = vmax.f32 %v7078, 0.0
    %v7593 = vmax.f32 %v7470, 0.0
    %v7594 = vmax.f32 %v4728, 0.0
    %v7595 = vmax.f32 %v5120, 0.0
    %v7596 = vmax.f32 %v5512, 0.0
    %v7597 = vmax.f32 %v5904, 0.0
    %v7598 = vmax.f32 %v6296, 0.0
    %v7599 = vmax.f32 %v6688, 0.0
    %v7600 = vmax.f32 %v7080, 0.0
    %v7601 = vmax.f32 %v7472, 0.0
    %v7602 = vpack.c.bf16 %v7482, %v7474
    %v7603 = vpack.c.bf16 %v7483, %v7475
    %v7604 = vpack.c.bf16 %v7484, %v7476
    %v7605 = vpack.c.bf16 %v7485, %v7477
    %v7606 = vpack.c.bf16 %v7486, %v7478
    %v7607 = vpack.c.bf16 %v7487, %v7479
    %v7608 = vpack.c.bf16 %v7488, %v7480
    %v7609 = vpack.c.bf16 %v7489, %v7481
    %v7610 = vpack.c.bf16 %v7498, %v7490
    %v7611 = vpack.c.bf16 %v7499, %v7491
    %v7612 = vpack.c.bf16 %v7500, %v7492
    %v7613 = vpack.c.bf16 %v7501, %v7493
    %v7614 = vpack.c.bf16 %v7502, %v7494
    %v7615 = vpack.c.bf16 %v7503, %v7495
    %v7616 = vpack.c.bf16 %v7504, %v7496
    %v7617 = vpack.c.bf16 %v7505, %v7497
    %v7618 = vpack.c.bf16 %v7514, %v7506
    %v7619 = vpack.c.bf16 %v7515, %v7507
    %v7620 = vpack.c.bf16 %v7516, %v7508
    %v7621 = vpack.c.bf16 %v7517, %v7509
    %v7622 = vpack.c.bf16 %v7518, %v7510
    %v7623 = vpack.c.bf16 %v7519, %v7511
    %v7624 = vpack.c.bf16 %v7520, %v7512
    %v7625 = vpack.c.bf16 %v7521, %v7513
    %v7626 = vpack.c.bf16 %v7530, %v7522
    %v7627 = vpack.c.bf16 %v7531, %v7523
    %v7628 = vpack.c.bf16 %v7532, %v7524
    %v7629 = vpack.c.bf16 %v7533, %v7525
    %v7630 = vpack.c.bf16 %v7534, %v7526
    %v7631 = vpack.c.bf16 %v7535, %v7527
    %v7632 = vpack.c.bf16 %v7536, %v7528
    %v7633 = vpack.c.bf16 %v7537, %v7529
    %v7634 = vpack.c.bf16 %v7546, %v7538
    %v7635 = vpack.c.bf16 %v7547, %v7539
    %v7636 = vpack.c.bf16 %v7548, %v7540
    %v7637 = vpack.c.bf16 %v7549, %v7541
    %v7638 = vpack.c.bf16 %v7550, %v7542
    %v7639 = vpack.c.bf16 %v7551, %v7543
    %v7640 = vpack.c.bf16 %v7552, %v7544
    %v7641 = vpack.c.bf16 %v7553, %v7545
    %v7642 = vpack.c.bf16 %v7562, %v7554
    %v7643 = vpack.c.bf16 %v7563, %v7555
    %v7644 = vpack.c.bf16 %v7564, %v7556
    %v7645 = vpack.c.bf16 %v7565, %v7557
    %v7646 = vpack.c.bf16 %v7566, %v7558
    %v7647 = vpack.c.bf16 %v7567, %v7559
    %v7648 = vpack.c.bf16 %v7568, %v7560
    %v7649 = vpack.c.bf16 %v7569, %v7561
    %v7650 = vpack.c.bf16 %v7578, %v7570
    %v7651 = vpack.c.bf16 %v7579, %v7571
    %v7652 = vpack.c.bf16 %v7580, %v7572
    %v7653 = vpack.c.bf16 %v7581, %v7573
    %v7654 = vpack.c.bf16 %v7582, %v7574
    %v7655 = vpack.c.bf16 %v7583, %v7575
    %v7656 = vpack.c.bf16 %v7584, %v7576
    %v7657 = vpack.c.bf16 %v7585, %v7577
    %v7658 = vpack.c.bf16 %v7594, %v7586
    %v7659 = vpack.c.bf16 %v7595, %v7587
    %v7660 = vpack.c.bf16 %v7596, %v7588
    %v7661 = vpack.c.bf16 %v7597, %v7589
    %v7662 = vpack.c.bf16 %v7598, %v7590
    %v7663 = vpack.c.bf16 %v7599, %v7591
    %v7664 = vpack.c.bf16 %v7600, %v7592
    %v7665 = vpack.c.bf16 %v7601, %v7593
    %v7666 = vld [vmem:[#allocation9] sm:$0xf]
    %v7667 = vld [vmem:[#allocation9 + $0x4] sm:$0xf]
    %v7668 = vld [vmem:[#allocation9 + $0x8] sm:$0xf]
    %v7669 = vld [vmem:[#allocation9 + $0xc] sm:$0xf]
    %v7670 = vld [vmem:[#allocation9 + $0x10] sm:$0xf]
    %v7671 = vld [vmem:[#allocation9 + $0x14] sm:$0xf]
    %v7672 = vld [vmem:[#allocation9 + $0x18] sm:$0xf]
    %v7673 = vld [vmem:[#allocation9 + $0x1c] sm:$0xf]
    %v7674 = vld [vmem:[#allocation9 + $0x20] sm:$0xf]
    %v7675 = vld [vmem:[#allocation9 + $0x24] sm:$0xf]
    %v7676 = vld [vmem:[#allocation9 + $0x28] sm:$0xf]
    %v7677 = vld [vmem:[#allocation9 + $0x2c] sm:$0xf]
    %v7678 = vld [vmem:[#allocation9 + $0x30] sm:$0xf]
    %v7679 = vld [vmem:[#allocation9 + $0x34] sm:$0xf]
    %v7680 = vld [vmem:[#allocation9 + $0x38] sm:$0xf]
    %v7681 = vld [vmem:[#allocation9 + $0x3c] sm:$0xf]
    %v7682 = vld [vmem:[#allocation9 + $0x40] sm:$0xf]
    %v7683 = vld [vmem:[#allocation9 + $0x44] sm:$0xf]
    %v7684 = vld [vmem:[#allocation9 + $0x48] sm:$0xf]
    %v7685 = vld [vmem:[#allocation9 + $0x4c] sm:$0xf]
    %v7686 = vld [vmem:[#allocation9 + $0x50] sm:$0xf]
    %v7687 = vld [vmem:[#allocation9 + $0x54] sm:$0xf]
    %v7688 = vld [vmem:[#allocation9 + $0x58] sm:$0xf]
    %v7689 = vld [vmem:[#allocation9 + $0x5c] sm:$0xf]
    %v7690 = vld [vmem:[#allocation9 + $0x60] sm:$0xf]
    %v7691 = vld [vmem:[#allocation9 + $0x64] sm:$0xf]
    %v7692 = vld [vmem:[#allocation9 + $0x68] sm:$0xf]
    %v7693 = vld [vmem:[#allocation9 + $0x6c] sm:$0xf]
    %v7694 = vld [vmem:[#allocation9 + $0x70] sm:$0xf]
    %v7695 = vld [vmem:[#allocation9 + $0x74] sm:$0xf]
    %v7696 = vld [vmem:[#allocation9 + $0x78] sm:$0xf]
    %v7697 = vld [vmem:[#allocation9 + $0x7c] sm:$0xf]
    %v7698 = vld [vmem:[#allocation9 + $0x80] sm:$0xf]
    %v7699 = vld [vmem:[#allocation9 + $0x84] sm:$0xf]
    %v7700 = vld [vmem:[#allocation9 + $0x88] sm:$0xf]
    %v7701 = vld [vmem:[#allocation9 + $0x8c] sm:$0xf]
    %v7702 = vld [vmem:[#allocation9 + $0x90] sm:$0xf]
    %v7703 = vld [vmem:[#allocation9 + $0x94] sm:$0xf]
    %v7704 = vld [vmem:[#allocation9 + $0x98] sm:$0xf]
    %v7705 = vld [vmem:[#allocation9 + $0x9c] sm:$0xf]
    %v7706 = vld [vmem:[#allocation9 + $0xa0] sm:$0xf]
    %v7707 = vld [vmem:[#allocation9 + $0xa4] sm:$0xf]
    %v7708 = vld [vmem:[#allocation9 + $0xa8] sm:$0xf]
    %v7709 = vld [vmem:[#allocation9 + $0xac] sm:$0xf]
    %v7710 = vld [vmem:[#allocation9 + $0xb0] sm:$0xf]
    %v7711 = vld [vmem:[#allocation9 + $0xb4] sm:$0xf]
    %v7712 = vld [vmem:[#allocation9 + $0xb8] sm:$0xf]
    %v7713 = vld [vmem:[#allocation9 + $0xbc] sm:$0xf]
    %v7714 = vld [vmem:[#allocation9 + $0xc0] sm:$0xf]
    %v7715 = vld [vmem:[#allocation9 + $0xc4] sm:$0xf]
    %v7716 = vld [vmem:[#allocation9 + $0xc8] sm:$0xf]
    %v7717 = vld [vmem:[#allocation9 + $0xcc] sm:$0xf]
    %v7718 = vld [vmem:[#allocation9 + $0xd0] sm:$0xf]
    %v7719 = vld [vmem:[#allocation9 + $0xd4] sm:$0xf]
    %v7720 = vld [vmem:[#allocation9 + $0xd8] sm:$0xf]
    %v7721 = vld [vmem:[#allocation9 + $0xdc] sm:$0xf]
    %v7722 = vld [vmem:[#allocation9 + $0xe0] sm:$0xf]
    %v7723 = vld [vmem:[#allocation9 + $0xe4] sm:$0xf]
    %v7724 = vld [vmem:[#allocation9 + $0xe8] sm:$0xf]
    %v7725 = vld [vmem:[#allocation9 + $0xec] sm:$0xf]
    %v7726 = vld [vmem:[#allocation9 + $0xf0] sm:$0xf]
    %v7727 = vld [vmem:[#allocation9 + $0xf4] sm:$0xf]
    %v7728 = vld [vmem:[#allocation9 + $0xf8] sm:$0xf]
    %v7729 = vld [vmem:[#allocation9 + $0xfc] sm:$0xf]
    %v7730 = vld [vmem:[#allocation9 + $0x100] sm:$0xf]
    %v7731 = vld [vmem:[#allocation9 + $0x104] sm:$0xf]
    %v7732 = vld [vmem:[#allocation9 + $0x108] sm:$0xf]
    %v7733 = vld [vmem:[#allocation9 + $0x10c] sm:$0xf]
    %v7734 = vld [vmem:[#allocation9 + $0x110] sm:$0xf]
    %v7735 = vld [vmem:[#allocation9 + $0x114] sm:$0xf]
    %v7736 = vld [vmem:[#allocation9 + $0x118] sm:$0xf]
    %v7737 = vld [vmem:[#allocation9 + $0x11c] sm:$0xf]
    %v7738 = vld [vmem:[#allocation9 + $0x120] sm:$0xf]
    %v7739 = vld [vmem:[#allocation9 + $0x124] sm:$0xf]
    %v7740 = vld [vmem:[#allocation9 + $0x128] sm:$0xf]
    %v7741 = vld [vmem:[#allocation9 + $0x12c] sm:$0xf]
    %v7742 = vld [vmem:[#allocation9 + $0x130] sm:$0xf]
    %v7743 = vld [vmem:[#allocation9 + $0x134] sm:$0xf]
    %v7744 = vld [vmem:[#allocation9 + $0x138] sm:$0xf]
    %v7745 = vld [vmem:[#allocation9 + $0x13c] sm:$0xf]
    %v7746 = vld [vmem:[#allocation9 + $0x140] sm:$0xf]
    %v7747 = vld [vmem:[#allocation9 + $0x144] sm:$0xf]
    %v7748 = vld [vmem:[#allocation9 + $0x148] sm:$0xf]
    %v7749 = vld [vmem:[#allocation9 + $0x14c] sm:$0xf]
    %v7750 = vld [vmem:[#allocation9 + $0x150] sm:$0xf]
    %v7751 = vld [vmem:[#allocation9 + $0x154] sm:$0xf]
    %v7752 = vld [vmem:[#allocation9 + $0x158] sm:$0xf]
    %v7753 = vld [vmem:[#allocation9 + $0x15c] sm:$0xf]
    %v7754 = vld [vmem:[#allocation9 + $0x160] sm:$0xf]
    %v7755 = vld [vmem:[#allocation9 + $0x164] sm:$0xf]
    %v7756 = vld [vmem:[#allocation9 + $0x168] sm:$0xf]
    %v7757 = vld [vmem:[#allocation9 + $0x16c] sm:$0xf]
    %v7758 = vld [vmem:[#allocation9 + $0x170] sm:$0xf]
    %v7759 = vld [vmem:[#allocation9 + $0x174] sm:$0xf]
    %v7760 = vld [vmem:[#allocation9 + $0x178] sm:$0xf]
    %v7761 = vld [vmem:[#allocation9 + $0x17c] sm:$0xf]
    %v7762 = vld [vmem:[#allocation9 + $0x180] sm:$0xf]
    %v7763 = vld [vmem:[#allocation9 + $0x184] sm:$0xf]
    %v7764 = vld [vmem:[#allocation9 + $0x188] sm:$0xf]
    %v7765 = vld [vmem:[#allocation9 + $0x18c] sm:$0xf]
    %v7766 = vld [vmem:[#allocation9 + $0x190] sm:$0xf]
    %v7767 = vld [vmem:[#allocation9 + $0x194] sm:$0xf]
    %v7768 = vld [vmem:[#allocation9 + $0x198] sm:$0xf]
    %v7769 = vld [vmem:[#allocation9 + $0x19c] sm:$0xf]
    %v7770 = vld [vmem:[#allocation9 + $0x1a0] sm:$0xf]
    %v7771 = vld [vmem:[#allocation9 + $0x1a4] sm:$0xf]
    %v7772 = vld [vmem:[#allocation9 + $0x1a8] sm:$0xf]
    %v7773 = vld [vmem:[#allocation9 + $0x1ac] sm:$0xf]
    %v7774 = vld [vmem:[#allocation9 + $0x1b0] sm:$0xf]
    %v7775 = vld [vmem:[#allocation9 + $0x1b4] sm:$0xf]
    %v7776 = vld [vmem:[#allocation9 + $0x1b8] sm:$0xf]
    %v7777 = vld [vmem:[#allocation9 + $0x1bc] sm:$0xf]
    %v7778 = vld [vmem:[#allocation9 + $0x1c0] sm:$0xf]
    %v7779 = vld [vmem:[#allocation9 + $0x1c4] sm:$0xf]
    %v7780 = vld [vmem:[#allocation9 + $0x1c8] sm:$0xf]
    %v7781 = vld [vmem:[#allocation9 + $0x1cc] sm:$0xf]
    %v7782 = vld [vmem:[#allocation9 + $0x1d0] sm:$0xf]
    %v7783 = vld [vmem:[#allocation9 + $0x1d4] sm:$0xf]
    %v7784 = vld [vmem:[#allocation9 + $0x1d8] sm:$0xf]
    %v7785 = vld [vmem:[#allocation9 + $0x1dc] sm:$0xf]
    %v7786 = vld [vmem:[#allocation9 + $0x1e0] sm:$0xf]
    %v7787 = vld [vmem:[#allocation9 + $0x1e4] sm:$0xf]
    %v7788 = vld [vmem:[#allocation9 + $0x1e8] sm:$0xf]
    %v7789 = vld [vmem:[#allocation9 + $0x1ec] sm:$0xf]
    %v7790 = vld [vmem:[#allocation9 + $0x1f0] sm:$0xf]
    %v7791 = vld [vmem:[#allocation9 + $0x1f4] sm:$0xf]
    %v7792 = vld [vmem:[#allocation9 + $0x1f8] sm:$0xf]
    %v7793 = vld [vmem:[#allocation9 + $0x1fc] sm:$0xf]
    %v7794 = vld [vmem:[#allocation10] sm:$0x1]
    %v7796 = vperm.slane %v7794, 0
    %v7926 = vunpack.c.l.b16 %v7666
    %v7927 = vunpack.c.l.b16 %v7667
    %v7928 = vunpack.c.l.b16 %v7668
    %v7929 = vunpack.c.l.b16 %v7669
    %v7930 = vunpack.c.l.b16 %v7670
    %v7931 = vunpack.c.l.b16 %v7671
    %v7932 = vunpack.c.l.b16 %v7672
    %v7933 = vunpack.c.l.b16 %v7673
    %v7934 = vunpack.c.l.b16 %v7674
    %v7935 = vunpack.c.l.b16 %v7675
    %v7936 = vunpack.c.l.b16 %v7676
    %v7937 = vunpack.c.l.b16 %v7677
    %v7938 = vunpack.c.l.b16 %v7678
    %v7939 = vunpack.c.l.b16 %v7679
    %v7940 = vunpack.c.l.b16 %v7680
    %v7941 = vunpack.c.l.b16 %v7681
    %v7942 = vunpack.c.l.b16 %v7682
    %v7943 = vunpack.c.l.b16 %v7683
    %v7944 = vunpack.c.l.b16 %v7684
    %v7945 = vunpack.c.l.b16 %v7685
    %v7946 = vunpack.c.l.b16 %v7686
    %v7947 = vunpack.c.l.b16 %v7687
    %v7948 = vunpack.c.l.b16 %v7688
    %v7949 = vunpack.c.l.b16 %v7689
    %v7950 = vunpack.c.l.b16 %v7690
    %v7951 = vunpack.c.l.b16 %v7691
    %v7952 = vunpack.c.l.b16 %v7692
    %v7953 = vunpack.c.l.b16 %v7693
    %v7954 = vunpack.c.l.b16 %v7694
    %v7955 = vunpack.c.l.b16 %v7695
    %v7956 = vunpack.c.l.b16 %v7696
    %v7957 = vunpack.c.l.b16 %v7697
    %v7958 = vunpack.c.l.b16 %v7698
    %v7959 = vunpack.c.l.b16 %v7699
    %v7960 = vunpack.c.l.b16 %v7700
    %v7961 = vunpack.c.l.b16 %v7701
    %v7962 = vunpack.c.l.b16 %v7702
    %v7963 = vunpack.c.l.b16 %v7703
    %v7964 = vunpack.c.l.b16 %v7704
    %v7965 = vunpack.c.l.b16 %v7705
    %v7966 = vunpack.c.l.b16 %v7706
    %v7967 = vunpack.c.l.b16 %v7707
    %v7968 = vunpack.c.l.b16 %v7708
    %v7969 = vunpack.c.l.b16 %v7709
    %v7970 = vunpack.c.l.b16 %v7710
    %v7971 = vunpack.c.l.b16 %v7711
    %v7972 = vunpack.c.l.b16 %v7712
    %v7973 = vunpack.c.l.b16 %v7713
    %v7974 = vunpack.c.l.b16 %v7714
    %v7975 = vunpack.c.l.b16 %v7715
    %v7976 = vunpack.c.l.b16 %v7716
    %v7977 = vunpack.c.l.b16 %v7717
    %v7978 = vunpack.c.l.b16 %v7718
    %v7979 = vunpack.c.l.b16 %v7719
    %v7980 = vunpack.c.l.b16 %v7720
    %v7981 = vunpack.c.l.b16 %v7721
    %v7982 = vunpack.c.l.b16 %v7722
    %v7983 = vunpack.c.l.b16 %v7723
    %v7984 = vunpack.c.l.b16 %v7724
    %v7985 = vunpack.c.l.b16 %v7725
    %v7986 = vunpack.c.l.b16 %v7726
    %v7987 = vunpack.c.l.b16 %v7727
    %v7988 = vunpack.c.l.b16 %v7728
    %v7989 = vunpack.c.l.b16 %v7729
    %v7990 = vunpack.c.l.b16 %v7730
    %v7991 = vunpack.c.l.b16 %v7731
    %v7992 = vunpack.c.l.b16 %v7732
    %v7993 = vunpack.c.l.b16 %v7733
    %v7994 = vunpack.c.l.b16 %v7734
    %v7995 = vunpack.c.l.b16 %v7735
    %v7996 = vunpack.c.l.b16 %v7736
    %v7997 = vunpack.c.l.b16 %v7737
    %v7998 = vunpack.c.l.b16 %v7738
    %v7999 = vunpack.c.l.b16 %v7739
    %v8000 = vunpack.c.l.b16 %v7740
    %v8001 = vunpack.c.l.b16 %v7741
    %v8002 = vunpack.c.l.b16 %v7742
    %v8003 = vunpack.c.l.b16 %v7743
    %v8004 = vunpack.c.l.b16 %v7744
    %v8005 = vunpack.c.l.b16 %v7745
    %v8006 = vunpack.c.l.b16 %v7746
    %v8007 = vunpack.c.l.b16 %v7747
    %v8008 = vunpack.c.l.b16 %v7748
    %v8009 = vunpack.c.l.b16 %v7749
    %v8010 = vunpack.c.l.b16 %v7750
    %v8011 = vunpack.c.l.b16 %v7751
    %v8012 = vunpack.c.l.b16 %v7752
    %v8013 = vunpack.c.l.b16 %v7753
    %v8014 = vunpack.c.l.b16 %v7754
    %v8015 = vunpack.c.l.b16 %v7755
    %v8016 = vunpack.c.l.b16 %v7756
    %v8017 = vunpack.c.l.b16 %v7757
    %v8018 = vunpack.c.l.b16 %v7758
    %v8019 = vunpack.c.l.b16 %v7759
    %v8020 = vunpack.c.l.b16 %v7760
    %v8021 = vunpack.c.l.b16 %v7761
    %v8022 = vunpack.c.l.b16 %v7762
    %v8023 = vunpack.c.l.b16 %v7763
    %v8024 = vunpack.c.l.b16 %v7764
    %v8025 = vunpack.c.l.b16 %v7765
    %v8026 = vunpack.c.l.b16 %v7766
    %v8027 = vunpack.c.l.b16 %v7767
    %v8028 = vunpack.c.l.b16 %v7768
    %v8029 = vunpack.c.l.b16 %v7769
    %v8030 = vunpack.c.l.b16 %v7770
    %v8031 = vunpack.c.l.b16 %v7771
    %v8032 = vunpack.c.l.b16 %v7772
    %v8033 = vunpack.c.l.b16 %v7773
    %v8034 = vunpack.c.l.b16 %v7774
    %v8035 = vunpack.c.l.b16 %v7775
    %v8036 = vunpack.c.l.b16 %v7776
    %v8037 = vunpack.c.l.b16 %v7777
    %v8038 = vunpack.c.l.b16 %v7778
    %v8039 = vunpack.c.l.b16 %v7779
    %v8040 = vunpack.c.l.b16 %v7780
    %v8041 = vunpack.c.l.b16 %v7781
    %v8042 = vunpack.c.l.b16 %v7782
    %v8043 = vunpack.c.l.b16 %v7783
    %v8044 = vunpack.c.l.b16 %v7784
    %v8045 = vunpack.c.l.b16 %v7785
    %v8046 = vunpack.c.l.b16 %v7786
    %v8047 = vunpack.c.l.b16 %v7787
    %v8048 = vunpack.c.l.b16 %v7788
    %v8049 = vunpack.c.l.b16 %v7789
    %v8050 = vunpack.c.l.b16 %v7790
    %v8051 = vunpack.c.l.b16 %v7791
    %v8052 = vunpack.c.l.b16 %v7792
    %v8053 = vunpack.c.l.b16 %v7793
    %v8054 = vpack.c.b16 %v7927, %v7926
    %v8055 = vpack.c.b16 %v7929, %v7928
    %v8056 = vpack.c.b16 %v7931, %v7930
    %v8057 = vpack.c.b16 %v7933, %v7932
    %v8058 = vpack.c.b16 %v7935, %v7934
    %v8059 = vpack.c.b16 %v7937, %v7936
    %v8060 = vpack.c.b16 %v7939, %v7938
    %v8061 = vpack.c.b16 %v7941, %v7940
    %v8062 = vpack.c.b16 %v7943, %v7942
    %v8063 = vpack.c.b16 %v7945, %v7944
    %v8064 = vpack.c.b16 %v7947, %v7946
    %v8065 = vpack.c.b16 %v7949, %v7948
    %v8066 = vpack.c.b16 %v7951, %v7950
    %v8067 = vpack.c.b16 %v7953, %v7952
    %v8068 = vpack.c.b16 %v7955, %v7954
    %v8069 = vpack.c.b16 %v7957, %v7956
    %v8070 = vpack.c.b16 %v7959, %v7958
    %v8071 = vpack.c.b16 %v7961, %v7960
    %v8072 = vpack.c.b16 %v7963, %v7962
    %v8073 = vpack.c.b16 %v7965, %v7964
    %v8074 = vpack.c.b16 %v7967, %v7966
    %v8075 = vpack.c.b16 %v7969, %v7968
    %v8076 = vpack.c.b16 %v7971, %v7970
    %v8077 = vpack.c.b16 %v7973, %v7972
    %v8078 = vpack.c.b16 %v7975, %v7974
    %v8079 = vpack.c.b16 %v7977, %v7976
    %v8080 = vpack.c.b16 %v7979, %v7978
    %v8081 = vpack.c.b16 %v7981, %v7980
    %v8082 = vpack.c.b16 %v7983, %v7982
    %v8083 = vpack.c.b16 %v7985, %v7984
    %v8084 = vpack.c.b16 %v7987, %v7986
    %v8085 = vpack.c.b16 %v7989, %v7988
    %v8086 = vpack.c.b16 %v7991, %v7990
    %v8087 = vpack.c.b16 %v7993, %v7992
    %v8088 = vpack.c.b16 %v7995, %v7994
    %v8089 = vpack.c.b16 %v7997, %v7996
    %v8090 = vpack.c.b16 %v7999, %v7998
    %v8091 = vpack.c.b16 %v8001, %v8000
    %v8092 = vpack.c.b16 %v8003, %v8002
    %v8093 = vpack.c.b16 %v8005, %v8004
    %v8094 = vpack.c.b16 %v8007, %v8006
    %v8095 = vpack.c.b16 %v8009, %v8008
    %v8096 = vpack.c.b16 %v8011, %v8010
    %v8097 = vpack.c.b16 %v8013, %v8012
    %v8098 = vpack.c.b16 %v8015, %v8014
    %v8099 = vpack.c.b16 %v8017, %v8016
    %v8100 = vpack.c.b16 %v8019, %v8018
    %v8101 = vpack.c.b16 %v8021, %v8020
    %v8102 = vpack.c.b16 %v8023, %v8022
    %v8103 = vpack.c.b16 %v8025, %v8024
    %v8104 = vpack.c.b16 %v8027, %v8026
    %v8105 = vpack.c.b16 %v8029, %v8028
    %v8106 = vpack.c.b16 %v8031, %v8030
    %v8107 = vpack.c.b16 %v8033, %v8032
    %v8108 = vpack.c.b16 %v8035, %v8034
    %v8109 = vpack.c.b16 %v8037, %v8036
    %v8110 = vpack.c.b16 %v8039, %v8038
    %v8111 = vpack.c.b16 %v8041, %v8040
    %v8112 = vpack.c.b16 %v8043, %v8042
    %v8113 = vpack.c.b16 %v8045, %v8044
    %v8114 = vpack.c.b16 %v8047, %v8046
    %v8115 = vpack.c.b16 %v8049, %v8048
    %v8116 = vpack.c.b16 %v8051, %v8050
    %v8117 = vpack.c.b16 %v8053, %v8052
    %8182 = vmatpush.bf16.msra.mxu0 %v8061
    %8183 = vmatpush.bf16.msra.mxu0 %v8060
    %8184 = vmatpush.bf16.msra.mxu0 %v8059
    %8185 = vmatpush.bf16.msra.mxu0 %v8058
    %8186 = vmatpush.bf16.msra.mxu0 %v8057
    %8187 = vmatpush.bf16.msra.mxu0 %v8056
    %8188 = vmatpush.bf16.msra.mxu0 %v8055
    %8189 = vmatpush.bf16.msra.mxu0 %v8054
    %8190 = vmatmul.bf16.gmra.mxu0 %v7602
    %v8191 = vpop.f32.mrf.mxu0
    %v8192 = vadd.f32 %v7796, %v8191
    %v8193 = vpop.f32.mrf.mxu0
    %v8194 = vadd.f32 %v7796, %v8193
    %8195 = vmatmul.bf16.gmra.mxu0 %v7610
    %v8196 = vpop.f32.mrf.mxu0
    %v8197 = vadd.f32 %v7796, %v8196
    %v8198 = vpop.f32.mrf.mxu0
    %v8199 = vadd.f32 %v7796, %v8198
    %8200 = vmatmul.bf16.gmra.mxu0 %v7618
    %v8201 = vpop.f32.mrf.mxu0
    %v8202 = vadd.f32 %v7796, %v8201
    %v8203 = vpop.f32.mrf.mxu0
    %v8204 = vadd.f32 %v7796, %v8203
    %8205 = vmatmul.bf16.gmra.mxu0 %v7626
    %v8206 = vpop.f32.mrf.mxu0
    %v8207 = vadd.f32 %v7796, %v8206
    %v8208 = vpop.f32.mrf.mxu0
    %v8209 = vadd.f32 %v7796, %v8208
    %8210 = vmatmul.bf16.gmra.mxu0 %v7634
    %v8211 = vpop.f32.mrf.mxu0
    %v8212 = vadd.f32 %v7796, %v8211
    %v8213 = vpop.f32.mrf.mxu0
    %v8214 = vadd.f32 %v7796, %v8213
    %8215 = vmatmul.bf16.gmra.mxu0 %v7642
    %v8216 = vpop.f32.mrf.mxu0
    %v8217 = vadd.f32 %v7796, %v8216
    %v8218 = vpop.f32.mrf.mxu0
    %v8219 = vadd.f32 %v7796, %v8218
    %8220 = vmatmul.bf16.gmra.mxu0 %v7650
    %v8221 = vpop.f32.mrf.mxu0
    %v8222 = vadd.f32 %v7796, %v8221
    %v8223 = vpop.f32.mrf.mxu0
    %v8224 = vadd.f32 %v7796, %v8223
    %8225 = vmatmul.bf16.gmra.mxu0 %v7658
    %v8226 = vpop.f32.mrf.mxu0
    %v8227 = vadd.f32 %v7796, %v8226
    %v8228 = vpop.f32.mrf.mxu0
    %v8229 = vadd.f32 %v7796, %v8228
    %8230 = vdwg.mxu0
    %8231 = vmatpush.bf16.msra.mxu0 %v8069
    %8232 = vmatpush.bf16.msra.mxu0 %v8068
    %8233 = vmatpush.bf16.msra.mxu0 %v8067
    %8234 = vmatpush.bf16.msra.mxu0 %v8066
    %8235 = vmatpush.bf16.msra.mxu0 %v8065
    %8236 = vmatpush.bf16.msra.mxu0 %v8064
    %8237 = vmatpush.bf16.msra.mxu0 %v8063
    %8238 = vmatpush.bf16.msra.mxu0 %v8062
    %8239 = vmatmul.bf16.gmra.mxu0 %v7603
    %v8240 = vpop.f32.mrf.mxu0
    %v8241 = vadd.f32 %v8192, %v8240
    %v8242 = vpop.f32.mrf.mxu0
    %v8243 = vadd.f32 %v8194, %v8242
    %8244 = vmatmul.bf16.gmra.mxu0 %v7611
    %v8245 = vpop.f32.mrf.mxu0
    %v8246 = vadd.f32 %v8197, %v8245
    %v8247 = vpop.f32.mrf.mxu0
    %v8248 = vadd.f32 %v8199, %v8247
    %8249 = vmatmul.bf16.gmra.mxu0 %v7619
    %v8250 = vpop.f32.mrf.mxu0
    %v8251 = vadd.f32 %v8202, %v8250
    %v8252 = vpop.f32.mrf.mxu0
    %v8253 = vadd.f32 %v8204, %v8252
    %8254 = vmatmul.bf16.gmra.mxu0 %v7627
    %v8255 = vpop.f32.mrf.mxu0
    %v8256 = vadd.f32 %v8207, %v8255
    %v8257 = vpop.f32.mrf.mxu0
    %v8258 = vadd.f32 %v8209, %v8257
    %8259 = vmatmul.bf16.gmra.mxu0 %v7635
    %v8260 = vpop.f32.mrf.mxu0
    %v8261 = vadd.f32 %v8212, %v8260
    %v8262 = vpop.f32.mrf.mxu0
    %v8263 = vadd.f32 %v8214, %v8262
    %8264 = vmatmul.bf16.gmra.mxu0 %v7643
    %v8265 = vpop.f32.mrf.mxu0
    %v8266 = vadd.f32 %v8217, %v8265
    %v8267 = vpop.f32.mrf.mxu0
    %v8268 = vadd.f32 %v8219, %v8267
    %8269 = vmatmul.bf16.gmra.mxu0 %v7651
    %v8270 = vpop.f32.mrf.mxu0
    %v8271 = vadd.f32 %v8222, %v8270
    %v8272 = vpop.f32.mrf.mxu0
    %v8273 = vadd.f32 %v8224, %v8272
    %8274 = vmatmul.bf16.gmra.mxu0 %v7659
    %v8275 = vpop.f32.mrf.mxu0
    %v8276 = vadd.f32 %v8227, %v8275
    %v8277 = vpop.f32.mrf.mxu0
    %v8278 = vadd.f32 %v8229, %v8277
    %8279 = vdwg.mxu0
    %8280 = vmatpush.bf16.msra.mxu0 %v8077
    %8281 = vmatpush.bf16.msra.mxu0 %v8076
    %8282 = vmatpush.bf16.msra.mxu0 %v8075
    %8283 = vmatpush.bf16.msra.mxu0 %v8074
    %8284 = vmatpush.bf16.msra.mxu0 %v8073
    %8285 = vmatpush.bf16.msra.mxu0 %v8072
    %8286 = vmatpush.bf16.msra.mxu0 %v8071
    %8287 = vmatpush.bf16.msra.mxu0 %v8070
    %8288 = vmatmul.bf16.gmra.mxu0 %v7604
    %v8289 = vpop.f32.mrf.mxu0
    %v8290 = vadd.f32 %v8241, %v8289
    %v8291 = vpop.f32.mrf.mxu0
    %v8292 = vadd.f32 %v8243, %v8291
    %8293 = vmatmul.bf16.gmra.mxu0 %v7612
    %v8294 = vpop.f32.mrf.mxu0
    %v8295 = vadd.f32 %v8246, %v8294
    %v8296 = vpop.f32.mrf.mxu0
    %v8297 = vadd.f32 %v8248, %v8296
    %8298 = vmatmul.bf16.gmra.mxu0 %v7620
    %v8299 = vpop.f32.mrf.mxu0
    %v8300 = vadd.f32 %v8251, %v8299
    %v8301 = vpop.f32.mrf.mxu0
    %v8302 = vadd.f32 %v8253, %v8301
    %8303 = vmatmul.bf16.gmra.mxu0 %v7628
    %v8304 = vpop.f32.mrf.mxu0
    %v8305 = vadd.f32 %v8256, %v8304
    %v8306 = vpop.f32.mrf.mxu0
    %v8307 = vadd.f32 %v8258, %v8306
    %8308 = vmatmul.bf16.gmra.mxu0 %v7636
    %v8309 = vpop.f32.mrf.mxu0
    %v8310 = vadd.f32 %v8261, %v8309
    %v8311 = vpop.f32.mrf.mxu0
    %v8312 = vadd.f32 %v8263, %v8311
    %8313 = vmatmul.bf16.gmra.mxu0 %v7644
    %v8314 = vpop.f32.mrf.mxu0
    %v8315 = vadd.f32 %v8266, %v8314
    %v8316 = vpop.f32.mrf.mxu0
    %v8317 = vadd.f32 %v8268, %v8316
    %8318 = vmatmul.bf16.gmra.mxu0 %v7652
    %v8319 = vpop.f32.mrf.mxu0
    %v8320 = vadd.f32 %v8271, %v8319
    %v8321 = vpop.f32.mrf.mxu0
    %v8322 = vadd.f32 %v8273, %v8321
    %8323 = vmatmul.bf16.gmra.mxu0 %v7660
    %v8324 = vpop.f32.mrf.mxu0
    %v8325 = vadd.f32 %v8276, %v8324
    %v8326 = vpop.f32.mrf.mxu0
    %v8327 = vadd.f32 %v8278, %v8326
    %8328 = vdwg.mxu0
    %8329 = vmatpush.bf16.msra.mxu0 %v8085
    %8330 = vmatpush.bf16.msra.mxu0 %v8084
    %8331 = vmatpush.bf16.msra.mxu0 %v8083
    %8332 = vmatpush.bf16.msra.mxu0 %v8082
    %8333 = vmatpush.bf16.msra.mxu0 %v8081
    %8334 = vmatpush.bf16.msra.mxu0 %v8080
    %8335 = vmatpush.bf16.msra.mxu0 %v8079
    %8336 = vmatpush.bf16.msra.mxu0 %v8078
    %8337 = vmatmul.bf16.gmra.mxu0 %v7605
    %v8338 = vpop.f32.mrf.mxu0
    %v8339 = vadd.f32 %v8290, %v8338
    %v8340 = vpop.f32.mrf.mxu0
    %v8341 = vadd.f32 %v8292, %v8340
    %8342 = vmatmul.bf16.gmra.mxu0 %v7613
    %v8343 = vpop.f32.mrf.mxu0
    %v8344 = vadd.f32 %v8295, %v8343
    %v8345 = vpop.f32.mrf.mxu0
    %v8346 = vadd.f32 %v8297, %v8345
    %8347 = vmatmul.bf16.gmra.mxu0 %v7621
    %v8348 = vpop.f32.mrf.mxu0
    %v8349 = vadd.f32 %v8300, %v8348
    %v8350 = vpop.f32.mrf.mxu0
    %v8351 = vadd.f32 %v8302, %v8350
    %8352 = vmatmul.bf16.gmra.mxu0 %v7629
    %v8353 = vpop.f32.mrf.mxu0
    %v8354 = vadd.f32 %v8305, %v8353
    %v8355 = vpop.f32.mrf.mxu0
    %v8356 = vadd.f32 %v8307, %v8355
    %8357 = vmatmul.bf16.gmra.mxu0 %v7637
    %v8358 = vpop.f32.mrf.mxu0
    %v8359 = vadd.f32 %v8310, %v8358
    %v8360 = vpop.f32.mrf.mxu0
    %v8361 = vadd.f32 %v8312, %v8360
    %8362 = vmatmul.bf16.gmra.mxu0 %v7645
    %v8363 = vpop.f32.mrf.mxu0
    %v8364 = vadd.f32 %v8315, %v8363
    %v8365 = vpop.f32.mrf.mxu0
    %v8366 = vadd.f32 %v8317, %v8365
    %8367 = vmatmul.bf16.gmra.mxu0 %v7653
    %v8368 = vpop.f32.mrf.mxu0
    %v8369 = vadd.f32 %v8320, %v8368
    %v8370 = vpop.f32.mrf.mxu0
    %v8371 = vadd.f32 %v8322, %v8370
    %8372 = vmatmul.bf16.gmra.mxu0 %v7661
    %v8373 = vpop.f32.mrf.mxu0
    %v8374 = vadd.f32 %v8325, %v8373
    %v8375 = vpop.f32.mrf.mxu0
    %v8376 = vadd.f32 %v8327, %v8375
    %8377 = vdwg.mxu0
    %8378 = vmatpush.bf16.msra.mxu0 %v8093
    %8379 = vmatpush.bf16.msra.mxu0 %v8092
    %8380 = vmatpush.bf16.msra.mxu0 %v8091
    %8381 = vmatpush.bf16.msra.mxu0 %v8090
    %8382 = vmatpush.bf16.msra.mxu0 %v8089
    %8383 = vmatpush.bf16.msra.mxu0 %v8088
    %8384 = vmatpush.bf16.msra.mxu0 %v8087
    %8385 = vmatpush.bf16.msra.mxu0 %v8086
    %8386 = vmatmul.bf16.gmra.mxu0 %v7606
    %v8387 = vpop.f32.mrf.mxu0
    %v8388 = vadd.f32 %v8339, %v8387
    %v8389 = vpop.f32.mrf.mxu0
    %v8390 = vadd.f32 %v8341, %v8389
    %8391 = vmatmul.bf16.gmra.mxu0 %v7614
    %v8392 = vpop.f32.mrf.mxu0
    %v8393 = vadd.f32 %v8344, %v8392
    %v8394 = vpop.f32.mrf.mxu0
    %v8395 = vadd.f32 %v8346, %v8394
    %8396 = vmatmul.bf16.gmra.mxu0 %v7622
    %v8397 = vpop.f32.mrf.mxu0
    %v8398 = vadd.f32 %v8349, %v8397
    %v8399 = vpop.f32.mrf.mxu0
    %v8400 = vadd.f32 %v8351, %v8399
    %8401 = vmatmul.bf16.gmra.mxu0 %v7630
    %v8402 = vpop.f32.mrf.mxu0
    %v8403 = vadd.f32 %v8354, %v8402
    %v8404 = vpop.f32.mrf.mxu0
    %v8405 = vadd.f32 %v8356, %v8404
    %8406 = vmatmul.bf16.gmra.mxu0 %v7638
    %v8407 = vpop.f32.mrf.mxu0
    %v8408 = vadd.f32 %v8359, %v8407
    %v8409 = vpop.f32.mrf.mxu0
    %v8410 = vadd.f32 %v8361, %v8409
    %8411 = vmatmul.bf16.gmra.mxu0 %v7646
    %v8412 = vpop.f32.mrf.mxu0
    %v8413 = vadd.f32 %v8364, %v8412
    %v8414 = vpop.f32.mrf.mxu0
    %v8415 = vadd.f32 %v8366, %v8414
    %8416 = vmatmul.bf16.gmra.mxu0 %v7654
    %v8417 = vpop.f32.mrf.mxu0
    %v8418 = vadd.f32 %v8369, %v8417
    %v8419 = vpop.f32.mrf.mxu0
    %v8420 = vadd.f32 %v8371, %v8419
    %8421 = vmatmul.bf16.gmra.mxu0 %v7662
    %v8422 = vpop.f32.mrf.mxu0
    %v8423 = vadd.f32 %v8374, %v8422
    %v8424 = vpop.f32.mrf.mxu0
    %v8425 = vadd.f32 %v8376, %v8424
    %8426 = vdwg.mxu0
    %8427 = vmatpush.bf16.msra.mxu0 %v8101
    %8428 = vmatpush.bf16.msra.mxu0 %v8100
    %8429 = vmatpush.bf16.msra.mxu0 %v8099
    %8430 = vmatpush.bf16.msra.mxu0 %v8098
    %8431 = vmatpush.bf16.msra.mxu0 %v8097
    %8432 = vmatpush.bf16.msra.mxu0 %v8096
    %8433 = vmatpush.bf16.msra.mxu0 %v8095
    %8434 = vmatpush.bf16.msra.mxu0 %v8094
    %8435 = vmatmul.bf16.gmra.mxu0 %v7607
    %v8436 = vpop.f32.mrf.mxu0
    %v8437 = vadd.f32 %v8388, %v8436
    %v8438 = vpop.f32.mrf.mxu0
    %v8439 = vadd.f32 %v8390, %v8438
    %8440 = vmatmul.bf16.gmra.mxu0 %v7615
    %v8441 = vpop.f32.mrf.mxu0
    %v8442 = vadd.f32 %v8393, %v8441
    %v8443 = vpop.f32.mrf.mxu0
    %v8444 = vadd.f32 %v8395, %v8443
    %8445 = vmatmul.bf16.gmra.mxu0 %v7623
    %v8446 = vpop.f32.mrf.mxu0
    %v8447 = vadd.f32 %v8398, %v8446
    %v8448 = vpop.f32.mrf.mxu0
    %v8449 = vadd.f32 %v8400, %v8448
    %8450 = vmatmul.bf16.gmra.mxu0 %v7631
    %v8451 = vpop.f32.mrf.mxu0
    %v8452 = vadd.f32 %v8403, %v8451
    %v8453 = vpop.f32.mrf.mxu0
    %v8454 = vadd.f32 %v8405, %v8453
    %8455 = vmatmul.bf16.gmra.mxu0 %v7639
    %v8456 = vpop.f32.mrf.mxu0
    %v8457 = vadd.f32 %v8408, %v8456
    %v8458 = vpop.f32.mrf.mxu0
    %v8459 = vadd.f32 %v8410, %v8458
    %8460 = vmatmul.bf16.gmra.mxu0 %v7647
    %v8461 = vpop.f32.mrf.mxu0
    %v8462 = vadd.f32 %v8413, %v8461
    %v8463 = vpop.f32.mrf.mxu0
    %v8464 = vadd.f32 %v8415, %v8463
    %8465 = vmatmul.bf16.gmra.mxu0 %v7655
    %v8466 = vpop.f32.mrf.mxu0
    %v8467 = vadd.f32 %v8418, %v8466
    %v8468 = vpop.f32.mrf.mxu0
    %v8469 = vadd.f32 %v8420, %v8468
    %8470 = vmatmul.bf16.gmra.mxu0 %v7663
    %v8471 = vpop.f32.mrf.mxu0
    %v8472 = vadd.f32 %v8423, %v8471
    %v8473 = vpop.f32.mrf.mxu0
    %v8474 = vadd.f32 %v8425, %v8473
    %8475 = vdwg.mxu0
    %8476 = vmatpush.bf16.msra.mxu0 %v8109
    %8477 = vmatpush.bf16.msra.mxu0 %v8108
    %8478 = vmatpush.bf16.msra.mxu0 %v8107
    %8479 = vmatpush.bf16.msra.mxu0 %v8106
    %8480 = vmatpush.bf16.msra.mxu0 %v8105
    %8481 = vmatpush.bf16.msra.mxu0 %v8104
    %8482 = vmatpush.bf16.msra.mxu0 %v8103
    %8483 = vmatpush.bf16.msra.mxu0 %v8102
    %8484 = vmatmul.bf16.gmra.mxu0 %v7608
    %v8485 = vpop.f32.mrf.mxu0
    %v8486 = vadd.f32 %v8437, %v8485
    %v8487 = vpop.f32.mrf.mxu0
    %v8488 = vadd.f32 %v8439, %v8487
    %8489 = vmatmul.bf16.gmra.mxu0 %v7616
    %v8490 = vpop.f32.mrf.mxu0
    %v8491 = vadd.f32 %v8442, %v8490
    %v8492 = vpop.f32.mrf.mxu0
    %v8493 = vadd.f32 %v8444, %v8492
    %8494 = vmatmul.bf16.gmra.mxu0 %v7624
    %v8495 = vpop.f32.mrf.mxu0
    %v8496 = vadd.f32 %v8447, %v8495
    %v8497 = vpop.f32.mrf.mxu0
    %v8498 = vadd.f32 %v8449, %v8497
    %8499 = vmatmul.bf16.gmra.mxu0 %v7632
    %v8500 = vpop.f32.mrf.mxu0
    %v8501 = vadd.f32 %v8452, %v8500
    %v8502 = vpop.f32.mrf.mxu0
    %v8503 = vadd.f32 %v8454, %v8502
    %8504 = vmatmul.bf16.gmra.mxu0 %v7640
    %v8505 = vpop.f32.mrf.mxu0
    %v8506 = vadd.f32 %v8457, %v8505
    %v8507 = vpop.f32.mrf.mxu0
    %v8508 = vadd.f32 %v8459, %v8507
    %8509 = vmatmul.bf16.gmra.mxu0 %v7648
    %v8510 = vpop.f32.mrf.mxu0
    %v8511 = vadd.f32 %v8462, %v8510
    %v8512 = vpop.f32.mrf.mxu0
    %v8513 = vadd.f32 %v8464, %v8512
    %8514 = vmatmul.bf16.gmra.mxu0 %v7656
    %v8515 = vpop.f32.mrf.mxu0
    %v8516 = vadd.f32 %v8467, %v8515
    %v8517 = vpop.f32.mrf.mxu0
    %v8518 = vadd.f32 %v8469, %v8517
    %8519 = vmatmul.bf16.gmra.mxu0 %v7664
    %v8520 = vpop.f32.mrf.mxu0
    %v8521 = vadd.f32 %v8472, %v8520
    %v8522 = vpop.f32.mrf.mxu0
    %v8523 = vadd.f32 %v8474, %v8522
    %8524 = vdwg.mxu0
    %8525 = vmatpush.bf16.msra.mxu0 %v8117
    %8526 = vmatpush.bf16.msra.mxu0 %v8116
    %8527 = vmatpush.bf16.msra.mxu0 %v8115
    %8528 = vmatpush.bf16.msra.mxu0 %v8114
    %8529 = vmatpush.bf16.msra.mxu0 %v8113
    %8530 = vmatpush.bf16.msra.mxu0 %v8112
    %8531 = vmatpush.bf16.msra.mxu0 %v8111
    %8532 = vmatpush.bf16.msra.mxu0 %v8110
    %8533 = vmatmul.bf16.gmra.mxu0 %v7609
    %v8534 = vpop.f32.mrf.mxu0
    %v8535 = vadd.f32 %v8486, %v8534
    %v8536 = vpop.f32.mrf.mxu0
    %v8537 = vadd.f32 %v8488, %v8536
    %8538 = vmatmul.bf16.gmra.mxu0 %v7617
    %v8539 = vpop.f32.mrf.mxu0
    %v8540 = vadd.f32 %v8491, %v8539
    %v8541 = vpop.f32.mrf.mxu0
    %v8542 = vadd.f32 %v8493, %v8541
    %8543 = vmatmul.bf16.gmra.mxu0 %v7625
    %v8544 = vpop.f32.mrf.mxu0
    %v8545 = vadd.f32 %v8496, %v8544
    %v8546 = vpop.f32.mrf.mxu0
    %v8547 = vadd.f32 %v8498, %v8546
    %8548 = vmatmul.bf16.gmra.mxu0 %v7633
    %v8549 = vpop.f32.mrf.mxu0
    %v8550 = vadd.f32 %v8501, %v8549
    %v8551 = vpop.f32.mrf.mxu0
    %v8552 = vadd.f32 %v8503, %v8551
    %8553 = vmatmul.bf16.gmra.mxu0 %v7641
    %v8554 = vpop.f32.mrf.mxu0
    %v8555 = vadd.f32 %v8506, %v8554
    %v8556 = vpop.f32.mrf.mxu0
    %v8557 = vadd.f32 %v8508, %v8556
    %8558 = vmatmul.bf16.gmra.mxu0 %v7649
    %v8559 = vpop.f32.mrf.mxu0
    %v8560 = vadd.f32 %v8511, %v8559
    %v8561 = vpop.f32.mrf.mxu0
    %v8562 = vadd.f32 %v8513, %v8561
    %8563 = vmatmul.bf16.gmra.mxu0 %v7657
    %v8564 = vpop.f32.mrf.mxu0
    %v8565 = vadd.f32 %v8516, %v8564
    %v8566 = vpop.f32.mrf.mxu0
    %v8567 = vadd.f32 %v8518, %v8566
    %8568 = vmatmul.bf16.gmra.mxu0 %v7665
    %v8569 = vpop.f32.mrf.mxu0
    %v8570 = vadd.f32 %v8521, %v8569
    %v8571 = vpop.f32.mrf.mxu0
    %v8572 = vadd.f32 %v8523, %v8571
    %8573 = vdwg.mxu0
    %v8574 = vmax.f32 %v8535, 0.0
    %v8575 = vmax.f32 %v8537, 0.0
    %v8576 = vmax.f32 %v8540, 0.0
    %v8577 = vmax.f32 %v8542, 0.0
    %v8578 = vmax.f32 %v8545, 0.0
    %v8579 = vmax.f32 %v8547, 0.0
    %v8580 = vmax.f32 %v8550, 0.0
    %v8581 = vmax.f32 %v8552, 0.0
    %v8582 = vmax.f32 %v8555, 0.0
    %v8583 = vmax.f32 %v8557, 0.0
    %v8584 = vmax.f32 %v8560, 0.0
    %v8585 = vmax.f32 %v8562, 0.0
    %v8586 = vmax.f32 %v8565, 0.0
    %v8587 = vmax.f32 %v8567, 0.0
    %v8588 = vmax.f32 %v8570, 0.0
    %v8589 = vmax.f32 %v8572, 0.0
    %v8590 = vpack.c.bf16 %v8575, %v8574
    %v8591 = vpack.c.bf16 %v8577, %v8576
    %v8592 = vpack.c.bf16 %v8579, %v8578
    %v8593 = vpack.c.bf16 %v8581, %v8580
    %v8594 = vpack.c.bf16 %v8583, %v8582
    %v8595 = vpack.c.bf16 %v8585, %v8584
    %v8596 = vpack.c.bf16 %v8587, %v8586
    %v8597 = vpack.c.bf16 %v8589, %v8588
    %v8598 = vld [vmem:[#allocation12] sm:$0xf]
    %v8599 = vld [vmem:[#allocation12 + $0x4] sm:$0xf]
    %v8600 = vld [vmem:[#allocation12 + $0x8] sm:$0xf]
    %v8601 = vld [vmem:[#allocation12 + $0xc] sm:$0xf]
    %v8602 = vld [vmem:[#allocation12 + $0x10] sm:$0xf]
    %v8603 = vld [vmem:[#allocation12 + $0x14] sm:$0xf]
    %v8604 = vld [vmem:[#allocation12 + $0x18] sm:$0xf]
    %v8605 = vld [vmem:[#allocation12 + $0x1c] sm:$0xf]
    %v8606 = vld [vmem:[#allocation12 + $0x20] sm:$0xf]
    %v8607 = vld [vmem:[#allocation12 + $0x24] sm:$0xf]
    %v8608 = vld [vmem:[#allocation12 + $0x28] sm:$0xf]
    %v8609 = vld [vmem:[#allocation12 + $0x2c] sm:$0xf]
    %v8610 = vld [vmem:[#allocation12 + $0x30] sm:$0xf]
    %v8611 = vld [vmem:[#allocation12 + $0x34] sm:$0xf]
    %v8612 = vld [vmem:[#allocation12 + $0x38] sm:$0xf]
    %v8613 = vld [vmem:[#allocation12 + $0x3c] sm:$0xf]
    %v8614 = vld [vmem:[#allocation13] sm:$0x1]
    %v8616 = vperm.slane %v8614, 0
    %v8634 = vunpack.c.l.b16 %v8598
    %v8635 = vunpack.c.l.b16 %v8599
    %v8636 = vunpack.c.l.b16 %v8600
    %v8637 = vunpack.c.l.b16 %v8601
    %v8638 = vunpack.c.l.b16 %v8602
    %v8639 = vunpack.c.l.b16 %v8603
    %v8640 = vunpack.c.l.b16 %v8604
    %v8641 = vunpack.c.l.b16 %v8605
    %v8642 = vunpack.c.l.b16 %v8606
    %v8643 = vunpack.c.l.b16 %v8607
    %v8644 = vunpack.c.l.b16 %v8608
    %v8645 = vunpack.c.l.b16 %v8609
    %v8646 = vunpack.c.l.b16 %v8610
    %v8647 = vunpack.c.l.b16 %v8611
    %v8648 = vunpack.c.l.b16 %v8612
    %v8649 = vunpack.c.l.b16 %v8613
    %v8650 = vpack.c.b16 %v8635, %v8634
    %v8651 = vpack.c.b16 %v8637, %v8636
    %v8652 = vpack.c.b16 %v8639, %v8638
    %v8653 = vpack.c.b16 %v8641, %v8640
    %v8654 = vpack.c.b16 %v8643, %v8642
    %v8655 = vpack.c.b16 %v8645, %v8644
    %v8656 = vpack.c.b16 %v8647, %v8646
    %v8657 = vpack.c.b16 %v8649, %v8648
    %8666 = vmatpush.bf16.msra.mxu0 %v8657
    %8667 = vmatpush.bf16.msra.mxu0 %v8656
    %8668 = vmatpush.bf16.msra.mxu0 %v8655
    %8669 = vmatpush.bf16.msra.mxu0 %v8654
    %8670 = vmatpush.bf16.msra.mxu0 %v8653
    %8671 = vmatpush.bf16.msra.mxu0 %v8652
    %8672 = vmatpush.bf16.msra.mxu0 %v8651
    %8673 = vmatpush.bf16.msra.mxu0 %v8650
    %8674 = vmatmul.bf16.gmra.mxu0 %v8590
    %v8675 = vpop.f32.mrf.mxu0
    %v8676 = vadd.f32 %v8616, %v8675
    %v8677 = vpop.f32.mrf.mxu0
    %v8678 = vadd.f32 %v8616, %v8677
    %8679 = vmatmul.bf16.gmra.mxu0 %v8591
    %v8680 = vpop.f32.mrf.mxu0
    %v8681 = vadd.f32 %v8616, %v8680
    %v8682 = vpop.f32.mrf.mxu0
    %v8683 = vadd.f32 %v8616, %v8682
    %8684 = vmatmul.bf16.gmra.mxu0 %v8592
    %v8685 = vpop.f32.mrf.mxu0
    %v8686 = vadd.f32 %v8616, %v8685
    %v8687 = vpop.f32.mrf.mxu0
    %v8688 = vadd.f32 %v8616, %v8687
    %8689 = vmatmul.bf16.gmra.mxu0 %v8593
    %v8690 = vpop.f32.mrf.mxu0
    %v8691 = vadd.f32 %v8616, %v8690
    %v8692 = vpop.f32.mrf.mxu0
    %v8693 = vadd.f32 %v8616, %v8692
    %8694 = vmatmul.bf16.gmra.mxu0 %v8594
    %v8695 = vpop.f32.mrf.mxu0
    %v8696 = vadd.f32 %v8616, %v8695
    %v8697 = vpop.f32.mrf.mxu0
    %v8698 = vadd.f32 %v8616, %v8697
    %8699 = vmatmul.bf16.gmra.mxu0 %v8595
    %v8700 = vpop.f32.mrf.mxu0
    %v8701 = vadd.f32 %v8616, %v8700
    %v8702 = vpop.f32.mrf.mxu0
    %v8703 = vadd.f32 %v8616, %v8702
    %8704 = vmatmul.bf16.gmra.mxu0 %v8596
    %v8705 = vpop.f32.mrf.mxu0
    %v8706 = vadd.f32 %v8616, %v8705
    %v8707 = vpop.f32.mrf.mxu0
    %v8708 = vadd.f32 %v8616, %v8707
    %8709 = vmatmul.bf16.gmra.mxu0 %v8597
    %v8710 = vpop.f32.mrf.mxu0
    %v8711 = vadd.f32 %v8616, %v8710
    %v8712 = vpop.f32.mrf.mxu0
    %v8713 = vadd.f32 %v8616, %v8712
    %8714 = vdwg.mxu0
    %v8715 = vmax.f32 %v8676, 0.0
    %v8716 = vmax.f32 %v8678, 0.0
    %v8717 = vmax.f32 %v8681, 0.0
    %v8718 = vmax.f32 %v8683, 0.0
    %v8719 = vmax.f32 %v8686, 0.0
    %v8720 = vmax.f32 %v8688, 0.0
    %v8721 = vmax.f32 %v8691, 0.0
    %v8722 = vmax.f32 %v8693, 0.0
    %v8723 = vmax.f32 %v8696, 0.0
    %v8724 = vmax.f32 %v8698, 0.0
    %v8725 = vmax.f32 %v8701, 0.0
    %v8726 = vmax.f32 %v8703, 0.0
    %v8727 = vmax.f32 %v8706, 0.0
    %v8728 = vmax.f32 %v8708, 0.0
    %v8729 = vmax.f32 %v8711, 0.0
    %v8730 = vmax.f32 %v8713, 0.0
    %v8731 = vpack.c.bf16 %v8716, %v8715
    %v8732 = vpack.c.bf16 %v8718, %v8717
    %v8733 = vpack.c.bf16 %v8720, %v8719
    %v8734 = vpack.c.bf16 %v8722, %v8721
    %v8735 = vpack.c.bf16 %v8724, %v8723
    %v8736 = vpack.c.bf16 %v8726, %v8725
    %v8737 = vpack.c.bf16 %v8728, %v8727
    %v8738 = vpack.c.bf16 %v8730, %v8729
    %v8739 = vld [vmem:[#allocation15] sm:$0xf]
    %v8740 = vld [vmem:[#allocation15 + $0x4] sm:$0xf]
    %v8741 = vld [vmem:[#allocation15 + $0x8] sm:$0xf]
    %v8742 = vld [vmem:[#allocation15 + $0xc] sm:$0xf]
    %v8743 = vld [vmem:[#allocation15 + $0x10] sm:$0xf]
    %v8744 = vld [vmem:[#allocation15 + $0x14] sm:$0xf]
    %v8745 = vld [vmem:[#allocation15 + $0x18] sm:$0xf]
    %v8746 = vld [vmem:[#allocation15 + $0x1c] sm:$0xf]
    %v8747 = vld [vmem:[#allocation15 + $0x20] sm:$0xf]
    %v8748 = vld [vmem:[#allocation15 + $0x24] sm:$0xf]
    %v8749 = vld [vmem:[#allocation15 + $0x28] sm:$0xf]
    %v8750 = vld [vmem:[#allocation15 + $0x2c] sm:$0xf]
    %v8751 = vld [vmem:[#allocation15 + $0x30] sm:$0xf]
    %v8752 = vld [vmem:[#allocation15 + $0x34] sm:$0xf]
    %v8753 = vld [vmem:[#allocation15 + $0x38] sm:$0xf]
    %v8754 = vld [vmem:[#allocation15 + $0x3c] sm:$0xf]
    %v8755 = vld [vmem:[#allocation16] sm:$0x1]
    %v8757 = vperm.slane %v8755, 0
    %v8775 = vunpack.c.l.b16 %v8739
    %v8776 = vunpack.c.l.b16 %v8740
    %v8777 = vunpack.c.l.b16 %v8741
    %v8778 = vunpack.c.l.b16 %v8742
    %v8779 = vunpack.c.l.b16 %v8743
    %v8780 = vunpack.c.l.b16 %v8744
    %v8781 = vunpack.c.l.b16 %v8745
    %v8782 = vunpack.c.l.b16 %v8746
    %v8783 = vunpack.c.l.b16 %v8747
    %v8784 = vunpack.c.l.b16 %v8748
    %v8785 = vunpack.c.l.b16 %v8749
    %v8786 = vunpack.c.l.b16 %v8750
    %v8787 = vunpack.c.l.b16 %v8751
    %v8788 = vunpack.c.l.b16 %v8752
    %v8789 = vunpack.c.l.b16 %v8753
    %v8790 = vunpack.c.l.b16 %v8754
    %v8791 = vpack.c.b16 %v8776, %v8775
    %v8792 = vpack.c.b16 %v8778, %v8777
    %v8793 = vpack.c.b16 %v8780, %v8779
    %v8794 = vpack.c.b16 %v8782, %v8781
    %v8795 = vpack.c.b16 %v8784, %v8783
    %v8796 = vpack.c.b16 %v8786, %v8785
    %v8797 = vpack.c.b16 %v8788, %v8787
    %v8798 = vpack.c.b16 %v8790, %v8789
    %8807 = vmatpush.bf16.msra.mxu0 %v8798
    %8808 = vmatpush.bf16.msra.mxu0 %v8797
    %8809 = vmatpush.bf16.msra.mxu0 %v8796
    %8810 = vmatpush.bf16.msra.mxu0 %v8795
    %8811 = vmatpush.bf16.msra.mxu0 %v8794
    %8812 = vmatpush.bf16.msra.mxu0 %v8793
    %8813 = vmatpush.bf16.msra.mxu0 %v8792
    %8814 = vmatpush.bf16.msra.mxu0 %v8791
    %8815 = vmatmul.bf16.gmra.mxu0 %v8731
    %v8816 = vpop.f32.mrf.mxu0
    %v8817 = vadd.f32 %v8757, %v8816
    %v8818 = vpop.f32.mrf.mxu0
    %v8819 = vadd.f32 %v8757, %v8818
    %8820 = vmatmul.bf16.gmra.mxu0 %v8732
    %v8821 = vpop.f32.mrf.mxu0
    %v8822 = vadd.f32 %v8757, %v8821
    %v8823 = vpop.f32.mrf.mxu0
    %v8824 = vadd.f32 %v8757, %v8823
    %8825 = vmatmul.bf16.gmra.mxu0 %v8733
    %v8826 = vpop.f32.mrf.mxu0
    %v8827 = vadd.f32 %v8757, %v8826
    %v8828 = vpop.f32.mrf.mxu0
    %v8829 = vadd.f32 %v8757, %v8828
    %8830 = vmatmul.bf16.gmra.mxu0 %v8734
    %v8831 = vpop.f32.mrf.mxu0
    %v8832 = vadd.f32 %v8757, %v8831
    %v8833 = vpop.f32.mrf.mxu0
    %v8834 = vadd.f32 %v8757, %v8833
    %8835 = vmatmul.bf16.gmra.mxu0 %v8735
    %v8836 = vpop.f32.mrf.mxu0
    %v8837 = vadd.f32 %v8757, %v8836
    %v8838 = vpop.f32.mrf.mxu0
    %v8839 = vadd.f32 %v8757, %v8838
    %8840 = vmatmul.bf16.gmra.mxu0 %v8736
    %v8841 = vpop.f32.mrf.mxu0
    %v8842 = vadd.f32 %v8757, %v8841
    %v8843 = vpop.f32.mrf.mxu0
    %v8844 = vadd.f32 %v8757, %v8843
    %8845 = vmatmul.bf16.gmra.mxu0 %v8737
    %v8846 = vpop.f32.mrf.mxu0
    %v8847 = vadd.f32 %v8757, %v8846
    %v8848 = vpop.f32.mrf.mxu0
    %v8849 = vadd.f32 %v8757, %v8848
    %8850 = vmatmul.bf16.gmra.mxu0 %v8738
    %v8851 = vpop.f32.mrf.mxu0
    %v8852 = vadd.f32 %v8757, %v8851
    %v8853 = vpop.f32.mrf.mxu0
    %v8854 = vadd.f32 %v8757, %v8853
    %8855 = vdwg.mxu0
    %v8856 = vsub.f32 0.0, %v8817
    %v8857 = vsub.f32 0.0, %v8819
    %v8858 = vsub.f32 0.0, %v8822
    %v8859 = vsub.f32 0.0, %v8824
    %v8860 = vsub.f32 0.0, %v8827
    %v8861 = vsub.f32 0.0, %v8829
    %v8862 = vsub.f32 0.0, %v8832
    %v8863 = vsub.f32 0.0, %v8834
    %v8864 = vsub.f32 0.0, %v8837
    %v8865 = vsub.f32 0.0, %v8839
    %v8866 = vsub.f32 0.0, %v8842
    %v8867 = vsub.f32 0.0, %v8844
    %v8868 = vsub.f32 0.0, %v8847
    %v8869 = vsub.f32 0.0, %v8849
    %v8870 = vsub.f32 0.0, %v8852
    %v8871 = vsub.f32 0.0, %v8854
    %v8872 = vmul.f32 %v8856, 1.442695
    %v8873 = vpow.pop %v8872
    %v8874 = vmul.f32 %v8857, 1.442695
    %v8875 = vpow.pop %v8874
    %v8876 = vmul.f32 %v8858, 1.442695
    %v8877 = vpow.pop %v8876
    %v8878 = vmul.f32 %v8859, 1.442695
    %v8879 = vpow.pop %v8878
    %v8880 = vmul.f32 %v8860, 1.442695
    %v8881 = vpow.pop %v8880
    %v8882 = vmul.f32 %v8861, 1.442695
    %v8883 = vpow.pop %v8882
    %v8884 = vmul.f32 %v8862, 1.442695
    %v8885 = vpow.pop %v8884
    %v8886 = vmul.f32 %v8863, 1.442695
    %v8887 = vpow.pop %v8886
    %v8888 = vmul.f32 %v8864, 1.442695
    %v8889 = vpow.pop %v8888
    %v8890 = vmul.f32 %v8865, 1.442695
    %v8891 = vpow.pop %v8890
    %v8892 = vmul.f32 %v8866, 1.442695
    %v8893 = vpow.pop %v8892
    %v8894 = vmul.f32 %v8867, 1.442695
    %v8895 = vpow.pop %v8894
    %v8896 = vmul.f32 %v8868, 1.442695
    %v8897 = vpow.pop %v8896
    %v8898 = vmul.f32 %v8869, 1.442695
    %v8899 = vpow.pop %v8898
    %v8900 = vmul.f32 %v8870, 1.442695
    %v8901 = vpow.pop %v8900
    %v8902 = vmul.f32 %v8871, 1.442695
    %v8903 = vpow.pop %v8902
    %v8904 = vadd.f32 %v8873, 1.0
    %v8905 = vadd.f32 %v8875, 1.0
    %v8906 = vadd.f32 %v8877, 1.0
    %v8907 = vadd.f32 %v8879, 1.0
    %v8908 = vadd.f32 %v8881, 1.0
    %v8909 = vadd.f32 %v8883, 1.0
    %v8910 = vadd.f32 %v8885, 1.0
    %v8911 = vadd.f32 %v8887, 1.0
    %v8912 = vadd.f32 %v8889, 1.0
    %v8913 = vadd.f32 %v8891, 1.0
    %v8914 = vadd.f32 %v8893, 1.0
    %v8915 = vadd.f32 %v8895, 1.0
    %v8916 = vadd.f32 %v8897, 1.0
    %v8917 = vadd.f32 %v8899, 1.0
    %v8918 = vadd.f32 %v8901, 1.0
    %v8919 = vadd.f32 %v8903, 1.0
    %v8920 = vrcp.pop %v8904
    %v8921 = vrcp.pop %v8905
    %v8922 = vrcp.pop %v8906
    %v8923 = vrcp.pop %v8907
    %v8924 = vrcp.pop %v8908
    %v8925 = vrcp.pop %v8909
    %v8926 = vrcp.pop %v8910
    %v8927 = vrcp.pop %v8911
    %v8928 = vrcp.pop %v8912
    %v8929 = vrcp.pop %v8913
    %v8930 = vrcp.pop %v8914
    %v8931 = vrcp.pop %v8915
    %v8932 = vrcp.pop %v8916
    %v8933 = vrcp.pop %v8917
    %v8934 = vrcp.pop %v8918
    %v8935 = vrcp.pop %v8919
    %v8936 = vld [vmem:[%s1] sm:$0xff]
    %v8937 = vld [vmem:[%s1 + $0x8] sm:$0xff]
    %v8938 = vld [vmem:[%s1 + $0x10] sm:$0xff]
    %v8939 = vld [vmem:[%s1 + $0x18] sm:$0xff]
    %v8940 = vld [vmem:[%s1 + $0x20] sm:$0xff]
    %v8941 = vld [vmem:[%s1 + $0x28] sm:$0xff]
    %v8942 = vld [vmem:[%s1 + $0x30] sm:$0xff]
    %v8943 = vld [vmem:[%s1 + $0x38] sm:$0xff]
    %v8944 = vld [vmem:[%s1 + $0x40] sm:$0xff]
    %v8945 = vld [vmem:[%s1 + $0x48] sm:$0xff]
    %v8946 = vld [vmem:[%s1 + $0x50] sm:$0xff]
    %v8947 = vld [vmem:[%s1 + $0x58] sm:$0xff]
    %v8948 = vld [vmem:[%s1 + $0x60] sm:$0xff]
    %v8949 = vld [vmem:[%s1 + $0x68] sm:$0xff]
    %v8950 = vld [vmem:[%s1 + $0x70] sm:$0xff]
    %v8951 = vld [vmem:[%s1 + $0x78] sm:$0xff]
    %vm8952 = vcmp.eq.s32.totalorder %v8936, 0
    %vm8953 = vcmp.eq.s32.totalorder %v8937, 0
    %vm8954 = vcmp.eq.s32.totalorder %v8938, 0
    %vm8955 = vcmp.eq.s32.totalorder %v8939, 0
    %vm8956 = vcmp.eq.s32.totalorder %v8940, 0
    %vm8957 = vcmp.eq.s32.totalorder %v8941, 0
    %vm8958 = vcmp.eq.s32.totalorder %v8942, 0
    %vm8959 = vcmp.eq.s32.totalorder %v8943, 0
    %vm8960 = vcmp.eq.s32.totalorder %v8944, 0
    %vm8961 = vcmp.eq.s32.totalorder %v8945, 0
    %vm8962 = vcmp.eq.s32.totalorder %v8946, 0
    %vm8963 = vcmp.eq.s32.totalorder %v8947, 0
    %vm8964 = vcmp.eq.s32.totalorder %v8948, 0
    %vm8965 = vcmp.eq.s32.totalorder %v8949, 0
    %vm8966 = vcmp.eq.s32.totalorder %v8950, 0
    %vm8967 = vcmp.eq.s32.totalorder %v8951, 0
    %v8968 = vsel %vm8952, 1, 0
    %v8969 = vsel %vm8953, 1, 0
    %v8970 = vsel %vm8954, 1, 0
    %v8971 = vsel %vm8955, 1, 0
    %v8972 = vsel %vm8956, 1, 0
    %v8973 = vsel %vm8957, 1, 0
    %v8974 = vsel %vm8958, 1, 0
    %v8975 = vsel %vm8959, 1, 0
    %v8976 = vsel %vm8960, 1, 0
    %v8977 = vsel %vm8961, 1, 0
    %v8978 = vsel %vm8962, 1, 0
    %v8979 = vsel %vm8963, 1, 0
    %v8980 = vsel %vm8964, 1, 0
    %v8981 = vsel %vm8965, 1, 0
    %v8982 = vsel %vm8966, 1, 0
    %v8983 = vsel %vm8967, 1, 0
    %v8984 = vcvt.s32.f32 %v8968
    %v8985 = vcvt.s32.f32 %v8969
    %v8986 = vcvt.s32.f32 %v8970
    %v8987 = vcvt.s32.f32 %v8971
    %v8988 = vcvt.s32.f32 %v8972
    %v8989 = vcvt.s32.f32 %v8973
    %v8990 = vcvt.s32.f32 %v8974
    %v8991 = vcvt.s32.f32 %v8975
    %v8992 = vcvt.s32.f32 %v8976
    %v8993 = vcvt.s32.f32 %v8977
    %v8994 = vcvt.s32.f32 %v8978
    %v8995 = vcvt.s32.f32 %v8979
    %v8996 = vcvt.s32.f32 %v8980
    %v8997 = vcvt.s32.f32 %v8981
    %v8998 = vcvt.s32.f32 %v8982
    %v8999 = vcvt.s32.f32 %v8983
    %v9000 = vmul.f32 %v8920, %v8984
    %v9001 = vmul.f32 %v8921, %v8985
    %v9002 = vmul.f32 %v8922, %v8986
    %v9003 = vmul.f32 %v8923, %v8987
    %v9004 = vmul.f32 %v8924, %v8988
    %v9005 = vmul.f32 %v8925, %v8989
    %v9006 = vmul.f32 %v8926, %v8990
    %v9007 = vmul.f32 %v8927, %v8991
    %v9008 = vmul.f32 %v8928, %v8992
    %v9009 = vmul.f32 %v8929, %v8993
    %v9010 = vmul.f32 %v8930, %v8994
    %v9011 = vmul.f32 %v8931, %v8995
    %v9012 = vmul.f32 %v8932, %v8996
    %v9013 = vmul.f32 %v8933, %v8997
    %v9014 = vmul.f32 %v8934, %v8998
    %v9015 = vmul.f32 %v8935, %v8999
    %v9016 = vadd.f32 %v9000, %v8984
    %v9017 = vadd.f32 %v9001, %v8985
    %v9018 = vadd.f32 %v9002, %v8986
    %v9019 = vadd.f32 %v9003, %v8987
    %v9020 = vadd.f32 %v9004, %v8988
    %v9021 = vadd.f32 %v9005, %v8989
    %v9022 = vadd.f32 %v9006, %v8990
    %v9023 = vadd.f32 %v9007, %v8991
    %v9024 = vadd.f32 %v9008, %v8992
    %v9025 = vadd.f32 %v9009, %v8993
    %v9026 = vadd.f32 %v9010, %v8994
    %v9027 = vadd.f32 %v9011, %v8995
    %v9028 = vadd.f32 %v9012, %v8996
    %v9029 = vadd.f32 %v9013, %v8997
    %v9030 = vadd.f32 %v9014, %v8998
    %v9031 = vadd.f32 %v9015, %v8999
    %9032 = vst [vmem:[%s12] sm:$0xff] %v9016
    %9033 = vst [vmem:[%s12 + $0x8] sm:$0xff] %v9017
    %9034 = vst [vmem:[%s12 + $0x10] sm:$0xff] %v9018
    %9035 = vst [vmem:[%s12 + $0x18] sm:$0xff] %v9019
    %9036 = vst [vmem:[%s12 + $0x20] sm:$0xff] %v9020
    %9037 = vst [vmem:[%s12 + $0x28] sm:$0xff] %v9021
    %9038 = vst [vmem:[%s12 + $0x30] sm:$0xff] %v9022
    %9039 = vst [vmem:[%s12 + $0x38] sm:$0xff] %v9023
    %9040 = vst [vmem:[%s12 + $0x40] sm:$0xff] %v9024
    %9041 = vst [vmem:[%s12 + $0x48] sm:$0xff] %v9025
    %9042 = vst [vmem:[%s12 + $0x50] sm:$0xff] %v9026
    %9043 = vst [vmem:[%s12 + $0x58] sm:$0xff] %v9027
    %9044 = vst [vmem:[%s12 + $0x60] sm:$0xff] %v9028
    %9045 = vst [vmem:[%s12 + $0x68] sm:$0xff] %v9029
    %9046 = vst [vmem:[%s12 + $0x70] sm:$0xff] %v9030
    %9047 = vst [vmem:[%s12 + $0x78] sm:$0xff] %v9031
    // Predicated region
    $region90: #{flipcard_forward_batch.1} parent=1 // pred_check
      _
    $region91: #{flipcard_forward_batch.1} parent=1 // pred_check_branch
      %9049 = sbr.rel (0) target = $region93
    $region92: #{flipcard_forward_batch.1} parent=1 // pred_region
      _
    $region93: #{flipcard_forward_batch.1} parent=1 // pred_fallthru
      _
    // Predicated region
    $region94: #{flipcard_forward_batch.1} parent=1 // pred_check
      _
    $region95: #{flipcard_forward_batch.1} parent=1 // pred_check_branch
      %9051 = sbr.rel (0) target = $region97
    $region96: #{flipcard_forward_batch.1} parent=1 // pred_region
      _
    $region97: #{flipcard_forward_batch.1} parent=1 // pred_fallthru
      _
    %9052 = vsyncpa [#allocation3], 1
    %9053 = vsyncpa [#allocation5], 1
    %9054 = vsyncpa [#allocation8], 1
    %9055 = vsyncpa [#allocation11], 1
    %9056 = vsyncpa [#allocation14], 1
    %9057 = vsyncpa [#allocation17], 1

</llo_original>
